<compile_context>
chip_gen: v6e
topology: v6e:2x2x1
jax: 0.10.0
libtpu: 0.0.40
codegen_flags: <defaults>
</compile_context>

<pallas_src>
import math

import jax
import jax.numpy as jnp
from jax.experimental import pallas as pl
from jax.experimental.pallas import tpu as pltpu


def _elu(x):
    # ELU(alpha=1). Clamp exp argument so the unselected branch never overflows.
    return jnp.where(x > 0, x, jnp.exp(jnp.minimum(x, 0.0)) - 1.0)


# --------------------------------------------------------------------------
# The single fused kernel: CNN + per-segment max pool + MHA + MLP tail.
# One grid step per batch element.
# --------------------------------------------------------------------------
def _make_fused_kernel(S, seg, step, num_heads, block_proj):
    def kernel(x_ref, w1_ref, b1_ref, w2_ref, b2_ref, w3_ref, b3_ref,
               wqkv_ref, bqkv_ref, mask_ref, wo_ref, bo_ref,
               pre_w_ref, pre_b_ref, *rest):
        o_ref = rest[-1]
        blk_refs = rest[:-1]

        def dense(a, w_ref, b_ref):
            # bf16 x bf16 MXU matmul, f32 accumulation, f32 bias.
            return (jnp.dot(a.astype(jnp.bfloat16), w_ref[...],
                            preferred_element_type=jnp.float32) + b_ref[...])

        # ---------------- CNN over the full-length sequence ----------------
        x = x_ref[0]                                   # (L, C) f32, one batch elem
        L, C = x.shape
        F1 = w1_ref.shape[1]

        # conv1 (kernel_size=1, Cin=2): VPU broadcast-FMAs in f32.
        acc1 = jnp.zeros((L, F1), jnp.float32)
        for c in range(C):
            acc1 = acc1 + x[:, c:c + 1] * w1_ref[c:c + 1, :]
        h = _elu(acc1 + b1_ref[...])                   # (L, F1)

        # conv2 / conv3: K tap-accumulated bf16 matmuls over the whole length.
        def conv_elu(h, w_ref, b_ref):
            K, _, Fout = w_ref.shape
            Lout = h.shape[0] - K + 1
            acc = jnp.zeros((Lout, Fout), jnp.float32)
            for k in range(K):
                acc = acc + jnp.dot(h[k:k + Lout, :].astype(jnp.bfloat16),
                                    w_ref[k],
                                    preferred_element_type=jnp.float32)
            return _elu(acc + b_ref[...])

        h = conv_elu(h, w2_ref, b2_ref)                # (L-4, F2)
        h = conv_elu(h, w3_ref, b3_ref)                # (L-8, F3)

        # Slicer + GlobalMaxPooling1D: per-segment max over the valid positions
        # (identical to slicing first, because the convs use valid padding).
        K2, K3 = w2_ref.shape[0], w3_ref.shape[0]
        Lvalid = seg - (K2 - 1) - (K3 - 1)
        pooled = jnp.concatenate(
            [jnp.max(h[s * step:s * step + Lvalid, :], axis=0, keepdims=True)
             for s in range(S)], axis=0)               # (S, F3) = (18, 128)

        # ------------- MultiheadAttention (block-diagonal over heads) -------------
        E = pooled.shape[1]
        H = num_heads
        D = E // H
        qkv = dense(pooled, wqkv_ref, bqkv_ref)        # (S, 3E) f32

        def split_heads(t):                            # (S, E) -> (H*S, D), head-major
            return jnp.concatenate(
                [t[:, hh * D:(hh + 1) * D] for hh in range(H)], axis=0)

        q2 = split_heads(qkv[:, :E]) * (1.0 / math.sqrt(D))
        k2 = split_heads(qkv[:, E:2 * E])
        v2 = split_heads(qkv[:, 2 * E:])
        s_mat = jax.lax.dot_general(                   # (H*S, H*S) block-diag scores
            q2.astype(jnp.bfloat16), k2.astype(jnp.bfloat16),
            (((1,), (1,)), ((), ())), preferred_element_type=jnp.float32)
        s_mat = s_mat + mask_ref[...]                  # -1e30 off the head diagonal
        m = jnp.max(s_mat, axis=-1, keepdims=True)
        p = jnp.exp(s_mat - m)
        p = p / jnp.sum(p, axis=-1, keepdims=True)     # exact softmax
        ctx = jnp.dot(p.astype(jnp.bfloat16), v2.astype(jnp.bfloat16),
                      preferred_element_type=jnp.float32)            # (H*S, D)
        ctx = jnp.concatenate(                         # back to (S, E) = concat heads
            [ctx[hh * S:(hh + 1) * S, :] for hh in range(H)], axis=1)
        attn = dense(ctx, wo_ref, bo_ref)              # (S, E)

        # --------- nn.Flatten + pre_resnet_linear + ResBlocks (MLP tail) ---------
        flat = jnp.concatenate(                        # (1, S*E), 128-aligned pieces
            [attn[s:s + 1, :] for s in range(S)], axis=1)
        hmlp = _elu(dense(flat, pre_w_ref, pre_b_ref))
        it = iter(blk_refs)
        for has_proj in block_proj:                    # ResBlocks, fully unrolled
            w1r, b1r, w2r, b2r = next(it), next(it), next(it), next(it)
            if has_proj:
                wsr, bsr = next(it), next(it)
                res = dense(hmlp, wsr, bsr)            # projection shortcut
            else:
                res = hmlp
            y = _elu(dense(hmlp, w1r, b1r))
            hmlp = _elu(dense(y, w2r, b2r) + res)
        o_ref[0] = hmlp                                # (1, out_dim)

    return kernel


def forward_pallas(params, strain, cfg):
    B, C, L = strain.shape
    S = cfg["num_segments"]
    H = cfg["num_heads"]

    # Only XLA-side prep: a ~2 KB transpose and the constant additive head mask.
    strain_t = jnp.transpose(strain, (0, 2, 1))                     # (B, L, C)
    head_id = jnp.arange(S * H, dtype=jnp.int32) // S
    mask = jnp.where(head_id[:, None] == head_id[None, :], 0.0,
                     -1e30).astype(jnp.float32)                     # (H*S, H*S)

    inputs = [strain_t,
              params["w1"], params["b1"], params["w2"], params["b2"],
              params["w3"], params["b3"],
              params["wqkv_t"], params["bqkv"], mask,
              params["wo_t"], params["bo"],
              params["pre_w_t"], params["pre_b"]]
    block_proj = []
    for blk in params["blocks"]:
        inputs += [blk["w1_t"], blk["b1"], blk["w2_t"], blk["b2"]]
        if "ws_t" in blk:
            inputs += [blk["ws_t"], blk["bs"]]
            block_proj.append(True)
        else:
            block_proj.append(False)
    out_dim = (params["blocks"][-1]["w2_t"].shape[1] if params["blocks"]
               else params["pre_w_t"].shape[1])

    def _const_spec(a):
        n = a.ndim
        return pl.BlockSpec(a.shape, lambda b, _n=n: (0,) * _n)

    in_specs = ([pl.BlockSpec((1, L, C), lambda b: (b, 0, 0))]
                + [_const_spec(a) for a in inputs[1:]])

    out = pl.pallas_call(
        _make_fused_kernel(S, cfg["seg_samples"], cfg["step"], H,
                           tuple(block_proj)),
        out_shape=jax.ShapeDtypeStruct((B, 1, out_dim), jnp.float32),
        grid=(B,),
        in_specs=in_specs,
        out_specs=pl.BlockSpec((1, 1, out_dim), lambda b: (b, 0, 0)),
        compiler_params=pltpu.CompilerParams(
            dimension_semantics=("parallel",),
            vmem_limit_bytes=32 * 1024 * 1024),
    )(*inputs)
    return out.reshape(B, out_dim)


# --------------------------------------------------------------------------
# Parameter construction (deterministic, PyTorch-default-like fan-in scaling).
# Matmul weights stored in bf16 (halves weight DMA); conv1 weight & biases f32.
# --------------------------------------------------------------------------
def _uniform(key, shape, fan_in, dtype=jnp.float32):
    bound = 1.0 / math.sqrt(fan_in)
    return jax.random.uniform(key, shape, jnp.float32, -bound, bound).astype(dtype)


def init_params(key, cfg):
    C = cfg["strain_channels"]
    F = cfg["CNN_filters"]
    K = cfg["CNN_kernel_sizes"]
    assert K[0] == 1, "conv1 is implemented as a kernel_size=1 pointwise layer"
    E = F[-1]
    S = cfg["num_segments"]
    wdt = jnp.bfloat16
    keys = iter(jax.random.split(key, 64))
    p = {}

    # CNN.  conv1 weight kept f32 (VPU broadcast-FMA path); conv2/3 bf16 (MXU).
    p["w1"] = _uniform(next(keys), (C, F[0]), C * K[0])
    p["b1"] = _uniform(next(keys), (1, F[0]), C * K[0])
    p["w2"] = _uniform(next(keys), (K[1], F[0], F[1]), F[0] * K[1], wdt)
    p["b2"] = _uniform(next(keys), (1, F[1]), F[0] * K[1])
    p["w3"] = _uniform(next(keys), (K[2], F[1], F[2]), F[1] * K[2], wdt)
    p["b3"] = _uniform(next(keys), (1, F[2]), F[1] * K[2])

    # MultiheadAttention: in_proj (E,3E) transposed, out_proj (E,E) transposed.
    p["wqkv_t"] = _uniform(next(keys), (E, 3 * E), E, wdt)
    p["bqkv"] = _uniform(next(keys), (1, 3 * E), E)
    p["wo_t"] = _uniform(next(keys), (E, E), E, wdt)
    p["bo"] = _uniform(next(keys), (1, E), E)

    # pre_resnet_linear: LazyLinear(num_segments*E -> block_dims[0]) + ELU.
    flat_dim = S * E
    d0 = cfg["block_dims"][0]
    p["pre_w_t"] = _uniform(next(keys), (flat_dim, d0), flat_dim, wdt)
    p["pre_b"] = _uniform(next(keys), (1, d0), flat_dim)

    # ResBlocks.
    blocks = []
    in_dim = d0
    for bd in cfg["block_dims"]:
        for _ in range(cfg["num_blocks"]):
            blk = {"w1_t": _uniform(next(keys), (in_dim, bd), in_dim, wdt),
                   "b1": _uniform(next(keys), (1, bd), in_dim),
                   "w2_t": _uniform(next(keys), (bd, bd), bd, wdt),
                   "b2": _uniform(next(keys), (1, bd), bd)}
            if in_dim != bd:  # projection shortcut when dims change
                blk["ws_t"] = _uniform(next(keys), (in_dim, bd), in_dim, wdt)
                blk["bs"] = _uniform(next(keys), (1, bd), in_dim)
            blocks.append(blk)
            in_dim = bd
    p["blocks"] = blocks
    return p


# --------------------------------------------------------------------------
# Pure-JAX reference (per-segment CNN exactly like the PyTorch module, f32
# activations, exact softmax) used only for the correctness check.
# --------------------------------------------------------------------------
def forward_reference(params, strain, cfg):
    B = strain.shape[0]
    S, seg, step = cfg["num_segments"], cfg["seg_samples"], cfg["step"]
    C = cfg["strain_channels"]
    H = cfg["num_heads"]

    # Slicer: overlapping segments -> (B*S, seg, C)
    sliced = jnp.stack([strain[:, :, i * step:i * step + seg] for i in range(S)],
                       axis=2)                                       # (B,C,S,seg)
    x = jnp.transpose(sliced, (0, 2, 3, 1)).reshape(B * S, seg, C)

    def conv_valid(x, w, b):          # w: (K, Cin, Cout), valid padding
        Kk = w.shape[0]
        Lout = x.shape[1] - Kk + 1
        acc = jnp.zeros((x.shape[0], Lout, w.shape[2]), jnp.float32)
        for k in range(Kk):
            acc = acc + jnp.einsum("nlc,cf->nlf", x[:, k:k + Lout, :],
                                   w[k].astype(jnp.float32))
        return acc + b[None]

    x = _elu(jnp.einsum("nlc,cf->nlf", x, params["w1"]) + params["b1"][None])
    x = _elu(conv_valid(x, params["w2"], params["b2"]))
    x = _elu(conv_valid(x, params["w3"], params["b3"]))
    tokens = jnp.max(x, axis=1).reshape(B, S, -1)     # GlobalMaxPooling1D

    E = tokens.shape[-1]
    D = E // H
    qkv = tokens @ params["wqkv_t"].astype(jnp.float32) + params["bqkv"]
    q, k, v = qkv[..., :E], qkv[..., E:2 * E], qkv[..., 2 * E:]
    to_heads = lambda t: t.reshape(B, S, H, D).transpose(0, 2, 1, 3)
    qh, kh, vh = to_heads(q), to_heads(k), to_heads(v)
    scores = jnp.einsum("bhqd,bhkd->bhqk", qh, kh) / math.sqrt(D)
    probs = jax.nn.softmax(scores, axis=-1)
    ctx = (jnp.einsum("bhqk,bhkd->bhqd", probs, vh)
           .transpose(0, 2, 1, 3).reshape(B, S, E))
    attn = ctx @ params["wo_t"].astype(jnp.float32) + params["bo"]

    h = attn.reshape(B, S * E)                        # nn.Flatten
    h = _elu(h @ params["pre_w_t"].astype(jnp.float32) + params["pre_b"])
    for blk in params["blocks"]:
        res = (h @ blk["ws_t"].astype(jnp.float32) + blk["bs"]
               if "ws_t" in blk else h)
        y = _elu(h @ blk["w1_t"].astype(jnp.float32) + blk["b1"])
        h = _elu(y @ blk["w2_t"].astype(jnp.float32) + blk["b2"] + res)
    return h


if __name__ == "__main__":
    # Small, self-consistent configuration.
    strain_shape = [2, 256]        # (channels, length)
    fs = 160
    segment_len = 0.1              # seconds -> 16 samples / segment
    overlap = 15.0                 # percent (Slicer assumption)
    seg_samples = int(segment_len * fs)                         # 16
    step = seg_samples - int(overlap / 100.0 * seg_samples)     # 14
    num_segments = (strain_shape[1] - seg_samples) // step + 1  # 18

    cfg = dict(
        strain_channels=strain_shape[0],
        strain_length=strain_shape[1],
        seg_samples=seg_samples,
        step=step,
        num_segments=num_segments,
        CNN_filters=[32, 64, 128],
        CNN_kernel_sizes=[1, 5, 5],
        num_heads=8,               # kwarg override; embed_dim=128 -> head_dim=16
        block_dims=[256, 128],     # small block_dims for the test
        num_blocks=2,
    )

    key = jax.random.PRNGKey(0)
    k_x, k_p = jax.random.split(key)
    B = 2
    strain = jax.random.normal(k_x, (B, strain_shape[0], strain_shape[1]),
                               jnp.float32)
    params = init_params(k_p, cfg)

    fwd = jax.jit(lambda p, s: forward_pallas(p, s, cfg))
    out = jax.block_until_ready(fwd(params, strain))
    assert out.shape == (B, cfg["block_dims"][-1])

    ref = forward_reference(params, strain, cfg)
    err = float(jnp.max(jnp.abs(out - ref)))
    assert jnp.allclose(out, ref, rtol=3e-2, atol=3e-2), f"max abs err {err}"

    print("KERNEL_OK")
</pallas_src>

<mosaic_0001>
module attributes {stable_mosaic.version = 11 : i64} {
  func.func @kernel(%arg0: i32, %arg1: memref<1x256x2xf32, #tpu.memory_space<vmem>>, %arg2: memref<2x32xf32, #tpu.memory_space<vmem>>, %arg3: memref<1x32xf32, #tpu.memory_space<vmem>>, %arg4: memref<5x32x64xbf16, #tpu.memory_space<vmem>>, %arg5: memref<1x64xf32, #tpu.memory_space<vmem>>, %arg6: memref<5x64x128xbf16, #tpu.memory_space<vmem>>, %arg7: memref<1x128xf32, #tpu.memory_space<vmem>>, %arg8: memref<128x384xbf16, #tpu.memory_space<vmem>>, %arg9: memref<1x384xf32, #tpu.memory_space<vmem>>, %arg10: memref<144x144xf32, #tpu.memory_space<vmem>>, %arg11: memref<128x128xbf16, #tpu.memory_space<vmem>>, %arg12: memref<1x128xf32, #tpu.memory_space<vmem>>, %arg13: memref<2304x256xbf16, #tpu.memory_space<vmem>>, %arg14: memref<1x256xf32, #tpu.memory_space<vmem>>, %arg15: memref<256x256xbf16, #tpu.memory_space<vmem>>, %arg16: memref<1x256xf32, #tpu.memory_space<vmem>>, %arg17: memref<256x256xbf16, #tpu.memory_space<vmem>>, %arg18: memref<1x256xf32, #tpu.memory_space<vmem>>, %arg19: memref<256x256xbf16, #tpu.memory_space<vmem>>, %arg20: memref<1x256xf32, #tpu.memory_space<vmem>>, %arg21: memref<256x256xbf16, #tpu.memory_space<vmem>>, %arg22: memref<1x256xf32, #tpu.memory_space<vmem>>, %arg23: memref<256x128xbf16, #tpu.memory_space<vmem>>, %arg24: memref<1x128xf32, #tpu.memory_space<vmem>>, %arg25: memref<128x128xbf16, #tpu.memory_space<vmem>>, %arg26: memref<1x128xf32, #tpu.memory_space<vmem>>, %arg27: memref<256x128xbf16, #tpu.memory_space<vmem>>, %arg28: memref<1x128xf32, #tpu.memory_space<vmem>>, %arg29: memref<128x128xbf16, #tpu.memory_space<vmem>>, %arg30: memref<1x128xf32, #tpu.memory_space<vmem>>, %arg31: memref<128x128xbf16, #tpu.memory_space<vmem>>, %arg32: memref<1x128xf32, #tpu.memory_space<vmem>>, %arg33: memref<1x1x128xf32, #tpu.memory_space<vmem>>) attributes {dimension_semantics = [#tpu.dimension_semantics<parallel>], iteration_bounds = array<i64: 2>, scalar_prefetch = 0 : i64, scratch_operands = 0 : i64, tpu.core_type = #tpu.core_type<tc>, window_params = [{transform_indices = @transform_0, window_bounds = array<i64: 1, 256, 2>}, {pipeline_mode = #tpu.pipeline_mode<synchronous>, transform_indices = @transform_1, window_bounds = array<i64: 2, 32>}, {pipeline_mode = #tpu.pipeline_mode<synchronous>, transform_indices = @transform_2, window_bounds = array<i64: 1, 32>}, {pipeline_mode = #tpu.pipeline_mode<synchronous>, transform_indices = @transform_3, window_bounds = array<i64: 5, 32, 64>}, {pipeline_mode = #tpu.pipeline_mode<synchronous>, transform_indices = @transform_4, window_bounds = array<i64: 1, 64>}, {pipeline_mode = #tpu.pipeline_mode<synchronous>, transform_indices = @transform_5, window_bounds = array<i64: 5, 64, 128>}, {pipeline_mode = #tpu.pipeline_mode<synchronous>, transform_indices = @transform_6, window_bounds = array<i64: 1, 128>}, {pipeline_mode = #tpu.pipeline_mode<synchronous>, transform_indices = @transform_7, window_bounds = array<i64: 128, 384>}, {pipeline_mode = #tpu.pipeline_mode<synchronous>, transform_indices = @transform_8, window_bounds = array<i64: 1, 384>}, {pipeline_mode = #tpu.pipeline_mode<synchronous>, transform_indices = @transform_9, window_bounds = array<i64: 144, 144>}, {pipeline_mode = #tpu.pipeline_mode<synchronous>, transform_indices = @transform_10, window_bounds = array<i64: 128, 128>}, {pipeline_mode = #tpu.pipeline_mode<synchronous>, transform_indices = @transform_11, window_bounds = array<i64: 1, 128>}, {pipeline_mode = #tpu.pipeline_mode<synchronous>, transform_indices = @transform_12, window_bounds = array<i64: 2304, 256>}, {pipeline_mode = #tpu.pipeline_mode<synchronous>, transform_indices = @transform_13, window_bounds = array<i64: 1, 256>}, {pipeline_mode = #tpu.pipeline_mode<synchronous>, transform_indices = @transform_14, window_bounds = array<i64: 256, 256>}, {pipeline_mode = #tpu.pipeline_mode<synchronous>, transform_indices = @transform_15, window_bounds = array<i64: 1, 256>}, {pipeline_mode = #tpu.pipeline_mode<synchronous>, transform_indices = @transform_16, window_bounds = array<i64: 256, 256>}, {pipeline_mode = #tpu.pipeline_mode<synchronous>, transform_indices = @transform_17, window_bounds = array<i64: 1, 256>}, {pipeline_mode = #tpu.pipeline_mode<synchronous>, transform_indices = @transform_18, window_bounds = array<i64: 256, 256>}, {pipeline_mode = #tpu.pipeline_mode<synchronous>, transform_indices = @transform_19, window_bounds = array<i64: 1, 256>}, {pipeline_mode = #tpu.pipeline_mode<synchronous>, transform_indices = @transform_20, window_bounds = array<i64: 256, 256>}, {pipeline_mode = #tpu.pipeline_mode<synchronous>, transform_indices = @transform_21, window_bounds = array<i64: 1, 256>}, {pipeline_mode = #tpu.pipeline_mode<synchronous>, transform_indices = @transform_22, window_bounds = array<i64: 256, 128>}, {pipeline_mode = #tpu.pipeline_mode<synchronous>, transform_indices = @transform_23, window_bounds = array<i64: 1, 128>}, {pipeline_mode = #tpu.pipeline_mode<synchronous>, transform_indices = @transform_24, window_bounds = array<i64: 128, 128>}, {pipeline_mode = #tpu.pipeline_mode<synchronous>, transform_indices = @transform_25, window_bounds = array<i64: 1, 128>}, {pipeline_mode = #tpu.pipeline_mode<synchronous>, transform_indices = @transform_26, window_bounds = array<i64: 256, 128>}, {pipeline_mode = #tpu.pipeline_mode<synchronous>, transform_indices = @transform_27, window_bounds = array<i64: 1, 128>}, {pipeline_mode = #tpu.pipeline_mode<synchronous>, transform_indices = @transform_28, window_bounds = array<i64: 128, 128>}, {pipeline_mode = #tpu.pipeline_mode<synchronous>, transform_indices = @transform_29, window_bounds = array<i64: 1, 128>}, {pipeline_mode = #tpu.pipeline_mode<synchronous>, transform_indices = @transform_30, window_bounds = array<i64: 128, 128>}, {pipeline_mode = #tpu.pipeline_mode<synchronous>, transform_indices = @transform_31, window_bounds = array<i64: 1, 128>}, {transform_indices = @transform_32, window_bounds = array<i64: 1, 1, 128>}]} {
    %c0 = arith.constant 0 : index
    %c0_0 = arith.constant 0 : index
    %c0_1 = arith.constant 0 : index
    %0 = vector.load %arg1[%c0, %c0_0, %c0_1] : memref<1x256x2xf32, #tpu.memory_space<vmem>>, vector<1x256x2xf32>
    %1 = vector.shape_cast %0 : vector<1x256x2xf32> to vector<256x2xf32>
    %cst = arith.constant 0.000000e+00 : f32
    %2 = vector.broadcast %cst : f32 to vector<256x32xf32>
    %3 = vector.extract_strided_slice %1 {offsets = [0, 0], sizes = [256, 1], strides = [1, 1]} : vector<256x2xf32> to vector<256x1xf32>
    %c0_2 = arith.constant 0 : index
    %c0_3 = arith.constant 0 : index
    %4 = vector.load %arg2[%c0_2, %c0_3] : memref<2x32xf32, #tpu.memory_space<vmem>>, vector<1x32xf32>
    %5 = vector.broadcast %3 : vector<256x1xf32> to vector<256x32xf32>
    %6 = vector.broadcast %4 : vector<1x32xf32> to vector<256x32xf32>
    %7 = arith.mulf %5, %6 : vector<256x32xf32>
    %8 = arith.addf %2, %7 : vector<256x32xf32>
    %9 = vector.extract_strided_slice %1 {offsets = [0, 1], sizes = [256, 1], strides = [1, 1]} : vector<256x2xf32> to vector<256x1xf32>
    %c1 = arith.constant 1 : index
    %c0_4 = arith.constant 0 : index
    %10 = vector.load %arg2[%c1, %c0_4] : memref<2x32xf32, #tpu.memory_space<vmem>>, vector<1x32xf32>
    %11 = vector.broadcast %9 : vector<256x1xf32> to vector<256x32xf32>
    %12 = vector.broadcast %10 : vector<1x32xf32> to vector<256x32xf32>
    %13 = arith.mulf %11, %12 : vector<256x32xf32>
    %14 = arith.addf %8, %13 : vector<256x32xf32>
    %c0_5 = arith.constant 0 : index
    %c0_6 = arith.constant 0 : index
    %15 = vector.load %arg3[%c0_5, %c0_6] : memref<1x32xf32, #tpu.memory_space<vmem>>, vector<1x32xf32>
    %16 = vector.broadcast %15 : vector<1x32xf32> to vector<256x32xf32>
    %17 = arith.addf %14, %16 : vector<256x32xf32>
    %cst_7 = arith.constant 0.000000e+00 : f32
    %18 = vector.broadcast %cst_7 : f32 to vector<256x32xf32>
    %19 = arith.cmpf ogt, %17, %18 : vector<256x32xf32>
    %cst_8 = arith.constant 0.000000e+00 : f32
    %20 = vector.broadcast %cst_8 : f32 to vector<256x32xf32>
    %21 = arith.minimumf %17, %20 : vector<256x32xf32>
    %22 = math.exp %21 : vector<256x32xf32>
    %cst_9 = arith.constant 1.000000e+00 : f32
    %23 = vector.broadcast %cst_9 : f32 to vector<256x32xf32>
    %24 = arith.subf %22, %23 : vector<256x32xf32>
    %25 = arith.select %19, %17, %24 : vector<256x32xi1>, vector<256x32xf32>
    %cst_10 = arith.constant 0.000000e+00 : f32
    %26 = vector.broadcast %cst_10 : f32 to vector<252x64xf32>
    %27 = vector.extract_strided_slice %25 {offsets = [0, 0], sizes = [252, 32], strides = [1, 1]} : vector<256x32xf32> to vector<252x32xf32>
    %28 = arith.truncf %27 : vector<252x32xf32> to vector<252x32xbf16>
    %c0_11 = arith.constant 0 : index
    %c0_12 = arith.constant 0 : index
    %c0_13 = arith.constant 0 : index
    %29 = vector.load %arg4[%c0_11, %c0_12, %c0_13] : memref<5x32x64xbf16, #tpu.memory_space<vmem>>, vector<1x32x64xbf16>
    %30 = vector.shape_cast %29 : vector<1x32x64xbf16> to vector<32x64xbf16>
    %cst_14 = arith.constant dense<0.000000e+00> : vector<252x64xf32>
    %31 = tpu.matmul %28, %30, %cst_14 {dimension_numbers = #tpu.dot_dimension_numbers<[1], [0], [0], [1], [0, 0, 1, 1], [], []>} : vector<252x32xbf16>, vector<32x64xbf16>, vector<252x64xf32> -> vector<252x64xf32>
    %32 = arith.addf %26, %31 : vector<252x64xf32>
    %33 = vector.extract_strided_slice %25 {offsets = [1, 0], sizes = [252, 32], strides = [1, 1]} : vector<256x32xf32> to vector<252x32xf32>
    %34 = arith.truncf %33 : vector<252x32xf32> to vector<252x32xbf16>
    %c1_15 = arith.constant 1 : index
    %c0_16 = arith.constant 0 : index
    %c0_17 = arith.constant 0 : index
    %35 = vector.load %arg4[%c1_15, %c0_16, %c0_17] : memref<5x32x64xbf16, #tpu.memory_space<vmem>>, vector<1x32x64xbf16>
    %36 = vector.shape_cast %35 : vector<1x32x64xbf16> to vector<32x64xbf16>
    %cst_18 = arith.constant dense<0.000000e+00> : vector<252x64xf32>
    %37 = tpu.matmul %34, %36, %cst_18 {dimension_numbers = #tpu.dot_dimension_numbers<[1], [0], [0], [1], [0, 0, 1, 1], [], []>} : vector<252x32xbf16>, vector<32x64xbf16>, vector<252x64xf32> -> vector<252x64xf32>
    %38 = arith.addf %32, %37 : vector<252x64xf32>
    %39 = vector.extract_strided_slice %25 {offsets = [2, 0], sizes = [252, 32], strides = [1, 1]} : vector<256x32xf32> to vector<252x32xf32>
    %40 = arith.truncf %39 : vector<252x32xf32> to vector<252x32xbf16>
    %c2 = arith.constant 2 : index
    %c0_19 = arith.constant 0 : index
    %c0_20 = arith.constant 0 : index
    %41 = vector.load %arg4[%c2, %c0_19, %c0_20] : memref<5x32x64xbf16, #tpu.memory_space<vmem>>, vector<1x32x64xbf16>
    %42 = vector.shape_cast %41 : vector<1x32x64xbf16> to vector<32x64xbf16>
    %cst_21 = arith.constant dense<0.000000e+00> : vector<252x64xf32>
    %43 = tpu.matmul %40, %42, %cst_21 {dimension_numbers = #tpu.dot_dimension_numbers<[1], [0], [0], [1], [0, 0, 1, 1], [], []>} : vector<252x32xbf16>, vector<32x64xbf16>, vector<252x64xf32> -> vector<252x64xf32>
    %44 = arith.addf %38, %43 : vector<252x64xf32>
    %45 = vector.extract_strided_slice %25 {offsets = [3, 0], sizes = [252, 32], strides = [1, 1]} : vector<256x32xf32> to vector<252x32xf32>
    %46 = arith.truncf %45 : vector<252x32xf32> to vector<252x32xbf16>
    %c3 = arith.constant 3 : index
    %c0_22 = arith.constant 0 : index
    %c0_23 = arith.constant 0 : index
    %47 = vector.load %arg4[%c3, %c0_22, %c0_23] : memref<5x32x64xbf16, #tpu.memory_space<vmem>>, vector<1x32x64xbf16>
    %48 = vector.shape_cast %47 : vector<1x32x64xbf16> to vector<32x64xbf16>
    %cst_24 = arith.constant dense<0.000000e+00> : vector<252x64xf32>
    %49 = tpu.matmul %46, %48, %cst_24 {dimension_numbers = #tpu.dot_dimension_numbers<[1], [0], [0], [1], [0, 0, 1, 1], [], []>} : vector<252x32xbf16>, vector<32x64xbf16>, vector<252x64xf32> -> vector<252x64xf32>
    %50 = arith.addf %44, %49 : vector<252x64xf32>
    %51 = vector.extract_strided_slice %25 {offsets = [4, 0], sizes = [252, 32], strides = [1, 1]} : vector<256x32xf32> to vector<252x32xf32>
    %52 = arith.truncf %51 : vector<252x32xf32> to vector<252x32xbf16>
    %c4 = arith.constant 4 : index
    %c0_25 = arith.constant 0 : index
    %c0_26 = arith.constant 0 : index
    %53 = vector.load %arg4[%c4, %c0_25, %c0_26] : memref<5x32x64xbf16, #tpu.memory_space<vmem>>, vector<1x32x64xbf16>
    %54 = vector.shape_cast %53 : vector<1x32x64xbf16> to vector<32x64xbf16>
    %cst_27 = arith.constant dense<0.000000e+00> : vector<252x64xf32>
    %55 = tpu.matmul %52, %54, %cst_27 {dimension_numbers = #tpu.dot_dimension_numbers<[1], [0], [0], [1], [0, 0, 1, 1], [], []>} : vector<252x32xbf16>, vector<32x64xbf16>, vector<252x64xf32> -> vector<252x64xf32>
    %56 = arith.addf %50, %55 : vector<252x64xf32>
    %c0_28 = arith.constant 0 : index
    %c0_29 = arith.constant 0 : index
    %57 = vector.load %arg5[%c0_28, %c0_29] : memref<1x64xf32, #tpu.memory_space<vmem>>, vector<1x64xf32>
    %58 = vector.broadcast %57 : vector<1x64xf32> to vector<252x64xf32>
    %59 = arith.addf %56, %58 : vector<252x64xf32>
    %cst_30 = arith.constant 0.000000e+00 : f32
    %60 = vector.broadcast %cst_30 : f32 to vector<252x64xf32>
    %61 = arith.cmpf ogt, %59, %60 : vector<252x64xf32>
    %cst_31 = arith.constant 0.000000e+00 : f32
    %62 = vector.broadcast %cst_31 : f32 to vector<252x64xf32>
    %63 = arith.minimumf %59, %62 : vector<252x64xf32>
    %64 = math.exp %63 : vector<252x64xf32>
    %cst_32 = arith.constant 1.000000e+00 : f32
    %65 = vector.broadcast %cst_32 : f32 to vector<252x64xf32>
    %66 = arith.subf %64, %65 : vector<252x64xf32>
    %67 = arith.select %61, %59, %66 : vector<252x64xi1>, vector<252x64xf32>
    %cst_33 = arith.constant 0.000000e+00 : f32
    %68 = vector.broadcast %cst_33 : f32 to vector<248x128xf32>
    %69 = vector.extract_strided_slice %67 {offsets = [0, 0], sizes = [248, 64], strides = [1, 1]} : vector<252x64xf32> to vector<248x64xf32>
    %70 = arith.truncf %69 : vector<248x64xf32> to vector<248x64xbf16>
    %c0_34 = arith.constant 0 : index
    %c0_35 = arith.constant 0 : index
    %c0_36 = arith.constant 0 : index
    %71 = vector.load %arg6[%c0_34, %c0_35, %c0_36] : memref<5x64x128xbf16, #tpu.memory_space<vmem>>, vector<1x64x128xbf16>
    %72 = vector.shape_cast %71 : vector<1x64x128xbf16> to vector<64x128xbf16>
    %cst_37 = arith.constant dense<0.000000e+00> : vector<248x128xf32>
    %73 = tpu.matmul %70, %72, %cst_37 {dimension_numbers = #tpu.dot_dimension_numbers<[1], [0], [0], [1], [0, 0, 1, 1], [], []>} : vector<248x64xbf16>, vector<64x128xbf16>, vector<248x128xf32> -> vector<248x128xf32>
    %74 = arith.addf %68, %73 : vector<248x128xf32>
    %75 = vector.extract_strided_slice %67 {offsets = [1, 0], sizes = [248, 64], strides = [1, 1]} : vector<252x64xf32> to vector<248x64xf32>
    %76 = arith.truncf %75 : vector<248x64xf32> to vector<248x64xbf16>
    %c1_38 = arith.constant 1 : index
    %c0_39 = arith.constant 0 : index
    %c0_40 = arith.constant 0 : index
    %77 = vector.load %arg6[%c1_38, %c0_39, %c0_40] : memref<5x64x128xbf16, #tpu.memory_space<vmem>>, vector<1x64x128xbf16>
    %78 = vector.shape_cast %77 : vector<1x64x128xbf16> to vector<64x128xbf16>
    %cst_41 = arith.constant dense<0.000000e+00> : vector<248x128xf32>
    %79 = tpu.matmul %76, %78, %cst_41 {dimension_numbers = #tpu.dot_dimension_numbers<[1], [0], [0], [1], [0, 0, 1, 1], [], []>} : vector<248x64xbf16>, vector<64x128xbf16>, vector<248x128xf32> -> vector<248x128xf32>
    %80 = arith.addf %74, %79 : vector<248x128xf32>
    %81 = vector.extract_strided_slice %67 {offsets = [2, 0], sizes = [248, 64], strides = [1, 1]} : vector<252x64xf32> to vector<248x64xf32>
    %82 = arith.truncf %81 : vector<248x64xf32> to vector<248x64xbf16>
    %c2_42 = arith.constant 2 : index
    %c0_43 = arith.constant 0 : index
    %c0_44 = arith.constant 0 : index
    %83 = vector.load %arg6[%c2_42, %c0_43, %c0_44] : memref<5x64x128xbf16, #tpu.memory_space<vmem>>, vector<1x64x128xbf16>
    %84 = vector.shape_cast %83 : vector<1x64x128xbf16> to vector<64x128xbf16>
    %cst_45 = arith.constant dense<0.000000e+00> : vector<248x128xf32>
    %85 = tpu.matmul %82, %84, %cst_45 {dimension_numbers = #tpu.dot_dimension_numbers<[1], [0], [0], [1], [0, 0, 1, 1], [], []>} : vector<248x64xbf16>, vector<64x128xbf16>, vector<248x128xf32> -> vector<248x128xf32>
    %86 = arith.addf %80, %85 : vector<248x128xf32>
    %87 = vector.extract_strided_slice %67 {offsets = [3, 0], sizes = [248, 64], strides = [1, 1]} : vector<252x64xf32> to vector<248x64xf32>
    %88 = arith.truncf %87 : vector<248x64xf32> to vector<248x64xbf16>
    %c3_46 = arith.constant 3 : index
    %c0_47 = arith.constant 0 : index
    %c0_48 = arith.constant 0 : index
    %89 = vector.load %arg6[%c3_46, %c0_47, %c0_48] : memref<5x64x128xbf16, #tpu.memory_space<vmem>>, vector<1x64x128xbf16>
    %90 = vector.shape_cast %89 : vector<1x64x128xbf16> to vector<64x128xbf16>
    %cst_49 = arith.constant dense<0.000000e+00> : vector<248x128xf32>
    %91 = tpu.matmul %88, %90, %cst_49 {dimension_numbers = #tpu.dot_dimension_numbers<[1], [0], [0], [1], [0, 0, 1, 1], [], []>} : vector<248x64xbf16>, vector<64x128xbf16>, vector<248x128xf32> -> vector<248x128xf32>
    %92 = arith.addf %86, %91 : vector<248x128xf32>
    %93 = vector.extract_strided_slice %67 {offsets = [4, 0], sizes = [248, 64], strides = [1, 1]} : vector<252x64xf32> to vector<248x64xf32>
    %94 = arith.truncf %93 : vector<248x64xf32> to vector<248x64xbf16>
    %c4_50 = arith.constant 4 : index
    %c0_51 = arith.constant 0 : index
    %c0_52 = arith.constant 0 : index
    %95 = vector.load %arg6[%c4_50, %c0_51, %c0_52] : memref<5x64x128xbf16, #tpu.memory_space<vmem>>, vector<1x64x128xbf16>
    %96 = vector.shape_cast %95 : vector<1x64x128xbf16> to vector<64x128xbf16>
    %cst_53 = arith.constant dense<0.000000e+00> : vector<248x128xf32>
    %97 = tpu.matmul %94, %96, %cst_53 {dimension_numbers = #tpu.dot_dimension_numbers<[1], [0], [0], [1], [0, 0, 1, 1], [], []>} : vector<248x64xbf16>, vector<64x128xbf16>, vector<248x128xf32> -> vector<248x128xf32>
    %98 = arith.addf %92, %97 : vector<248x128xf32>
    %c0_54 = arith.constant 0 : index
    %c0_55 = arith.constant 0 : index
    %99 = vector.load %arg7[%c0_54, %c0_55] : memref<1x128xf32, #tpu.memory_space<vmem>>, vector<1x128xf32>
    %100 = vector.broadcast %99 : vector<1x128xf32> to vector<248x128xf32>
    %101 = arith.addf %98, %100 : vector<248x128xf32>
    %cst_56 = arith.constant 0.000000e+00 : f32
    %102 = vector.broadcast %cst_56 : f32 to vector<248x128xf32>
    %103 = arith.cmpf ogt, %101, %102 : vector<248x128xf32>
    %cst_57 = arith.constant 0.000000e+00 : f32
    %104 = vector.broadcast %cst_57 : f32 to vector<248x128xf32>
    %105 = arith.minimumf %101, %104 : vector<248x128xf32>
    %106 = math.exp %105 : vector<248x128xf32>
    %cst_58 = arith.constant 1.000000e+00 : f32
    %107 = vector.broadcast %cst_58 : f32 to vector<248x128xf32>
    %108 = arith.subf %106, %107 : vector<248x128xf32>
    %109 = arith.select %103, %101, %108 : vector<248x128xi1>, vector<248x128xf32>
    %110 = vector.extract_strided_slice %109 {offsets = [0, 0], sizes = [8, 128], strides = [1, 1]} : vector<248x128xf32> to vector<8x128xf32>
    %cst_59 = arith.constant dense<0xFF800000> : vector<128xf32>
    %111 = vector.multi_reduction <maximumf>, %110, %cst_59 [0] : vector<8x128xf32> to vector<128xf32>
    %112 = vector.shape_cast %111 : vector<128xf32> to vector<1x128xf32>
    %113 = vector.extract_strided_slice %109 {offsets = [14, 0], sizes = [8, 128], strides = [1, 1]} : vector<248x128xf32> to vector<8x128xf32>
    %cst_60 = arith.constant dense<0xFF800000> : vector<128xf32>
    %114 = vector.multi_reduction <maximumf>, %113, %cst_60 [0] : vector<8x128xf32> to vector<128xf32>
    %115 = vector.shape_cast %114 : vector<128xf32> to vector<1x128xf32>
    %116 = vector.extract_strided_slice %109 {offsets = [28, 0], sizes = [8, 128], strides = [1, 1]} : vector<248x128xf32> to vector<8x128xf32>
    %cst_61 = arith.constant dense<0xFF800000> : vector<128xf32>
    %117 = vector.multi_reduction <maximumf>, %116, %cst_61 [0] : vector<8x128xf32> to vector<128xf32>
    %118 = vector.shape_cast %117 : vector<128xf32> to vector<1x128xf32>
    %119 = vector.extract_strided_slice %109 {offsets = [42, 0], sizes = [8, 128], strides = [1, 1]} : vector<248x128xf32> to vector<8x128xf32>
    %cst_62 = arith.constant dense<0xFF800000> : vector<128xf32>
    %120 = vector.multi_reduction <maximumf>, %119, %cst_62 [0] : vector<8x128xf32> to vector<128xf32>
    %121 = vector.shape_cast %120 : vector<128xf32> to vector<1x128xf32>
    %122 = vector.extract_strided_slice %109 {offsets = [56, 0], sizes = [8, 128], strides = [1, 1]} : vector<248x128xf32> to vector<8x128xf32>
    %cst_63 = arith.constant dense<0xFF800000> : vector<128xf32>
    %123 = vector.multi_reduction <maximumf>, %122, %cst_63 [0] : vector<8x128xf32> to vector<128xf32>
    %124 = vector.shape_cast %123 : vector<128xf32> to vector<1x128xf32>
    %125 = vector.extract_strided_slice %109 {offsets = [70, 0], sizes = [8, 128], strides = [1, 1]} : vector<248x128xf32> to vector<8x128xf32>
    %cst_64 = arith.constant dense<0xFF800000> : vector<128xf32>
    %126 = vector.multi_reduction <maximumf>, %125, %cst_64 [0] : vector<8x128xf32> to vector<128xf32>
    %127 = vector.shape_cast %126 : vector<128xf32> to vector<1x128xf32>
    %128 = vector.extract_strided_slice %109 {offsets = [84, 0], sizes = [8, 128], strides = [1, 1]} : vector<248x128xf32> to vector<8x128xf32>
    %cst_65 = arith.constant dense<0xFF800000> : vector<128xf32>
    %129 = vector.multi_reduction <maximumf>, %128, %cst_65 [0] : vector<8x128xf32> to vector<128xf32>
    %130 = vector.shape_cast %129 : vector<128xf32> to vector<1x128xf32>
    %131 = vector.extract_strided_slice %109 {offsets = [98, 0], sizes = [8, 128], strides = [1, 1]} : vector<248x128xf32> to vector<8x128xf32>
    %cst_66 = arith.constant dense<0xFF800000> : vector<128xf32>
    %132 = vector.multi_reduction <maximumf>, %131, %cst_66 [0] : vector<8x128xf32> to vector<128xf32>
    %133 = vector.shape_cast %132 : vector<128xf32> to vector<1x128xf32>
    %134 = vector.extract_strided_slice %109 {offsets = [112, 0], sizes = [8, 128], strides = [1, 1]} : vector<248x128xf32> to vector<8x128xf32>
    %cst_67 = arith.constant dense<0xFF800000> : vector<128xf32>
    %135 = vector.multi_reduction <maximumf>, %134, %cst_67 [0] : vector<8x128xf32> to vector<128xf32>
    %136 = vector.shape_cast %135 : vector<128xf32> to vector<1x128xf32>
    %137 = vector.extract_strided_slice %109 {offsets = [126, 0], sizes = [8, 128], strides = [1, 1]} : vector<248x128xf32> to vector<8x128xf32>
    %cst_68 = arith.constant dense<0xFF800000> : vector<128xf32>
    %138 = vector.multi_reduction <maximumf>, %137, %cst_68 [0] : vector<8x128xf32> to vector<128xf32>
    %139 = vector.shape_cast %138 : vector<128xf32> to vector<1x128xf32>
    %140 = vector.extract_strided_slice %109 {offsets = [140, 0], sizes = [8, 128], strides = [1, 1]} : vector<248x128xf32> to vector<8x128xf32>
    %cst_69 = arith.constant dense<0xFF800000> : vector<128xf32>
    %141 = vector.multi_reduction <maximumf>, %140, %cst_69 [0] : vector<8x128xf32> to vector<128xf32>
    %142 = vector.shape_cast %141 : vector<128xf32> to vector<1x128xf32>
    %143 = vector.extract_strided_slice %109 {offsets = [154, 0], sizes = [8, 128], strides = [1, 1]} : vector<248x128xf32> to vector<8x128xf32>
    %cst_70 = arith.constant dense<0xFF800000> : vector<128xf32>
    %144 = vector.multi_reduction <maximumf>, %143, %cst_70 [0] : vector<8x128xf32> to vector<128xf32>
    %145 = vector.shape_cast %144 : vector<128xf32> to vector<1x128xf32>
    %146 = vector.extract_strided_slice %109 {offsets = [168, 0], sizes = [8, 128], strides = [1, 1]} : vector<248x128xf32> to vector<8x128xf32>
    %cst_71 = arith.constant dense<0xFF800000> : vector<128xf32>
    %147 = vector.multi_reduction <maximumf>, %146, %cst_71 [0] : vector<8x128xf32> to vector<128xf32>
    %148 = vector.shape_cast %147 : vector<128xf32> to vector<1x128xf32>
    %149 = vector.extract_strided_slice %109 {offsets = [182, 0], sizes = [8, 128], strides = [1, 1]} : vector<248x128xf32> to vector<8x128xf32>
    %cst_72 = arith.constant dense<0xFF800000> : vector<128xf32>
    %150 = vector.multi_reduction <maximumf>, %149, %cst_72 [0] : vector<8x128xf32> to vector<128xf32>
    %151 = vector.shape_cast %150 : vector<128xf32> to vector<1x128xf32>
    %152 = vector.extract_strided_slice %109 {offsets = [196, 0], sizes = [8, 128], strides = [1, 1]} : vector<248x128xf32> to vector<8x128xf32>
    %cst_73 = arith.constant dense<0xFF800000> : vector<128xf32>
    %153 = vector.multi_reduction <maximumf>, %152, %cst_73 [0] : vector<8x128xf32> to vector<128xf32>
    %154 = vector.shape_cast %153 : vector<128xf32> to vector<1x128xf32>
    %155 = vector.extract_strided_slice %109 {offsets = [210, 0], sizes = [8, 128], strides = [1, 1]} : vector<248x128xf32> to vector<8x128xf32>
    %cst_74 = arith.constant dense<0xFF800000> : vector<128xf32>
    %156 = vector.multi_reduction <maximumf>, %155, %cst_74 [0] : vector<8x128xf32> to vector<128xf32>
    %157 = vector.shape_cast %156 : vector<128xf32> to vector<1x128xf32>
    %158 = vector.extract_strided_slice %109 {offsets = [224, 0], sizes = [8, 128], strides = [1, 1]} : vector<248x128xf32> to vector<8x128xf32>
    %cst_75 = arith.constant dense<0xFF800000> : vector<128xf32>
    %159 = vector.multi_reduction <maximumf>, %158, %cst_75 [0] : vector<8x128xf32> to vector<128xf32>
    %160 = vector.shape_cast %159 : vector<128xf32> to vector<1x128xf32>
    %161 = vector.extract_strided_slice %109 {offsets = [238, 0], sizes = [8, 128], strides = [1, 1]} : vector<248x128xf32> to vector<8x128xf32>
    %cst_76 = arith.constant dense<0xFF800000> : vector<128xf32>
    %162 = vector.multi_reduction <maximumf>, %161, %cst_76 [0] : vector<8x128xf32> to vector<128xf32>
    %163 = vector.shape_cast %162 : vector<128xf32> to vector<1x128xf32>
    %164 = tpu.concatenate %112, %115, %118, %121, %124, %127, %130, %133, %136, %139, %142, %145, %148, %151, %154, %157 in 0 : vector<1x128xf32>, vector<1x128xf32>, vector<1x128xf32>, vector<1x128xf32>, vector<1x128xf32>, vector<1x128xf32>, vector<1x128xf32>, vector<1x128xf32>, vector<1x128xf32>, vector<1x128xf32>, vector<1x128xf32>, vector<1x128xf32>, vector<1x128xf32>, vector<1x128xf32>, vector<1x128xf32>, vector<1x128xf32> -> vector<16x128xf32>
    %165 = tpu.concatenate %160, %163 in 0 : vector<1x128xf32>, vector<1x128xf32> -> vector<2x128xf32>
    %166 = tpu.concatenate %164, %165 in 0 : vector<16x128xf32>, vector<2x128xf32> -> vector<18x128xf32>
    %167 = arith.truncf %166 : vector<18x128xf32> to vector<18x128xbf16>
    %c0_77 = arith.constant 0 : index
    %c0_78 = arith.constant 0 : index
    %168 = vector.load %arg8[%c0_77, %c0_78] : memref<128x384xbf16, #tpu.memory_space<vmem>>, vector<128x384xbf16>
    %cst_79 = arith.constant dense<0.000000e+00> : vector<18x384xf32>
    %169 = tpu.matmul %167, %168, %cst_79 {dimension_numbers = #tpu.dot_dimension_numbers<[1], [0], [0], [1], [0, 0, 1, 1], [], []>} : vector<18x128xbf16>, vector<128x384xbf16>, vector<18x384xf32> -> vector<18x384xf32>
    %c0_80 = arith.constant 0 : index
    %c0_81 = arith.constant 0 : index
    %170 = vector.load %arg9[%c0_80, %c0_81] : memref<1x384xf32, #tpu.memory_space<vmem>>, vector<1x384xf32>
    %171 = vector.broadcast %170 : vector<1x384xf32> to vector<18x384xf32>
    %172 = arith.addf %169, %171 : vector<18x384xf32>
    %173 = vector.extract_strided_slice %172 {offsets = [0, 0], sizes = [18, 128], strides = [1, 1]} : vector<18x384xf32> to vector<18x128xf32>
    %174 = vector.extract_strided_slice %173 {offsets = [0, 0], sizes = [18, 16], strides = [1, 1]} : vector<18x128xf32> to vector<18x16xf32>
    %175 = vector.extract_strided_slice %173 {offsets = [0, 16], sizes = [18, 16], strides = [1, 1]} : vector<18x128xf32> to vector<18x16xf32>
    %176 = vector.extract_strided_slice %173 {offsets = [0, 32], sizes = [18, 16], strides = [1, 1]} : vector<18x128xf32> to vector<18x16xf32>
    %177 = vector.extract_strided_slice %173 {offsets = [0, 48], sizes = [18, 16], strides = [1, 1]} : vector<18x128xf32> to vector<18x16xf32>
    %178 = vector.extract_strided_slice %173 {offsets = [0, 64], sizes = [18, 16], strides = [1, 1]} : vector<18x128xf32> to vector<18x16xf32>
    %179 = vector.extract_strided_slice %173 {offsets = [0, 80], sizes = [18, 16], strides = [1, 1]} : vector<18x128xf32> to vector<18x16xf32>
    %180 = vector.extract_strided_slice %173 {offsets = [0, 96], sizes = [18, 16], strides = [1, 1]} : vector<18x128xf32> to vector<18x16xf32>
    %181 = vector.extract_strided_slice %173 {offsets = [0, 112], sizes = [18, 16], strides = [1, 1]} : vector<18x128xf32> to vector<18x16xf32>
    %182 = tpu.concatenate %174, %175, %176, %177, %178, %179, %180, %181 in 0 : vector<18x16xf32>, vector<18x16xf32>, vector<18x16xf32>, vector<18x16xf32>, vector<18x16xf32>, vector<18x16xf32>, vector<18x16xf32>, vector<18x16xf32> -> vector<144x16xf32>
    %cst_82 = arith.constant 2.500000e-01 : f32
    %183 = vector.broadcast %cst_82 : f32 to vector<144x16xf32>
    %184 = arith.mulf %182, %183 : vector<144x16xf32>
    %185 = vector.extract_strided_slice %172 {offsets = [0, 128], sizes = [18, 128], strides = [1, 1]} : vector<18x384xf32> to vector<18x128xf32>
    %186 = vector.extract_strided_slice %185 {offsets = [0, 0], sizes = [18, 16], strides = [1, 1]} : vector<18x128xf32> to vector<18x16xf32>
    %187 = vector.extract_strided_slice %185 {offsets = [0, 16], sizes = [18, 16], strides = [1, 1]} : vector<18x128xf32> to vector<18x16xf32>
    %188 = vector.extract_strided_slice %185 {offsets = [0, 32], sizes = [18, 16], strides = [1, 1]} : vector<18x128xf32> to vector<18x16xf32>
    %189 = vector.extract_strided_slice %185 {offsets = [0, 48], sizes = [18, 16], strides = [1, 1]} : vector<18x128xf32> to vector<18x16xf32>
    %190 = vector.extract_strided_slice %185 {offsets = [0, 64], sizes = [18, 16], strides = [1, 1]} : vector<18x128xf32> to vector<18x16xf32>
    %191 = vector.extract_strided_slice %185 {offsets = [0, 80], sizes = [18, 16], strides = [1, 1]} : vector<18x128xf32> to vector<18x16xf32>
    %192 = vector.extract_strided_slice %185 {offsets = [0, 96], sizes = [18, 16], strides = [1, 1]} : vector<18x128xf32> to vector<18x16xf32>
    %193 = vector.extract_strided_slice %185 {offsets = [0, 112], sizes = [18, 16], strides = [1, 1]} : vector<18x128xf32> to vector<18x16xf32>
    %194 = tpu.concatenate %186, %187, %188, %189, %190, %191, %192, %193 in 0 : vector<18x16xf32>, vector<18x16xf32>, vector<18x16xf32>, vector<18x16xf32>, vector<18x16xf32>, vector<18x16xf32>, vector<18x16xf32>, vector<18x16xf32> -> vector<144x16xf32>
    %195 = vector.extract_strided_slice %172 {offsets = [0, 256], sizes = [18, 128], strides = [1, 1]} : vector<18x384xf32> to vector<18x128xf32>
    %196 = vector.extract_strided_slice %195 {offsets = [0, 0], sizes = [18, 16], strides = [1, 1]} : vector<18x128xf32> to vector<18x16xf32>
    %197 = vector.extract_strided_slice %195 {offsets = [0, 16], sizes = [18, 16], strides = [1, 1]} : vector<18x128xf32> to vector<18x16xf32>
    %198 = vector.extract_strided_slice %195 {offsets = [0, 32], sizes = [18, 16], strides = [1, 1]} : vector<18x128xf32> to vector<18x16xf32>
    %199 = vector.extract_strided_slice %195 {offsets = [0, 48], sizes = [18, 16], strides = [1, 1]} : vector<18x128xf32> to vector<18x16xf32>
    %200 = vector.extract_strided_slice %195 {offsets = [0, 64], sizes = [18, 16], strides = [1, 1]} : vector<18x128xf32> to vector<18x16xf32>
    %201 = vector.extract_strided_slice %195 {offsets = [0, 80], sizes = [18, 16], strides = [1, 1]} : vector<18x128xf32> to vector<18x16xf32>
    %202 = vector.extract_strided_slice %195 {offsets = [0, 96], sizes = [18, 16], strides = [1, 1]} : vector<18x128xf32> to vector<18x16xf32>
    %203 = vector.extract_strided_slice %195 {offsets = [0, 112], sizes = [18, 16], strides = [1, 1]} : vector<18x128xf32> to vector<18x16xf32>
    %204 = tpu.concatenate %196, %197, %198, %199, %200, %201, %202, %203 in 0 : vector<18x16xf32>, vector<18x16xf32>, vector<18x16xf32>, vector<18x16xf32>, vector<18x16xf32>, vector<18x16xf32>, vector<18x16xf32>, vector<18x16xf32> -> vector<144x16xf32>
    %205 = arith.truncf %184 : vector<144x16xf32> to vector<144x16xbf16>
    %206 = arith.truncf %194 : vector<144x16xf32> to vector<144x16xbf16>
    %cst_83 = arith.constant dense<0.000000e+00> : vector<144x144xf32>
    %207 = tpu.matmul %205, %206, %cst_83 {dimension_numbers = #tpu.dot_dimension_numbers<[1], [1], [0], [0], [0, 0, 1, 0], [], []>} : vector<144x16xbf16>, vector<144x16xbf16>, vector<144x144xf32> -> vector<144x144xf32>
    %c0_84 = arith.constant 0 : index
    %c0_85 = arith.constant 0 : index
    %208 = vector.load %arg10[%c0_84, %c0_85] : memref<144x144xf32, #tpu.memory_space<vmem>>, vector<144x144xf32>
    %209 = arith.addf %207, %208 : vector<144x144xf32>
    %cst_86 = arith.constant dense<0xFF800000> : vector<144xf32>
    %210 = vector.multi_reduction <maximumf>, %209, %cst_86 [1] : vector<144x144xf32> to vector<144xf32>
    %211 = vector.shape_cast %210 : vector<144xf32> to vector<144x1xf32>
    %212 = vector.broadcast %211 : vector<144x1xf32> to vector<144x144xf32>
    %213 = arith.subf %209, %212 : vector<144x144xf32>
    %214 = math.exp %213 : vector<144x144xf32>
    %cst_87 = arith.constant dense<0.000000e+00> : vector<144xf32>
    %215 = vector.multi_reduction <add>, %214, %cst_87 [1] : vector<144x144xf32> to vector<144xf32>
    %216 = vector.shape_cast %215 : vector<144xf32> to vector<144x1xf32>
    %217 = vector.broadcast %216 : vector<144x1xf32> to vector<144x144xf32>
    %218 = arith.divf %214, %217 : vector<144x144xf32>
    %219 = arith.truncf %218 : vector<144x144xf32> to vector<144x144xbf16>
    %220 = arith.truncf %204 : vector<144x16xf32> to vector<144x16xbf16>
    %cst_88 = arith.constant dense<0.000000e+00> : vector<144x16xf32>
    %221 = tpu.matmul %219, %220, %cst_88 {dimension_numbers = #tpu.dot_dimension_numbers<[1], [0], [0], [1], [0, 0, 1, 1], [], []>} : vector<144x144xbf16>, vector<144x16xbf16>, vector<144x16xf32> -> vector<144x16xf32>
    %222 = vector.extract_strided_slice %221 {offsets = [0, 0], sizes = [18, 16], strides = [1, 1]} : vector<144x16xf32> to vector<18x16xf32>
    %223 = vector.extract_strided_slice %221 {offsets = [18, 0], sizes = [18, 16], strides = [1, 1]} : vector<144x16xf32> to vector<18x16xf32>
    %224 = vector.extract_strided_slice %221 {offsets = [36, 0], sizes = [18, 16], strides = [1, 1]} : vector<144x16xf32> to vector<18x16xf32>
    %225 = vector.extract_strided_slice %221 {offsets = [54, 0], sizes = [18, 16], strides = [1, 1]} : vector<144x16xf32> to vector<18x16xf32>
    %226 = vector.extract_strided_slice %221 {offsets = [72, 0], sizes = [18, 16], strides = [1, 1]} : vector<144x16xf32> to vector<18x16xf32>
    %227 = vector.extract_strided_slice %221 {offsets = [90, 0], sizes = [18, 16], strides = [1, 1]} : vector<144x16xf32> to vector<18x16xf32>
    %228 = vector.extract_strided_slice %221 {offsets = [108, 0], sizes = [18, 16], strides = [1, 1]} : vector<144x16xf32> to vector<18x16xf32>
    %229 = vector.extract_strided_slice %221 {offsets = [126, 0], sizes = [18, 16], strides = [1, 1]} : vector<144x16xf32> to vector<18x16xf32>
    %230 = tpu.concatenate %222, %223, %224, %225, %226, %227, %228, %229 in 1 : vector<18x16xf32>, vector<18x16xf32>, vector<18x16xf32>, vector<18x16xf32>, vector<18x16xf32>, vector<18x16xf32>, vector<18x16xf32>, vector<18x16xf32> -> vector<18x128xf32>
    %231 = arith.truncf %230 : vector<18x128xf32> to vector<18x128xbf16>
    %c0_89 = arith.constant 0 : index
    %c0_90 = arith.constant 0 : index
    %232 = vector.load %arg11[%c0_89, %c0_90] : memref<128x128xbf16, #tpu.memory_space<vmem>>, vector<128x128xbf16>
    %cst_91 = arith.constant dense<0.000000e+00> : vector<18x128xf32>
    %233 = tpu.matmul %231, %232, %cst_91 {dimension_numbers = #tpu.dot_dimension_numbers<[1], [0], [0], [1], [0, 0, 1, 1], [], []>} : vector<18x128xbf16>, vector<128x128xbf16>, vector<18x128xf32> -> vector<18x128xf32>
    %c0_92 = arith.constant 0 : index
    %c0_93 = arith.constant 0 : index
    %234 = vector.load %arg12[%c0_92, %c0_93] : memref<1x128xf32, #tpu.memory_space<vmem>>, vector<1x128xf32>
    %235 = vector.broadcast %234 : vector<1x128xf32> to vector<18x128xf32>
    %236 = arith.addf %233, %235 : vector<18x128xf32>
    %237 = vector.extract_strided_slice %236 {offsets = [0, 0], sizes = [1, 128], strides = [1, 1]} : vector<18x128xf32> to vector<1x128xf32>
    %238 = vector.extract_strided_slice %236 {offsets = [1, 0], sizes = [1, 128], strides = [1, 1]} : vector<18x128xf32> to vector<1x128xf32>
    %239 = vector.extract_strided_slice %236 {offsets = [2, 0], sizes = [1, 128], strides = [1, 1]} : vector<18x128xf32> to vector<1x128xf32>
    %240 = vector.extract_strided_slice %236 {offsets = [3, 0], sizes = [1, 128], strides = [1, 1]} : vector<18x128xf32> to vector<1x128xf32>
    %241 = vector.extract_strided_slice %236 {offsets = [4, 0], sizes = [1, 128], strides = [1, 1]} : vector<18x128xf32> to vector<1x128xf32>
    %242 = vector.extract_strided_slice %236 {offsets = [5, 0], sizes = [1, 128], strides = [1, 1]} : vector<18x128xf32> to vector<1x128xf32>
    %243 = vector.extract_strided_slice %236 {offsets = [6, 0], sizes = [1, 128], strides = [1, 1]} : vector<18x128xf32> to vector<1x128xf32>
    %244 = vector.extract_strided_slice %236 {offsets = [7, 0], sizes = [1, 128], strides = [1, 1]} : vector<18x128xf32> to vector<1x128xf32>
    %245 = vector.extract_strided_slice %236 {offsets = [8, 0], sizes = [1, 128], strides = [1, 1]} : vector<18x128xf32> to vector<1x128xf32>
    %246 = vector.extract_strided_slice %236 {offsets = [9, 0], sizes = [1, 128], strides = [1, 1]} : vector<18x128xf32> to vector<1x128xf32>
    %247 = vector.extract_strided_slice %236 {offsets = [10, 0], sizes = [1, 128], strides = [1, 1]} : vector<18x128xf32> to vector<1x128xf32>
    %248 = vector.extract_strided_slice %236 {offsets = [11, 0], sizes = [1, 128], strides = [1, 1]} : vector<18x128xf32> to vector<1x128xf32>
    %249 = vector.extract_strided_slice %236 {offsets = [12, 0], sizes = [1, 128], strides = [1, 1]} : vector<18x128xf32> to vector<1x128xf32>
    %250 = vector.extract_strided_slice %236 {offsets = [13, 0], sizes = [1, 128], strides = [1, 1]} : vector<18x128xf32> to vector<1x128xf32>
    %251 = vector.extract_strided_slice %236 {offsets = [14, 0], sizes = [1, 128], strides = [1, 1]} : vector<18x128xf32> to vector<1x128xf32>
    %252 = vector.extract_strided_slice %236 {offsets = [15, 0], sizes = [1, 128], strides = [1, 1]} : vector<18x128xf32> to vector<1x128xf32>
    %253 = vector.extract_strided_slice %236 {offsets = [16, 0], sizes = [1, 128], strides = [1, 1]} : vector<18x128xf32> to vector<1x128xf32>
    %254 = vector.extract_strided_slice %236 {offsets = [17, 0], sizes = [1, 128], strides = [1, 1]} : vector<18x128xf32> to vector<1x128xf32>
    %255 = tpu.concatenate %237, %238, %239, %240, %241, %242, %243, %244, %245, %246, %247, %248, %249, %250, %251, %252 in 1 : vector<1x128xf32>, vector<1x128xf32>, vector<1x128xf32>, vector<1x128xf32>, vector<1x128xf32>, vector<1x128xf32>, vector<1x128xf32>, vector<1x128xf32>, vector<1x128xf32>, vector<1x128xf32>, vector<1x128xf32>, vector<1x128xf32>, vector<1x128xf32>, vector<1x128xf32>, vector<1x128xf32>, vector<1x128xf32> -> vector<1x2048xf32>
    %256 = tpu.concatenate %253, %254 in 1 : vector<1x128xf32>, vector<1x128xf32> -> vector<1x256xf32>
    %257 = tpu.concatenate %255, %256 in 1 : vector<1x2048xf32>, vector<1x256xf32> -> vector<1x2304xf32>
    %258 = arith.truncf %257 : vector<1x2304xf32> to vector<1x2304xbf16>
    %c0_94 = arith.constant 0 : index
    %c0_95 = arith.constant 0 : index
    %259 = vector.load %arg13[%c0_94, %c0_95] : memref<2304x256xbf16, #tpu.memory_space<vmem>>, vector<2304x256xbf16>
    %cst_96 = arith.constant dense<0.000000e+00> : vector<1x256xf32>
    %260 = tpu.matmul %258, %259, %cst_96 {dimension_numbers = #tpu.dot_dimension_numbers<[1], [0], [0], [1], [0, 0, 1, 1], [], []>} : vector<1x2304xbf16>, vector<2304x256xbf16>, vector<1x256xf32> -> vector<1x256xf32>
    %c0_97 = arith.constant 0 : index
    %c0_98 = arith.constant 0 : index
    %261 = vector.load %arg14[%c0_97, %c0_98] : memref<1x256xf32, #tpu.memory_space<vmem>>, vector<1x256xf32>
    %262 = arith.addf %260, %261 : vector<1x256xf32>
    %cst_99 = arith.constant 0.000000e+00 : f32
    %263 = vector.broadcast %cst_99 : f32 to vector<1x256xf32>
    %264 = arith.cmpf ogt, %262, %263 : vector<1x256xf32>
    %cst_100 = arith.constant 0.000000e+00 : f32
    %265 = vector.broadcast %cst_100 : f32 to vector<1x256xf32>
    %266 = arith.minimumf %262, %265 : vector<1x256xf32>
    %267 = math.exp %266 : vector<1x256xf32>
    %cst_101 = arith.constant 1.000000e+00 : f32
    %268 = vector.broadcast %cst_101 : f32 to vector<1x256xf32>
    %269 = arith.subf %267, %268 : vector<1x256xf32>
    %270 = arith.select %264, %262, %269 : vector<1x256xi1>, vector<1x256xf32>
    %271 = arith.truncf %270 : vector<1x256xf32> to vector<1x256xbf16>
    %c0_102 = arith.constant 0 : index
    %c0_103 = arith.constant 0 : index
    %272 = vector.load %arg15[%c0_102, %c0_103] : memref<256x256xbf16, #tpu.memory_space<vmem>>, vector<256x256xbf16>
    %cst_104 = arith.constant dense<0.000000e+00> : vector<1x256xf32>
    %273 = tpu.matmul %271, %272, %cst_104 {dimension_numbers = #tpu.dot_dimension_numbers<[1], [0], [0], [1], [0, 0, 1, 1], [], []>} : vector<1x256xbf16>, vector<256x256xbf16>, vector<1x256xf32> -> vector<1x256xf32>
    %c0_105 = arith.constant 0 : index
    %c0_106 = arith.constant 0 : index
    %274 = vector.load %arg16[%c0_105, %c0_106] : memref<1x256xf32, #tpu.memory_space<vmem>>, vector<1x256xf32>
    %275 = arith.addf %273, %274 : vector<1x256xf32>
    %cst_107 = arith.constant 0.000000e+00 : f32
    %276 = vector.broadcast %cst_107 : f32 to vector<1x256xf32>
    %277 = arith.cmpf ogt, %275, %276 : vector<1x256xf32>
    %cst_108 = arith.constant 0.000000e+00 : f32
    %278 = vector.broadcast %cst_108 : f32 to vector<1x256xf32>
    %279 = arith.minimumf %275, %278 : vector<1x256xf32>
    %280 = math.exp %279 : vector<1x256xf32>
    %cst_109 = arith.constant 1.000000e+00 : f32
    %281 = vector.broadcast %cst_109 : f32 to vector<1x256xf32>
    %282 = arith.subf %280, %281 : vector<1x256xf32>
    %283 = arith.select %277, %275, %282 : vector<1x256xi1>, vector<1x256xf32>
    %284 = arith.truncf %283 : vector<1x256xf32> to vector<1x256xbf16>
    %c0_110 = arith.constant 0 : index
    %c0_111 = arith.constant 0 : index
    %285 = vector.load %arg17[%c0_110, %c0_111] : memref<256x256xbf16, #tpu.memory_space<vmem>>, vector<256x256xbf16>
    %cst_112 = arith.constant dense<0.000000e+00> : vector<1x256xf32>
    %286 = tpu.matmul %284, %285, %cst_112 {dimension_numbers = #tpu.dot_dimension_numbers<[1], [0], [0], [1], [0, 0, 1, 1], [], []>} : vector<1x256xbf16>, vector<256x256xbf16>, vector<1x256xf32> -> vector<1x256xf32>
    %c0_113 = arith.constant 0 : index
    %c0_114 = arith.constant 0 : index
    %287 = vector.load %arg18[%c0_113, %c0_114] : memref<1x256xf32, #tpu.memory_space<vmem>>, vector<1x256xf32>
    %288 = arith.addf %286, %287 : vector<1x256xf32>
    %289 = arith.addf %288, %270 : vector<1x256xf32>
    %cst_115 = arith.constant 0.000000e+00 : f32
    %290 = vector.broadcast %cst_115 : f32 to vector<1x256xf32>
    %291 = arith.cmpf ogt, %289, %290 : vector<1x256xf32>
    %cst_116 = arith.constant 0.000000e+00 : f32
    %292 = vector.broadcast %cst_116 : f32 to vector<1x256xf32>
    %293 = arith.minimumf %289, %292 : vector<1x256xf32>
    %294 = math.exp %293 : vector<1x256xf32>
    %cst_117 = arith.constant 1.000000e+00 : f32
    %295 = vector.broadcast %cst_117 : f32 to vector<1x256xf32>
    %296 = arith.subf %294, %295 : vector<1x256xf32>
    %297 = arith.select %291, %289, %296 : vector<1x256xi1>, vector<1x256xf32>
    %298 = arith.truncf %297 : vector<1x256xf32> to vector<1x256xbf16>
    %c0_118 = arith.constant 0 : index
    %c0_119 = arith.constant 0 : index
    %299 = vector.load %arg19[%c0_118, %c0_119] : memref<256x256xbf16, #tpu.memory_space<vmem>>, vector<256x256xbf16>
    %cst_120 = arith.constant dense<0.000000e+00> : vector<1x256xf32>
    %300 = tpu.matmul %298, %299, %cst_120 {dimension_numbers = #tpu.dot_dimension_numbers<[1], [0], [0], [1], [0, 0, 1, 1], [], []>} : vector<1x256xbf16>, vector<256x256xbf16>, vector<1x256xf32> -> vector<1x256xf32>
    %c0_121 = arith.constant 0 : index
    %c0_122 = arith.constant 0 : index
    %301 = vector.load %arg20[%c0_121, %c0_122] : memref<1x256xf32, #tpu.memory_space<vmem>>, vector<1x256xf32>
    %302 = arith.addf %300, %301 : vector<1x256xf32>
    %cst_123 = arith.constant 0.000000e+00 : f32
    %303 = vector.broadcast %cst_123 : f32 to vector<1x256xf32>
    %304 = arith.cmpf ogt, %302, %303 : vector<1x256xf32>
    %cst_124 = arith.constant 0.000000e+00 : f32
    %305 = vector.broadcast %cst_124 : f32 to vector<1x256xf32>
    %306 = arith.minimumf %302, %305 : vector<1x256xf32>
    %307 = math.exp %306 : vector<1x256xf32>
    %cst_125 = arith.constant 1.000000e+00 : f32
    %308 = vector.broadcast %cst_125 : f32 to vector<1x256xf32>
    %309 = arith.subf %307, %308 : vector<1x256xf32>
    %310 = arith.select %304, %302, %309 : vector<1x256xi1>, vector<1x256xf32>
    %311 = arith.truncf %310 : vector<1x256xf32> to vector<1x256xbf16>
    %c0_126 = arith.constant 0 : index
    %c0_127 = arith.constant 0 : index
    %312 = vector.load %arg21[%c0_126, %c0_127] : memref<256x256xbf16, #tpu.memory_space<vmem>>, vector<256x256xbf16>
    %cst_128 = arith.constant dense<0.000000e+00> : vector<1x256xf32>
    %313 = tpu.matmul %311, %312, %cst_128 {dimension_numbers = #tpu.dot_dimension_numbers<[1], [0], [0], [1], [0, 0, 1, 1], [], []>} : vector<1x256xbf16>, vector<256x256xbf16>, vector<1x256xf32> -> vector<1x256xf32>
    %c0_129 = arith.constant 0 : index
    %c0_130 = arith.constant 0 : index
    %314 = vector.load %arg22[%c0_129, %c0_130] : memref<1x256xf32, #tpu.memory_space<vmem>>, vector<1x256xf32>
    %315 = arith.addf %313, %314 : vector<1x256xf32>
    %316 = arith.addf %315, %297 : vector<1x256xf32>
    %cst_131 = arith.constant 0.000000e+00 : f32
    %317 = vector.broadcast %cst_131 : f32 to vector<1x256xf32>
    %318 = arith.cmpf ogt, %316, %317 : vector<1x256xf32>
    %cst_132 = arith.constant 0.000000e+00 : f32
    %319 = vector.broadcast %cst_132 : f32 to vector<1x256xf32>
    %320 = arith.minimumf %316, %319 : vector<1x256xf32>
    %321 = math.exp %320 : vector<1x256xf32>
    %cst_133 = arith.constant 1.000000e+00 : f32
    %322 = vector.broadcast %cst_133 : f32 to vector<1x256xf32>
    %323 = arith.subf %321, %322 : vector<1x256xf32>
    %324 = arith.select %318, %316, %323 : vector<1x256xi1>, vector<1x256xf32>
    %325 = arith.truncf %324 : vector<1x256xf32> to vector<1x256xbf16>
    %c0_134 = arith.constant 0 : index
    %c0_135 = arith.constant 0 : index
    %326 = vector.load %arg27[%c0_134, %c0_135] : memref<256x128xbf16, #tpu.memory_space<vmem>>, vector<256x128xbf16>
    %cst_136 = arith.constant dense<0.000000e+00> : vector<1x128xf32>
    %327 = tpu.matmul %325, %326, %cst_136 {dimension_numbers = #tpu.dot_dimension_numbers<[1], [0], [0], [1], [0, 0, 1, 1], [], []>} : vector<1x256xbf16>, vector<256x128xbf16>, vector<1x128xf32> -> vector<1x128xf32>
    %c0_137 = arith.constant 0 : index
    %c0_138 = arith.constant 0 : index
    %328 = vector.load %arg28[%c0_137, %c0_138] : memref<1x128xf32, #tpu.memory_space<vmem>>, vector<1x128xf32>
    %329 = arith.addf %327, %328 : vector<1x128xf32>
    %330 = arith.truncf %324 : vector<1x256xf32> to vector<1x256xbf16>
    %c0_139 = arith.constant 0 : index
    %c0_140 = arith.constant 0 : index
    %331 = vector.load %arg23[%c0_139, %c0_140] : memref<256x128xbf16, #tpu.memory_space<vmem>>, vector<256x128xbf16>
    %cst_141 = arith.constant dense<0.000000e+00> : vector<1x128xf32>
    %332 = tpu.matmul %330, %331, %cst_141 {dimension_numbers = #tpu.dot_dimension_numbers<[1], [0], [0], [1], [0, 0, 1, 1], [], []>} : vector<1x256xbf16>, vector<256x128xbf16>, vector<1x128xf32> -> vector<1x128xf32>
    %c0_142 = arith.constant 0 : index
    %c0_143 = arith.constant 0 : index
    %333 = vector.load %arg24[%c0_142, %c0_143] : memref<1x128xf32, #tpu.memory_space<vmem>>, vector<1x128xf32>
    %334 = arith.addf %332, %333 : vector<1x128xf32>
    %cst_144 = arith.constant 0.000000e+00 : f32
    %335 = vector.broadcast %cst_144 : f32 to vector<1x128xf32>
    %336 = arith.cmpf ogt, %334, %335 : vector<1x128xf32>
    %cst_145 = arith.constant 0.000000e+00 : f32
    %337 = vector.broadcast %cst_145 : f32 to vector<1x128xf32>
    %338 = arith.minimumf %334, %337 : vector<1x128xf32>
    %339 = math.exp %338 : vector<1x128xf32>
    %cst_146 = arith.constant 1.000000e+00 : f32
    %340 = vector.broadcast %cst_146 : f32 to vector<1x128xf32>
    %341 = arith.subf %339, %340 : vector<1x128xf32>
    %342 = arith.select %336, %334, %341 : vector<1x128xi1>, vector<1x128xf32>
    %343 = arith.truncf %342 : vector<1x128xf32> to vector<1x128xbf16>
    %c0_147 = arith.constant 0 : index
    %c0_148 = arith.constant 0 : index
    %344 = vector.load %arg25[%c0_147, %c0_148] : memref<128x128xbf16, #tpu.memory_space<vmem>>, vector<128x128xbf16>
    %cst_149 = arith.constant dense<0.000000e+00> : vector<1x128xf32>
    %345 = tpu.matmul %343, %344, %cst_149 {dimension_numbers = #tpu.dot_dimension_numbers<[1], [0], [0], [1], [0, 0, 1, 1], [], []>} : vector<1x128xbf16>, vector<128x128xbf16>, vector<1x128xf32> -> vector<1x128xf32>
    %c0_150 = arith.constant 0 : index
    %c0_151 = arith.constant 0 : index
    %346 = vector.load %arg26[%c0_150, %c0_151] : memref<1x128xf32, #tpu.memory_space<vmem>>, vector<1x128xf32>
    %347 = arith.addf %345, %346 : vector<1x128xf32>
    %348 = arith.addf %347, %329 : vector<1x128xf32>
    %cst_152 = arith.constant 0.000000e+00 : f32
    %349 = vector.broadcast %cst_152 : f32 to vector<1x128xf32>
    %350 = arith.cmpf ogt, %348, %349 : vector<1x128xf32>
    %cst_153 = arith.constant 0.000000e+00 : f32
    %351 = vector.broadcast %cst_153 : f32 to vector<1x128xf32>
    %352 = arith.minimumf %348, %351 : vector<1x128xf32>
    %353 = math.exp %352 : vector<1x128xf32>
    %cst_154 = arith.constant 1.000000e+00 : f32
    %354 = vector.broadcast %cst_154 : f32 to vector<1x128xf32>
    %355 = arith.subf %353, %354 : vector<1x128xf32>
    %356 = arith.select %350, %348, %355 : vector<1x128xi1>, vector<1x128xf32>
    %357 = arith.truncf %356 : vector<1x128xf32> to vector<1x128xbf16>
    %c0_155 = arith.constant 0 : index
    %c0_156 = arith.constant 0 : index
    %358 = vector.load %arg29[%c0_155, %c0_156] : memref<128x128xbf16, #tpu.memory_space<vmem>>, vector<128x128xbf16>
    %cst_157 = arith.constant dense<0.000000e+00> : vector<1x128xf32>
    %359 = tpu.matmul %357, %358, %cst_157 {dimension_numbers = #tpu.dot_dimension_numbers<[1], [0], [0], [1], [0, 0, 1, 1], [], []>} : vector<1x128xbf16>, vector<128x128xbf16>, vector<1x128xf32> -> vector<1x128xf32>
    %c0_158 = arith.constant 0 : index
    %c0_159 = arith.constant 0 : index
    %360 = vector.load %arg30[%c0_158, %c0_159] : memref<1x128xf32, #tpu.memory_space<vmem>>, vector<1x128xf32>
    %361 = arith.addf %359, %360 : vector<1x128xf32>
    %cst_160 = arith.constant 0.000000e+00 : f32
    %362 = vector.broadcast %cst_160 : f32 to vector<1x128xf32>
    %363 = arith.cmpf ogt, %361, %362 : vector<1x128xf32>
    %cst_161 = arith.constant 0.000000e+00 : f32
    %364 = vector.broadcast %cst_161 : f32 to vector<1x128xf32>
    %365 = arith.minimumf %361, %364 : vector<1x128xf32>
    %366 = math.exp %365 : vector<1x128xf32>
    %cst_162 = arith.constant 1.000000e+00 : f32
    %367 = vector.broadcast %cst_162 : f32 to vector<1x128xf32>
    %368 = arith.subf %366, %367 : vector<1x128xf32>
    %369 = arith.select %363, %361, %368 : vector<1x128xi1>, vector<1x128xf32>
    %370 = arith.truncf %369 : vector<1x128xf32> to vector<1x128xbf16>
    %c0_163 = arith.constant 0 : index
    %c0_164 = arith.constant 0 : index
    %371 = vector.load %arg31[%c0_163, %c0_164] : memref<128x128xbf16, #tpu.memory_space<vmem>>, vector<128x128xbf16>
    %cst_165 = arith.constant dense<0.000000e+00> : vector<1x128xf32>
    %372 = tpu.matmul %370, %371, %cst_165 {dimension_numbers = #tpu.dot_dimension_numbers<[1], [0], [0], [1], [0, 0, 1, 1], [], []>} : vector<1x128xbf16>, vector<128x128xbf16>, vector<1x128xf32> -> vector<1x128xf32>
    %c0_166 = arith.constant 0 : index
    %c0_167 = arith.constant 0 : index
    %373 = vector.load %arg32[%c0_166, %c0_167] : memref<1x128xf32, #tpu.memory_space<vmem>>, vector<1x128xf32>
    %374 = arith.addf %372, %373 : vector<1x128xf32>
    %375 = arith.addf %374, %356 : vector<1x128xf32>
    %cst_168 = arith.constant 0.000000e+00 : f32
    %376 = vector.broadcast %cst_168 : f32 to vector<1x128xf32>
    %377 = arith.cmpf ogt, %375, %376 : vector<1x128xf32>
    %cst_169 = arith.constant 0.000000e+00 : f32
    %378 = vector.broadcast %cst_169 : f32 to vector<1x128xf32>
    %379 = arith.minimumf %375, %378 : vector<1x128xf32>
    %380 = math.exp %379 : vector<1x128xf32>
    %cst_170 = arith.constant 1.000000e+00 : f32
    %381 = vector.broadcast %cst_170 : f32 to vector<1x128xf32>
    %382 = arith.subf %380, %381 : vector<1x128xf32>
    %383 = arith.select %377, %375, %382 : vector<1x128xi1>, vector<1x128xf32>
    %c0_171 = arith.constant 0 : index
    %c0_172 = arith.constant 0 : index
    %c0_173 = arith.constant 0 : index
    %384 = vector.load %arg33[%c0_171, %c0_172, %c0_173] : memref<1x1x128xf32, #tpu.memory_space<vmem>>, vector<1x1x128xf32>
    %385 = vector.shape_cast %384 : vector<1x1x128xf32> to vector<1x128xf32>
    %386 = vector.shape_cast %383 : vector<1x128xf32> to vector<1x1x128xf32>
    tpu.vector_store %arg33[%c0_171, %c0_172, %c0_173], %386 {strides = array<i32>} : memref<1x1x128xf32, #tpu.memory_space<vmem>>, vector<1x1x128xf32>,
    return
  }
  func.func @transform_0(%arg0: i32) -> (i32, i32, i32) {
    %c0_i32 = arith.constant 0 : i32
    %c0_i32_0 = arith.constant 0 : i32
    %c0_i32_1 = arith.constant 0 : i32
    return %arg0, %c0_i32, %c0_i32_0 : i32, i32, i32
  }
  func.func @transform_1(%arg0: i32) -> (i32, i32) {
    %c0_i32 = arith.constant 0 : i32
    %c0_i32_0 = arith.constant 0 : i32
    %c0_i32_1 = arith.constant 0 : i32
    return %c0_i32, %c0_i32_0 : i32, i32
  }
  func.func @transform_2(%arg0: i32) -> (i32, i32) {
    %c0_i32 = arith.constant 0 : i32
    %c0_i32_0 = arith.constant 0 : i32
    %c0_i32_1 = arith.constant 0 : i32
    return %c0_i32, %c0_i32_0 : i32, i32
  }
  func.func @transform_3(%arg0: i32) -> (i32, i32, i32) {
    %c0_i32 = arith.constant 0 : i32
    %c0_i32_0 = arith.constant 0 : i32
    %c0_i32_1 = arith.constant 0 : i32
    %c0_i32_2 = arith.constant 0 : i32
    return %c0_i32, %c0_i32_0, %c0_i32_1 : i32, i32, i32
  }
  func.func @transform_4(%arg0: i32) -> (i32, i32) {
    %c0_i32 = arith.constant 0 : i32
    %c0_i32_0 = arith.constant 0 : i32
    %c0_i32_1 = arith.constant 0 : i32
    return %c0_i32, %c0_i32_0 : i32, i32
  }
  func.func @transform_5(%arg0: i32) -> (i32, i32, i32) {
    %c0_i32 = arith.constant 0 : i32
    %c0_i32_0 = arith.constant 0 : i32
    %c0_i32_1 = arith.constant 0 : i32
    %c0_i32_2 = arith.constant 0 : i32
    return %c0_i32, %c0_i32_0, %c0_i32_1 : i32, i32, i32
  }
  func.func @transform_6(%arg0: i32) -> (i32, i32) {
    %c0_i32 = arith.constant 0 : i32
    %c0_i32_0 = arith.constant 0 : i32
    %c0_i32_1 = arith.constant 0 : i32
    return %c0_i32, %c0_i32_0 : i32, i32
  }
  func.func @transform_7(%arg0: i32) -> (i32, i32) {
    %c0_i32 = arith.constant 0 : i32
    %c0_i32_0 = arith.constant 0 : i32
    %c0_i32_1 = arith.constant 0 : i32
    return %c0_i32, %c0_i32_0 : i32, i32
  }
  func.func @transform_8(%arg0: i32) -> (i32, i32) {
    %c0_i32 = arith.constant 0 : i32
    %c0_i32_0 = arith.constant 0 : i32
    %c0_i32_1 = arith.constant 0 : i32
    return %c0_i32, %c0_i32_0 : i32, i32
  }
  func.func @transform_9(%arg0: i32) -> (i32, i32) {
    %c0_i32 = arith.constant 0 : i32
    %c0_i32_0 = arith.constant 0 : i32
    %c0_i32_1 = arith.constant 0 : i32
    return %c0_i32, %c0_i32_0 : i32, i32
  }
  func.func @transform_10(%arg0: i32) -> (i32, i32) {
    %c0_i32 = arith.constant 0 : i32
    %c0_i32_0 = arith.constant 0 : i32
    %c0_i32_1 = arith.constant 0 : i32
    return %c0_i32, %c0_i32_0 : i32, i32
  }
  func.func @transform_11(%arg0: i32) -> (i32, i32) {
    %c0_i32 = arith.constant 0 : i32
    %c0_i32_0 = arith.constant 0 : i32
    %c0_i32_1 = arith.constant 0 : i32
    return %c0_i32, %c0_i32_0 : i32, i32
  }
  func.func @transform_12(%arg0: i32) -> (i32, i32) {
    %c0_i32 = arith.constant 0 : i32
    %c0_i32_0 = arith.constant 0 : i32
    %c0_i32_1 = arith.constant 0 : i32
    return %c0_i32, %c0_i32_0 : i32, i32
  }
  func.func @transform_13(%arg0: i32) -> (i32, i32) {
    %c0_i32 = arith.constant 0 : i32
    %c0_i32_0 = arith.constant 0 : i32
    %c0_i32_1 = arith.constant 0 : i32
    return %c0_i32, %c0_i32_0 : i32, i32
  }
  func.func @transform_14(%arg0: i32) -> (i32, i32) {
    %c0_i32 = arith.constant 0 : i32
    %c0_i32_0 = arith.constant 0 : i32
    %c0_i32_1 = arith.constant 0 : i32
    return %c0_i32, %c0_i32_0 : i32, i32
  }
  func.func @transform_15(%arg0: i32) -> (i32, i32) {
    %c0_i32 = arith.constant 0 : i32
    %c0_i32_0 = arith.constant 0 : i32
    %c0_i32_1 = arith.constant 0 : i32
    return %c0_i32, %c0_i32_0 : i32, i32
  }
  func.func @transform_16(%arg0: i32) -> (i32, i32) {
    %c0_i32 = arith.constant 0 : i32
    %c0_i32_0 = arith.constant 0 : i32
    %c0_i32_1 = arith.constant 0 : i32
    return %c0_i32, %c0_i32_0 : i32, i32
  }
  func.func @transform_17(%arg0: i32) -> (i32, i32) {
    %c0_i32 = arith.constant 0 : i32
    %c0_i32_0 = arith.constant 0 : i32
    %c0_i32_1 = arith.constant 0 : i32
    return %c0_i32, %c0_i32_0 : i32, i32
  }
  func.func @transform_18(%arg0: i32) -> (i32, i32) {
    %c0_i32 = arith.constant 0 : i32
    %c0_i32_0 = arith.constant 0 : i32
    %c0_i32_1 = arith.constant 0 : i32
    return %c0_i32, %c0_i32_0 : i32, i32
  }
  func.func @transform_19(%arg0: i32) -> (i32, i32) {
    %c0_i32 = arith.constant 0 : i32
    %c0_i32_0 = arith.constant 0 : i32
    %c0_i32_1 = arith.constant 0 : i32
    return %c0_i32, %c0_i32_0 : i32, i32
  }
  func.func @transform_20(%arg0: i32) -> (i32, i32) {
    %c0_i32 = arith.constant 0 : i32
    %c0_i32_0 = arith.constant 0 : i32
    %c0_i32_1 = arith.constant 0 : i32
    return %c0_i32, %c0_i32_0 : i32, i32
  }
  func.func @transform_21(%arg0: i32) -> (i32, i32) {
    %c0_i32 = arith.constant 0 : i32
    %c0_i32_0 = arith.constant 0 : i32
    %c0_i32_1 = arith.constant 0 : i32
    return %c0_i32, %c0_i32_0 : i32, i32
  }
  func.func @transform_22(%arg0: i32) -> (i32, i32) {
    %c0_i32 = arith.constant 0 : i32
    %c0_i32_0 = arith.constant 0 : i32
    %c0_i32_1 = arith.constant 0 : i32
    return %c0_i32, %c0_i32_0 : i32, i32
  }
  func.func @transform_23(%arg0: i32) -> (i32, i32) {
    %c0_i32 = arith.constant 0 : i32
    %c0_i32_0 = arith.constant 0 : i32
    %c0_i32_1 = arith.constant 0 : i32
    return %c0_i32, %c0_i32_0 : i32, i32
  }
  func.func @transform_24(%arg0: i32) -> (i32, i32) {
    %c0_i32 = arith.constant 0 : i32
    %c0_i32_0 = arith.constant 0 : i32
    %c0_i32_1 = arith.constant 0 : i32
    return %c0_i32, %c0_i32_0 : i32, i32
  }
  func.func @transform_25(%arg0: i32) -> (i32, i32) {
    %c0_i32 = arith.constant 0 : i32
    %c0_i32_0 = arith.constant 0 : i32
    %c0_i32_1 = arith.constant 0 : i32
    return %c0_i32, %c0_i32_0 : i32, i32
  }
  func.func @transform_26(%arg0: i32) -> (i32, i32) {
    %c0_i32 = arith.constant 0 : i32
    %c0_i32_0 = arith.constant 0 : i32
    %c0_i32_1 = arith.constant 0 : i32
    return %c0_i32, %c0_i32_0 : i32, i32
  }
  func.func @transform_27(%arg0: i32) -> (i32, i32) {
    %c0_i32 = arith.constant 0 : i32
    %c0_i32_0 = arith.constant 0 : i32
    %c0_i32_1 = arith.constant 0 : i32
    return %c0_i32, %c0_i32_0 : i32, i32
  }
  func.func @transform_28(%arg0: i32) -> (i32, i32) {
    %c0_i32 = arith.constant 0 : i32
    %c0_i32_0 = arith.constant 0 : i32
    %c0_i32_1 = arith.constant 0 : i32
    return %c0_i32, %c0_i32_0 : i32, i32
  }
  func.func @transform_29(%arg0: i32) -> (i32, i32) {
    %c0_i32 = arith.constant 0 : i32
    %c0_i32_0 = arith.constant 0 : i32
    %c0_i32_1 = arith.constant 0 : i32
    return %c0_i32, %c0_i32_0 : i32, i32
  }
  func.func @transform_30(%arg0: i32) -> (i32, i32) {
    %c0_i32 = arith.constant 0 : i32
    %c0_i32_0 = arith.constant 0 : i32
    %c0_i32_1 = arith.constant 0 : i32
    return %c0_i32, %c0_i32_0 : i32, i32
  }
  func.func @transform_31(%arg0: i32) -> (i32, i32) {
    %c0_i32 = arith.constant 0 : i32
    %c0_i32_0 = arith.constant 0 : i32
    %c0_i32_1 = arith.constant 0 : i32
    return %c0_i32, %c0_i32_0 : i32, i32
  }
  func.func @transform_32(%arg0: i32) -> (i32, i32, i32) {
    %c0_i32 = arith.constant 0 : i32
    %c0_i32_0 = arith.constant 0 : i32
    %c0_i32_1 = arith.constant 0 : i32
    return %arg0, %c0_i32, %c0_i32_0 : i32, i32, i32
  }
}

</mosaic_0001>

<llo_original>
// kernel: _lambda_.1
$region0: #{_lambda_.1}
  #allocation0 [shape = 'u32[]', space=smem, size = 0x4, offset = 0x4, fixed_abs, tag = 'smem constant byte address 0x4 - core index']
  #allocation1 [shape = 'u32[144,128]{1,0:T(1,128)}', space=vmem, size = 0x12000, scoped, tag = 'internal scratch']
  %s0 = inlined_call_operand.smem [shape: u32[33], index: -1, kind: input, shape index: {}]
  %s1 = sld [smem:[%s0]]
  %s2 = scalar_lea.smem %s0, 1
  %s3 = sld [smem:[%s2]]
  %s4 = scalar_lea.smem %s0, 2
  %s5 = sld [smem:[%s4]]
  %s6 = scalar_lea.smem %s0, 3
  %s7 = sld [smem:[%s6]]
  %s8 = scalar_lea.smem %s0, 4
  %s9 = sld [smem:[%s8]]
  %s10 = scalar_lea.smem %s0, 5
  %s11 = sld [smem:[%s10]]
  %s12 = scalar_lea.smem %s0, 6
  %s13 = sld [smem:[%s12]]
  %s14 = scalar_lea.smem %s0, 7
  %s15 = sld [smem:[%s14]]
  %s16 = scalar_lea.smem %s0, 8
  %s17 = sld [smem:[%s16]]
  %s18 = scalar_lea.smem %s0, 9
  %s19 = sld [smem:[%s18]]
  %s20 = scalar_lea.smem %s0, 10
  %s21 = sld [smem:[%s20]]
  %s22 = scalar_lea.smem %s0, 11
  %s23 = sld [smem:[%s22]]
  %s24 = scalar_lea.smem %s0, 12
  %s25 = sld [smem:[%s24]]
  %s26 = scalar_lea.smem %s0, 13
  %s27 = sld [smem:[%s26]]
  %s28 = scalar_lea.smem %s0, 14
  %s29 = sld [smem:[%s28]]
  %s30 = scalar_lea.smem %s0, 15
  %s31 = sld [smem:[%s30]]
  %s32 = scalar_lea.smem %s0, 16
  %s33 = sld [smem:[%s32]]
  %s34 = scalar_lea.smem %s0, 17
  %s35 = sld [smem:[%s34]]
  %s36 = scalar_lea.smem %s0, 18
  %s37 = sld [smem:[%s36]]
  %s38 = scalar_lea.smem %s0, 19
  %s39 = sld [smem:[%s38]]
  %s40 = scalar_lea.smem %s0, 20
  %s41 = sld [smem:[%s40]]
  %s42 = scalar_lea.smem %s0, 21
  %s43 = sld [smem:[%s42]]
  %s44 = scalar_lea.smem %s0, 22
  %s45 = sld [smem:[%s44]]
  %s46 = scalar_lea.smem %s0, 23
  %s47 = sld [smem:[%s46]]
  %s48 = scalar_lea.smem %s0, 24
  %s49 = sld [smem:[%s48]]
  %s50 = scalar_lea.smem %s0, 25
  %s51 = sld [smem:[%s50]]
  %s52 = scalar_lea.smem %s0, 26
  %s53 = sld [smem:[%s52]]
  %s54 = scalar_lea.smem %s0, 27
  %s55 = sld [smem:[%s54]]
  %s56 = scalar_lea.smem %s0, 28
  %s57 = sld [smem:[%s56]]
  %s58 = scalar_lea.smem %s0, 29
  %s59 = sld [smem:[%s58]]
  %s60 = scalar_lea.smem %s0, 30
  %s61 = sld [smem:[%s60]]
  %s62 = scalar_lea.smem %s0, 31
  %s63 = sld [smem:[%s62]]
  %s64 = scalar_lea.smem %s0, 32
  %s65 = sld [smem:[%s64]]
  %s66 = sld [smem:[#allocation0]]
  $region281: #{_lambda_.1} parent=0
    _
  %s68 = ssub.s32 1, %s66
  %s69 = scalar_select 0, %s68, %s66
  $region1: #{_lambda_.1} parent=0
    #allocation2 [shape = 'u8[1024]{0}', space=vmem, size = 0x400, scoped, tag = 'input window, operand 1, single buffered']
    #allocation3 [shape = 's32[2]{0}', space=sflag, size = 0x8, scoped, tag = 'scoped memory for _lambda_.1']
    #allocation4 [shape = 's32[2]{0}', space=sflag, size = 0x8, scoped, tag = 'scoped memory for _lambda_.1']
    #allocation5 [shape = 'u8[512]{0}', space=vmem, size = 0x400, scoped, tag = 'input window, operand 2, single buffered']
    #allocation6 [shape = 's32[1]{0}', space=sflag, size = 0x4, scoped, tag = 'scoped memory for _lambda_.1']
    #allocation7 [shape = 'u8[40960]{0}', space=vmem, size = 0xa000, scoped, tag = 'input window, operand 3, single buffered']
    #allocation8 [shape = 'u8[512]{0}', space=vmem, size = 0x400, scoped, tag = 'input window, operand 4, single buffered']
    #allocation9 [shape = 's32[1]{0}', space=sflag, size = 0x4, scoped, tag = 'scoped memory for _lambda_.1']
    #allocation10 [shape = 'u8[81920]{0}', space=vmem, size = 0x14000, scoped, tag = 'input window, operand 5, single buffered']
    #allocation11 [shape = 'u8[512]{0}', space=vmem, size = 0x400, scoped, tag = 'input window, operand 6, single buffered']
    #allocation12 [shape = 's32[1]{0}', space=sflag, size = 0x4, scoped, tag = 'scoped memory for _lambda_.1']
    #allocation13 [shape = 'u8[98304]{0}', space=vmem, size = 0x18000, scoped, tag = 'input window, operand 7, single buffered']
    #allocation14 [shape = 'u8[1536]{0}', space=vmem, size = 0x800, scoped, tag = 'input window, operand 8, single buffered']
    #allocation15 [shape = 's32[1]{0}', space=sflag, size = 0x4, scoped, tag = 'scoped memory for _lambda_.1']
    #allocation16 [shape = 'u8[32768]{0}', space=vmem, size = 0x8000, scoped, tag = 'input window, operand 10, single buffered']
    #allocation17 [shape = 'u8[512]{0}', space=vmem, size = 0x400, scoped, tag = 'input window, operand 11, single buffered']
    #allocation18 [shape = 's32[1]{0}', space=sflag, size = 0x4, scoped, tag = 'scoped memory for _lambda_.1']
    #allocation19 [shape = 'u8[1179648]{0}', space=vmem, size = 0x120000, scoped, tag = 'input window, operand 12, single buffered']
    #allocation20 [shape = 'u8[1024]{0}', space=vmem, size = 0x400, scoped, tag = 'input window, operand 13, single buffered']
    #allocation21 [shape = 's32[1]{0}', space=sflag, size = 0x4, scoped, tag = 'scoped memory for _lambda_.1']
    #allocation22 [shape = 'u8[131072]{0}', space=vmem, size = 0x20000, scoped, tag = 'input window, operand 14, single buffered']
    #allocation23 [shape = 'u8[1024]{0}', space=vmem, size = 0x400, scoped, tag = 'input window, operand 15, single buffered']
    #allocation24 [shape = 's32[1]{0}', space=sflag, size = 0x4, scoped, tag = 'scoped memory for _lambda_.1']
    #allocation25 [shape = 'u8[131072]{0}', space=vmem, size = 0x20000, scoped, tag = 'input window, operand 16, single buffered']
    #allocation26 [shape = 'u8[1024]{0}', space=vmem, size = 0x400, scoped, tag = 'input window, operand 17, single buffered']
    #allocation27 [shape = 's32[1]{0}', space=sflag, size = 0x4, scoped, tag = 'scoped memory for _lambda_.1']
    #allocation28 [shape = 'u8[131072]{0}', space=vmem, size = 0x20000, scoped, tag = 'input window, operand 18, single buffered']
    #allocation29 [shape = 'u8[1024]{0}', space=vmem, size = 0x400, scoped, tag = 'input window, operand 19, single buffered']
    #allocation30 [shape = 's32[1]{0}', space=sflag, size = 0x4, scoped, tag = 'scoped memory for _lambda_.1']
    #allocation31 [shape = 'u8[131072]{0}', space=vmem, size = 0x20000, scoped, tag = 'input window, operand 20, single buffered']
    #allocation32 [shape = 'u8[1024]{0}', space=vmem, size = 0x400, scoped, tag = 'input window, operand 21, single buffered']
    #allocation33 [shape = 's32[1]{0}', space=sflag, size = 0x4, scoped, tag = 'scoped memory for _lambda_.1']
    #allocation34 [shape = 'u8[65536]{0}', space=vmem, size = 0x10000, scoped, tag = 'input window, operand 22, single buffered']
    #allocation35 [shape = 'u8[512]{0}', space=vmem, size = 0x400, scoped, tag = 'input window, operand 23, single buffered']
    #allocation36 [shape = 's32[1]{0}', space=sflag, size = 0x4, scoped, tag = 'scoped memory for _lambda_.1']
    #allocation37 [shape = 'u8[32768]{0}', space=vmem, size = 0x8000, scoped, tag = 'input window, operand 24, single buffered']
    #allocation38 [shape = 'u8[512]{0}', space=vmem, size = 0x400, scoped, tag = 'input window, operand 25, single buffered']
    #allocation39 [shape = 's32[1]{0}', space=sflag, size = 0x4, scoped, tag = 'scoped memory for _lambda_.1']
    #allocation40 [shape = 'u8[65536]{0}', space=vmem, size = 0x10000, scoped, tag = 'input window, operand 26, single buffered']
    #allocation41 [shape = 'u8[512]{0}', space=vmem, size = 0x400, scoped, tag = 'input window, operand 27, single buffered']
    #allocation42 [shape = 's32[1]{0}', space=sflag, size = 0x4, scoped, tag = 'scoped memory for _lambda_.1']
    #allocation43 [shape = 'u8[32768]{0}', space=vmem, size = 0x8000, scoped, tag = 'input window, operand 28, single buffered']
    #allocation44 [shape = 'u8[512]{0}', space=vmem, size = 0x400, scoped, tag = 'input window, operand 29, single buffered']
    #allocation45 [shape = 's32[1]{0}', space=sflag, size = 0x4, scoped, tag = 'scoped memory for _lambda_.1']
    #allocation46 [shape = 'u8[32768]{0}', space=vmem, size = 0x8000, scoped, tag = 'input window, operand 30, single buffered']
    #allocation47 [shape = 'u8[512]{0}', space=vmem, size = 0x400, scoped, tag = 'input window, operand 31, single buffered']
    #allocation48 [shape = 's32[1]{0}', space=sflag, size = 0x4, scoped, tag = 'scoped memory for _lambda_.1']
    #allocation49 [shape = 'u8[1024]{0}', space=vmem, size = 0x400, scoped, tag = 'output window, operand 0']
    %70 = vsyncpa [#allocation3], 0
    %71 = vsyncpa [#allocation6], 0
    %72 = vsyncpa [#allocation9], 0
    %73 = vsyncpa [#allocation12], 0
    %74 = vsyncpa [#allocation15], 0
    %75 = vsyncpa [#allocation18], 0
    %76 = vsyncpa [#allocation21], 0
    %77 = vsyncpa [#allocation24], 0
    %78 = vsyncpa [#allocation27], 0
    %79 = vsyncpa [#allocation30], 0
    %80 = vsyncpa [#allocation33], 0
    %81 = vsyncpa [#allocation36], 0
    %82 = vsyncpa [#allocation39], 0
    %83 = vsyncpa [#allocation42], 0
    %84 = vsyncpa [#allocation45], 0
    %85 = vsyncpa [#allocation48], 0
    %86 = vsyncpa [#allocation4], 0
    %s87 = scalar_lea.sflag [#allocation4], 1
    %88 = vsyncpa %s87, 0
    loop: start=0, step=1, limit=4
    $region2: #{_lambda_.1} parent=1 // loop_pre_header
      _
    $region3: #{_lambda_.1} parent=1 // loop_header
      %s90 = sphi 0, %s94
      %p91 = scmp.ge.s32.totalorder %s90, 4
      %s100 = sphi 0, %s102
      %s103 = sphi 0, %s100
      %s104 = sphi 0, %s103
      %s120 = sphi 0, %s104
      %s124 = sphi 0, %s124
      %s126 = sphi 0, %s124
      %s127 = sphi 0, %s126
      %s141 = sphi 0, %s127
      %s145 = sphi 0, %s145
      %s147 = sphi 0, %s145
      %s148 = sphi 0, %s147
      %s162 = sphi 0, %s148
      %s166 = sphi 0, %s166
      %s168 = sphi 0, %s166
      %s169 = sphi 0, %s168
      %s183 = sphi 0, %s169
      %s187 = sphi 0, %s187
      %s189 = sphi 0, %s187
      %s190 = sphi 0, %s189
      %s204 = sphi 0, %s190
      %s208 = sphi 0, %s208
      %s210 = sphi 0, %s208
      %s211 = sphi 0, %s210
      %s225 = sphi 0, %s211
      %s229 = sphi 0, %s229
      %s231 = sphi 0, %s229
      %s232 = sphi 0, %s231
      %s246 = sphi 0, %s232
      %s250 = sphi 0, %s250
      %s252 = sphi 0, %s250
      %s253 = sphi 0, %s252
      %s267 = sphi 0, %s253
      %s271 = sphi 0, %s271
      %s273 = sphi 0, %s271
      %s274 = sphi 0, %s273
      %s288 = sphi 0, %s274
      %s292 = sphi 0, %s292
      %s294 = sphi 0, %s292
      %s295 = sphi 0, %s294
      %s309 = sphi 0, %s295
      %s313 = sphi 0, %s313
      %s315 = sphi 0, %s313
      %s316 = sphi 0, %s315
      %s330 = sphi 0, %s316
      %s334 = sphi 0, %s334
      %s336 = sphi 0, %s334
      %s337 = sphi 0, %s336
      %s351 = sphi 0, %s337
      %s355 = sphi 0, %s355
      %s357 = sphi 0, %s355
      %s358 = sphi 0, %s357
      %s372 = sphi 0, %s358
      %s376 = sphi 0, %s376
      %s378 = sphi 0, %s376
      %s379 = sphi 0, %s378
      %s393 = sphi 0, %s379
      %s397 = sphi 0, %s397
      %s399 = sphi 0, %s397
      %s400 = sphi 0, %s399
      %s414 = sphi 0, %s400
      %s418 = sphi 0, %s418
      %s420 = sphi 0, %s418
      %s421 = sphi 0, %s420
      %s435 = sphi 0, %s421
      %s439 = sphi 0, %s439
      %s441 = sphi 0, %s439
      %s442 = sphi 0, %s441
      %s456 = sphi 0, %s442
      %s460 = sphi 0, %s460
      %s462 = sphi 0, %s460
      %s463 = sphi 0, %s462
      %s477 = sphi 0, %s463
      %s481 = sphi 0, %s481
      %s483 = sphi 0, %s481
      %s484 = sphi 0, %s483
      %s498 = sphi 0, %s484
      %s502 = sphi 0, %s502
      %s504 = sphi 0, %s502
      %s505 = sphi 0, %s504
      %s519 = sphi 0, %s505
      %s523 = sphi 0, %s523
      %s525 = sphi 0, %s523
      %s526 = sphi 0, %s525
      %s540 = sphi 0, %s526
      %s544 = sphi 0, %s544
      %s546 = sphi 0, %s544
      %s547 = sphi 0, %s546
      %s561 = sphi 0, %s547
      %s565 = sphi 0, %s565
      %s567 = sphi 0, %s565
      %s568 = sphi 0, %s567
      %s582 = sphi 0, %s568
      %s586 = sphi 0, %s586
      %s588 = sphi 0, %s586
      %s589 = sphi 0, %s588
      %s603 = sphi 0, %s589
      %s607 = sphi 0, %s607
      %s609 = sphi 0, %s607
      %s610 = sphi 0, %s609
      %s624 = sphi 0, %s610
      %s628 = sphi 0, %s628
      %s630 = sphi 0, %s628
      %s631 = sphi 0, %s630
      %s645 = sphi 0, %s631
      %s649 = sphi 0, %s649
      %s651 = sphi 0, %s649
      %s652 = sphi 0, %s651
      %s666 = sphi 0, %s652
      %s670 = sphi 0, %s670
      %s672 = sphi 0, %s670
      %s673 = sphi 0, %s672
      %s687 = sphi 0, %s673
      %s691 = sphi 0, %s691
      %s693 = sphi 0, %s691
      %s694 = sphi 0, %s693
      %s708 = sphi 0, %s694
      %s712 = sphi 0, %s712
      %s714 = sphi 0, %s712
      %s715 = sphi 0, %s714
      %s729 = sphi 0, %s715
      %s733 = sphi 0, %s733
      %s735 = sphi 0, %s733
      %s736 = sphi 0, %s735
      %s750 = sphi 0, %s736
      %s754 = sphi 0, %s754
      %s756 = sphi 0, %s754
      %s757 = sphi 0, %s756
      %s771 = sphi 0, %s757
      %s777 = sphi 0, %s779
      %s780 = sphi 0, %s777
      %s781 = sphi 0, %s780
      %s797 = sphi 0, %s781
    $region4: #{_lambda_.1} parent=1 // loop_header_branch
      %93 = sbr.rel (%p91) target = $region8
    $region5: #{_lambda_.1} parent=1 // loop_body
      %s95 = ssub.s32 %s90, 1
      %s96 = ssub.s32 %s90, 2
      %s97 = sadd.s32 %s90, 1
      %s98 = ssub.s32 %s90, %s97
      %p99 = scmp.eq.s32.totalorder %s98, 0
      %s101 = sadd.s32 %s100, 1
      %s102 = scalar_select %p99, %s100, %s101
      %p105 = pneg %p99
      %p106 = scmp.eq.s32.totalorder %s90, 1
      %p107 = por %p105, %p106
      %p108 = scmp.ne.s32.totalorder %s100, %s103
      %p109 = scmp.eq.s32.totalorder %s90, 0
      %p110 = por %p108, %p109
      %p111 = scmp.ne.s32.totalorder %s100, %s103
      %p112 = scmp.eq.s32.totalorder %s95, 1
      %p113 = por %p111, %p112
      %p114 = scmp.ne.s32.totalorder %s103, %s104
      %p115 = scmp.eq.s32.totalorder %s95, 0
      %p116 = por %p114, %p115
      %p117 = scmp.ne.s32.totalorder %s103, %s104
      %p118 = scmp.eq.s32.totalorder %s96, 1
      %p119 = por %p117, %p118
      %p121 = scmp.ne.s32.totalorder %s104, %s120
      %p122 = scmp.eq.s32.totalorder %s96, 0
      %p123 = por %p121, %p122
      %s125 = sadd.s32 %s124, 1
      %p128 = scmp.eq.s32.totalorder %s90, 1
      %p129 = scmp.ne.s32.totalorder %s124, %s126
      %p130 = scmp.eq.s32.totalorder %s90, 0
      %p131 = por %p129, %p130
      %p132 = scmp.ne.s32.totalorder %s124, %s126
      %p133 = scmp.eq.s32.totalorder %s95, 1
      %p134 = por %p132, %p133
      %p135 = scmp.ne.s32.totalorder %s126, %s127
      %p136 = scmp.eq.s32.totalorder %s95, 0
      %p137 = por %p135, %p136
      %p138 = scmp.ne.s32.totalorder %s126, %s127
      %p139 = scmp.eq.s32.totalorder %s96, 1
      %p140 = por %p138, %p139
      %p142 = scmp.ne.s32.totalorder %s127, %s141
      %p143 = scmp.eq.s32.totalorder %s96, 0
      %p144 = por %p142, %p143
      %s146 = sadd.s32 %s145, 1
      %p149 = scmp.eq.s32.totalorder %s90, 1
      %p150 = scmp.ne.s32.totalorder %s145, %s147
      %p151 = scmp.eq.s32.totalorder %s90, 0
      %p152 = por %p150, %p151
      %p153 = scmp.ne.s32.totalorder %s145, %s147
      %p154 = scmp.eq.s32.totalorder %s95, 1
      %p155 = por %p153, %p154
      %p156 = scmp.ne.s32.totalorder %s147, %s148
      %p157 = scmp.eq.s32.totalorder %s95, 0
      %p158 = por %p156, %p157
      %p159 = scmp.ne.s32.totalorder %s147, %s148
      %p160 = scmp.eq.s32.totalorder %s96, 1
      %p161 = por %p159, %p160
      %p163 = scmp.ne.s32.totalorder %s148, %s162
      %p164 = scmp.eq.s32.totalorder %s96, 0
      %p165 = por %p163, %p164
      %s167 = sadd.s32 %s166, 1
      %p170 = scmp.eq.s32.totalorder %s90, 1
      %p171 = scmp.ne.s32.totalorder %s166, %s168
      %p172 = scmp.eq.s32.totalorder %s90, 0
      %p173 = por %p171, %p172
      %p174 = scmp.ne.s32.totalorder %s166, %s168
      %p175 = scmp.eq.s32.totalorder %s95, 1
      %p176 = por %p174, %p175
      %p177 = scmp.ne.s32.totalorder %s168, %s169
      %p178 = scmp.eq.s32.totalorder %s95, 0
      %p179 = por %p177, %p178
      %p180 = scmp.ne.s32.totalorder %s168, %s169
      %p181 = scmp.eq.s32.totalorder %s96, 1
      %p182 = por %p180, %p181
      %p184 = scmp.ne.s32.totalorder %s169, %s183
      %p185 = scmp.eq.s32.totalorder %s96, 0
      %p186 = por %p184, %p185
      %s188 = sadd.s32 %s187, 1
      %p191 = scmp.eq.s32.totalorder %s90, 1
      %p192 = scmp.ne.s32.totalorder %s187, %s189
      %p193 = scmp.eq.s32.totalorder %s90, 0
      %p194 = por %p192, %p193
      %p195 = scmp.ne.s32.totalorder %s187, %s189
      %p196 = scmp.eq.s32.totalorder %s95, 1
      %p197 = por %p195, %p196
      %p198 = scmp.ne.s32.totalorder %s189, %s190
      %p199 = scmp.eq.s32.totalorder %s95, 0
      %p200 = por %p198, %p199
      %p201 = scmp.ne.s32.totalorder %s189, %s190
      %p202 = scmp.eq.s32.totalorder %s96, 1
      %p203 = por %p201, %p202
      %p205 = scmp.ne.s32.totalorder %s190, %s204
      %p206 = scmp.eq.s32.totalorder %s96, 0
      %p207 = por %p205, %p206
      %s209 = sadd.s32 %s208, 1
      %p212 = scmp.eq.s32.totalorder %s90, 1
      %p213 = scmp.ne.s32.totalorder %s208, %s210
      %p214 = scmp.eq.s32.totalorder %s90, 0
      %p215 = por %p213, %p214
      %p216 = scmp.ne.s32.totalorder %s208, %s210
      %p217 = scmp.eq.s32.totalorder %s95, 1
      %p218 = por %p216, %p217
      %p219 = scmp.ne.s32.totalorder %s210, %s211
      %p220 = scmp.eq.s32.totalorder %s95, 0
      %p221 = por %p219, %p220
      %p222 = scmp.ne.s32.totalorder %s210, %s211
      %p223 = scmp.eq.s32.totalorder %s96, 1
      %p224 = por %p222, %p223
      %p226 = scmp.ne.s32.totalorder %s211, %s225
      %p227 = scmp.eq.s32.totalorder %s96, 0
      %p228 = por %p226, %p227
      %s230 = sadd.s32 %s229, 1
      %p233 = scmp.eq.s32.totalorder %s90, 1
      %p234 = scmp.ne.s32.totalorder %s229, %s231
      %p235 = scmp.eq.s32.totalorder %s90, 0
      %p236 = por %p234, %p235
      %p237 = scmp.ne.s32.totalorder %s229, %s231
      %p238 = scmp.eq.s32.totalorder %s95, 1
      %p239 = por %p237, %p238
      %p240 = scmp.ne.s32.totalorder %s231, %s232
      %p241 = scmp.eq.s32.totalorder %s95, 0
      %p242 = por %p240, %p241
      %p243 = scmp.ne.s32.totalorder %s231, %s232
      %p244 = scmp.eq.s32.totalorder %s96, 1
      %p245 = por %p243, %p244
      %p247 = scmp.ne.s32.totalorder %s232, %s246
      %p248 = scmp.eq.s32.totalorder %s96, 0
      %p249 = por %p247, %p248
      %s251 = sadd.s32 %s250, 1
      %p254 = scmp.eq.s32.totalorder %s90, 1
      %p255 = scmp.ne.s32.totalorder %s250, %s252
      %p256 = scmp.eq.s32.totalorder %s90, 0
      %p257 = por %p255, %p256
      %p258 = scmp.ne.s32.totalorder %s250, %s252
      %p259 = scmp.eq.s32.totalorder %s95, 1
      %p260 = por %p258, %p259
      %p261 = scmp.ne.s32.totalorder %s252, %s253
      %p262 = scmp.eq.s32.totalorder %s95, 0
      %p263 = por %p261, %p262
      %p264 = scmp.ne.s32.totalorder %s252, %s253
      %p265 = scmp.eq.s32.totalorder %s96, 1
      %p266 = por %p264, %p265
      %p268 = scmp.ne.s32.totalorder %s253, %s267
      %p269 = scmp.eq.s32.totalorder %s96, 0
      %p270 = por %p268, %p269
      %s272 = sadd.s32 %s271, 1
      %p275 = scmp.eq.s32.totalorder %s90, 1
      %p276 = scmp.ne.s32.totalorder %s271, %s273
      %p277 = scmp.eq.s32.totalorder %s90, 0
      %p278 = por %p276, %p277
      %p279 = scmp.ne.s32.totalorder %s271, %s273
      %p280 = scmp.eq.s32.totalorder %s95, 1
      %p281 = por %p279, %p280
      %p282 = scmp.ne.s32.totalorder %s273, %s274
      %p283 = scmp.eq.s32.totalorder %s95, 0
      %p284 = por %p282, %p283
      %p285 = scmp.ne.s32.totalorder %s273, %s274
      %p286 = scmp.eq.s32.totalorder %s96, 1
      %p287 = por %p285, %p286
      %p289 = scmp.ne.s32.totalorder %s274, %s288
      %p290 = scmp.eq.s32.totalorder %s96, 0
      %p291 = por %p289, %p290
      %s293 = sadd.s32 %s292, 1
      %p296 = scmp.eq.s32.totalorder %s90, 1
      %p297 = scmp.ne.s32.totalorder %s292, %s294
      %p298 = scmp.eq.s32.totalorder %s90, 0
      %p299 = por %p297, %p298
      %p300 = scmp.ne.s32.totalorder %s292, %s294
      %p301 = scmp.eq.s32.totalorder %s95, 1
      %p302 = por %p300, %p301
      %p303 = scmp.ne.s32.totalorder %s294, %s295
      %p304 = scmp.eq.s32.totalorder %s95, 0
      %p305 = por %p303, %p304
      %p306 = scmp.ne.s32.totalorder %s294, %s295
      %p307 = scmp.eq.s32.totalorder %s96, 1
      %p308 = por %p306, %p307
      %p310 = scmp.ne.s32.totalorder %s295, %s309
      %p311 = scmp.eq.s32.totalorder %s96, 0
      %p312 = por %p310, %p311
      %s314 = sadd.s32 %s313, 1
      %p317 = scmp.eq.s32.totalorder %s90, 1
      %p318 = scmp.ne.s32.totalorder %s313, %s315
      %p319 = scmp.eq.s32.totalorder %s90, 0
      %p320 = por %p318, %p319
      %p321 = scmp.ne.s32.totalorder %s313, %s315
      %p322 = scmp.eq.s32.totalorder %s95, 1
      %p323 = por %p321, %p322
      %p324 = scmp.ne.s32.totalorder %s315, %s316
      %p325 = scmp.eq.s32.totalorder %s95, 0
      %p326 = por %p324, %p325
      %p327 = scmp.ne.s32.totalorder %s315, %s316
      %p328 = scmp.eq.s32.totalorder %s96, 1
      %p329 = por %p327, %p328
      %p331 = scmp.ne.s32.totalorder %s316, %s330
      %p332 = scmp.eq.s32.totalorder %s96, 0
      %p333 = por %p331, %p332
      %s335 = sadd.s32 %s334, 1
      %p338 = scmp.eq.s32.totalorder %s90, 1
      %p339 = scmp.ne.s32.totalorder %s334, %s336
      %p340 = scmp.eq.s32.totalorder %s90, 0
      %p341 = por %p339, %p340
      %p342 = scmp.ne.s32.totalorder %s334, %s336
      %p343 = scmp.eq.s32.totalorder %s95, 1
      %p344 = por %p342, %p343
      %p345 = scmp.ne.s32.totalorder %s336, %s337
      %p346 = scmp.eq.s32.totalorder %s95, 0
      %p347 = por %p345, %p346
      %p348 = scmp.ne.s32.totalorder %s336, %s337
      %p349 = scmp.eq.s32.totalorder %s96, 1
      %p350 = por %p348, %p349
      %p352 = scmp.ne.s32.totalorder %s337, %s351
      %p353 = scmp.eq.s32.totalorder %s96, 0
      %p354 = por %p352, %p353
      %s356 = sadd.s32 %s355, 1
      %p359 = scmp.eq.s32.totalorder %s90, 1
      %p360 = scmp.ne.s32.totalorder %s355, %s357
      %p361 = scmp.eq.s32.totalorder %s90, 0
      %p362 = por %p360, %p361
      %p363 = scmp.ne.s32.totalorder %s355, %s357
      %p364 = scmp.eq.s32.totalorder %s95, 1
      %p365 = por %p363, %p364
      %p366 = scmp.ne.s32.totalorder %s357, %s358
      %p367 = scmp.eq.s32.totalorder %s95, 0
      %p368 = por %p366, %p367
      %p369 = scmp.ne.s32.totalorder %s357, %s358
      %p370 = scmp.eq.s32.totalorder %s96, 1
      %p371 = por %p369, %p370
      %p373 = scmp.ne.s32.totalorder %s358, %s372
      %p374 = scmp.eq.s32.totalorder %s96, 0
      %p375 = por %p373, %p374
      %s377 = sadd.s32 %s376, 1
      %p380 = scmp.eq.s32.totalorder %s90, 1
      %p381 = scmp.ne.s32.totalorder %s376, %s378
      %p382 = scmp.eq.s32.totalorder %s90, 0
      %p383 = por %p381, %p382
      %p384 = scmp.ne.s32.totalorder %s376, %s378
      %p385 = scmp.eq.s32.totalorder %s95, 1
      %p386 = por %p384, %p385
      %p387 = scmp.ne.s32.totalorder %s378, %s379
      %p388 = scmp.eq.s32.totalorder %s95, 0
      %p389 = por %p387, %p388
      %p390 = scmp.ne.s32.totalorder %s378, %s379
      %p391 = scmp.eq.s32.totalorder %s96, 1
      %p392 = por %p390, %p391
      %p394 = scmp.ne.s32.totalorder %s379, %s393
      %p395 = scmp.eq.s32.totalorder %s96, 0
      %p396 = por %p394, %p395
      %s398 = sadd.s32 %s397, 1
      %p401 = scmp.eq.s32.totalorder %s90, 1
      %p402 = scmp.ne.s32.totalorder %s397, %s399
      %p403 = scmp.eq.s32.totalorder %s90, 0
      %p404 = por %p402, %p403
      %p405 = scmp.ne.s32.totalorder %s397, %s399
      %p406 = scmp.eq.s32.totalorder %s95, 1
      %p407 = por %p405, %p406
      %p408 = scmp.ne.s32.totalorder %s399, %s400
      %p409 = scmp.eq.s32.totalorder %s95, 0
      %p410 = por %p408, %p409
      %p411 = scmp.ne.s32.totalorder %s399, %s400
      %p412 = scmp.eq.s32.totalorder %s96, 1
      %p413 = por %p411, %p412
      %p415 = scmp.ne.s32.totalorder %s400, %s414
      %p416 = scmp.eq.s32.totalorder %s96, 0
      %p417 = por %p415, %p416
      %s419 = sadd.s32 %s418, 1
      %p422 = scmp.eq.s32.totalorder %s90, 1
      %p423 = scmp.ne.s32.totalorder %s418, %s420
      %p424 = scmp.eq.s32.totalorder %s90, 0
      %p425 = por %p423, %p424
      %p426 = scmp.ne.s32.totalorder %s418, %s420
      %p427 = scmp.eq.s32.totalorder %s95, 1
      %p428 = por %p426, %p427
      %p429 = scmp.ne.s32.totalorder %s420, %s421
      %p430 = scmp.eq.s32.totalorder %s95, 0
      %p431 = por %p429, %p430
      %p432 = scmp.ne.s32.totalorder %s420, %s421
      %p433 = scmp.eq.s32.totalorder %s96, 1
      %p434 = por %p432, %p433
      %p436 = scmp.ne.s32.totalorder %s421, %s435
      %p437 = scmp.eq.s32.totalorder %s96, 0
      %p438 = por %p436, %p437
      %s440 = sadd.s32 %s439, 1
      %p443 = scmp.eq.s32.totalorder %s90, 1
      %p444 = scmp.ne.s32.totalorder %s439, %s441
      %p445 = scmp.eq.s32.totalorder %s90, 0
      %p446 = por %p444, %p445
      %p447 = scmp.ne.s32.totalorder %s439, %s441
      %p448 = scmp.eq.s32.totalorder %s95, 1
      %p449 = por %p447, %p448
      %p450 = scmp.ne.s32.totalorder %s441, %s442
      %p451 = scmp.eq.s32.totalorder %s95, 0
      %p452 = por %p450, %p451
      %p453 = scmp.ne.s32.totalorder %s441, %s442
      %p454 = scmp.eq.s32.totalorder %s96, 1
      %p455 = por %p453, %p454
      %p457 = scmp.ne.s32.totalorder %s442, %s456
      %p458 = scmp.eq.s32.totalorder %s96, 0
      %p459 = por %p457, %p458
      %s461 = sadd.s32 %s460, 1
      %p464 = scmp.eq.s32.totalorder %s90, 1
      %p465 = scmp.ne.s32.totalorder %s460, %s462
      %p466 = scmp.eq.s32.totalorder %s90, 0
      %p467 = por %p465, %p466
      %p468 = scmp.ne.s32.totalorder %s460, %s462
      %p469 = scmp.eq.s32.totalorder %s95, 1
      %p470 = por %p468, %p469
      %p471 = scmp.ne.s32.totalorder %s462, %s463
      %p472 = scmp.eq.s32.totalorder %s95, 0
      %p473 = por %p471, %p472
      %p474 = scmp.ne.s32.totalorder %s462, %s463
      %p475 = scmp.eq.s32.totalorder %s96, 1
      %p476 = por %p474, %p475
      %p478 = scmp.ne.s32.totalorder %s463, %s477
      %p479 = scmp.eq.s32.totalorder %s96, 0
      %p480 = por %p478, %p479
      %s482 = sadd.s32 %s481, 1
      %p485 = scmp.eq.s32.totalorder %s90, 1
      %p486 = scmp.ne.s32.totalorder %s481, %s483
      %p487 = scmp.eq.s32.totalorder %s90, 0
      %p488 = por %p486, %p487
      %p489 = scmp.ne.s32.totalorder %s481, %s483
      %p490 = scmp.eq.s32.totalorder %s95, 1
      %p491 = por %p489, %p490
      %p492 = scmp.ne.s32.totalorder %s483, %s484
      %p493 = scmp.eq.s32.totalorder %s95, 0
      %p494 = por %p492, %p493
      %p495 = scmp.ne.s32.totalorder %s483, %s484
      %p496 = scmp.eq.s32.totalorder %s96, 1
      %p497 = por %p495, %p496
      %p499 = scmp.ne.s32.totalorder %s484, %s498
      %p500 = scmp.eq.s32.totalorder %s96, 0
      %p501 = por %p499, %p500
      %s503 = sadd.s32 %s502, 1
      %p506 = scmp.eq.s32.totalorder %s90, 1
      %p507 = scmp.ne.s32.totalorder %s502, %s504
      %p508 = scmp.eq.s32.totalorder %s90, 0
      %p509 = por %p507, %p508
      %p510 = scmp.ne.s32.totalorder %s502, %s504
      %p511 = scmp.eq.s32.totalorder %s95, 1
      %p512 = por %p510, %p511
      %p513 = scmp.ne.s32.totalorder %s504, %s505
      %p514 = scmp.eq.s32.totalorder %s95, 0
      %p515 = por %p513, %p514
      %p516 = scmp.ne.s32.totalorder %s504, %s505
      %p517 = scmp.eq.s32.totalorder %s96, 1
      %p518 = por %p516, %p517
      %p520 = scmp.ne.s32.totalorder %s505, %s519
      %p521 = scmp.eq.s32.totalorder %s96, 0
      %p522 = por %p520, %p521
      %s524 = sadd.s32 %s523, 1
      %p527 = scmp.eq.s32.totalorder %s90, 1
      %p528 = scmp.ne.s32.totalorder %s523, %s525
      %p529 = scmp.eq.s32.totalorder %s90, 0
      %p530 = por %p528, %p529
      %p531 = scmp.ne.s32.totalorder %s523, %s525
      %p532 = scmp.eq.s32.totalorder %s95, 1
      %p533 = por %p531, %p532
      %p534 = scmp.ne.s32.totalorder %s525, %s526
      %p535 = scmp.eq.s32.totalorder %s95, 0
      %p536 = por %p534, %p535
      %p537 = scmp.ne.s32.totalorder %s525, %s526
      %p538 = scmp.eq.s32.totalorder %s96, 1
      %p539 = por %p537, %p538
      %p541 = scmp.ne.s32.totalorder %s526, %s540
      %p542 = scmp.eq.s32.totalorder %s96, 0
      %p543 = por %p541, %p542
      %s545 = sadd.s32 %s544, 1
      %p548 = scmp.eq.s32.totalorder %s90, 1
      %p549 = scmp.ne.s32.totalorder %s544, %s546
      %p550 = scmp.eq.s32.totalorder %s90, 0
      %p551 = por %p549, %p550
      %p552 = scmp.ne.s32.totalorder %s544, %s546
      %p553 = scmp.eq.s32.totalorder %s95, 1
      %p554 = por %p552, %p553
      %p555 = scmp.ne.s32.totalorder %s546, %s547
      %p556 = scmp.eq.s32.totalorder %s95, 0
      %p557 = por %p555, %p556
      %p558 = scmp.ne.s32.totalorder %s546, %s547
      %p559 = scmp.eq.s32.totalorder %s96, 1
      %p560 = por %p558, %p559
      %p562 = scmp.ne.s32.totalorder %s547, %s561
      %p563 = scmp.eq.s32.totalorder %s96, 0
      %p564 = por %p562, %p563
      %s566 = sadd.s32 %s565, 1
      %p569 = scmp.eq.s32.totalorder %s90, 1
      %p570 = scmp.ne.s32.totalorder %s565, %s567
      %p571 = scmp.eq.s32.totalorder %s90, 0
      %p572 = por %p570, %p571
      %p573 = scmp.ne.s32.totalorder %s565, %s567
      %p574 = scmp.eq.s32.totalorder %s95, 1
      %p575 = por %p573, %p574
      %p576 = scmp.ne.s32.totalorder %s567, %s568
      %p577 = scmp.eq.s32.totalorder %s95, 0
      %p578 = por %p576, %p577
      %p579 = scmp.ne.s32.totalorder %s567, %s568
      %p580 = scmp.eq.s32.totalorder %s96, 1
      %p581 = por %p579, %p580
      %p583 = scmp.ne.s32.totalorder %s568, %s582
      %p584 = scmp.eq.s32.totalorder %s96, 0
      %p585 = por %p583, %p584
      %s587 = sadd.s32 %s586, 1
      %p590 = scmp.eq.s32.totalorder %s90, 1
      %p591 = scmp.ne.s32.totalorder %s586, %s588
      %p592 = scmp.eq.s32.totalorder %s90, 0
      %p593 = por %p591, %p592
      %p594 = scmp.ne.s32.totalorder %s586, %s588
      %p595 = scmp.eq.s32.totalorder %s95, 1
      %p596 = por %p594, %p595
      %p597 = scmp.ne.s32.totalorder %s588, %s589
      %p598 = scmp.eq.s32.totalorder %s95, 0
      %p599 = por %p597, %p598
      %p600 = scmp.ne.s32.totalorder %s588, %s589
      %p601 = scmp.eq.s32.totalorder %s96, 1
      %p602 = por %p600, %p601
      %p604 = scmp.ne.s32.totalorder %s589, %s603
      %p605 = scmp.eq.s32.totalorder %s96, 0
      %p606 = por %p604, %p605
      %s608 = sadd.s32 %s607, 1
      %p611 = scmp.eq.s32.totalorder %s90, 1
      %p612 = scmp.ne.s32.totalorder %s607, %s609
      %p613 = scmp.eq.s32.totalorder %s90, 0
      %p614 = por %p612, %p613
      %p615 = scmp.ne.s32.totalorder %s607, %s609
      %p616 = scmp.eq.s32.totalorder %s95, 1
      %p617 = por %p615, %p616
      %p618 = scmp.ne.s32.totalorder %s609, %s610
      %p619 = scmp.eq.s32.totalorder %s95, 0
      %p620 = por %p618, %p619
      %p621 = scmp.ne.s32.totalorder %s609, %s610
      %p622 = scmp.eq.s32.totalorder %s96, 1
      %p623 = por %p621, %p622
      %p625 = scmp.ne.s32.totalorder %s610, %s624
      %p626 = scmp.eq.s32.totalorder %s96, 0
      %p627 = por %p625, %p626
      %s629 = sadd.s32 %s628, 1
      %p632 = scmp.eq.s32.totalorder %s90, 1
      %p633 = scmp.ne.s32.totalorder %s628, %s630
      %p634 = scmp.eq.s32.totalorder %s90, 0
      %p635 = por %p633, %p634
      %p636 = scmp.ne.s32.totalorder %s628, %s630
      %p637 = scmp.eq.s32.totalorder %s95, 1
      %p638 = por %p636, %p637
      %p639 = scmp.ne.s32.totalorder %s630, %s631
      %p640 = scmp.eq.s32.totalorder %s95, 0
      %p641 = por %p639, %p640
      %p642 = scmp.ne.s32.totalorder %s630, %s631
      %p643 = scmp.eq.s32.totalorder %s96, 1
      %p644 = por %p642, %p643
      %p646 = scmp.ne.s32.totalorder %s631, %s645
      %p647 = scmp.eq.s32.totalorder %s96, 0
      %p648 = por %p646, %p647
      %s650 = sadd.s32 %s649, 1
      %p653 = scmp.eq.s32.totalorder %s90, 1
      %p654 = scmp.ne.s32.totalorder %s649, %s651
      %p655 = scmp.eq.s32.totalorder %s90, 0
      %p656 = por %p654, %p655
      %p657 = scmp.ne.s32.totalorder %s649, %s651
      %p658 = scmp.eq.s32.totalorder %s95, 1
      %p659 = por %p657, %p658
      %p660 = scmp.ne.s32.totalorder %s651, %s652
      %p661 = scmp.eq.s32.totalorder %s95, 0
      %p662 = por %p660, %p661
      %p663 = scmp.ne.s32.totalorder %s651, %s652
      %p664 = scmp.eq.s32.totalorder %s96, 1
      %p665 = por %p663, %p664
      %p667 = scmp.ne.s32.totalorder %s652, %s666
      %p668 = scmp.eq.s32.totalorder %s96, 0
      %p669 = por %p667, %p668
      %s671 = sadd.s32 %s670, 1
      %p674 = scmp.eq.s32.totalorder %s90, 1
      %p675 = scmp.ne.s32.totalorder %s670, %s672
      %p676 = scmp.eq.s32.totalorder %s90, 0
      %p677 = por %p675, %p676
      %p678 = scmp.ne.s32.totalorder %s670, %s672
      %p679 = scmp.eq.s32.totalorder %s95, 1
      %p680 = por %p678, %p679
      %p681 = scmp.ne.s32.totalorder %s672, %s673
      %p682 = scmp.eq.s32.totalorder %s95, 0
      %p683 = por %p681, %p682
      %p684 = scmp.ne.s32.totalorder %s672, %s673
      %p685 = scmp.eq.s32.totalorder %s96, 1
      %p686 = por %p684, %p685
      %p688 = scmp.ne.s32.totalorder %s673, %s687
      %p689 = scmp.eq.s32.totalorder %s96, 0
      %p690 = por %p688, %p689
      %s692 = sadd.s32 %s691, 1
      %p695 = scmp.eq.s32.totalorder %s90, 1
      %p696 = scmp.ne.s32.totalorder %s691, %s693
      %p697 = scmp.eq.s32.totalorder %s90, 0
      %p698 = por %p696, %p697
      %p699 = scmp.ne.s32.totalorder %s691, %s693
      %p700 = scmp.eq.s32.totalorder %s95, 1
      %p701 = por %p699, %p700
      %p702 = scmp.ne.s32.totalorder %s693, %s694
      %p703 = scmp.eq.s32.totalorder %s95, 0
      %p704 = por %p702, %p703
      %p705 = scmp.ne.s32.totalorder %s693, %s694
      %p706 = scmp.eq.s32.totalorder %s96, 1
      %p707 = por %p705, %p706
      %p709 = scmp.ne.s32.totalorder %s694, %s708
      %p710 = scmp.eq.s32.totalorder %s96, 0
      %p711 = por %p709, %p710
      %s713 = sadd.s32 %s712, 1
      %p716 = scmp.eq.s32.totalorder %s90, 1
      %p717 = scmp.ne.s32.totalorder %s712, %s714
      %p718 = scmp.eq.s32.totalorder %s90, 0
      %p719 = por %p717, %p718
      %p720 = scmp.ne.s32.totalorder %s712, %s714
      %p721 = scmp.eq.s32.totalorder %s95, 1
      %p722 = por %p720, %p721
      %p723 = scmp.ne.s32.totalorder %s714, %s715
      %p724 = scmp.eq.s32.totalorder %s95, 0
      %p725 = por %p723, %p724
      %p726 = scmp.ne.s32.totalorder %s714, %s715
      %p727 = scmp.eq.s32.totalorder %s96, 1
      %p728 = por %p726, %p727
      %p730 = scmp.ne.s32.totalorder %s715, %s729
      %p731 = scmp.eq.s32.totalorder %s96, 0
      %p732 = por %p730, %p731
      %s734 = sadd.s32 %s733, 1
      %p737 = scmp.eq.s32.totalorder %s90, 1
      %p738 = scmp.ne.s32.totalorder %s733, %s735
      %p739 = scmp.eq.s32.totalorder %s90, 0
      %p740 = por %p738, %p739
      %p741 = scmp.ne.s32.totalorder %s733, %s735
      %p742 = scmp.eq.s32.totalorder %s95, 1
      %p743 = por %p741, %p742
      %p744 = scmp.ne.s32.totalorder %s735, %s736
      %p745 = scmp.eq.s32.totalorder %s95, 0
      %p746 = por %p744, %p745
      %p747 = scmp.ne.s32.totalorder %s735, %s736
      %p748 = scmp.eq.s32.totalorder %s96, 1
      %p749 = por %p747, %p748
      %p751 = scmp.ne.s32.totalorder %s736, %s750
      %p752 = scmp.eq.s32.totalorder %s96, 0
      %p753 = por %p751, %p752
      %s755 = sadd.s32 %s754, 1
      %p758 = scmp.eq.s32.totalorder %s90, 1
      %p759 = scmp.ne.s32.totalorder %s754, %s756
      %p760 = scmp.eq.s32.totalorder %s90, 0
      %p761 = por %p759, %p760
      %p762 = scmp.ne.s32.totalorder %s754, %s756
      %p763 = scmp.eq.s32.totalorder %s95, 1
      %p764 = por %p762, %p763
      %p765 = scmp.ne.s32.totalorder %s756, %s757
      %p766 = scmp.eq.s32.totalorder %s95, 0
      %p767 = por %p765, %p766
      %p768 = scmp.ne.s32.totalorder %s756, %s757
      %p769 = scmp.eq.s32.totalorder %s96, 1
      %p770 = por %p768, %p769
      %p772 = scmp.ne.s32.totalorder %s757, %s771
      %p773 = scmp.eq.s32.totalorder %s96, 0
      %p774 = por %p772, %p773
      %s775 = ssub.s32 %s90, %s97
      %p776 = scmp.eq.s32.totalorder %s775, 0
      %s778 = sadd.s32 %s777, 1
      %s779 = scalar_select %p776, %s777, %s778
      %p782 = pneg %p776
      %p783 = scmp.eq.s32.totalorder %s90, 1
      %p784 = por %p782, %p783
      %p785 = scmp.ne.s32.totalorder %s777, %s780
      %p786 = scmp.eq.s32.totalorder %s90, 0
      %p787 = por %p785, %p786
      %p788 = scmp.ne.s32.totalorder %s777, %s780
      %p789 = scmp.eq.s32.totalorder %s95, 1
      %p790 = por %p788, %p789
      %p791 = scmp.ne.s32.totalorder %s780, %s781
      %p792 = scmp.eq.s32.totalorder %s95, 0
      %p793 = por %p791, %p792
      %p794 = scmp.ne.s32.totalorder %s780, %s781
      %p795 = scmp.eq.s32.totalorder %s96, 1
      %p796 = por %p794, %p795
      %p798 = scmp.ne.s32.totalorder %s781, %s797
      %p799 = scmp.eq.s32.totalorder %s96, 0
      %p800 = por %p798, %p799
      %p801 = scmp.le.s32.totalorder 1, %s90
      %p802 = scmp.lt.s32.totalorder %s90, 3
      %p803 = pnand %p801, %p802
      %p804 = pneg %p803
      // Predicated region
      $region9: #{_lambda_.1} parent=5 // pred_check
        _
      $region10: #{_lambda_.1} parent=5 // pred_check_branch
        %806 = sbr.rel (%p803) target = $region12
      $region11: #{_lambda_.1} parent=5 // pred_region
        %s807 = ssub.s32 %s90, 1
        // Predicated region
        $region13: #{_lambda_.1} parent=11 // pred_check
          %p808 = pneg %p137
        $region14: #{_lambda_.1} parent=11 // pred_check_branch
          %810 = sbr.rel (%p808) target = $region16
        $region15: #{_lambda_.1} parent=11 // pred_region
          %s812 = ssub.s32 32, 32
          %813 = vsyncadd [#allocation3], %s812
          %s815 = sshll.u32 [#allocation2], 4
          %s816 = int_to_ptr.vmem [resolvable:$true] %s815
          %818 = dma.hbm_to_vmem [thread:$0]  %s3, 32, %s816, [#allocation3]
        $region16: #{_lambda_.1} parent=11 // pred_fallthru
          _
        // Predicated region
        $region17: #{_lambda_.1} parent=11 // pred_check
          %p819 = pneg %p158
        $region18: #{_lambda_.1} parent=11 // pred_check_branch
          %821 = sbr.rel (%p819) target = $region20
        $region19: #{_lambda_.1} parent=11 // pred_region
          %s823 = ssub.s32 16, 16
          %824 = vsyncadd [#allocation6], %s823
          %s826 = sshll.u32 [#allocation5], 4
          %s827 = int_to_ptr.vmem [resolvable:$true] %s826
          %829 = dma.hbm_to_vmem [thread:$0]  %s5, 16, %s827, [#allocation6]
        $region20: #{_lambda_.1} parent=11 // pred_fallthru
          _
        // Predicated region
        $region21: #{_lambda_.1} parent=11 // pred_check
          %p830 = pneg %p179
        $region22: #{_lambda_.1} parent=11 // pred_check_branch
          %832 = sbr.rel (%p830) target = $region24
        $region23: #{_lambda_.1} parent=11 // pred_region
          %s834 = ssub.s32 1280, 1280
          %835 = vsyncadd [#allocation6], %s834
          %s836 = sshll.u32 [#allocation7], 4
          %s837 = int_to_ptr.vmem [resolvable:$true] %s836
          %842 = dma.hbm_to_vmem [thread:$0]  %s7, 1280, %s837, [#allocation6], 64, 64, 4
        $region24: #{_lambda_.1} parent=11 // pred_fallthru
          _
        // Predicated region
        $region25: #{_lambda_.1} parent=11 // pred_check
          %p843 = pneg %p200
        $region26: #{_lambda_.1} parent=11 // pred_check_branch
          %845 = sbr.rel (%p843) target = $region28
        $region27: #{_lambda_.1} parent=11 // pred_region
          %s847 = ssub.s32 16, 16
          %848 = vsyncadd [#allocation9], %s847
          %s850 = sshll.u32 [#allocation8], 4
          %s851 = int_to_ptr.vmem [resolvable:$true] %s850
          %853 = dma.hbm_to_vmem [thread:$0]  %s9, 16, %s851, [#allocation9]
        $region28: #{_lambda_.1} parent=11 // pred_fallthru
          _
        // Predicated region
        $region29: #{_lambda_.1} parent=11 // pred_check
          %p854 = pneg %p221
        $region30: #{_lambda_.1} parent=11 // pred_check_branch
          %856 = sbr.rel (%p854) target = $region32
        $region31: #{_lambda_.1} parent=11 // pred_region
          %s858 = ssub.s32 2560, 2560
          %859 = vsyncadd [#allocation9], %s858
          %s860 = sshll.u32 [#allocation10], 4
          %s861 = int_to_ptr.vmem [resolvable:$true] %s860
          %866 = dma.hbm_to_vmem [thread:$0]  %s11, 2560, %s861, [#allocation9], 64, 64, 4
        $region32: #{_lambda_.1} parent=11 // pred_fallthru
          _
        // Predicated region
        $region33: #{_lambda_.1} parent=11 // pred_check
          %p867 = pneg %p242
        $region34: #{_lambda_.1} parent=11 // pred_check_branch
          %869 = sbr.rel (%p867) target = $region36
        $region35: #{_lambda_.1} parent=11 // pred_region
          %s871 = ssub.s32 16, 16
          %872 = vsyncadd [#allocation12], %s871
          %s874 = sshll.u32 [#allocation11], 4
          %s875 = int_to_ptr.vmem [resolvable:$true] %s874
          %877 = dma.hbm_to_vmem [thread:$0]  %s13, 16, %s875, [#allocation12]
        $region36: #{_lambda_.1} parent=11 // pred_fallthru
          _
        // Predicated region
        $region37: #{_lambda_.1} parent=11 // pred_check
          %p878 = pneg %p263
        $region38: #{_lambda_.1} parent=11 // pred_check_branch
          %880 = sbr.rel (%p878) target = $region40
        $region39: #{_lambda_.1} parent=11 // pred_region
          %s882 = ssub.s32 3072, 3072
          %883 = vsyncadd [#allocation12], %s882
          %s884 = sshll.u32 [#allocation13], 4
          %s885 = int_to_ptr.vmem [resolvable:$true] %s884
          %890 = dma.hbm_to_vmem [thread:$0]  %s15, 3072, %s885, [#allocation12], 192, 192, 12
        $region40: #{_lambda_.1} parent=11 // pred_fallthru
          _
        // Predicated region
        $region41: #{_lambda_.1} parent=11 // pred_check
          %p891 = pneg %p284
        $region42: #{_lambda_.1} parent=11 // pred_check_branch
          %893 = sbr.rel (%p891) target = $region44
        $region43: #{_lambda_.1} parent=11 // pred_region
          %s895 = ssub.s32 48, 48
          %896 = vsyncadd [#allocation15], %s895
          %s898 = sshll.u32 [#allocation14], 4
          %s899 = int_to_ptr.vmem [resolvable:$true] %s898
          %901 = dma.hbm_to_vmem [thread:$0]  %s17, 48, %s899, [#allocation15]
        $region44: #{_lambda_.1} parent=11 // pred_fallthru
          _
        // Predicated region
        $region45: #{_lambda_.1} parent=11 // pred_check
          %p902 = pneg %p305
        $region46: #{_lambda_.1} parent=11 // pred_check_branch
          %904 = sbr.rel (%p902) target = $region48
        $region47: #{_lambda_.1} parent=11 // pred_region
          _
        $region48: #{_lambda_.1} parent=11 // pred_fallthru
          _
        // Predicated region
        $region49: #{_lambda_.1} parent=11 // pred_check
          %p905 = pneg %p326
        $region50: #{_lambda_.1} parent=11 // pred_check_branch
          %907 = sbr.rel (%p905) target = $region52
        $region51: #{_lambda_.1} parent=11 // pred_region
          %s909 = ssub.s32 1024, 1024
          %910 = vsyncadd [#allocation15], %s909
          %s911 = sshll.u32 [#allocation16], 4
          %s912 = int_to_ptr.vmem [resolvable:$true] %s911
          %917 = dma.hbm_to_vmem [thread:$0]  %s21, 1024, %s912, [#allocation15], 64, 64, 4
        $region52: #{_lambda_.1} parent=11 // pred_fallthru
          _
        // Predicated region
        $region53: #{_lambda_.1} parent=11 // pred_check
          %p918 = pneg %p347
        $region54: #{_lambda_.1} parent=11 // pred_check_branch
          %920 = sbr.rel (%p918) target = $region56
        $region55: #{_lambda_.1} parent=11 // pred_region
          %s922 = ssub.s32 16, 16
          %923 = vsyncadd [#allocation18], %s922
          %s925 = sshll.u32 [#allocation17], 4
          %s926 = int_to_ptr.vmem [resolvable:$true] %s925
          %928 = dma.hbm_to_vmem [thread:$0]  %s23, 16, %s926, [#allocation18]
        $region56: #{_lambda_.1} parent=11 // pred_fallthru
          _
        // Predicated region
        $region57: #{_lambda_.1} parent=11 // pred_check
          %p929 = pneg %p368
        $region58: #{_lambda_.1} parent=11 // pred_check_branch
          %931 = sbr.rel (%p929) target = $region60
        $region59: #{_lambda_.1} parent=11 // pred_region
          %s933 = ssub.s32 36864, 36864
          %934 = vsyncadd [#allocation18], %s933
          %s935 = sshll.u32 [#allocation19], 4
          %s936 = int_to_ptr.vmem [resolvable:$true] %s935
          %941 = dma.hbm_to_vmem [thread:$0]  %s25, 36864, %s936, [#allocation18], 128, 128, 8
        $region60: #{_lambda_.1} parent=11 // pred_fallthru
          _
        // Predicated region
        $region61: #{_lambda_.1} parent=11 // pred_check
          %p942 = pneg %p389
        $region62: #{_lambda_.1} parent=11 // pred_check_branch
          %944 = sbr.rel (%p942) target = $region64
        $region63: #{_lambda_.1} parent=11 // pred_region
          %s946 = ssub.s32 32, 32
          %947 = vsyncadd [#allocation21], %s946
          %s949 = sshll.u32 [#allocation20], 4
          %s950 = int_to_ptr.vmem [resolvable:$true] %s949
          %952 = dma.hbm_to_vmem [thread:$0]  %s27, 32, %s950, [#allocation21]
        $region64: #{_lambda_.1} parent=11 // pred_fallthru
          _
        // Predicated region
        $region65: #{_lambda_.1} parent=11 // pred_check
          %p953 = pneg %p410
        $region66: #{_lambda_.1} parent=11 // pred_check_branch
          %955 = sbr.rel (%p953) target = $region68
        $region67: #{_lambda_.1} parent=11 // pred_region
          %s957 = ssub.s32 4096, 4096
          %958 = vsyncadd [#allocation21], %s957
          %s959 = sshll.u32 [#allocation22], 4
          %s960 = int_to_ptr.vmem [resolvable:$true] %s959
          %965 = dma.hbm_to_vmem [thread:$0]  %s29, 4096, %s960, [#allocation21], 128, 128, 8
        $region68: #{_lambda_.1} parent=11 // pred_fallthru
          _
        // Predicated region
        $region69: #{_lambda_.1} parent=11 // pred_check
          %p966 = pneg %p431
        $region70: #{_lambda_.1} parent=11 // pred_check_branch
          %968 = sbr.rel (%p966) target = $region72
        $region71: #{_lambda_.1} parent=11 // pred_region
          %s970 = ssub.s32 32, 32
          %971 = vsyncadd [#allocation24], %s970
          %s973 = sshll.u32 [#allocation23], 4
          %s974 = int_to_ptr.vmem [resolvable:$true] %s973
          %976 = dma.hbm_to_vmem [thread:$0]  %s31, 32, %s974, [#allocation24]
        $region72: #{_lambda_.1} parent=11 // pred_fallthru
          _
        // Predicated region
        $region73: #{_lambda_.1} parent=11 // pred_check
          %p977 = pneg %p452
        $region74: #{_lambda_.1} parent=11 // pred_check_branch
          %979 = sbr.rel (%p977) target = $region76
        $region75: #{_lambda_.1} parent=11 // pred_region
          %s981 = ssub.s32 4096, 4096
          %982 = vsyncadd [#allocation24], %s981
          %s983 = sshll.u32 [#allocation25], 4
          %s984 = int_to_ptr.vmem [resolvable:$true] %s983
          %989 = dma.hbm_to_vmem [thread:$0]  %s33, 4096, %s984, [#allocation24], 128, 128, 8
        $region76: #{_lambda_.1} parent=11 // pred_fallthru
          _
        // Predicated region
        $region77: #{_lambda_.1} parent=11 // pred_check
          %p990 = pneg %p473
        $region78: #{_lambda_.1} parent=11 // pred_check_branch
          %992 = sbr.rel (%p990) target = $region80
        $region79: #{_lambda_.1} parent=11 // pred_region
          %s994 = ssub.s32 32, 32
          %995 = vsyncadd [#allocation27], %s994
          %s997 = sshll.u32 [#allocation26], 4
          %s998 = int_to_ptr.vmem [resolvable:$true] %s997
          %1000 = dma.hbm_to_vmem [thread:$0]  %s35, 32, %s998, [#allocation27]
        $region80: #{_lambda_.1} parent=11 // pred_fallthru
          _
        // Predicated region
        $region81: #{_lambda_.1} parent=11 // pred_check
          %p1001 = pneg %p494
        $region82: #{_lambda_.1} parent=11 // pred_check_branch
          %1003 = sbr.rel (%p1001) target = $region84
        $region83: #{_lambda_.1} parent=11 // pred_region
          %s1005 = ssub.s32 4096, 4096
          %1006 = vsyncadd [#allocation27], %s1005
          %s1007 = sshll.u32 [#allocation28], 4
          %s1008 = int_to_ptr.vmem [resolvable:$true] %s1007
          %1013 = dma.hbm_to_vmem [thread:$0]  %s37, 4096, %s1008, [#allocation27], 128, 128, 8
        $region84: #{_lambda_.1} parent=11 // pred_fallthru
          _
        // Predicated region
        $region85: #{_lambda_.1} parent=11 // pred_check
          %p1014 = pneg %p515
        $region86: #{_lambda_.1} parent=11 // pred_check_branch
          %1016 = sbr.rel (%p1014) target = $region88
        $region87: #{_lambda_.1} parent=11 // pred_region
          %s1018 = ssub.s32 32, 32
          %1019 = vsyncadd [#allocation30], %s1018
          %s1021 = sshll.u32 [#allocation29], 4
          %s1022 = int_to_ptr.vmem [resolvable:$true] %s1021
          %1024 = dma.hbm_to_vmem [thread:$0]  %s39, 32, %s1022, [#allocation30]
        $region88: #{_lambda_.1} parent=11 // pred_fallthru
          _
        // Predicated region
        $region89: #{_lambda_.1} parent=11 // pred_check
          %p1025 = pneg %p536
        $region90: #{_lambda_.1} parent=11 // pred_check_branch
          %1027 = sbr.rel (%p1025) target = $region92
        $region91: #{_lambda_.1} parent=11 // pred_region
          %s1029 = ssub.s32 4096, 4096
          %1030 = vsyncadd [#allocation30], %s1029
          %s1031 = sshll.u32 [#allocation31], 4
          %s1032 = int_to_ptr.vmem [resolvable:$true] %s1031
          %1037 = dma.hbm_to_vmem [thread:$0]  %s41, 4096, %s1032, [#allocation30], 128, 128, 8
        $region92: #{_lambda_.1} parent=11 // pred_fallthru
          _
        // Predicated region
        $region93: #{_lambda_.1} parent=11 // pred_check
          %p1038 = pneg %p557
        $region94: #{_lambda_.1} parent=11 // pred_check_branch
          %1040 = sbr.rel (%p1038) target = $region96
        $region95: #{_lambda_.1} parent=11 // pred_region
          %s1042 = ssub.s32 32, 32
          %1043 = vsyncadd [#allocation33], %s1042
          %s1045 = sshll.u32 [#allocation32], 4
          %s1046 = int_to_ptr.vmem [resolvable:$true] %s1045
          %1048 = dma.hbm_to_vmem [thread:$0]  %s43, 32, %s1046, [#allocation33]
        $region96: #{_lambda_.1} parent=11 // pred_fallthru
          _
        // Predicated region
        $region97: #{_lambda_.1} parent=11 // pred_check
          %p1049 = pneg %p578
        $region98: #{_lambda_.1} parent=11 // pred_check_branch
          %1051 = sbr.rel (%p1049) target = $region100
        $region99: #{_lambda_.1} parent=11 // pred_region
          %s1053 = ssub.s32 2048, 2048
          %1054 = vsyncadd [#allocation33], %s1053
          %s1055 = sshll.u32 [#allocation34], 4
          %s1056 = int_to_ptr.vmem [resolvable:$true] %s1055
          %1061 = dma.hbm_to_vmem [thread:$0]  %s45, 2048, %s1056, [#allocation33], 64, 64, 4
        $region100: #{_lambda_.1} parent=11 // pred_fallthru
          _
        // Predicated region
        $region101: #{_lambda_.1} parent=11 // pred_check
          %p1062 = pneg %p599
        $region102: #{_lambda_.1} parent=11 // pred_check_branch
          %1064 = sbr.rel (%p1062) target = $region104
        $region103: #{_lambda_.1} parent=11 // pred_region
          %s1066 = ssub.s32 16, 16
          %1067 = vsyncadd [#allocation36], %s1066
          %s1069 = sshll.u32 [#allocation35], 4
          %s1070 = int_to_ptr.vmem [resolvable:$true] %s1069
          %1072 = dma.hbm_to_vmem [thread:$0]  %s47, 16, %s1070, [#allocation36]
        $region104: #{_lambda_.1} parent=11 // pred_fallthru
          _
        // Predicated region
        $region105: #{_lambda_.1} parent=11 // pred_check
          %p1073 = pneg %p620
        $region106: #{_lambda_.1} parent=11 // pred_check_branch
          %1075 = sbr.rel (%p1073) target = $region108
        $region107: #{_lambda_.1} parent=11 // pred_region
          %s1077 = ssub.s32 1024, 1024
          %1078 = vsyncadd [#allocation36], %s1077
          %s1079 = sshll.u32 [#allocation37], 4
          %s1080 = int_to_ptr.vmem [resolvable:$true] %s1079
          %1085 = dma.hbm_to_vmem [thread:$0]  %s49, 1024, %s1080, [#allocation36], 64, 64, 4
        $region108: #{_lambda_.1} parent=11 // pred_fallthru
          _
        // Predicated region
        $region109: #{_lambda_.1} parent=11 // pred_check
          %p1086 = pneg %p641
        $region110: #{_lambda_.1} parent=11 // pred_check_branch
          %1088 = sbr.rel (%p1086) target = $region112
        $region111: #{_lambda_.1} parent=11 // pred_region
          %s1090 = ssub.s32 16, 16
          %1091 = vsyncadd [#allocation39], %s1090
          %s1093 = sshll.u32 [#allocation38], 4
          %s1094 = int_to_ptr.vmem [resolvable:$true] %s1093
          %1096 = dma.hbm_to_vmem [thread:$0]  %s51, 16, %s1094, [#allocation39]
        $region112: #{_lambda_.1} parent=11 // pred_fallthru
          _
        // Predicated region
        $region113: #{_lambda_.1} parent=11 // pred_check
          %p1097 = pneg %p662
        $region114: #{_lambda_.1} parent=11 // pred_check_branch
          %1099 = sbr.rel (%p1097) target = $region116
        $region115: #{_lambda_.1} parent=11 // pred_region
          %s1101 = ssub.s32 2048, 2048
          %1102 = vsyncadd [#allocation39], %s1101
          %s1103 = sshll.u32 [#allocation40], 4
          %s1104 = int_to_ptr.vmem [resolvable:$true] %s1103
          %1109 = dma.hbm_to_vmem [thread:$0]  %s53, 2048, %s1104, [#allocation39], 64, 64, 4
        $region116: #{_lambda_.1} parent=11 // pred_fallthru
          _
        // Predicated region
        $region117: #{_lambda_.1} parent=11 // pred_check
          %p1110 = pneg %p683
        $region118: #{_lambda_.1} parent=11 // pred_check_branch
          %1112 = sbr.rel (%p1110) target = $region120
        $region119: #{_lambda_.1} parent=11 // pred_region
          %s1114 = ssub.s32 16, 16
          %1115 = vsyncadd [#allocation42], %s1114
          %s1117 = sshll.u32 [#allocation41], 4
          %s1118 = int_to_ptr.vmem [resolvable:$true] %s1117
          %1120 = dma.hbm_to_vmem [thread:$0]  %s55, 16, %s1118, [#allocation42]
        $region120: #{_lambda_.1} parent=11 // pred_fallthru
          _
        // Predicated region
        $region121: #{_lambda_.1} parent=11 // pred_check
          %p1121 = pneg %p704
        $region122: #{_lambda_.1} parent=11 // pred_check_branch
          %1123 = sbr.rel (%p1121) target = $region124
        $region123: #{_lambda_.1} parent=11 // pred_region
          %s1125 = ssub.s32 1024, 1024
          %1126 = vsyncadd [#allocation42], %s1125
          %s1127 = sshll.u32 [#allocation43], 4
          %s1128 = int_to_ptr.vmem [resolvable:$true] %s1127
          %1133 = dma.hbm_to_vmem [thread:$0]  %s57, 1024, %s1128, [#allocation42], 64, 64, 4
        $region124: #{_lambda_.1} parent=11 // pred_fallthru
          _
        // Predicated region
        $region125: #{_lambda_.1} parent=11 // pred_check
          %p1134 = pneg %p725
        $region126: #{_lambda_.1} parent=11 // pred_check_branch
          %1136 = sbr.rel (%p1134) target = $region128
        $region127: #{_lambda_.1} parent=11 // pred_region
          %s1138 = ssub.s32 16, 16
          %1139 = vsyncadd [#allocation45], %s1138
          %s1141 = sshll.u32 [#allocation44], 4
          %s1142 = int_to_ptr.vmem [resolvable:$true] %s1141
          %1144 = dma.hbm_to_vmem [thread:$0]  %s59, 16, %s1142, [#allocation45]
        $region128: #{_lambda_.1} parent=11 // pred_fallthru
          _
        // Predicated region
        $region129: #{_lambda_.1} parent=11 // pred_check
          %p1145 = pneg %p746
        $region130: #{_lambda_.1} parent=11 // pred_check_branch
          %1147 = sbr.rel (%p1145) target = $region132
        $region131: #{_lambda_.1} parent=11 // pred_region
          %s1149 = ssub.s32 1024, 1024
          %1150 = vsyncadd [#allocation45], %s1149
          %s1151 = sshll.u32 [#allocation46], 4
          %s1152 = int_to_ptr.vmem [resolvable:$true] %s1151
          %1157 = dma.hbm_to_vmem [thread:$0]  %s61, 1024, %s1152, [#allocation45], 64, 64, 4
        $region132: #{_lambda_.1} parent=11 // pred_fallthru
          _
        // Predicated region
        $region133: #{_lambda_.1} parent=11 // pred_check
          %p1158 = pneg %p767
        $region134: #{_lambda_.1} parent=11 // pred_check_branch
          %1160 = sbr.rel (%p1158) target = $region136
        $region135: #{_lambda_.1} parent=11 // pred_region
          %s1162 = ssub.s32 16, 16
          %1163 = vsyncadd [#allocation48], %s1162
          %s1165 = sshll.u32 [#allocation47], 4
          %s1166 = int_to_ptr.vmem [resolvable:$true] %s1165
          %1168 = dma.hbm_to_vmem [thread:$0]  %s63, 16, %s1166, [#allocation48]
        $region136: #{_lambda_.1} parent=11 // pred_fallthru
          _
      $region12: #{_lambda_.1} parent=5 // pred_fallthru
        _
      %p1169 = scmp.lt.s32.totalorder %s90, 2
      // Predicated region
      $region137: #{_lambda_.1} parent=5 // pred_check
        %p1170 = pneg %p1169
      $region138: #{_lambda_.1} parent=5 // pred_check_branch
        %1172 = sbr.rel (%p1170) target = $region140
      $region139: #{_lambda_.1} parent=5 // pred_region
        // Predicated region
        $region141: #{_lambda_.1} parent=139 // pred_check
          %p1173 = pneg %p110
        $region142: #{_lambda_.1} parent=139 // pred_check_branch
          %1175 = sbr.rel (%p1173) target = $region144
        $region143: #{_lambda_.1} parent=139 // pred_region
          %p1176 = scmp.lt.s32.totalorder %s90, 1
          %s1177 = scalar_select %p1176, %s90, 1
          %s1178 = smul.addr %s1177, 32
          %s1179 = smul.addr %s1178, 8
          %s1180 = scalar_lea.vmem %s1, %s1179
        $region144: #{_lambda_.1} parent=139 // pred_fallthru
          _
      $region140: #{_lambda_.1} parent=5 // pred_fallthru
        _
      %p1181 = scmp.le.s32.totalorder 1, %s90
      %p1182 = scmp.lt.s32.totalorder %s90, 3
      %p1183 = pnand %p1181, %p1182
      %p1184 = pneg %p1183
      // Predicated region
      $region145: #{_lambda_.1} parent=5 // pred_check
        _
      $region146: #{_lambda_.1} parent=5 // pred_check_branch
        %1186 = sbr.rel (%p1183) target = $region148
      $region147: #{_lambda_.1} parent=5 // pred_region
        %s1187 = ssub.s32 %s90, 1
        // Predicated region
        $region149: #{_lambda_.1} parent=147 // pred_check
          %p1188 = pneg %p137
        $region150: #{_lambda_.1} parent=147 // pred_check_branch
          %1190 = sbr.rel (%p1188) target = $region152
        $region151: #{_lambda_.1} parent=147 // pred_region
          %1191 = dma.done [#allocation3], 32
        $region152: #{_lambda_.1} parent=147 // pred_fallthru
          _
        // Predicated region
        $region153: #{_lambda_.1} parent=147 // pred_check
          %p1192 = pneg %p158
        $region154: #{_lambda_.1} parent=147 // pred_check_branch
          %1194 = sbr.rel (%p1192) target = $region156
        $region155: #{_lambda_.1} parent=147 // pred_region
          %1195 = dma.done [#allocation6], 16
        $region156: #{_lambda_.1} parent=147 // pred_fallthru
          _
        // Predicated region
        $region157: #{_lambda_.1} parent=147 // pred_check
          %p1196 = pneg %p179
        $region158: #{_lambda_.1} parent=147 // pred_check_branch
          %1198 = sbr.rel (%p1196) target = $region160
        $region159: #{_lambda_.1} parent=147 // pred_region
          %1199 = dma.done [#allocation6], 1280
        $region160: #{_lambda_.1} parent=147 // pred_fallthru
          _
        // Predicated region
        $region161: #{_lambda_.1} parent=147 // pred_check
          %p1200 = pneg %p200
        $region162: #{_lambda_.1} parent=147 // pred_check_branch
          %1202 = sbr.rel (%p1200) target = $region164
        $region163: #{_lambda_.1} parent=147 // pred_region
          %1203 = dma.done [#allocation9], 16
        $region164: #{_lambda_.1} parent=147 // pred_fallthru
          _
        // Predicated region
        $region165: #{_lambda_.1} parent=147 // pred_check
          %p1204 = pneg %p221
        $region166: #{_lambda_.1} parent=147 // pred_check_branch
          %1206 = sbr.rel (%p1204) target = $region168
        $region167: #{_lambda_.1} parent=147 // pred_region
          %1207 = dma.done [#allocation9], 2560
        $region168: #{_lambda_.1} parent=147 // pred_fallthru
          _
        // Predicated region
        $region169: #{_lambda_.1} parent=147 // pred_check
          %p1208 = pneg %p242
        $region170: #{_lambda_.1} parent=147 // pred_check_branch
          %1210 = sbr.rel (%p1208) target = $region172
        $region171: #{_lambda_.1} parent=147 // pred_region
          %1211 = dma.done [#allocation12], 16
        $region172: #{_lambda_.1} parent=147 // pred_fallthru
          _
        // Predicated region
        $region173: #{_lambda_.1} parent=147 // pred_check
          %p1212 = pneg %p263
        $region174: #{_lambda_.1} parent=147 // pred_check_branch
          %1214 = sbr.rel (%p1212) target = $region176
        $region175: #{_lambda_.1} parent=147 // pred_region
          %1215 = dma.done [#allocation12], 3072
        $region176: #{_lambda_.1} parent=147 // pred_fallthru
          _
        // Predicated region
        $region177: #{_lambda_.1} parent=147 // pred_check
          %p1216 = pneg %p284
        $region178: #{_lambda_.1} parent=147 // pred_check_branch
          %1218 = sbr.rel (%p1216) target = $region180
        $region179: #{_lambda_.1} parent=147 // pred_region
          %1219 = dma.done [#allocation15], 48
        $region180: #{_lambda_.1} parent=147 // pred_fallthru
          _
        // Predicated region
        $region181: #{_lambda_.1} parent=147 // pred_check
          %p1220 = pneg %p326
        $region182: #{_lambda_.1} parent=147 // pred_check_branch
          %1222 = sbr.rel (%p1220) target = $region184
        $region183: #{_lambda_.1} parent=147 // pred_region
          %1223 = dma.done [#allocation15], 1024
        $region184: #{_lambda_.1} parent=147 // pred_fallthru
          _
        // Predicated region
        $region185: #{_lambda_.1} parent=147 // pred_check
          %p1224 = pneg %p347
        $region186: #{_lambda_.1} parent=147 // pred_check_branch
          %1226 = sbr.rel (%p1224) target = $region188
        $region187: #{_lambda_.1} parent=147 // pred_region
          %1227 = dma.done [#allocation18], 16
        $region188: #{_lambda_.1} parent=147 // pred_fallthru
          _
        // Predicated region
        $region189: #{_lambda_.1} parent=147 // pred_check
          %p1228 = pneg %p368
        $region190: #{_lambda_.1} parent=147 // pred_check_branch
          %1230 = sbr.rel (%p1228) target = $region192
        $region191: #{_lambda_.1} parent=147 // pred_region
          %1231 = dma.done [#allocation18], 36864
        $region192: #{_lambda_.1} parent=147 // pred_fallthru
          _
        // Predicated region
        $region193: #{_lambda_.1} parent=147 // pred_check
          %p1232 = pneg %p389
        $region194: #{_lambda_.1} parent=147 // pred_check_branch
          %1234 = sbr.rel (%p1232) target = $region196
        $region195: #{_lambda_.1} parent=147 // pred_region
          %1235 = dma.done [#allocation21], 32
        $region196: #{_lambda_.1} parent=147 // pred_fallthru
          _
        // Predicated region
        $region197: #{_lambda_.1} parent=147 // pred_check
          %p1236 = pneg %p410
        $region198: #{_lambda_.1} parent=147 // pred_check_branch
          %1238 = sbr.rel (%p1236) target = $region200
        $region199: #{_lambda_.1} parent=147 // pred_region
          %1239 = dma.done [#allocation21], 4096
        $region200: #{_lambda_.1} parent=147 // pred_fallthru
          _
        // Predicated region
        $region201: #{_lambda_.1} parent=147 // pred_check
          %p1240 = pneg %p431
        $region202: #{_lambda_.1} parent=147 // pred_check_branch
          %1242 = sbr.rel (%p1240) target = $region204
        $region203: #{_lambda_.1} parent=147 // pred_region
          %1243 = dma.done [#allocation24], 32
        $region204: #{_lambda_.1} parent=147 // pred_fallthru
          _
        // Predicated region
        $region205: #{_lambda_.1} parent=147 // pred_check
          %p1244 = pneg %p452
        $region206: #{_lambda_.1} parent=147 // pred_check_branch
          %1246 = sbr.rel (%p1244) target = $region208
        $region207: #{_lambda_.1} parent=147 // pred_region
          %1247 = dma.done [#allocation24], 4096
        $region208: #{_lambda_.1} parent=147 // pred_fallthru
          _
        // Predicated region
        $region209: #{_lambda_.1} parent=147 // pred_check
          %p1248 = pneg %p473
        $region210: #{_lambda_.1} parent=147 // pred_check_branch
          %1250 = sbr.rel (%p1248) target = $region212
        $region211: #{_lambda_.1} parent=147 // pred_region
          %1251 = dma.done [#allocation27], 32
        $region212: #{_lambda_.1} parent=147 // pred_fallthru
          _
        // Predicated region
        $region213: #{_lambda_.1} parent=147 // pred_check
          %p1252 = pneg %p494
        $region214: #{_lambda_.1} parent=147 // pred_check_branch
          %1254 = sbr.rel (%p1252) target = $region216
        $region215: #{_lambda_.1} parent=147 // pred_region
          %1255 = dma.done [#allocation27], 4096
        $region216: #{_lambda_.1} parent=147 // pred_fallthru
          _
        // Predicated region
        $region217: #{_lambda_.1} parent=147 // pred_check
          %p1256 = pneg %p515
        $region218: #{_lambda_.1} parent=147 // pred_check_branch
          %1258 = sbr.rel (%p1256) target = $region220
        $region219: #{_lambda_.1} parent=147 // pred_region
          %1259 = dma.done [#allocation30], 32
        $region220: #{_lambda_.1} parent=147 // pred_fallthru
          _
        // Predicated region
        $region221: #{_lambda_.1} parent=147 // pred_check
          %p1260 = pneg %p536
        $region222: #{_lambda_.1} parent=147 // pred_check_branch
          %1262 = sbr.rel (%p1260) target = $region224
        $region223: #{_lambda_.1} parent=147 // pred_region
          %1263 = dma.done [#allocation30], 4096
        $region224: #{_lambda_.1} parent=147 // pred_fallthru
          _
        // Predicated region
        $region225: #{_lambda_.1} parent=147 // pred_check
          %p1264 = pneg %p557
        $region226: #{_lambda_.1} parent=147 // pred_check_branch
          %1266 = sbr.rel (%p1264) target = $region228
        $region227: #{_lambda_.1} parent=147 // pred_region
          %1267 = dma.done [#allocation33], 32
        $region228: #{_lambda_.1} parent=147 // pred_fallthru
          _
        // Predicated region
        $region229: #{_lambda_.1} parent=147 // pred_check
          %p1268 = pneg %p578
        $region230: #{_lambda_.1} parent=147 // pred_check_branch
          %1270 = sbr.rel (%p1268) target = $region232
        $region231: #{_lambda_.1} parent=147 // pred_region
          %1271 = dma.done [#allocation33], 2048
        $region232: #{_lambda_.1} parent=147 // pred_fallthru
          _
        // Predicated region
        $region233: #{_lambda_.1} parent=147 // pred_check
          %p1272 = pneg %p599
        $region234: #{_lambda_.1} parent=147 // pred_check_branch
          %1274 = sbr.rel (%p1272) target = $region236
        $region235: #{_lambda_.1} parent=147 // pred_region
          %1275 = dma.done [#allocation36], 16
        $region236: #{_lambda_.1} parent=147 // pred_fallthru
          _
        // Predicated region
        $region237: #{_lambda_.1} parent=147 // pred_check
          %p1276 = pneg %p620
        $region238: #{_lambda_.1} parent=147 // pred_check_branch
          %1278 = sbr.rel (%p1276) target = $region240
        $region239: #{_lambda_.1} parent=147 // pred_region
          %1279 = dma.done [#allocation36], 1024
        $region240: #{_lambda_.1} parent=147 // pred_fallthru
          _
        // Predicated region
        $region241: #{_lambda_.1} parent=147 // pred_check
          %p1280 = pneg %p641
        $region242: #{_lambda_.1} parent=147 // pred_check_branch
          %1282 = sbr.rel (%p1280) target = $region244
        $region243: #{_lambda_.1} parent=147 // pred_region
          %1283 = dma.done [#allocation39], 16
        $region244: #{_lambda_.1} parent=147 // pred_fallthru
          _
        // Predicated region
        $region245: #{_lambda_.1} parent=147 // pred_check
          %p1284 = pneg %p662
        $region246: #{_lambda_.1} parent=147 // pred_check_branch
          %1286 = sbr.rel (%p1284) target = $region248
        $region247: #{_lambda_.1} parent=147 // pred_region
          %1287 = dma.done [#allocation39], 2048
        $region248: #{_lambda_.1} parent=147 // pred_fallthru
          _
        // Predicated region
        $region249: #{_lambda_.1} parent=147 // pred_check
          %p1288 = pneg %p683
        $region250: #{_lambda_.1} parent=147 // pred_check_branch
          %1290 = sbr.rel (%p1288) target = $region252
        $region251: #{_lambda_.1} parent=147 // pred_region
          %1291 = dma.done [#allocation42], 16
        $region252: #{_lambda_.1} parent=147 // pred_fallthru
          _
        // Predicated region
        $region253: #{_lambda_.1} parent=147 // pred_check
          %p1292 = pneg %p704
        $region254: #{_lambda_.1} parent=147 // pred_check_branch
          %1294 = sbr.rel (%p1292) target = $region256
        $region255: #{_lambda_.1} parent=147 // pred_region
          %1295 = dma.done [#allocation42], 1024
        $region256: #{_lambda_.1} parent=147 // pred_fallthru
          _
        // Predicated region
        $region257: #{_lambda_.1} parent=147 // pred_check
          %p1296 = pneg %p725
        $region258: #{_lambda_.1} parent=147 // pred_check_branch
          %1298 = sbr.rel (%p1296) target = $region260
        $region259: #{_lambda_.1} parent=147 // pred_region
          %1299 = dma.done [#allocation45], 16
        $region260: #{_lambda_.1} parent=147 // pred_fallthru
          _
        // Predicated region
        $region261: #{_lambda_.1} parent=147 // pred_check
          %p1300 = pneg %p746
        $region262: #{_lambda_.1} parent=147 // pred_check_branch
          %1302 = sbr.rel (%p1300) target = $region264
        $region263: #{_lambda_.1} parent=147 // pred_region
          %1303 = dma.done [#allocation45], 1024
        $region264: #{_lambda_.1} parent=147 // pred_fallthru
          _
        // Predicated region
        $region265: #{_lambda_.1} parent=147 // pred_check
          %p1304 = pneg %p767
        $region266: #{_lambda_.1} parent=147 // pred_check_branch
          %1306 = sbr.rel (%p1304) target = $region268
        $region267: #{_lambda_.1} parent=147 // pred_region
          %1307 = dma.done [#allocation48], 16
        $region268: #{_lambda_.1} parent=147 // pred_fallthru
          _
        %p1308 = scmp.lt.s32.totalorder %s95, 1
        %s1309 = scalar_select %p1308, %s95, 1
        %s1310 = smul.addr %s1309, 32
        %s1311 = smul.addr %s1310, 8
        %s1312 = scalar_lea.vmem %s1, %s1311
        %p1313 = pneg %p116
        %p1314 = pneg %p113
        %p1315 = pneg %p137
        %p1316 = pneg %p134
        %p1317 = pneg %p158
        %p1318 = pneg %p155
        %p1319 = pneg %p179
        %p1320 = pneg %p176
        %p1321 = pneg %p200
        %p1322 = pneg %p197
        %p1323 = pneg %p221
        %p1324 = pneg %p218
        %p1325 = pneg %p242
        %p1326 = pneg %p239
        %p1327 = pneg %p263
        %p1328 = pneg %p260
        %p1329 = pneg %p284
        %p1330 = pneg %p281
        %p1331 = pneg %p305
        %p1332 = pneg %p302
        %p1333 = pneg %p326
        %p1334 = pneg %p323
        %p1335 = pneg %p347
        %p1336 = pneg %p344
        %p1337 = pneg %p368
        %p1338 = pneg %p365
        %p1339 = pneg %p389
        %p1340 = pneg %p386
        %p1341 = pneg %p410
        %p1342 = pneg %p407
        %p1343 = pneg %p431
        %p1344 = pneg %p428
        %p1345 = pneg %p452
        %p1346 = pneg %p449
        %p1347 = pneg %p473
        %p1348 = pneg %p470
        %p1349 = pneg %p494
        %p1350 = pneg %p491
        %p1351 = pneg %p515
        %p1352 = pneg %p512
        %p1353 = pneg %p536
        %p1354 = pneg %p533
        %p1355 = pneg %p557
        %p1356 = pneg %p554
        %p1357 = pneg %p578
        %p1358 = pneg %p575
        %p1359 = pneg %p599
        %p1360 = pneg %p596
        %p1361 = pneg %p620
        %p1362 = pneg %p617
        %p1363 = pneg %p641
        %p1364 = pneg %p638
        %p1365 = pneg %p662
        %p1366 = pneg %p659
        %p1367 = pneg %p683
        %p1368 = pneg %p680
        %p1369 = pneg %p704
        %p1370 = pneg %p701
        %p1371 = pneg %p725
        %p1372 = pneg %p722
        %p1373 = pneg %p746
        %p1374 = pneg %p743
        %p1375 = pneg %p767
        %p1376 = pneg %p764
        %p1377 = pneg %p793
        %p1378 = pneg %p790
        %s1379 = sand.u32 %s780, 1
        %s1380 = scalar_lea.sflag [#allocation4], %s1379
        %s1381 = sand.u32 %s780, 1
        %s1382 = scalar_lea.vmem [#allocation49], %s1381
        %p1383 = scmp.lt.s32.totalorder %s95, 1
        %s1384 = scalar_select %p1383, %s95, 1
        %s1385 = smul.addr %s1384, 32
        %s1386 = smul.addr %s1385, 8
        %s1387 = scalar_lea.vmem %s1, %s1386
        %v1389 = vld [vmem:[%s1387] sm:$0xff]
        %v1390 = vld [vmem:[%s1387 + $0x8] sm:$0xff]
        %v1391 = vld [vmem:[%s1387 + $0x10] sm:$0xff]
        %v1392 = vld [vmem:[%s1387 + $0x18] sm:$0xff]
        %v1393 = vld [vmem:[%s1387 + $0x20] sm:$0xff]
        %v1394 = vld [vmem:[%s1387 + $0x28] sm:$0xff]
        %v1395 = vld [vmem:[%s1387 + $0x30] sm:$0xff]
        %v1396 = vld [vmem:[%s1387 + $0x38] sm:$0xff]
        %v1397 = vld [vmem:[%s1387 + $0x40] sm:$0xff]
        %v1398 = vld [vmem:[%s1387 + $0x48] sm:$0xff]
        %v1399 = vld [vmem:[%s1387 + $0x50] sm:$0xff]
        %v1400 = vld [vmem:[%s1387 + $0x58] sm:$0xff]
        %v1401 = vld [vmem:[%s1387 + $0x60] sm:$0xff]
        %v1402 = vld [vmem:[%s1387 + $0x68] sm:$0xff]
        %v1403 = vld [vmem:[%s1387 + $0x70] sm:$0xff]
        %v1404 = vld [vmem:[%s1387 + $0x78] sm:$0xff]
        %v1405 = vld [vmem:[%s1387 + $0x80] sm:$0xff]
        %v1406 = vld [vmem:[%s1387 + $0x88] sm:$0xff]
        %v1407 = vld [vmem:[%s1387 + $0x90] sm:$0xff]
        %v1408 = vld [vmem:[%s1387 + $0x98] sm:$0xff]
        %v1409 = vld [vmem:[%s1387 + $0xa0] sm:$0xff]
        %v1410 = vld [vmem:[%s1387 + $0xa8] sm:$0xff]
        %v1411 = vld [vmem:[%s1387 + $0xb0] sm:$0xff]
        %v1412 = vld [vmem:[%s1387 + $0xb8] sm:$0xff]
        %v1413 = vld [vmem:[%s1387 + $0xc0] sm:$0xff]
        %v1414 = vld [vmem:[%s1387 + $0xc8] sm:$0xff]
        %v1415 = vld [vmem:[%s1387 + $0xd0] sm:$0xff]
        %v1416 = vld [vmem:[%s1387 + $0xd8] sm:$0xff]
        %v1417 = vld [vmem:[%s1387 + $0xe0] sm:$0xff]
        %v1418 = vld [vmem:[%s1387 + $0xe8] sm:$0xff]
        %v1419 = vld [vmem:[%s1387 + $0xf0] sm:$0xff]
        %v1420 = vld [vmem:[%s1387 + $0xf8] sm:$0xff]
        %v1421 = vld [vmem:[#allocation2] sm:$0x1]
        %1423 = vset.pattern.permute.xlu0 0
        %1424 = vperm.xlu0 %1423, %v1389
        %v1425 = vpop.permute.xlu0 %1424
        %1428 = vset.pattern.permute.xlu0 0
        %1429 = vperm.xlu0 %1428, %v1390
        %v1430 = vpop.permute.xlu0 %1429
        %1433 = vset.pattern.permute.xlu0 0
        %1434 = vperm.xlu0 %1433, %v1391
        %v1435 = vpop.permute.xlu0 %1434
        %1438 = vset.pattern.permute.xlu0 0
        %1439 = vperm.xlu0 %1438, %v1392
        %v1440 = vpop.permute.xlu0 %1439
        %1443 = vset.pattern.permute.xlu0 0
        %1444 = vperm.xlu0 %1443, %v1393
        %v1445 = vpop.permute.xlu0 %1444
        %1448 = vset.pattern.permute.xlu0 0
        %1449 = vperm.xlu0 %1448, %v1394
        %v1450 = vpop.permute.xlu0 %1449
        %1453 = vset.pattern.permute.xlu0 0
        %1454 = vperm.xlu0 %1453, %v1395
        %v1455 = vpop.permute.xlu0 %1454
        %1458 = vset.pattern.permute.xlu0 0
        %1459 = vperm.xlu0 %1458, %v1396
        %v1460 = vpop.permute.xlu0 %1459
        %1463 = vset.pattern.permute.xlu0 0
        %1464 = vperm.xlu0 %1463, %v1397
        %v1465 = vpop.permute.xlu0 %1464
        %1468 = vset.pattern.permute.xlu0 0
        %1469 = vperm.xlu0 %1468, %v1398
        %v1470 = vpop.permute.xlu0 %1469
        %1473 = vset.pattern.permute.xlu0 0
        %1474 = vperm.xlu0 %1473, %v1399
        %v1475 = vpop.permute.xlu0 %1474
        %1478 = vset.pattern.permute.xlu0 0
        %1479 = vperm.xlu0 %1478, %v1400
        %v1480 = vpop.permute.xlu0 %1479
        %1483 = vset.pattern.permute.xlu0 0
        %1484 = vperm.xlu0 %1483, %v1401
        %v1485 = vpop.permute.xlu0 %1484
        %1488 = vset.pattern.permute.xlu0 0
        %1489 = vperm.xlu0 %1488, %v1402
        %v1490 = vpop.permute.xlu0 %1489
        %1493 = vset.pattern.permute.xlu0 0
        %1494 = vperm.xlu0 %1493, %v1403
        %v1495 = vpop.permute.xlu0 %1494
        %1498 = vset.pattern.permute.xlu0 0
        %1499 = vperm.xlu0 %1498, %v1404
        %v1500 = vpop.permute.xlu0 %1499
        %1503 = vset.pattern.permute.xlu0 0
        %1504 = vperm.xlu0 %1503, %v1405
        %v1505 = vpop.permute.xlu0 %1504
        %1508 = vset.pattern.permute.xlu0 0
        %1509 = vperm.xlu0 %1508, %v1406
        %v1510 = vpop.permute.xlu0 %1509
        %1513 = vset.pattern.permute.xlu0 0
        %1514 = vperm.xlu0 %1513, %v1407
        %v1515 = vpop.permute.xlu0 %1514
        %1518 = vset.pattern.permute.xlu0 0
        %1519 = vperm.xlu0 %1518, %v1408
        %v1520 = vpop.permute.xlu0 %1519
        %1523 = vset.pattern.permute.xlu0 0
        %1524 = vperm.xlu0 %1523, %v1409
        %v1525 = vpop.permute.xlu0 %1524
        %1528 = vset.pattern.permute.xlu0 0
        %1529 = vperm.xlu0 %1528, %v1410
        %v1530 = vpop.permute.xlu0 %1529
        %1533 = vset.pattern.permute.xlu0 0
        %1534 = vperm.xlu0 %1533, %v1411
        %v1535 = vpop.permute.xlu0 %1534
        %1538 = vset.pattern.permute.xlu0 0
        %1539 = vperm.xlu0 %1538, %v1412
        %v1540 = vpop.permute.xlu0 %1539
        %1543 = vset.pattern.permute.xlu0 0
        %1544 = vperm.xlu0 %1543, %v1413
        %v1545 = vpop.permute.xlu0 %1544
        %1548 = vset.pattern.permute.xlu0 0
        %1549 = vperm.xlu0 %1548, %v1414
        %v1550 = vpop.permute.xlu0 %1549
        %1553 = vset.pattern.permute.xlu0 0
        %1554 = vperm.xlu0 %1553, %v1415
        %v1555 = vpop.permute.xlu0 %1554
        %1558 = vset.pattern.permute.xlu0 0
        %1559 = vperm.xlu0 %1558, %v1416
        %v1560 = vpop.permute.xlu0 %1559
        %1563 = vset.pattern.permute.xlu0 0
        %1564 = vperm.xlu0 %1563, %v1417
        %v1565 = vpop.permute.xlu0 %1564
        %1568 = vset.pattern.permute.xlu0 0
        %1569 = vperm.xlu0 %1568, %v1418
        %v1570 = vpop.permute.xlu0 %1569
        %1573 = vset.pattern.permute.xlu0 0
        %1574 = vperm.xlu0 %1573, %v1419
        %v1575 = vpop.permute.xlu0 %1574
        %1578 = vset.pattern.permute.xlu0 0
        %1579 = vperm.xlu0 %1578, %v1420
        %v1580 = vpop.permute.xlu0 %1579
        %v1582 = vlaneseq
        %v1583 = vshrl.u32 %v1582, 7
        %v1584 = vsub.s32 0, %v1583
        %v1585 = vrot.slane %v1421, %v1584
        %v1586 = vmul.f32 %v1425, %v1585
        %v1587 = vmul.f32 %v1430, %v1585
        %v1588 = vmul.f32 %v1435, %v1585
        %v1589 = vmul.f32 %v1440, %v1585
        %v1590 = vmul.f32 %v1445, %v1585
        %v1591 = vmul.f32 %v1450, %v1585
        %v1592 = vmul.f32 %v1455, %v1585
        %v1593 = vmul.f32 %v1460, %v1585
        %v1594 = vmul.f32 %v1465, %v1585
        %v1595 = vmul.f32 %v1470, %v1585
        %v1596 = vmul.f32 %v1475, %v1585
        %v1597 = vmul.f32 %v1480, %v1585
        %v1598 = vmul.f32 %v1485, %v1585
        %v1599 = vmul.f32 %v1490, %v1585
        %v1600 = vmul.f32 %v1495, %v1585
        %v1601 = vmul.f32 %v1500, %v1585
        %v1602 = vmul.f32 %v1505, %v1585
        %v1603 = vmul.f32 %v1510, %v1585
        %v1604 = vmul.f32 %v1515, %v1585
        %v1605 = vmul.f32 %v1520, %v1585
        %v1606 = vmul.f32 %v1525, %v1585
        %v1607 = vmul.f32 %v1530, %v1585
        %v1608 = vmul.f32 %v1535, %v1585
        %v1609 = vmul.f32 %v1540, %v1585
        %v1610 = vmul.f32 %v1545, %v1585
        %v1611 = vmul.f32 %v1550, %v1585
        %v1612 = vmul.f32 %v1555, %v1585
        %v1613 = vmul.f32 %v1560, %v1585
        %v1614 = vmul.f32 %v1565, %v1585
        %v1615 = vmul.f32 %v1570, %v1585
        %v1616 = vmul.f32 %v1575, %v1585
        %v1617 = vmul.f32 %v1580, %v1585
        %v1618 = vadd.f32 %v1586, 0.0
        %v1619 = vadd.f32 %v1587, 0.0
        %v1620 = vadd.f32 %v1588, 0.0
        %v1621 = vadd.f32 %v1589, 0.0
        %v1622 = vadd.f32 %v1590, 0.0
        %v1623 = vadd.f32 %v1591, 0.0
        %v1624 = vadd.f32 %v1592, 0.0
        %v1625 = vadd.f32 %v1593, 0.0
        %v1626 = vadd.f32 %v1594, 0.0
        %v1627 = vadd.f32 %v1595, 0.0
        %v1628 = vadd.f32 %v1596, 0.0
        %v1629 = vadd.f32 %v1597, 0.0
        %v1630 = vadd.f32 %v1598, 0.0
        %v1631 = vadd.f32 %v1599, 0.0
        %v1632 = vadd.f32 %v1600, 0.0
        %v1633 = vadd.f32 %v1601, 0.0
        %v1634 = vadd.f32 %v1602, 0.0
        %v1635 = vadd.f32 %v1603, 0.0
        %v1636 = vadd.f32 %v1604, 0.0
        %v1637 = vadd.f32 %v1605, 0.0
        %v1638 = vadd.f32 %v1606, 0.0
        %v1639 = vadd.f32 %v1607, 0.0
        %v1640 = vadd.f32 %v1608, 0.0
        %v1641 = vadd.f32 %v1609, 0.0
        %v1642 = vadd.f32 %v1610, 0.0
        %v1643 = vadd.f32 %v1611, 0.0
        %v1644 = vadd.f32 %v1612, 0.0
        %v1645 = vadd.f32 %v1613, 0.0
        %v1646 = vadd.f32 %v1614, 0.0
        %v1647 = vadd.f32 %v1615, 0.0
        %v1648 = vadd.f32 %v1616, 0.0
        %v1649 = vadd.f32 %v1617, 0.0
        %v1650 = vld [vmem:[#allocation2 + $0x1] sm:$0x1]
        %1651 = vset.pattern.permute.xlu0 1
        %1652 = vperm.xlu0 %1651, %v1389
        %v1653 = vpop.permute.xlu0 %1652
        %1655 = vset.pattern.permute.xlu0 1
        %1656 = vperm.xlu0 %1655, %v1390
        %v1657 = vpop.permute.xlu0 %1656
        %1659 = vset.pattern.permute.xlu0 1
        %1660 = vperm.xlu0 %1659, %v1391
        %v1661 = vpop.permute.xlu0 %1660
        %1663 = vset.pattern.permute.xlu0 1
        %1664 = vperm.xlu0 %1663, %v1392
        %v1665 = vpop.permute.xlu0 %1664
        %1667 = vset.pattern.permute.xlu0 1
        %1668 = vperm.xlu0 %1667, %v1393
        %v1669 = vpop.permute.xlu0 %1668
        %1671 = vset.pattern.permute.xlu0 1
        %1672 = vperm.xlu0 %1671, %v1394
        %v1673 = vpop.permute.xlu0 %1672
        %1675 = vset.pattern.permute.xlu0 1
        %1676 = vperm.xlu0 %1675, %v1395
        %v1677 = vpop.permute.xlu0 %1676
        %1679 = vset.pattern.permute.xlu0 1
        %1680 = vperm.xlu0 %1679, %v1396
        %v1681 = vpop.permute.xlu0 %1680
        %1683 = vset.pattern.permute.xlu0 1
        %1684 = vperm.xlu0 %1683, %v1397
        %v1685 = vpop.permute.xlu0 %1684
        %1687 = vset.pattern.permute.xlu0 1
        %1688 = vperm.xlu0 %1687, %v1398
        %v1689 = vpop.permute.xlu0 %1688
        %1691 = vset.pattern.permute.xlu0 1
        %1692 = vperm.xlu0 %1691, %v1399
        %v1693 = vpop.permute.xlu0 %1692
        %1695 = vset.pattern.permute.xlu0 1
        %1696 = vperm.xlu0 %1695, %v1400
        %v1697 = vpop.permute.xlu0 %1696
        %1699 = vset.pattern.permute.xlu0 1
        %1700 = vperm.xlu0 %1699, %v1401
        %v1701 = vpop.permute.xlu0 %1700
        %1703 = vset.pattern.permute.xlu0 1
        %1704 = vperm.xlu0 %1703, %v1402
        %v1705 = vpop.permute.xlu0 %1704
        %1707 = vset.pattern.permute.xlu0 1
        %1708 = vperm.xlu0 %1707, %v1403
        %v1709 = vpop.permute.xlu0 %1708
        %1711 = vset.pattern.permute.xlu0 1
        %1712 = vperm.xlu0 %1711, %v1404
        %v1713 = vpop.permute.xlu0 %1712
        %1715 = vset.pattern.permute.xlu0 1
        %1716 = vperm.xlu0 %1715, %v1405
        %v1717 = vpop.permute.xlu0 %1716
        %1719 = vset.pattern.permute.xlu0 1
        %1720 = vperm.xlu0 %1719, %v1406
        %v1721 = vpop.permute.xlu0 %1720
        %1723 = vset.pattern.permute.xlu0 1
        %1724 = vperm.xlu0 %1723, %v1407
        %v1725 = vpop.permute.xlu0 %1724
        %1727 = vset.pattern.permute.xlu0 1
        %1728 = vperm.xlu0 %1727, %v1408
        %v1729 = vpop.permute.xlu0 %1728
        %1731 = vset.pattern.permute.xlu0 1
        %1732 = vperm.xlu0 %1731, %v1409
        %v1733 = vpop.permute.xlu0 %1732
        %1735 = vset.pattern.permute.xlu0 1
        %1736 = vperm.xlu0 %1735, %v1410
        %v1737 = vpop.permute.xlu0 %1736
        %1739 = vset.pattern.permute.xlu0 1
        %1740 = vperm.xlu0 %1739, %v1411
        %v1741 = vpop.permute.xlu0 %1740
        %1743 = vset.pattern.permute.xlu0 1
        %1744 = vperm.xlu0 %1743, %v1412
        %v1745 = vpop.permute.xlu0 %1744
        %1747 = vset.pattern.permute.xlu0 1
        %1748 = vperm.xlu0 %1747, %v1413
        %v1749 = vpop.permute.xlu0 %1748
        %1751 = vset.pattern.permute.xlu0 1
        %1752 = vperm.xlu0 %1751, %v1414
        %v1753 = vpop.permute.xlu0 %1752
        %1755 = vset.pattern.permute.xlu0 1
        %1756 = vperm.xlu0 %1755, %v1415
        %v1757 = vpop.permute.xlu0 %1756
        %1759 = vset.pattern.permute.xlu0 1
        %1760 = vperm.xlu0 %1759, %v1416
        %v1761 = vpop.permute.xlu0 %1760
        %1763 = vset.pattern.permute.xlu0 1
        %1764 = vperm.xlu0 %1763, %v1417
        %v1765 = vpop.permute.xlu0 %1764
        %1767 = vset.pattern.permute.xlu0 1
        %1768 = vperm.xlu0 %1767, %v1418
        %v1769 = vpop.permute.xlu0 %1768
        %1771 = vset.pattern.permute.xlu0 1
        %1772 = vperm.xlu0 %1771, %v1419
        %v1773 = vpop.permute.xlu0 %1772
        %1775 = vset.pattern.permute.xlu0 1
        %1776 = vperm.xlu0 %1775, %v1420
        %v1777 = vpop.permute.xlu0 %1776
        %v1779 = vlaneseq
        %v1780 = vshrl.u32 %v1779, 7
        %v1781 = vsub.s32 0, %v1780
        %v1782 = vrot.slane %v1650, %v1781
        %v1783 = vmul.f32 %v1653, %v1782
        %v1784 = vmul.f32 %v1657, %v1782
        %v1785 = vmul.f32 %v1661, %v1782
        %v1786 = vmul.f32 %v1665, %v1782
        %v1787 = vmul.f32 %v1669, %v1782
        %v1788 = vmul.f32 %v1673, %v1782
        %v1789 = vmul.f32 %v1677, %v1782
        %v1790 = vmul.f32 %v1681, %v1782
        %v1791 = vmul.f32 %v1685, %v1782
        %v1792 = vmul.f32 %v1689, %v1782
        %v1793 = vmul.f32 %v1693, %v1782
        %v1794 = vmul.f32 %v1697, %v1782
        %v1795 = vmul.f32 %v1701, %v1782
        %v1796 = vmul.f32 %v1705, %v1782
        %v1797 = vmul.f32 %v1709, %v1782
        %v1798 = vmul.f32 %v1713, %v1782
        %v1799 = vmul.f32 %v1717, %v1782
        %v1800 = vmul.f32 %v1721, %v1782
        %v1801 = vmul.f32 %v1725, %v1782
        %v1802 = vmul.f32 %v1729, %v1782
        %v1803 = vmul.f32 %v1733, %v1782
        %v1804 = vmul.f32 %v1737, %v1782
        %v1805 = vmul.f32 %v1741, %v1782
        %v1806 = vmul.f32 %v1745, %v1782
        %v1807 = vmul.f32 %v1749, %v1782
        %v1808 = vmul.f32 %v1753, %v1782
        %v1809 = vmul.f32 %v1757, %v1782
        %v1810 = vmul.f32 %v1761, %v1782
        %v1811 = vmul.f32 %v1765, %v1782
        %v1812 = vmul.f32 %v1769, %v1782
        %v1813 = vmul.f32 %v1773, %v1782
        %v1814 = vmul.f32 %v1777, %v1782
        %v1815 = vadd.f32 %v1618, %v1783
        %v1816 = vadd.f32 %v1619, %v1784
        %v1817 = vadd.f32 %v1620, %v1785
        %v1818 = vadd.f32 %v1621, %v1786
        %v1819 = vadd.f32 %v1622, %v1787
        %v1820 = vadd.f32 %v1623, %v1788
        %v1821 = vadd.f32 %v1624, %v1789
        %v1822 = vadd.f32 %v1625, %v1790
        %v1823 = vadd.f32 %v1626, %v1791
        %v1824 = vadd.f32 %v1627, %v1792
        %v1825 = vadd.f32 %v1628, %v1793
        %v1826 = vadd.f32 %v1629, %v1794
        %v1827 = vadd.f32 %v1630, %v1795
        %v1828 = vadd.f32 %v1631, %v1796
        %v1829 = vadd.f32 %v1632, %v1797
        %v1830 = vadd.f32 %v1633, %v1798
        %v1831 = vadd.f32 %v1634, %v1799
        %v1832 = vadd.f32 %v1635, %v1800
        %v1833 = vadd.f32 %v1636, %v1801
        %v1834 = vadd.f32 %v1637, %v1802
        %v1835 = vadd.f32 %v1638, %v1803
        %v1836 = vadd.f32 %v1639, %v1804
        %v1837 = vadd.f32 %v1640, %v1805
        %v1838 = vadd.f32 %v1641, %v1806
        %v1839 = vadd.f32 %v1642, %v1807
        %v1840 = vadd.f32 %v1643, %v1808
        %v1841 = vadd.f32 %v1644, %v1809
        %v1842 = vadd.f32 %v1645, %v1810
        %v1843 = vadd.f32 %v1646, %v1811
        %v1844 = vadd.f32 %v1647, %v1812
        %v1845 = vadd.f32 %v1648, %v1813
        %v1846 = vadd.f32 %v1649, %v1814
        %v1847 = vld [vmem:[#allocation5] sm:$0x1]
        %v1849 = vlaneseq
        %v1850 = vshrl.u32 %v1849, 7
        %v1851 = vsub.s32 0, %v1850
        %v1852 = vrot.slane %v1847, %v1851
        %v1854 = vadd.f32 %v1815, %v1852
        %v1855 = vadd.f32 %v1816, %v1852
        %v1856 = vadd.f32 %v1817, %v1852
        %v1857 = vadd.f32 %v1818, %v1852
        %v1858 = vadd.f32 %v1819, %v1852
        %v1859 = vadd.f32 %v1820, %v1852
        %v1860 = vadd.f32 %v1821, %v1852
        %v1861 = vadd.f32 %v1822, %v1852
        %v1862 = vadd.f32 %v1823, %v1852
        %v1863 = vadd.f32 %v1824, %v1852
        %v1864 = vadd.f32 %v1825, %v1852
        %v1865 = vadd.f32 %v1826, %v1852
        %v1866 = vadd.f32 %v1827, %v1852
        %v1867 = vadd.f32 %v1828, %v1852
        %v1868 = vadd.f32 %v1829, %v1852
        %v1869 = vadd.f32 %v1830, %v1852
        %v1870 = vadd.f32 %v1831, %v1852
        %v1871 = vadd.f32 %v1832, %v1852
        %v1872 = vadd.f32 %v1833, %v1852
        %v1873 = vadd.f32 %v1834, %v1852
        %v1874 = vadd.f32 %v1835, %v1852
        %v1875 = vadd.f32 %v1836, %v1852
        %v1876 = vadd.f32 %v1837, %v1852
        %v1877 = vadd.f32 %v1838, %v1852
        %v1878 = vadd.f32 %v1839, %v1852
        %v1879 = vadd.f32 %v1840, %v1852
        %v1880 = vadd.f32 %v1841, %v1852
        %v1881 = vadd.f32 %v1842, %v1852
        %v1882 = vadd.f32 %v1843, %v1852
        %v1883 = vadd.f32 %v1844, %v1852
        %v1884 = vadd.f32 %v1845, %v1852
        %v1885 = vadd.f32 %v1846, %v1852
        %vm1886 = vcmp.gt.f32.partialorder %v1854, 0.0
        %vm1887 = vcmp.gt.f32.partialorder %v1855, 0.0
        %vm1888 = vcmp.gt.f32.partialorder %v1856, 0.0
        %vm1889 = vcmp.gt.f32.partialorder %v1857, 0.0
        %vm1890 = vcmp.gt.f32.partialorder %v1858, 0.0
        %vm1891 = vcmp.gt.f32.partialorder %v1859, 0.0
        %vm1892 = vcmp.gt.f32.partialorder %v1860, 0.0
        %vm1893 = vcmp.gt.f32.partialorder %v1861, 0.0
        %vm1894 = vcmp.gt.f32.partialorder %v1862, 0.0
        %vm1895 = vcmp.gt.f32.partialorder %v1863, 0.0
        %vm1896 = vcmp.gt.f32.partialorder %v1864, 0.0
        %vm1897 = vcmp.gt.f32.partialorder %v1865, 0.0
        %vm1898 = vcmp.gt.f32.partialorder %v1866, 0.0
        %vm1899 = vcmp.gt.f32.partialorder %v1867, 0.0
        %vm1900 = vcmp.gt.f32.partialorder %v1868, 0.0
        %vm1901 = vcmp.gt.f32.partialorder %v1869, 0.0
        %vm1902 = vcmp.gt.f32.partialorder %v1870, 0.0
        %vm1903 = vcmp.gt.f32.partialorder %v1871, 0.0
        %vm1904 = vcmp.gt.f32.partialorder %v1872, 0.0
        %vm1905 = vcmp.gt.f32.partialorder %v1873, 0.0
        %vm1906 = vcmp.gt.f32.partialorder %v1874, 0.0
        %vm1907 = vcmp.gt.f32.partialorder %v1875, 0.0
        %vm1908 = vcmp.gt.f32.partialorder %v1876, 0.0
        %vm1909 = vcmp.gt.f32.partialorder %v1877, 0.0
        %vm1910 = vcmp.gt.f32.partialorder %v1878, 0.0
        %vm1911 = vcmp.gt.f32.partialorder %v1879, 0.0
        %vm1912 = vcmp.gt.f32.partialorder %v1880, 0.0
        %vm1913 = vcmp.gt.f32.partialorder %v1881, 0.0
        %vm1914 = vcmp.gt.f32.partialorder %v1882, 0.0
        %vm1915 = vcmp.gt.f32.partialorder %v1883, 0.0
        %vm1916 = vcmp.gt.f32.partialorder %v1884, 0.0
        %vm1917 = vcmp.gt.f32.partialorder %v1885, 0.0
        %v1918 = vmin.f32 %v1854, 0.0
        %v1919 = vmin.f32 %v1855, 0.0
        %v1920 = vmin.f32 %v1856, 0.0
        %v1921 = vmin.f32 %v1857, 0.0
        %v1922 = vmin.f32 %v1858, 0.0
        %v1923 = vmin.f32 %v1859, 0.0
        %v1924 = vmin.f32 %v1860, 0.0
        %v1925 = vmin.f32 %v1861, 0.0
        %v1926 = vmin.f32 %v1862, 0.0
        %v1927 = vmin.f32 %v1863, 0.0
        %v1928 = vmin.f32 %v1864, 0.0
        %v1929 = vmin.f32 %v1865, 0.0
        %v1930 = vmin.f32 %v1866, 0.0
        %v1931 = vmin.f32 %v1867, 0.0
        %v1932 = vmin.f32 %v1868, 0.0
        %v1933 = vmin.f32 %v1869, 0.0
        %v1934 = vmin.f32 %v1870, 0.0
        %v1935 = vmin.f32 %v1871, 0.0
        %v1936 = vmin.f32 %v1872, 0.0
        %v1937 = vmin.f32 %v1873, 0.0
        %v1938 = vmin.f32 %v1874, 0.0
        %v1939 = vmin.f32 %v1875, 0.0
        %v1940 = vmin.f32 %v1876, 0.0
        %v1941 = vmin.f32 %v1877, 0.0
        %v1942 = vmin.f32 %v1878, 0.0
        %v1943 = vmin.f32 %v1879, 0.0
        %v1944 = vmin.f32 %v1880, 0.0
        %v1945 = vmin.f32 %v1881, 0.0
        %v1946 = vmin.f32 %v1882, 0.0
        %v1947 = vmin.f32 %v1883, 0.0
        %v1948 = vmin.f32 %v1884, 0.0
        %v1949 = vmin.f32 %v1885, 0.0
        %v1950 = vmul.f32 %v1918, 1.442695
        %v1951 = vpow.pop %v1950
        %v1952 = vmul.f32 %v1919, 1.442695
        %v1953 = vpow.pop %v1952
        %v1954 = vmul.f32 %v1920, 1.442695
        %v1955 = vpow.pop %v1954
        %v1956 = vmul.f32 %v1921, 1.442695
        %v1957 = vpow.pop %v1956
        %v1958 = vmul.f32 %v1922, 1.442695
        %v1959 = vpow.pop %v1958
        %v1960 = vmul.f32 %v1923, 1.442695
        %v1961 = vpow.pop %v1960
        %v1962 = vmul.f32 %v1924, 1.442695
        %v1963 = vpow.pop %v1962
        %v1964 = vmul.f32 %v1925, 1.442695
        %v1965 = vpow.pop %v1964
        %v1966 = vmul.f32 %v1926, 1.442695
        %v1967 = vpow.pop %v1966
        %v1968 = vmul.f32 %v1927, 1.442695
        %v1969 = vpow.pop %v1968
        %v1970 = vmul.f32 %v1928, 1.442695
        %v1971 = vpow.pop %v1970
        %v1972 = vmul.f32 %v1929, 1.442695
        %v1973 = vpow.pop %v1972
        %v1974 = vmul.f32 %v1930, 1.442695
        %v1975 = vpow.pop %v1974
        %v1976 = vmul.f32 %v1931, 1.442695
        %v1977 = vpow.pop %v1976
        %v1978 = vmul.f32 %v1932, 1.442695
        %v1979 = vpow.pop %v1978
        %v1980 = vmul.f32 %v1933, 1.442695
        %v1981 = vpow.pop %v1980
        %v1982 = vmul.f32 %v1934, 1.442695
        %v1983 = vpow.pop %v1982
        %v1984 = vmul.f32 %v1935, 1.442695
        %v1985 = vpow.pop %v1984
        %v1986 = vmul.f32 %v1936, 1.442695
        %v1987 = vpow.pop %v1986
        %v1988 = vmul.f32 %v1937, 1.442695
        %v1989 = vpow.pop %v1988
        %v1990 = vmul.f32 %v1938, 1.442695
        %v1991 = vpow.pop %v1990
        %v1992 = vmul.f32 %v1939, 1.442695
        %v1993 = vpow.pop %v1992
        %v1994 = vmul.f32 %v1940, 1.442695
        %v1995 = vpow.pop %v1994
        %v1996 = vmul.f32 %v1941, 1.442695
        %v1997 = vpow.pop %v1996
        %v1998 = vmul.f32 %v1942, 1.442695
        %v1999 = vpow.pop %v1998
        %v2000 = vmul.f32 %v1943, 1.442695
        %v2001 = vpow.pop %v2000
        %v2002 = vmul.f32 %v1944, 1.442695
        %v2003 = vpow.pop %v2002
        %v2004 = vmul.f32 %v1945, 1.442695
        %v2005 = vpow.pop %v2004
        %v2006 = vmul.f32 %v1946, 1.442695
        %v2007 = vpow.pop %v2006
        %v2008 = vmul.f32 %v1947, 1.442695
        %v2009 = vpow.pop %v2008
        %v2010 = vmul.f32 %v1948, 1.442695
        %v2011 = vpow.pop %v2010
        %v2012 = vmul.f32 %v1949, 1.442695
        %v2013 = vpow.pop %v2012
        %v2014 = vsub.f32 %v1951, 1.0
        %v2015 = vsub.f32 %v1953, 1.0
        %v2016 = vsub.f32 %v1955, 1.0
        %v2017 = vsub.f32 %v1957, 1.0
        %v2018 = vsub.f32 %v1959, 1.0
        %v2019 = vsub.f32 %v1961, 1.0
        %v2020 = vsub.f32 %v1963, 1.0
        %v2021 = vsub.f32 %v1965, 1.0
        %v2022 = vsub.f32 %v1967, 1.0
        %v2023 = vsub.f32 %v1969, 1.0
        %v2024 = vsub.f32 %v1971, 1.0
        %v2025 = vsub.f32 %v1973, 1.0
        %v2026 = vsub.f32 %v1975, 1.0
        %v2027 = vsub.f32 %v1977, 1.0
        %v2028 = vsub.f32 %v1979, 1.0
        %v2029 = vsub.f32 %v1981, 1.0
        %v2030 = vsub.f32 %v1983, 1.0
        %v2031 = vsub.f32 %v1985, 1.0
        %v2032 = vsub.f32 %v1987, 1.0
        %v2033 = vsub.f32 %v1989, 1.0
        %v2034 = vsub.f32 %v1991, 1.0
        %v2035 = vsub.f32 %v1993, 1.0
        %v2036 = vsub.f32 %v1995, 1.0
        %v2037 = vsub.f32 %v1997, 1.0
        %v2038 = vsub.f32 %v1999, 1.0
        %v2039 = vsub.f32 %v2001, 1.0
        %v2040 = vsub.f32 %v2003, 1.0
        %v2041 = vsub.f32 %v2005, 1.0
        %v2042 = vsub.f32 %v2007, 1.0
        %v2043 = vsub.f32 %v2009, 1.0
        %v2044 = vsub.f32 %v2011, 1.0
        %v2045 = vsub.f32 %v2013, 1.0
        %v2046 = vsel %vm1886, %v1854, %v2014
        %v2047 = vsel %vm1887, %v1855, %v2015
        %v2048 = vsel %vm1888, %v1856, %v2016
        %v2049 = vsel %vm1889, %v1857, %v2017
        %v2050 = vsel %vm1890, %v1858, %v2018
        %v2051 = vsel %vm1891, %v1859, %v2019
        %v2052 = vsel %vm1892, %v1860, %v2020
        %v2053 = vsel %vm1893, %v1861, %v2021
        %v2054 = vsel %vm1894, %v1862, %v2022
        %v2055 = vsel %vm1895, %v1863, %v2023
        %v2056 = vsel %vm1896, %v1864, %v2024
        %v2057 = vsel %vm1897, %v1865, %v2025
        %v2058 = vsel %vm1898, %v1866, %v2026
        %v2059 = vsel %vm1899, %v1867, %v2027
        %v2060 = vsel %vm1900, %v1868, %v2028
        %v2061 = vsel %vm1901, %v1869, %v2029
        %v2062 = vsel %vm1902, %v1870, %v2030
        %v2063 = vsel %vm1903, %v1871, %v2031
        %v2064 = vsel %vm1904, %v1872, %v2032
        %v2065 = vsel %vm1905, %v1873, %v2033
        %v2066 = vsel %vm1906, %v1874, %v2034
        %v2067 = vsel %vm1907, %v1875, %v2035
        %v2068 = vsel %vm1908, %v1876, %v2036
        %v2069 = vsel %vm1909, %v1877, %v2037
        %v2070 = vsel %vm1910, %v1878, %v2038
        %v2071 = vsel %vm1911, %v1879, %v2039
        %v2072 = vsel %vm1912, %v1880, %v2040
        %v2073 = vsel %vm1913, %v1881, %v2041
        %v2074 = vsel %vm1914, %v1882, %v2042
        %v2075 = vsel %vm1915, %v1883, %v2043
        %v2076 = vsel %vm1916, %v1884, %v2044
        %v2077 = vsel %vm1917, %v1885, %v2045
        %v2078 = vpack.c.bf16 %v2047, %v2046
        %v2079 = vpack.c.bf16 %v2049, %v2048
        %v2080 = vpack.c.bf16 %v2051, %v2050
        %v2081 = vpack.c.bf16 %v2053, %v2052
        %v2082 = vpack.c.bf16 %v2055, %v2054
        %v2083 = vpack.c.bf16 %v2057, %v2056
        %v2084 = vpack.c.bf16 %v2059, %v2058
        %v2085 = vpack.c.bf16 %v2061, %v2060
        %v2086 = vpack.c.bf16 %v2063, %v2062
        %v2087 = vpack.c.bf16 %v2065, %v2064
        %v2088 = vpack.c.bf16 %v2067, %v2066
        %v2089 = vpack.c.bf16 %v2069, %v2068
        %v2090 = vpack.c.bf16 %v2071, %v2070
        %v2091 = vpack.c.bf16 %v2073, %v2072
        %v2092 = vpack.c.bf16 %v2075, %v2074
        %v2093 = vpack.c.bf16 %v2077, %v2076
        %v2094 = vld [vmem:[#allocation7] sm:$0xf]
        %v2095 = vld [vmem:[#allocation7 + $0x4] sm:$0xf]
        %v2096 = vld [vmem:[#allocation7 + $0x8] sm:$0xf]
        %v2097 = vld [vmem:[#allocation7 + $0xc] sm:$0xf]
        %s2098 = scalar_lea.vmem [#allocation7], 16
        %v2099 = vld [vmem:[%s2098] sm:$0xf]
        %v2100 = vld [vmem:[%s2098 + $0x4] sm:$0xf]
        %v2101 = vld [vmem:[%s2098 + $0x8] sm:$0xf]
        %v2102 = vld [vmem:[%s2098 + $0xc] sm:$0xf]
        %vm2103 = vsmask.f32 7424
        %v2105 = vshrl.u32 %v2078, 16
        %v2107 = vshll.u32 %v2078, 16
        %v2109 = vrot.slane %v2107, 1
        %v2110 = vor.u32 %v2105, %v2109
        %v2112 = vshll.u32 %v2079, 16
        %v2114 = vrot.slane %v2112, 1
        %v2115 = vsel %vm2103, %v2110, %v2114
        %v2116 = vshrl.u32 %v2079, 16
        %v2118 = vor.u32 %v2116, %v2114
        %v2120 = vshll.u32 %v2080, 16
        %v2122 = vrot.slane %v2120, 1
        %v2123 = vsel %vm2103, %v2118, %v2122
        %v2124 = vshrl.u32 %v2080, 16
        %v2126 = vor.u32 %v2124, %v2122
        %v2128 = vshll.u32 %v2081, 16
        %v2130 = vrot.slane %v2128, 1
        %v2131 = vsel %vm2103, %v2126, %v2130
        %v2132 = vshrl.u32 %v2081, 16
        %v2134 = vor.u32 %v2132, %v2130
        %v2136 = vshll.u32 %v2082, 16
        %v2138 = vrot.slane %v2136, 1
        %v2139 = vsel %vm2103, %v2134, %v2138
        %v2140 = vshrl.u32 %v2082, 16
        %v2142 = vor.u32 %v2140, %v2138
        %v2144 = vshll.u32 %v2083, 16
        %v2146 = vrot.slane %v2144, 1
        %v2147 = vsel %vm2103, %v2142, %v2146
        %v2148 = vshrl.u32 %v2083, 16
        %v2150 = vor.u32 %v2148, %v2146
        %v2152 = vshll.u32 %v2084, 16
        %v2154 = vrot.slane %v2152, 1
        %v2155 = vsel %vm2103, %v2150, %v2154
        %v2156 = vshrl.u32 %v2084, 16
        %v2158 = vor.u32 %v2156, %v2154
        %v2160 = vshll.u32 %v2085, 16
        %v2162 = vrot.slane %v2160, 1
        %v2163 = vsel %vm2103, %v2158, %v2162
        %v2164 = vshrl.u32 %v2085, 16
        %v2166 = vor.u32 %v2164, %v2162
        %v2168 = vshll.u32 %v2086, 16
        %v2170 = vrot.slane %v2168, 1
        %v2171 = vsel %vm2103, %v2166, %v2170
        %v2172 = vshrl.u32 %v2086, 16
        %v2174 = vor.u32 %v2172, %v2170
        %v2176 = vshll.u32 %v2087, 16
        %v2178 = vrot.slane %v2176, 1
        %v2179 = vsel %vm2103, %v2174, %v2178
        %v2180 = vshrl.u32 %v2087, 16
        %v2182 = vor.u32 %v2180, %v2178
        %v2184 = vshll.u32 %v2088, 16
        %v2186 = vrot.slane %v2184, 1
        %v2187 = vsel %vm2103, %v2182, %v2186
        %v2188 = vshrl.u32 %v2088, 16
        %v2190 = vor.u32 %v2188, %v2186
        %v2192 = vshll.u32 %v2089, 16
        %v2194 = vrot.slane %v2192, 1
        %v2195 = vsel %vm2103, %v2190, %v2194
        %v2196 = vshrl.u32 %v2089, 16
        %v2198 = vor.u32 %v2196, %v2194
        %v2200 = vshll.u32 %v2090, 16
        %v2202 = vrot.slane %v2200, 1
        %v2203 = vsel %vm2103, %v2198, %v2202
        %v2204 = vshrl.u32 %v2090, 16
        %v2206 = vor.u32 %v2204, %v2202
        %v2208 = vshll.u32 %v2091, 16
        %v2210 = vrot.slane %v2208, 1
        %v2211 = vsel %vm2103, %v2206, %v2210
        %v2212 = vshrl.u32 %v2091, 16
        %v2214 = vor.u32 %v2212, %v2210
        %v2216 = vshll.u32 %v2092, 16
        %v2218 = vrot.slane %v2216, 1
        %v2219 = vsel %vm2103, %v2214, %v2218
        %v2220 = vshrl.u32 %v2092, 16
        %v2222 = vor.u32 %v2220, %v2218
        %v2224 = vshll.u32 %v2093, 16
        %v2226 = vrot.slane %v2224, 1
        %v2227 = vsel %vm2103, %v2222, %v2226
        %v2228 = vshrl.u32 %v2093, 16
        %v2230 = vor.u32 %v2228, %v2226
        %v2235 = vunpack.c.l.b16 %v2099
        %v2236 = vunpack.c.l.b16 %v2100
        %v2237 = vunpack.c.l.b16 %v2101
        %v2238 = vunpack.c.l.b16 %v2102
        %v2239 = vpack.c.b16 %v2236, %v2235
        %v2240 = vpack.c.b16 %v2238, %v2237
        %vm2243 = vcmask 261120
        %v2245 = vsel %vm2243, %v2115, 0
        %v2248 = vsel %vm2243, %v2123, 0
        %v2251 = vsel %vm2243, %v2131, 0
        %v2254 = vsel %vm2243, %v2139, 0
        %v2257 = vsel %vm2243, %v2147, 0
        %v2260 = vsel %vm2243, %v2155, 0
        %v2263 = vsel %vm2243, %v2163, 0
        %v2266 = vsel %vm2243, %v2171, 0
        %v2269 = vsel %vm2243, %v2179, 0
        %v2272 = vsel %vm2243, %v2187, 0
        %v2275 = vsel %vm2243, %v2195, 0
        %v2278 = vsel %vm2243, %v2203, 0
        %v2281 = vsel %vm2243, %v2211, 0
        %v2284 = vsel %vm2243, %v2219, 0
        %v2287 = vsel %vm2243, %v2227, 0
        %v2290 = vsel %vm2243, %v2230, 0
        %2292 = vmatprep.subr.bf16.mxu0 0
        %2293 = vmatpush1.bf16.msra.mxu0 0
        %2294 = vmatprep.subr.bf16.mxu0 0
        %2295 = vmatpush1.bf16.msra.mxu0 0
        %2296 = vmatprep.subr.bf16.mxu0 0
        %2297 = vmatpush1.bf16.msra.mxu0 0
        %2298 = vmatprep.subr.bf16.mxu0 0
        %2299 = vmatpush1.bf16.msra.mxu0 0
        %2300 = vmatprep.subr.bf16.mxu0 0
        %2301 = vmatpush1.bf16.msra.mxu0 0
        %2302 = vmatprep.subr.bf16.mxu0 0
        %2303 = vmatpush1.bf16.msra.mxu0 0
        %2304 = vmatprep.subr.bf16.mxu0 0
        %2305 = vmatpush1.bf16.msra.mxu0 %v2240
        %2306 = vmatprep.subr.bf16.mxu0 0
        %2307 = vmatpush1.bf16.msra.mxu0 %v2239
        %2308 = vmatprep.subr.bf16.mxu0 0
        %2309 = vmatpush2.bf16.msra.mxu0 0
        %2310 = vmatprep.subr.bf16.mxu0 0
        %2311 = vmatpush2.bf16.msra.mxu0 0
        %2312 = vmatprep.subr.bf16.mxu0 0
        %2313 = vmatpush2.bf16.msra.mxu0 0
        %2314 = vmatprep.subr.bf16.mxu0 0
        %2315 = vmatpush2.bf16.msra.mxu0 0
        %2316 = vmatprep.subr.bf16.mxu0 0
        %2317 = vmatpush2.bf16.msra.mxu0 0
        %2318 = vmatprep.subr.bf16.mxu0 0
        %2319 = vmatpush2.bf16.msra.mxu0 0
        %2320 = vmatprep.subr.bf16.mxu0 0
        %2321 = vmatpush2.bf16.msra.mxu0 0
        %2322 = vmatprep.subr.bf16.mxu0 0
        %2323 = vmatpush2.bf16.msra.mxu0 0
        %2324 = vmatprep.mubr.bf16.mxu0 0
        %2325 = vmatmul.mubr.bf16.gmra.mxu0 %v2245
        %v2326 = vpop.f32.mrf.mxu0
        %v2327 = vadd.f32 0.0, %v2326
        %v2328 = vpop.f32.mrf.mxu0
        %v2329 = vpop.f32.mrf.mxu0
        %v2330 = vadd.f32 0.0, %v2329
        %v2331 = vpop.f32.mrf.mxu0
        %2332 = vmatprep.mubr.bf16.mxu0 0
        %2333 = vmatmul.mubr.bf16.gmra.mxu0 %v2248
        %v2334 = vpop.f32.mrf.mxu0
        %v2335 = vadd.f32 0.0, %v2334
        %v2336 = vpop.f32.mrf.mxu0
        %v2337 = vpop.f32.mrf.mxu0
        %v2338 = vadd.f32 0.0, %v2337
        %v2339 = vpop.f32.mrf.mxu0
        %2340 = vmatprep.mubr.bf16.mxu0 0
        %2341 = vmatmul.mubr.bf16.gmra.mxu0 %v2251
        %v2342 = vpop.f32.mrf.mxu0
        %v2343 = vadd.f32 0.0, %v2342
        %v2344 = vpop.f32.mrf.mxu0
        %v2345 = vpop.f32.mrf.mxu0
        %v2346 = vadd.f32 0.0, %v2345
        %v2347 = vpop.f32.mrf.mxu0
        %2348 = vmatprep.mubr.bf16.mxu0 0
        %2349 = vmatmul.mubr.bf16.gmra.mxu0 %v2254
        %v2350 = vpop.f32.mrf.mxu0
        %v2351 = vadd.f32 0.0, %v2350
        %v2352 = vpop.f32.mrf.mxu0
        %v2353 = vpop.f32.mrf.mxu0
        %v2354 = vadd.f32 0.0, %v2353
        %v2355 = vpop.f32.mrf.mxu0
        %2356 = vmatprep.mubr.bf16.mxu0 0
        %2357 = vmatmul.mubr.bf16.gmra.mxu0 %v2257
        %v2358 = vpop.f32.mrf.mxu0
        %v2359 = vadd.f32 0.0, %v2358
        %v2360 = vpop.f32.mrf.mxu0
        %v2361 = vpop.f32.mrf.mxu0
        %v2362 = vadd.f32 0.0, %v2361
        %v2363 = vpop.f32.mrf.mxu0
        %2364 = vmatprep.mubr.bf16.mxu0 0
        %2365 = vmatmul.mubr.bf16.gmra.mxu0 %v2260
        %v2366 = vpop.f32.mrf.mxu0
        %v2367 = vadd.f32 0.0, %v2366
        %v2368 = vpop.f32.mrf.mxu0
        %v2369 = vpop.f32.mrf.mxu0
        %v2370 = vadd.f32 0.0, %v2369
        %v2371 = vpop.f32.mrf.mxu0
        %2372 = vmatprep.mubr.bf16.mxu0 0
        %2373 = vmatmul.mubr.bf16.gmra.mxu0 %v2263
        %v2374 = vpop.f32.mrf.mxu0
        %v2375 = vadd.f32 0.0, %v2374
        %v2376 = vpop.f32.mrf.mxu0
        %v2377 = vpop.f32.mrf.mxu0
        %v2378 = vadd.f32 0.0, %v2377
        %v2379 = vpop.f32.mrf.mxu0
        %2380 = vmatprep.mubr.bf16.mxu0 0
        %2381 = vmatmul.mubr.bf16.gmra.mxu0 %v2266
        %v2382 = vpop.f32.mrf.mxu0
        %v2383 = vadd.f32 0.0, %v2382
        %v2384 = vpop.f32.mrf.mxu0
        %v2385 = vpop.f32.mrf.mxu0
        %v2386 = vadd.f32 0.0, %v2385
        %v2387 = vpop.f32.mrf.mxu0
        %2388 = vmatprep.mubr.bf16.mxu0 0
        %2389 = vmatmul.mubr.bf16.gmra.mxu0 %v2269
        %v2390 = vpop.f32.mrf.mxu0
        %v2391 = vadd.f32 0.0, %v2390
        %v2392 = vpop.f32.mrf.mxu0
        %v2393 = vpop.f32.mrf.mxu0
        %v2394 = vadd.f32 0.0, %v2393
        %v2395 = vpop.f32.mrf.mxu0
        %2396 = vmatprep.mubr.bf16.mxu0 0
        %2397 = vmatmul.mubr.bf16.gmra.mxu0 %v2272
        %v2398 = vpop.f32.mrf.mxu0
        %v2399 = vadd.f32 0.0, %v2398
        %v2400 = vpop.f32.mrf.mxu0
        %v2401 = vpop.f32.mrf.mxu0
        %v2402 = vadd.f32 0.0, %v2401
        %v2403 = vpop.f32.mrf.mxu0
        %2404 = vmatprep.mubr.bf16.mxu0 0
        %2405 = vmatmul.mubr.bf16.gmra.mxu0 %v2275
        %v2406 = vpop.f32.mrf.mxu0
        %v2407 = vadd.f32 0.0, %v2406
        %v2408 = vpop.f32.mrf.mxu0
        %v2409 = vpop.f32.mrf.mxu0
        %v2410 = vadd.f32 0.0, %v2409
        %v2411 = vpop.f32.mrf.mxu0
        %2412 = vmatprep.mubr.bf16.mxu0 0
        %2413 = vmatmul.mubr.bf16.gmra.mxu0 %v2278
        %v2414 = vpop.f32.mrf.mxu0
        %v2415 = vadd.f32 0.0, %v2414
        %v2416 = vpop.f32.mrf.mxu0
        %v2417 = vpop.f32.mrf.mxu0
        %v2418 = vadd.f32 0.0, %v2417
        %v2419 = vpop.f32.mrf.mxu0
        %2420 = vmatprep.mubr.bf16.mxu0 0
        %2421 = vmatmul.mubr.bf16.gmra.mxu0 %v2281
        %v2422 = vpop.f32.mrf.mxu0
        %v2423 = vadd.f32 0.0, %v2422
        %v2424 = vpop.f32.mrf.mxu0
        %v2425 = vpop.f32.mrf.mxu0
        %v2426 = vadd.f32 0.0, %v2425
        %v2427 = vpop.f32.mrf.mxu0
        %2428 = vmatprep.mubr.bf16.mxu0 0
        %2429 = vmatmul.mubr.bf16.gmra.mxu0 %v2284
        %v2430 = vpop.f32.mrf.mxu0
        %v2431 = vadd.f32 0.0, %v2430
        %v2432 = vpop.f32.mrf.mxu0
        %v2433 = vpop.f32.mrf.mxu0
        %v2434 = vadd.f32 0.0, %v2433
        %v2435 = vpop.f32.mrf.mxu0
        %2436 = vmatprep.mubr.bf16.mxu0 0
        %2437 = vmatmul.mubr.bf16.gmra.mxu0 %v2287
        %v2438 = vpop.f32.mrf.mxu0
        %v2439 = vadd.f32 0.0, %v2438
        %v2440 = vpop.f32.mrf.mxu0
        %v2441 = vpop.f32.mrf.mxu0
        %v2442 = vadd.f32 0.0, %v2441
        %v2443 = vpop.f32.mrf.mxu0
        %2444 = vmatprep.mubr.bf16.mxu0 0
        %2445 = vmatmul.mubr.bf16.gmra.mxu0 %v2290
        %v2446 = vpop.f32.mrf.mxu0
        %v2447 = vadd.f32 0.0, %v2446
        %v2448 = vpop.f32.mrf.mxu0
        %v2449 = vpop.f32.mrf.mxu0
        %v2450 = vadd.f32 0.0, %v2449
        %v2451 = vpop.f32.mrf.mxu0
        %2452 = vdwg.mxu0
        %v2457 = vunpack.c.l.b16 %v2094
        %v2458 = vunpack.c.l.b16 %v2095
        %v2459 = vunpack.c.l.b16 %v2096
        %v2460 = vunpack.c.l.b16 %v2097
        %v2461 = vpack.c.b16 %v2458, %v2457
        %v2462 = vpack.c.b16 %v2460, %v2459
        %v2465 = vsel %vm2243, %v2078, 0
        %v2467 = vsel %vm2243, %v2079, 0
        %v2469 = vsel %vm2243, %v2080, 0
        %v2471 = vsel %vm2243, %v2081, 0
        %v2473 = vsel %vm2243, %v2082, 0
        %v2475 = vsel %vm2243, %v2083, 0
        %v2477 = vsel %vm2243, %v2084, 0
        %v2479 = vsel %vm2243, %v2085, 0
        %v2481 = vsel %vm2243, %v2086, 0
        %v2483 = vsel %vm2243, %v2087, 0
        %v2485 = vsel %vm2243, %v2088, 0
        %v2487 = vsel %vm2243, %v2089, 0
        %v2489 = vsel %vm2243, %v2090, 0
        %v2491 = vsel %vm2243, %v2091, 0
        %v2493 = vsel %vm2243, %v2092, 0
        %v2495 = vsel %vm2243, %v2093, 0
        %2497 = vmatprep.subr.bf16.mxu0 0
        %2498 = vmatpush1.bf16.msra.mxu0 0
        %2499 = vmatprep.subr.bf16.mxu0 0
        %2500 = vmatpush1.bf16.msra.mxu0 0
        %2501 = vmatprep.subr.bf16.mxu0 0
        %2502 = vmatpush1.bf16.msra.mxu0 0
        %2503 = vmatprep.subr.bf16.mxu0 0
        %2504 = vmatpush1.bf16.msra.mxu0 0
        %2505 = vmatprep.subr.bf16.mxu0 0
        %2506 = vmatpush1.bf16.msra.mxu0 0
        %2507 = vmatprep.subr.bf16.mxu0 0
        %2508 = vmatpush1.bf16.msra.mxu0 0
        %2509 = vmatprep.subr.bf16.mxu0 0
        %2510 = vmatpush1.bf16.msra.mxu0 %v2462
        %2511 = vmatprep.subr.bf16.mxu0 0
        %2512 = vmatpush1.bf16.msra.mxu0 %v2461
        %2513 = vmatprep.subr.bf16.mxu0 0
        %2514 = vmatpush2.bf16.msra.mxu0 0
        %2515 = vmatprep.subr.bf16.mxu0 0
        %2516 = vmatpush2.bf16.msra.mxu0 0
        %2517 = vmatprep.subr.bf16.mxu0 0
        %2518 = vmatpush2.bf16.msra.mxu0 0
        %2519 = vmatprep.subr.bf16.mxu0 0
        %2520 = vmatpush2.bf16.msra.mxu0 0
        %2521 = vmatprep.subr.bf16.mxu0 0
        %2522 = vmatpush2.bf16.msra.mxu0 0
        %2523 = vmatprep.subr.bf16.mxu0 0
        %2524 = vmatpush2.bf16.msra.mxu0 0
        %2525 = vmatprep.subr.bf16.mxu0 0
        %2526 = vmatpush2.bf16.msra.mxu0 0
        %2527 = vmatprep.subr.bf16.mxu0 0
        %2528 = vmatpush2.bf16.msra.mxu0 0
        %2529 = vmatprep.mubr.bf16.mxu0 0
        %2530 = vmatmul.mubr.bf16.gmra.mxu0 %v2465
        %v2531 = vpop.f32.mrf.mxu0
        %v2532 = vadd.f32 %v2327, %v2531
        %v2533 = vpop.f32.mrf.mxu0
        %v2534 = vpop.f32.mrf.mxu0
        %v2535 = vadd.f32 %v2330, %v2534
        %v2536 = vpop.f32.mrf.mxu0
        %2537 = vmatprep.mubr.bf16.mxu0 0
        %2538 = vmatmul.mubr.bf16.gmra.mxu0 %v2467
        %v2539 = vpop.f32.mrf.mxu0
        %v2540 = vadd.f32 %v2335, %v2539
        %v2541 = vpop.f32.mrf.mxu0
        %v2542 = vpop.f32.mrf.mxu0
        %v2543 = vadd.f32 %v2338, %v2542
        %v2544 = vpop.f32.mrf.mxu0
        %2545 = vmatprep.mubr.bf16.mxu0 0
        %2546 = vmatmul.mubr.bf16.gmra.mxu0 %v2469
        %v2547 = vpop.f32.mrf.mxu0
        %v2548 = vadd.f32 %v2343, %v2547
        %v2549 = vpop.f32.mrf.mxu0
        %v2550 = vpop.f32.mrf.mxu0
        %v2551 = vadd.f32 %v2346, %v2550
        %v2552 = vpop.f32.mrf.mxu0
        %2553 = vmatprep.mubr.bf16.mxu0 0
        %2554 = vmatmul.mubr.bf16.gmra.mxu0 %v2471
        %v2555 = vpop.f32.mrf.mxu0
        %v2556 = vadd.f32 %v2351, %v2555
        %v2557 = vpop.f32.mrf.mxu0
        %v2558 = vpop.f32.mrf.mxu0
        %v2559 = vadd.f32 %v2354, %v2558
        %v2560 = vpop.f32.mrf.mxu0
        %2561 = vmatprep.mubr.bf16.mxu0 0
        %2562 = vmatmul.mubr.bf16.gmra.mxu0 %v2473
        %v2563 = vpop.f32.mrf.mxu0
        %v2564 = vadd.f32 %v2359, %v2563
        %v2565 = vpop.f32.mrf.mxu0
        %v2566 = vpop.f32.mrf.mxu0
        %v2567 = vadd.f32 %v2362, %v2566
        %v2568 = vpop.f32.mrf.mxu0
        %2569 = vmatprep.mubr.bf16.mxu0 0
        %2570 = vmatmul.mubr.bf16.gmra.mxu0 %v2475
        %v2571 = vpop.f32.mrf.mxu0
        %v2572 = vadd.f32 %v2367, %v2571
        %v2573 = vpop.f32.mrf.mxu0
        %v2574 = vpop.f32.mrf.mxu0
        %v2575 = vadd.f32 %v2370, %v2574
        %v2576 = vpop.f32.mrf.mxu0
        %2577 = vmatprep.mubr.bf16.mxu0 0
        %2578 = vmatmul.mubr.bf16.gmra.mxu0 %v2477
        %v2579 = vpop.f32.mrf.mxu0
        %v2580 = vadd.f32 %v2375, %v2579
        %v2581 = vpop.f32.mrf.mxu0
        %v2582 = vpop.f32.mrf.mxu0
        %v2583 = vadd.f32 %v2378, %v2582
        %v2584 = vpop.f32.mrf.mxu0
        %2585 = vmatprep.mubr.bf16.mxu0 0
        %2586 = vmatmul.mubr.bf16.gmra.mxu0 %v2479
        %v2587 = vpop.f32.mrf.mxu0
        %v2588 = vadd.f32 %v2383, %v2587
        %v2589 = vpop.f32.mrf.mxu0
        %v2590 = vpop.f32.mrf.mxu0
        %v2591 = vadd.f32 %v2386, %v2590
        %v2592 = vpop.f32.mrf.mxu0
        %2593 = vmatprep.mubr.bf16.mxu0 0
        %2594 = vmatmul.mubr.bf16.gmra.mxu0 %v2481
        %v2595 = vpop.f32.mrf.mxu0
        %v2596 = vadd.f32 %v2391, %v2595
        %v2597 = vpop.f32.mrf.mxu0
        %v2598 = vpop.f32.mrf.mxu0
        %v2599 = vadd.f32 %v2394, %v2598
        %v2600 = vpop.f32.mrf.mxu0
        %2601 = vmatprep.mubr.bf16.mxu0 0
        %2602 = vmatmul.mubr.bf16.gmra.mxu0 %v2483
        %v2603 = vpop.f32.mrf.mxu0
        %v2604 = vadd.f32 %v2399, %v2603
        %v2605 = vpop.f32.mrf.mxu0
        %v2606 = vpop.f32.mrf.mxu0
        %v2607 = vadd.f32 %v2402, %v2606
        %v2608 = vpop.f32.mrf.mxu0
        %2609 = vmatprep.mubr.bf16.mxu0 0
        %2610 = vmatmul.mubr.bf16.gmra.mxu0 %v2485
        %v2611 = vpop.f32.mrf.mxu0
        %v2612 = vadd.f32 %v2407, %v2611
        %v2613 = vpop.f32.mrf.mxu0
        %v2614 = vpop.f32.mrf.mxu0
        %v2615 = vadd.f32 %v2410, %v2614
        %v2616 = vpop.f32.mrf.mxu0
        %2617 = vmatprep.mubr.bf16.mxu0 0
        %2618 = vmatmul.mubr.bf16.gmra.mxu0 %v2487
        %v2619 = vpop.f32.mrf.mxu0
        %v2620 = vadd.f32 %v2415, %v2619
        %v2621 = vpop.f32.mrf.mxu0
        %v2622 = vpop.f32.mrf.mxu0
        %v2623 = vadd.f32 %v2418, %v2622
        %v2624 = vpop.f32.mrf.mxu0
        %2625 = vmatprep.mubr.bf16.mxu0 0
        %2626 = vmatmul.mubr.bf16.gmra.mxu0 %v2489
        %v2627 = vpop.f32.mrf.mxu0
        %v2628 = vadd.f32 %v2423, %v2627
        %v2629 = vpop.f32.mrf.mxu0
        %v2630 = vpop.f32.mrf.mxu0
        %v2631 = vadd.f32 %v2426, %v2630
        %v2632 = vpop.f32.mrf.mxu0
        %2633 = vmatprep.mubr.bf16.mxu0 0
        %2634 = vmatmul.mubr.bf16.gmra.mxu0 %v2491
        %v2635 = vpop.f32.mrf.mxu0
        %v2636 = vadd.f32 %v2431, %v2635
        %v2637 = vpop.f32.mrf.mxu0
        %v2638 = vpop.f32.mrf.mxu0
        %v2639 = vadd.f32 %v2434, %v2638
        %v2640 = vpop.f32.mrf.mxu0
        %2641 = vmatprep.mubr.bf16.mxu0 0
        %2642 = vmatmul.mubr.bf16.gmra.mxu0 %v2493
        %v2643 = vpop.f32.mrf.mxu0
        %v2644 = vadd.f32 %v2439, %v2643
        %v2645 = vpop.f32.mrf.mxu0
        %v2646 = vpop.f32.mrf.mxu0
        %v2647 = vadd.f32 %v2442, %v2646
        %v2648 = vpop.f32.mrf.mxu0
        %2649 = vmatprep.mubr.bf16.mxu0 0
        %2650 = vmatmul.mubr.bf16.gmra.mxu0 %v2495
        %v2651 = vpop.f32.mrf.mxu0
        %v2652 = vadd.f32 %v2447, %v2651
        %v2653 = vpop.f32.mrf.mxu0
        %v2654 = vpop.f32.mrf.mxu0
        %v2655 = vadd.f32 %v2450, %v2654
        %v2656 = vpop.f32.mrf.mxu0
        %2657 = vdwg.mxu0
        %s2658 = scalar_lea.vmem [#allocation7], 32
        %v2659 = vld [vmem:[%s2658] sm:$0xf]
        %v2660 = vld [vmem:[%s2658 + $0x4] sm:$0xf]
        %v2661 = vld [vmem:[%s2658 + $0x8] sm:$0xf]
        %v2662 = vld [vmem:[%s2658 + $0xc] sm:$0xf]
        %vm2679 = vcmask 1046528
        %v2680 = vrot.slane %v2078, 1
        %v2681 = vrot.slane %v2079, 1
        %v2682 = vsel %vm2679, %v2680, %v2681
        %v2683 = vrot.slane %v2080, 1
        %v2684 = vsel %vm2679, %v2681, %v2683
        %v2685 = vrot.slane %v2081, 1
        %v2686 = vsel %vm2679, %v2683, %v2685
        %v2687 = vrot.slane %v2082, 1
        %v2688 = vsel %vm2679, %v2685, %v2687
        %v2689 = vrot.slane %v2083, 1
        %v2690 = vsel %vm2679, %v2687, %v2689
        %v2691 = vrot.slane %v2084, 1
        %v2692 = vsel %vm2679, %v2689, %v2691
        %v2693 = vrot.slane %v2085, 1
        %v2694 = vsel %vm2679, %v2691, %v2693
        %v2695 = vrot.slane %v2086, 1
        %v2696 = vsel %vm2679, %v2693, %v2695
        %v2697 = vrot.slane %v2087, 1
        %v2698 = vsel %vm2679, %v2695, %v2697
        %v2699 = vrot.slane %v2088, 1
        %v2700 = vsel %vm2679, %v2697, %v2699
        %v2701 = vrot.slane %v2089, 1
        %v2702 = vsel %vm2679, %v2699, %v2701
        %v2703 = vrot.slane %v2090, 1
        %v2704 = vsel %vm2679, %v2701, %v2703
        %v2705 = vrot.slane %v2091, 1
        %v2706 = vsel %vm2679, %v2703, %v2705
        %v2707 = vrot.slane %v2092, 1
        %v2708 = vsel %vm2679, %v2705, %v2707
        %v2709 = vrot.slane %v2093, 1
        %v2710 = vsel %vm2679, %v2707, %v2709
        %v2715 = vunpack.c.l.b16 %v2659
        %v2716 = vunpack.c.l.b16 %v2660
        %v2717 = vunpack.c.l.b16 %v2661
        %v2718 = vunpack.c.l.b16 %v2662
        %v2719 = vpack.c.b16 %v2716, %v2715
        %v2720 = vpack.c.b16 %v2718, %v2717
        %v2724 = vsel %vm2243, %v2682, 0
        %v2727 = vsel %vm2243, %v2684, 0
        %v2730 = vsel %vm2243, %v2686, 0
        %v2733 = vsel %vm2243, %v2688, 0
        %v2736 = vsel %vm2243, %v2690, 0
        %v2739 = vsel %vm2243, %v2692, 0
        %v2742 = vsel %vm2243, %v2694, 0
        %v2745 = vsel %vm2243, %v2696, 0
        %v2748 = vsel %vm2243, %v2698, 0
        %v2751 = vsel %vm2243, %v2700, 0
        %v2754 = vsel %vm2243, %v2702, 0
        %v2757 = vsel %vm2243, %v2704, 0
        %v2760 = vsel %vm2243, %v2706, 0
        %v2763 = vsel %vm2243, %v2708, 0
        %v2766 = vsel %vm2243, %v2710, 0
        %v2769 = vsel %vm2243, %v2709, 0
        %2771 = vmatprep.subr.bf16.mxu0 0
        %2772 = vmatpush1.bf16.msra.mxu0 0
        %2773 = vmatprep.subr.bf16.mxu0 0
        %2774 = vmatpush1.bf16.msra.mxu0 0
        %2775 = vmatprep.subr.bf16.mxu0 0
        %2776 = vmatpush1.bf16.msra.mxu0 0
        %2777 = vmatprep.subr.bf16.mxu0 0
        %2778 = vmatpush1.bf16.msra.mxu0 0
        %2779 = vmatprep.subr.bf16.mxu0 0
        %2780 = vmatpush1.bf16.msra.mxu0 0
        %2781 = vmatprep.subr.bf16.mxu0 0
        %2782 = vmatpush1.bf16.msra.mxu0 0
        %2783 = vmatprep.subr.bf16.mxu0 0
        %2784 = vmatpush1.bf16.msra.mxu0 %v2720
        %2785 = vmatprep.subr.bf16.mxu0 0
        %2786 = vmatpush1.bf16.msra.mxu0 %v2719
        %2787 = vmatprep.subr.bf16.mxu0 0
        %2788 = vmatpush2.bf16.msra.mxu0 0
        %2789 = vmatprep.subr.bf16.mxu0 0
        %2790 = vmatpush2.bf16.msra.mxu0 0
        %2791 = vmatprep.subr.bf16.mxu0 0
        %2792 = vmatpush2.bf16.msra.mxu0 0
        %2793 = vmatprep.subr.bf16.mxu0 0
        %2794 = vmatpush2.bf16.msra.mxu0 0
        %2795 = vmatprep.subr.bf16.mxu0 0
        %2796 = vmatpush2.bf16.msra.mxu0 0
        %2797 = vmatprep.subr.bf16.mxu0 0
        %2798 = vmatpush2.bf16.msra.mxu0 0
        %2799 = vmatprep.subr.bf16.mxu0 0
        %2800 = vmatpush2.bf16.msra.mxu0 0
        %2801 = vmatprep.subr.bf16.mxu0 0
        %2802 = vmatpush2.bf16.msra.mxu0 0
        %2803 = vmatprep.mubr.bf16.mxu0 0
        %2804 = vmatmul.mubr.bf16.gmra.mxu0 %v2724
        %v2805 = vpop.f32.mrf.mxu0
        %v2806 = vadd.f32 0.0, %v2805
        %v2807 = vpop.f32.mrf.mxu0
        %v2808 = vpop.f32.mrf.mxu0
        %v2809 = vadd.f32 0.0, %v2808
        %v2810 = vpop.f32.mrf.mxu0
        %2811 = vmatprep.mubr.bf16.mxu0 0
        %2812 = vmatmul.mubr.bf16.gmra.mxu0 %v2727
        %v2813 = vpop.f32.mrf.mxu0
        %v2814 = vadd.f32 0.0, %v2813
        %v2815 = vpop.f32.mrf.mxu0
        %v2816 = vpop.f32.mrf.mxu0
        %v2817 = vadd.f32 0.0, %v2816
        %v2818 = vpop.f32.mrf.mxu0
        %2819 = vmatprep.mubr.bf16.mxu0 0
        %2820 = vmatmul.mubr.bf16.gmra.mxu0 %v2730
        %v2821 = vpop.f32.mrf.mxu0
        %v2822 = vadd.f32 0.0, %v2821
        %v2823 = vpop.f32.mrf.mxu0
        %v2824 = vpop.f32.mrf.mxu0
        %v2825 = vadd.f32 0.0, %v2824
        %v2826 = vpop.f32.mrf.mxu0
        %2827 = vmatprep.mubr.bf16.mxu0 0
        %2828 = vmatmul.mubr.bf16.gmra.mxu0 %v2733
        %v2829 = vpop.f32.mrf.mxu0
        %v2830 = vadd.f32 0.0, %v2829
        %v2831 = vpop.f32.mrf.mxu0
        %v2832 = vpop.f32.mrf.mxu0
        %v2833 = vadd.f32 0.0, %v2832
        %v2834 = vpop.f32.mrf.mxu0
        %2835 = vmatprep.mubr.bf16.mxu0 0
        %2836 = vmatmul.mubr.bf16.gmra.mxu0 %v2736
        %v2837 = vpop.f32.mrf.mxu0
        %v2838 = vadd.f32 0.0, %v2837
        %v2839 = vpop.f32.mrf.mxu0
        %v2840 = vpop.f32.mrf.mxu0
        %v2841 = vadd.f32 0.0, %v2840
        %v2842 = vpop.f32.mrf.mxu0
        %2843 = vmatprep.mubr.bf16.mxu0 0
        %2844 = vmatmul.mubr.bf16.gmra.mxu0 %v2739
        %v2845 = vpop.f32.mrf.mxu0
        %v2846 = vadd.f32 0.0, %v2845
        %v2847 = vpop.f32.mrf.mxu0
        %v2848 = vpop.f32.mrf.mxu0
        %v2849 = vadd.f32 0.0, %v2848
        %v2850 = vpop.f32.mrf.mxu0
        %2851 = vmatprep.mubr.bf16.mxu0 0
        %2852 = vmatmul.mubr.bf16.gmra.mxu0 %v2742
        %v2853 = vpop.f32.mrf.mxu0
        %v2854 = vadd.f32 0.0, %v2853
        %v2855 = vpop.f32.mrf.mxu0
        %v2856 = vpop.f32.mrf.mxu0
        %v2857 = vadd.f32 0.0, %v2856
        %v2858 = vpop.f32.mrf.mxu0
        %2859 = vmatprep.mubr.bf16.mxu0 0
        %2860 = vmatmul.mubr.bf16.gmra.mxu0 %v2745
        %v2861 = vpop.f32.mrf.mxu0
        %v2862 = vadd.f32 0.0, %v2861
        %v2863 = vpop.f32.mrf.mxu0
        %v2864 = vpop.f32.mrf.mxu0
        %v2865 = vadd.f32 0.0, %v2864
        %v2866 = vpop.f32.mrf.mxu0
        %2867 = vmatprep.mubr.bf16.mxu0 0
        %2868 = vmatmul.mubr.bf16.gmra.mxu0 %v2748
        %v2869 = vpop.f32.mrf.mxu0
        %v2870 = vadd.f32 0.0, %v2869
        %v2871 = vpop.f32.mrf.mxu0
        %v2872 = vpop.f32.mrf.mxu0
        %v2873 = vadd.f32 0.0, %v2872
        %v2874 = vpop.f32.mrf.mxu0
        %2875 = vmatprep.mubr.bf16.mxu0 0
        %2876 = vmatmul.mubr.bf16.gmra.mxu0 %v2751
        %v2877 = vpop.f32.mrf.mxu0
        %v2878 = vadd.f32 0.0, %v2877
        %v2879 = vpop.f32.mrf.mxu0
        %v2880 = vpop.f32.mrf.mxu0
        %v2881 = vadd.f32 0.0, %v2880
        %v2882 = vpop.f32.mrf.mxu0
        %2883 = vmatprep.mubr.bf16.mxu0 0
        %2884 = vmatmul.mubr.bf16.gmra.mxu0 %v2754
        %v2885 = vpop.f32.mrf.mxu0
        %v2886 = vadd.f32 0.0, %v2885
        %v2887 = vpop.f32.mrf.mxu0
        %v2888 = vpop.f32.mrf.mxu0
        %v2889 = vadd.f32 0.0, %v2888
        %v2890 = vpop.f32.mrf.mxu0
        %2891 = vmatprep.mubr.bf16.mxu0 0
        %2892 = vmatmul.mubr.bf16.gmra.mxu0 %v2757
        %v2893 = vpop.f32.mrf.mxu0
        %v2894 = vadd.f32 0.0, %v2893
        %v2895 = vpop.f32.mrf.mxu0
        %v2896 = vpop.f32.mrf.mxu0
        %v2897 = vadd.f32 0.0, %v2896
        %v2898 = vpop.f32.mrf.mxu0
        %2899 = vmatprep.mubr.bf16.mxu0 0
        %2900 = vmatmul.mubr.bf16.gmra.mxu0 %v2760
        %v2901 = vpop.f32.mrf.mxu0
        %v2902 = vadd.f32 0.0, %v2901
        %v2903 = vpop.f32.mrf.mxu0
        %v2904 = vpop.f32.mrf.mxu0
        %v2905 = vadd.f32 0.0, %v2904
        %v2906 = vpop.f32.mrf.mxu0
        %2907 = vmatprep.mubr.bf16.mxu0 0
        %2908 = vmatmul.mubr.bf16.gmra.mxu0 %v2763
        %v2909 = vpop.f32.mrf.mxu0
        %v2910 = vadd.f32 0.0, %v2909
        %v2911 = vpop.f32.mrf.mxu0
        %v2912 = vpop.f32.mrf.mxu0
        %v2913 = vadd.f32 0.0, %v2912
        %v2914 = vpop.f32.mrf.mxu0
        %2915 = vmatprep.mubr.bf16.mxu0 0
        %2916 = vmatmul.mubr.bf16.gmra.mxu0 %v2766
        %v2917 = vpop.f32.mrf.mxu0
        %v2918 = vadd.f32 0.0, %v2917
        %v2919 = vpop.f32.mrf.mxu0
        %v2920 = vpop.f32.mrf.mxu0
        %v2921 = vadd.f32 0.0, %v2920
        %v2922 = vpop.f32.mrf.mxu0
        %2923 = vmatprep.mubr.bf16.mxu0 0
        %2924 = vmatmul.mubr.bf16.gmra.mxu0 %v2769
        %v2925 = vpop.f32.mrf.mxu0
        %v2926 = vadd.f32 0.0, %v2925
        %v2927 = vpop.f32.mrf.mxu0
        %v2928 = vpop.f32.mrf.mxu0
        %v2929 = vadd.f32 0.0, %v2928
        %v2930 = vpop.f32.mrf.mxu0
        %2931 = vdwg.mxu0
        %v2932 = vadd.f32 %v2532, %v2806
        %v2933 = vadd.f32 %v2535, %v2809
        %v2934 = vadd.f32 %v2540, %v2814
        %v2935 = vadd.f32 %v2543, %v2817
        %v2936 = vadd.f32 %v2548, %v2822
        %v2937 = vadd.f32 %v2551, %v2825
        %v2938 = vadd.f32 %v2556, %v2830
        %v2939 = vadd.f32 %v2559, %v2833
        %v2940 = vadd.f32 %v2564, %v2838
        %v2941 = vadd.f32 %v2567, %v2841
        %v2942 = vadd.f32 %v2572, %v2846
        %v2943 = vadd.f32 %v2575, %v2849
        %v2944 = vadd.f32 %v2580, %v2854
        %v2945 = vadd.f32 %v2583, %v2857
        %v2946 = vadd.f32 %v2588, %v2862
        %v2947 = vadd.f32 %v2591, %v2865
        %v2948 = vadd.f32 %v2596, %v2870
        %v2949 = vadd.f32 %v2599, %v2873
        %v2950 = vadd.f32 %v2604, %v2878
        %v2951 = vadd.f32 %v2607, %v2881
        %v2952 = vadd.f32 %v2612, %v2886
        %v2953 = vadd.f32 %v2615, %v2889
        %v2954 = vadd.f32 %v2620, %v2894
        %v2955 = vadd.f32 %v2623, %v2897
        %v2956 = vadd.f32 %v2628, %v2902
        %v2957 = vadd.f32 %v2631, %v2905
        %v2958 = vadd.f32 %v2636, %v2910
        %v2959 = vadd.f32 %v2639, %v2913
        %v2960 = vadd.f32 %v2644, %v2918
        %v2961 = vadd.f32 %v2647, %v2921
        %v2962 = vadd.f32 %v2652, %v2926
        %v2963 = vadd.f32 %v2655, %v2929
        %s2964 = scalar_lea.vmem [#allocation7], 48
        %v2965 = vld [vmem:[%s2964] sm:$0xf]
        %v2966 = vld [vmem:[%s2964 + $0x4] sm:$0xf]
        %v2967 = vld [vmem:[%s2964 + $0x8] sm:$0xf]
        %v2968 = vld [vmem:[%s2964 + $0xc] sm:$0xf]
        %vm2969 = vsmask.f32 6400
        %v2970 = vrot.slane %v2105, 1
        %v2971 = vrot.slane %v2107, 2
        %v2972 = vor.u32 %v2970, %v2971
        %v2973 = vrot.slane %v2116, 1
        %v2974 = vrot.slane %v2112, 2
        %v2975 = vor.u32 %v2973, %v2974
        %v2976 = vsel %vm2969, %v2972, %v2975
        %v2977 = vrot.slane %v2124, 1
        %v2978 = vrot.slane %v2120, 2
        %v2979 = vor.u32 %v2977, %v2978
        %v2980 = vsel %vm2969, %v2975, %v2979
        %v2981 = vrot.slane %v2132, 1
        %v2982 = vrot.slane %v2128, 2
        %v2983 = vor.u32 %v2981, %v2982
        %v2984 = vsel %vm2969, %v2979, %v2983
        %v2985 = vrot.slane %v2140, 1
        %v2986 = vrot.slane %v2136, 2
        %v2987 = vor.u32 %v2985, %v2986
        %v2988 = vsel %vm2969, %v2983, %v2987
        %v2989 = vrot.slane %v2148, 1
        %v2990 = vrot.slane %v2144, 2
        %v2991 = vor.u32 %v2989, %v2990
        %v2992 = vsel %vm2969, %v2987, %v2991
        %v2993 = vrot.slane %v2156, 1
        %v2994 = vrot.slane %v2152, 2
        %v2995 = vor.u32 %v2993, %v2994
        %v2996 = vsel %vm2969, %v2991, %v2995
        %v2997 = vrot.slane %v2164, 1
        %v2998 = vrot.slane %v2160, 2
        %v2999 = vor.u32 %v2997, %v2998
        %v3000 = vsel %vm2969, %v2995, %v2999
        %v3001 = vrot.slane %v2172, 1
        %v3002 = vrot.slane %v2168, 2
        %v3003 = vor.u32 %v3001, %v3002
        %v3004 = vsel %vm2969, %v2999, %v3003
        %v3005 = vrot.slane %v2180, 1
        %v3006 = vrot.slane %v2176, 2
        %v3007 = vor.u32 %v3005, %v3006
        %v3008 = vsel %vm2969, %v3003, %v3007
        %v3009 = vrot.slane %v2188, 1
        %v3010 = vrot.slane %v2184, 2
        %v3011 = vor.u32 %v3009, %v3010
        %v3012 = vsel %vm2969, %v3007, %v3011
        %v3013 = vrot.slane %v2196, 1
        %v3014 = vrot.slane %v2192, 2
        %v3015 = vor.u32 %v3013, %v3014
        %v3016 = vsel %vm2969, %v3011, %v3015
        %v3017 = vrot.slane %v2204, 1
        %v3018 = vrot.slane %v2200, 2
        %v3019 = vor.u32 %v3017, %v3018
        %v3020 = vsel %vm2969, %v3015, %v3019
        %v3021 = vrot.slane %v2212, 1
        %v3022 = vrot.slane %v2208, 2
        %v3023 = vor.u32 %v3021, %v3022
        %v3024 = vsel %vm2969, %v3019, %v3023
        %v3025 = vrot.slane %v2220, 1
        %v3026 = vrot.slane %v2216, 2
        %v3027 = vor.u32 %v3025, %v3026
        %v3028 = vsel %vm2969, %v3023, %v3027
        %v3029 = vrot.slane %v2228, 1
        %v3030 = vrot.slane %v2224, 2
        %v3031 = vor.u32 %v3029, %v3030
        %v3032 = vsel %vm2969, %v3027, %v3031
        %v3037 = vunpack.c.l.b16 %v2965
        %v3038 = vunpack.c.l.b16 %v2966
        %v3039 = vunpack.c.l.b16 %v2967
        %v3040 = vunpack.c.l.b16 %v2968
        %v3041 = vpack.c.b16 %v3038, %v3037
        %v3042 = vpack.c.b16 %v3040, %v3039
        %v3046 = vsel %vm2243, %v2976, 0
        %v3049 = vsel %vm2243, %v2980, 0
        %v3052 = vsel %vm2243, %v2984, 0
        %v3055 = vsel %vm2243, %v2988, 0
        %v3058 = vsel %vm2243, %v2992, 0
        %v3061 = vsel %vm2243, %v2996, 0
        %v3064 = vsel %vm2243, %v3000, 0
        %v3067 = vsel %vm2243, %v3004, 0
        %v3070 = vsel %vm2243, %v3008, 0
        %v3073 = vsel %vm2243, %v3012, 0
        %v3076 = vsel %vm2243, %v3016, 0
        %v3079 = vsel %vm2243, %v3020, 0
        %v3082 = vsel %vm2243, %v3024, 0
        %v3085 = vsel %vm2243, %v3028, 0
        %v3088 = vsel %vm2243, %v3032, 0
        %v3091 = vsel %vm2243, %v3031, 0
        %3093 = vmatprep.subr.bf16.mxu0 0
        %3094 = vmatpush1.bf16.msra.mxu0 0
        %3095 = vmatprep.subr.bf16.mxu0 0
        %3096 = vmatpush1.bf16.msra.mxu0 0
        %3097 = vmatprep.subr.bf16.mxu0 0
        %3098 = vmatpush1.bf16.msra.mxu0 0
        %3099 = vmatprep.subr.bf16.mxu0 0
        %3100 = vmatpush1.bf16.msra.mxu0 0
        %3101 = vmatprep.subr.bf16.mxu0 0
        %3102 = vmatpush1.bf16.msra.mxu0 0
        %3103 = vmatprep.subr.bf16.mxu0 0
        %3104 = vmatpush1.bf16.msra.mxu0 0
        %3105 = vmatprep.subr.bf16.mxu0 0
        %3106 = vmatpush1.bf16.msra.mxu0 %v3042
        %3107 = vmatprep.subr.bf16.mxu0 0
        %3108 = vmatpush1.bf16.msra.mxu0 %v3041
        %3109 = vmatprep.subr.bf16.mxu0 0
        %3110 = vmatpush2.bf16.msra.mxu0 0
        %3111 = vmatprep.subr.bf16.mxu0 0
        %3112 = vmatpush2.bf16.msra.mxu0 0
        %3113 = vmatprep.subr.bf16.mxu0 0
        %3114 = vmatpush2.bf16.msra.mxu0 0
        %3115 = vmatprep.subr.bf16.mxu0 0
        %3116 = vmatpush2.bf16.msra.mxu0 0
        %3117 = vmatprep.subr.bf16.mxu0 0
        %3118 = vmatpush2.bf16.msra.mxu0 0
        %3119 = vmatprep.subr.bf16.mxu0 0
        %3120 = vmatpush2.bf16.msra.mxu0 0
        %3121 = vmatprep.subr.bf16.mxu0 0
        %3122 = vmatpush2.bf16.msra.mxu0 0
        %3123 = vmatprep.subr.bf16.mxu0 0
        %3124 = vmatpush2.bf16.msra.mxu0 0
        %3125 = vmatprep.mubr.bf16.mxu0 0
        %3126 = vmatmul.mubr.bf16.gmra.mxu0 %v3046
        %v3127 = vpop.f32.mrf.mxu0
        %v3128 = vadd.f32 0.0, %v3127
        %v3129 = vpop.f32.mrf.mxu0
        %v3130 = vpop.f32.mrf.mxu0
        %v3131 = vadd.f32 0.0, %v3130
        %v3132 = vpop.f32.mrf.mxu0
        %3133 = vmatprep.mubr.bf16.mxu0 0
        %3134 = vmatmul.mubr.bf16.gmra.mxu0 %v3049
        %v3135 = vpop.f32.mrf.mxu0
        %v3136 = vadd.f32 0.0, %v3135
        %v3137 = vpop.f32.mrf.mxu0
        %v3138 = vpop.f32.mrf.mxu0
        %v3139 = vadd.f32 0.0, %v3138
        %v3140 = vpop.f32.mrf.mxu0
        %3141 = vmatprep.mubr.bf16.mxu0 0
        %3142 = vmatmul.mubr.bf16.gmra.mxu0 %v3052
        %v3143 = vpop.f32.mrf.mxu0
        %v3144 = vadd.f32 0.0, %v3143
        %v3145 = vpop.f32.mrf.mxu0
        %v3146 = vpop.f32.mrf.mxu0
        %v3147 = vadd.f32 0.0, %v3146
        %v3148 = vpop.f32.mrf.mxu0
        %3149 = vmatprep.mubr.bf16.mxu0 0
        %3150 = vmatmul.mubr.bf16.gmra.mxu0 %v3055
        %v3151 = vpop.f32.mrf.mxu0
        %v3152 = vadd.f32 0.0, %v3151
        %v3153 = vpop.f32.mrf.mxu0
        %v3154 = vpop.f32.mrf.mxu0
        %v3155 = vadd.f32 0.0, %v3154
        %v3156 = vpop.f32.mrf.mxu0
        %3157 = vmatprep.mubr.bf16.mxu0 0
        %3158 = vmatmul.mubr.bf16.gmra.mxu0 %v3058
        %v3159 = vpop.f32.mrf.mxu0
        %v3160 = vadd.f32 0.0, %v3159
        %v3161 = vpop.f32.mrf.mxu0
        %v3162 = vpop.f32.mrf.mxu0
        %v3163 = vadd.f32 0.0, %v3162
        %v3164 = vpop.f32.mrf.mxu0
        %3165 = vmatprep.mubr.bf16.mxu0 0
        %3166 = vmatmul.mubr.bf16.gmra.mxu0 %v3061
        %v3167 = vpop.f32.mrf.mxu0
        %v3168 = vadd.f32 0.0, %v3167
        %v3169 = vpop.f32.mrf.mxu0
        %v3170 = vpop.f32.mrf.mxu0
        %v3171 = vadd.f32 0.0, %v3170
        %v3172 = vpop.f32.mrf.mxu0
        %3173 = vmatprep.mubr.bf16.mxu0 0
        %3174 = vmatmul.mubr.bf16.gmra.mxu0 %v3064
        %v3175 = vpop.f32.mrf.mxu0
        %v3176 = vadd.f32 0.0, %v3175
        %v3177 = vpop.f32.mrf.mxu0
        %v3178 = vpop.f32.mrf.mxu0
        %v3179 = vadd.f32 0.0, %v3178
        %v3180 = vpop.f32.mrf.mxu0
        %3181 = vmatprep.mubr.bf16.mxu0 0
        %3182 = vmatmul.mubr.bf16.gmra.mxu0 %v3067
        %v3183 = vpop.f32.mrf.mxu0
        %v3184 = vadd.f32 0.0, %v3183
        %v3185 = vpop.f32.mrf.mxu0
        %v3186 = vpop.f32.mrf.mxu0
        %v3187 = vadd.f32 0.0, %v3186
        %v3188 = vpop.f32.mrf.mxu0
        %3189 = vmatprep.mubr.bf16.mxu0 0
        %3190 = vmatmul.mubr.bf16.gmra.mxu0 %v3070
        %v3191 = vpop.f32.mrf.mxu0
        %v3192 = vadd.f32 0.0, %v3191
        %v3193 = vpop.f32.mrf.mxu0
        %v3194 = vpop.f32.mrf.mxu0
        %v3195 = vadd.f32 0.0, %v3194
        %v3196 = vpop.f32.mrf.mxu0
        %3197 = vmatprep.mubr.bf16.mxu0 0
        %3198 = vmatmul.mubr.bf16.gmra.mxu0 %v3073
        %v3199 = vpop.f32.mrf.mxu0
        %v3200 = vadd.f32 0.0, %v3199
        %v3201 = vpop.f32.mrf.mxu0
        %v3202 = vpop.f32.mrf.mxu0
        %v3203 = vadd.f32 0.0, %v3202
        %v3204 = vpop.f32.mrf.mxu0
        %3205 = vmatprep.mubr.bf16.mxu0 0
        %3206 = vmatmul.mubr.bf16.gmra.mxu0 %v3076
        %v3207 = vpop.f32.mrf.mxu0
        %v3208 = vadd.f32 0.0, %v3207
        %v3209 = vpop.f32.mrf.mxu0
        %v3210 = vpop.f32.mrf.mxu0
        %v3211 = vadd.f32 0.0, %v3210
        %v3212 = vpop.f32.mrf.mxu0
        %3213 = vmatprep.mubr.bf16.mxu0 0
        %3214 = vmatmul.mubr.bf16.gmra.mxu0 %v3079
        %v3215 = vpop.f32.mrf.mxu0
        %v3216 = vadd.f32 0.0, %v3215
        %v3217 = vpop.f32.mrf.mxu0
        %v3218 = vpop.f32.mrf.mxu0
        %v3219 = vadd.f32 0.0, %v3218
        %v3220 = vpop.f32.mrf.mxu0
        %3221 = vmatprep.mubr.bf16.mxu0 0
        %3222 = vmatmul.mubr.bf16.gmra.mxu0 %v3082
        %v3223 = vpop.f32.mrf.mxu0
        %v3224 = vadd.f32 0.0, %v3223
        %v3225 = vpop.f32.mrf.mxu0
        %v3226 = vpop.f32.mrf.mxu0
        %v3227 = vadd.f32 0.0, %v3226
        %v3228 = vpop.f32.mrf.mxu0
        %3229 = vmatprep.mubr.bf16.mxu0 0
        %3230 = vmatmul.mubr.bf16.gmra.mxu0 %v3085
        %v3231 = vpop.f32.mrf.mxu0
        %v3232 = vadd.f32 0.0, %v3231
        %v3233 = vpop.f32.mrf.mxu0
        %v3234 = vpop.f32.mrf.mxu0
        %v3235 = vadd.f32 0.0, %v3234
        %v3236 = vpop.f32.mrf.mxu0
        %3237 = vmatprep.mubr.bf16.mxu0 0
        %3238 = vmatmul.mubr.bf16.gmra.mxu0 %v3088
        %v3239 = vpop.f32.mrf.mxu0
        %v3240 = vadd.f32 0.0, %v3239
        %v3241 = vpop.f32.mrf.mxu0
        %v3242 = vpop.f32.mrf.mxu0
        %v3243 = vadd.f32 0.0, %v3242
        %v3244 = vpop.f32.mrf.mxu0
        %3245 = vmatprep.mubr.bf16.mxu0 0
        %3246 = vmatmul.mubr.bf16.gmra.mxu0 %v3091
        %v3247 = vpop.f32.mrf.mxu0
        %v3248 = vadd.f32 0.0, %v3247
        %v3249 = vpop.f32.mrf.mxu0
        %v3250 = vpop.f32.mrf.mxu0
        %v3251 = vadd.f32 0.0, %v3250
        %v3252 = vpop.f32.mrf.mxu0
        %3253 = vdwg.mxu0
        %v3254 = vadd.f32 %v2932, %v3128
        %v3255 = vadd.f32 %v2933, %v3131
        %v3256 = vadd.f32 %v2934, %v3136
        %v3257 = vadd.f32 %v2935, %v3139
        %v3258 = vadd.f32 %v2936, %v3144
        %v3259 = vadd.f32 %v2937, %v3147
        %v3260 = vadd.f32 %v2938, %v3152
        %v3261 = vadd.f32 %v2939, %v3155
        %v3262 = vadd.f32 %v2940, %v3160
        %v3263 = vadd.f32 %v2941, %v3163
        %v3264 = vadd.f32 %v2942, %v3168
        %v3265 = vadd.f32 %v2943, %v3171
        %v3266 = vadd.f32 %v2944, %v3176
        %v3267 = vadd.f32 %v2945, %v3179
        %v3268 = vadd.f32 %v2946, %v3184
        %v3269 = vadd.f32 %v2947, %v3187
        %v3270 = vadd.f32 %v2948, %v3192
        %v3271 = vadd.f32 %v2949, %v3195
        %v3272 = vadd.f32 %v2950, %v3200
        %v3273 = vadd.f32 %v2951, %v3203
        %v3274 = vadd.f32 %v2952, %v3208
        %v3275 = vadd.f32 %v2953, %v3211
        %v3276 = vadd.f32 %v2954, %v3216
        %v3277 = vadd.f32 %v2955, %v3219
        %v3278 = vadd.f32 %v2956, %v3224
        %v3279 = vadd.f32 %v2957, %v3227
        %v3280 = vadd.f32 %v2958, %v3232
        %v3281 = vadd.f32 %v2959, %v3235
        %v3282 = vadd.f32 %v2960, %v3240
        %v3283 = vadd.f32 %v2961, %v3243
        %v3284 = vadd.f32 %v2962, %v3248
        %v3285 = vadd.f32 %v2963, %v3251
        %s3286 = scalar_lea.vmem [#allocation7], 64
        %v3287 = vld [vmem:[%s3286] sm:$0xf]
        %v3288 = vld [vmem:[%s3286 + $0x4] sm:$0xf]
        %v3289 = vld [vmem:[%s3286 + $0x8] sm:$0xf]
        %v3290 = vld [vmem:[%s3286 + $0xc] sm:$0xf]
        %vm3291 = vcmask 1045504
        %v3292 = vrot.slane %v2078, 2
        %v3293 = vrot.slane %v2079, 2
        %v3294 = vsel %vm3291, %v3292, %v3293
        %v3295 = vrot.slane %v2080, 2
        %v3296 = vsel %vm3291, %v3293, %v3295
        %v3297 = vrot.slane %v2081, 2
        %v3298 = vsel %vm3291, %v3295, %v3297
        %v3299 = vrot.slane %v2082, 2
        %v3300 = vsel %vm3291, %v3297, %v3299
        %v3301 = vrot.slane %v2083, 2
        %v3302 = vsel %vm3291, %v3299, %v3301
        %v3303 = vrot.slane %v2084, 2
        %v3304 = vsel %vm3291, %v3301, %v3303
        %v3305 = vrot.slane %v2085, 2
        %v3306 = vsel %vm3291, %v3303, %v3305
        %v3307 = vrot.slane %v2086, 2
        %v3308 = vsel %vm3291, %v3305, %v3307
        %v3309 = vrot.slane %v2087, 2
        %v3310 = vsel %vm3291, %v3307, %v3309
        %v3311 = vrot.slane %v2088, 2
        %v3312 = vsel %vm3291, %v3309, %v3311
        %v3313 = vrot.slane %v2089, 2
        %v3314 = vsel %vm3291, %v3311, %v3313
        %v3315 = vrot.slane %v2090, 2
        %v3316 = vsel %vm3291, %v3313, %v3315
        %v3317 = vrot.slane %v2091, 2
        %v3318 = vsel %vm3291, %v3315, %v3317
        %v3319 = vrot.slane %v2092, 2
        %v3320 = vsel %vm3291, %v3317, %v3319
        %v3321 = vrot.slane %v2093, 2
        %v3322 = vsel %vm3291, %v3319, %v3321
        %v3327 = vunpack.c.l.b16 %v3287
        %v3328 = vunpack.c.l.b16 %v3288
        %v3329 = vunpack.c.l.b16 %v3289
        %v3330 = vunpack.c.l.b16 %v3290
        %v3331 = vpack.c.b16 %v3328, %v3327
        %v3332 = vpack.c.b16 %v3330, %v3329
        %v3336 = vsel %vm2243, %v3294, 0
        %v3339 = vsel %vm2243, %v3296, 0
        %v3342 = vsel %vm2243, %v3298, 0
        %v3345 = vsel %vm2243, %v3300, 0
        %v3348 = vsel %vm2243, %v3302, 0
        %v3351 = vsel %vm2243, %v3304, 0
        %v3354 = vsel %vm2243, %v3306, 0
        %v3357 = vsel %vm2243, %v3308, 0
        %v3360 = vsel %vm2243, %v3310, 0
        %v3363 = vsel %vm2243, %v3312, 0
        %v3366 = vsel %vm2243, %v3314, 0
        %v3369 = vsel %vm2243, %v3316, 0
        %v3372 = vsel %vm2243, %v3318, 0
        %v3375 = vsel %vm2243, %v3320, 0
        %v3378 = vsel %vm2243, %v3322, 0
        %v3381 = vsel %vm2243, %v3321, 0
        %3383 = vmatprep.subr.bf16.mxu0 0
        %3384 = vmatpush1.bf16.msra.mxu0 0
        %3385 = vmatprep.subr.bf16.mxu0 0
        %3386 = vmatpush1.bf16.msra.mxu0 0
        %3387 = vmatprep.subr.bf16.mxu0 0
        %3388 = vmatpush1.bf16.msra.mxu0 0
        %3389 = vmatprep.subr.bf16.mxu0 0
        %3390 = vmatpush1.bf16.msra.mxu0 0
        %3391 = vmatprep.subr.bf16.mxu0 0
        %3392 = vmatpush1.bf16.msra.mxu0 0
        %3393 = vmatprep.subr.bf16.mxu0 0
        %3394 = vmatpush1.bf16.msra.mxu0 0
        %3395 = vmatprep.subr.bf16.mxu0 0
        %3396 = vmatpush1.bf16.msra.mxu0 %v3332
        %3397 = vmatprep.subr.bf16.mxu0 0
        %3398 = vmatpush1.bf16.msra.mxu0 %v3331
        %3399 = vmatprep.subr.bf16.mxu0 0
        %3400 = vmatpush2.bf16.msra.mxu0 0
        %3401 = vmatprep.subr.bf16.mxu0 0
        %3402 = vmatpush2.bf16.msra.mxu0 0
        %3403 = vmatprep.subr.bf16.mxu0 0
        %3404 = vmatpush2.bf16.msra.mxu0 0
        %3405 = vmatprep.subr.bf16.mxu0 0
        %3406 = vmatpush2.bf16.msra.mxu0 0
        %3407 = vmatprep.subr.bf16.mxu0 0
        %3408 = vmatpush2.bf16.msra.mxu0 0
        %3409 = vmatprep.subr.bf16.mxu0 0
        %3410 = vmatpush2.bf16.msra.mxu0 0
        %3411 = vmatprep.subr.bf16.mxu0 0
        %3412 = vmatpush2.bf16.msra.mxu0 0
        %3413 = vmatprep.subr.bf16.mxu0 0
        %3414 = vmatpush2.bf16.msra.mxu0 0
        %3415 = vmatprep.mubr.bf16.mxu0 0
        %3416 = vmatmul.mubr.bf16.gmra.mxu0 %v3336
        %v3417 = vpop.f32.mrf.mxu0
        %v3418 = vadd.f32 0.0, %v3417
        %v3419 = vpop.f32.mrf.mxu0
        %v3420 = vpop.f32.mrf.mxu0
        %v3421 = vadd.f32 0.0, %v3420
        %v3422 = vpop.f32.mrf.mxu0
        %3423 = vmatprep.mubr.bf16.mxu0 0
        %3424 = vmatmul.mubr.bf16.gmra.mxu0 %v3339
        %v3425 = vpop.f32.mrf.mxu0
        %v3426 = vadd.f32 0.0, %v3425
        %v3427 = vpop.f32.mrf.mxu0
        %v3428 = vpop.f32.mrf.mxu0
        %v3429 = vadd.f32 0.0, %v3428
        %v3430 = vpop.f32.mrf.mxu0
        %3431 = vmatprep.mubr.bf16.mxu0 0
        %3432 = vmatmul.mubr.bf16.gmra.mxu0 %v3342
        %v3433 = vpop.f32.mrf.mxu0
        %v3434 = vadd.f32 0.0, %v3433
        %v3435 = vpop.f32.mrf.mxu0
        %v3436 = vpop.f32.mrf.mxu0
        %v3437 = vadd.f32 0.0, %v3436
        %v3438 = vpop.f32.mrf.mxu0
        %3439 = vmatprep.mubr.bf16.mxu0 0
        %3440 = vmatmul.mubr.bf16.gmra.mxu0 %v3345
        %v3441 = vpop.f32.mrf.mxu0
        %v3442 = vadd.f32 0.0, %v3441
        %v3443 = vpop.f32.mrf.mxu0
        %v3444 = vpop.f32.mrf.mxu0
        %v3445 = vadd.f32 0.0, %v3444
        %v3446 = vpop.f32.mrf.mxu0
        %3447 = vmatprep.mubr.bf16.mxu0 0
        %3448 = vmatmul.mubr.bf16.gmra.mxu0 %v3348
        %v3449 = vpop.f32.mrf.mxu0
        %v3450 = vadd.f32 0.0, %v3449
        %v3451 = vpop.f32.mrf.mxu0
        %v3452 = vpop.f32.mrf.mxu0
        %v3453 = vadd.f32 0.0, %v3452
        %v3454 = vpop.f32.mrf.mxu0
        %3455 = vmatprep.mubr.bf16.mxu0 0
        %3456 = vmatmul.mubr.bf16.gmra.mxu0 %v3351
        %v3457 = vpop.f32.mrf.mxu0
        %v3458 = vadd.f32 0.0, %v3457
        %v3459 = vpop.f32.mrf.mxu0
        %v3460 = vpop.f32.mrf.mxu0
        %v3461 = vadd.f32 0.0, %v3460
        %v3462 = vpop.f32.mrf.mxu0
        %3463 = vmatprep.mubr.bf16.mxu0 0
        %3464 = vmatmul.mubr.bf16.gmra.mxu0 %v3354
        %v3465 = vpop.f32.mrf.mxu0
        %v3466 = vadd.f32 0.0, %v3465
        %v3467 = vpop.f32.mrf.mxu0
        %v3468 = vpop.f32.mrf.mxu0
        %v3469 = vadd.f32 0.0, %v3468
        %v3470 = vpop.f32.mrf.mxu0
        %3471 = vmatprep.mubr.bf16.mxu0 0
        %3472 = vmatmul.mubr.bf16.gmra.mxu0 %v3357
        %v3473 = vpop.f32.mrf.mxu0
        %v3474 = vadd.f32 0.0, %v3473
        %v3475 = vpop.f32.mrf.mxu0
        %v3476 = vpop.f32.mrf.mxu0
        %v3477 = vadd.f32 0.0, %v3476
        %v3478 = vpop.f32.mrf.mxu0
        %3479 = vmatprep.mubr.bf16.mxu0 0
        %3480 = vmatmul.mubr.bf16.gmra.mxu0 %v3360
        %v3481 = vpop.f32.mrf.mxu0
        %v3482 = vadd.f32 0.0, %v3481
        %v3483 = vpop.f32.mrf.mxu0
        %v3484 = vpop.f32.mrf.mxu0
        %v3485 = vadd.f32 0.0, %v3484
        %v3486 = vpop.f32.mrf.mxu0
        %3487 = vmatprep.mubr.bf16.mxu0 0
        %3488 = vmatmul.mubr.bf16.gmra.mxu0 %v3363
        %v3489 = vpop.f32.mrf.mxu0
        %v3490 = vadd.f32 0.0, %v3489
        %v3491 = vpop.f32.mrf.mxu0
        %v3492 = vpop.f32.mrf.mxu0
        %v3493 = vadd.f32 0.0, %v3492
        %v3494 = vpop.f32.mrf.mxu0
        %3495 = vmatprep.mubr.bf16.mxu0 0
        %3496 = vmatmul.mubr.bf16.gmra.mxu0 %v3366
        %v3497 = vpop.f32.mrf.mxu0
        %v3498 = vadd.f32 0.0, %v3497
        %v3499 = vpop.f32.mrf.mxu0
        %v3500 = vpop.f32.mrf.mxu0
        %v3501 = vadd.f32 0.0, %v3500
        %v3502 = vpop.f32.mrf.mxu0
        %3503 = vmatprep.mubr.bf16.mxu0 0
        %3504 = vmatmul.mubr.bf16.gmra.mxu0 %v3369
        %v3505 = vpop.f32.mrf.mxu0
        %v3506 = vadd.f32 0.0, %v3505
        %v3507 = vpop.f32.mrf.mxu0
        %v3508 = vpop.f32.mrf.mxu0
        %v3509 = vadd.f32 0.0, %v3508
        %v3510 = vpop.f32.mrf.mxu0
        %3511 = vmatprep.mubr.bf16.mxu0 0
        %3512 = vmatmul.mubr.bf16.gmra.mxu0 %v3372
        %v3513 = vpop.f32.mrf.mxu0
        %v3514 = vadd.f32 0.0, %v3513
        %v3515 = vpop.f32.mrf.mxu0
        %v3516 = vpop.f32.mrf.mxu0
        %v3517 = vadd.f32 0.0, %v3516
        %v3518 = vpop.f32.mrf.mxu0
        %3519 = vmatprep.mubr.bf16.mxu0 0
        %3520 = vmatmul.mubr.bf16.gmra.mxu0 %v3375
        %v3521 = vpop.f32.mrf.mxu0
        %v3522 = vadd.f32 0.0, %v3521
        %v3523 = vpop.f32.mrf.mxu0
        %v3524 = vpop.f32.mrf.mxu0
        %v3525 = vadd.f32 0.0, %v3524
        %v3526 = vpop.f32.mrf.mxu0
        %3527 = vmatprep.mubr.bf16.mxu0 0
        %3528 = vmatmul.mubr.bf16.gmra.mxu0 %v3378
        %v3529 = vpop.f32.mrf.mxu0
        %v3530 = vadd.f32 0.0, %v3529
        %v3531 = vpop.f32.mrf.mxu0
        %v3532 = vpop.f32.mrf.mxu0
        %v3533 = vadd.f32 0.0, %v3532
        %v3534 = vpop.f32.mrf.mxu0
        %3535 = vmatprep.mubr.bf16.mxu0 0
        %3536 = vmatmul.mubr.bf16.gmra.mxu0 %v3381
        %v3537 = vpop.f32.mrf.mxu0
        %v3538 = vadd.f32 0.0, %v3537
        %v3539 = vpop.f32.mrf.mxu0
        %v3540 = vpop.f32.mrf.mxu0
        %v3541 = vadd.f32 0.0, %v3540
        %v3542 = vpop.f32.mrf.mxu0
        %3543 = vdwg.mxu0
        %v3544 = vadd.f32 %v3254, %v3418
        %v3545 = vadd.f32 %v3255, %v3421
        %v3546 = vadd.f32 %v3256, %v3426
        %v3547 = vadd.f32 %v3257, %v3429
        %v3548 = vadd.f32 %v3258, %v3434
        %v3549 = vadd.f32 %v3259, %v3437
        %v3550 = vadd.f32 %v3260, %v3442
        %v3551 = vadd.f32 %v3261, %v3445
        %v3552 = vadd.f32 %v3262, %v3450
        %v3553 = vadd.f32 %v3263, %v3453
        %v3554 = vadd.f32 %v3264, %v3458
        %v3555 = vadd.f32 %v3265, %v3461
        %v3556 = vadd.f32 %v3266, %v3466
        %v3557 = vadd.f32 %v3267, %v3469
        %v3558 = vadd.f32 %v3268, %v3474
        %v3559 = vadd.f32 %v3269, %v3477
        %v3560 = vadd.f32 %v3270, %v3482
        %v3561 = vadd.f32 %v3271, %v3485
        %v3562 = vadd.f32 %v3272, %v3490
        %v3563 = vadd.f32 %v3273, %v3493
        %v3564 = vadd.f32 %v3274, %v3498
        %v3565 = vadd.f32 %v3275, %v3501
        %v3566 = vadd.f32 %v3276, %v3506
        %v3567 = vadd.f32 %v3277, %v3509
        %v3568 = vadd.f32 %v3278, %v3514
        %v3569 = vadd.f32 %v3279, %v3517
        %v3570 = vadd.f32 %v3280, %v3522
        %v3571 = vadd.f32 %v3281, %v3525
        %v3572 = vadd.f32 %v3282, %v3530
        %v3573 = vadd.f32 %v3283, %v3533
        %v3574 = vadd.f32 %v3284, %v3538
        %v3575 = vadd.f32 %v3285, %v3541
        %v3576 = vld [vmem:[#allocation8] sm:$0x1]
        %v3578 = vlaneseq
        %v3579 = vshrl.u32 %v3578, 7
        %v3580 = vsub.s32 0, %v3579
        %v3581 = vrot.slane %v3576, %v3580
        %v3583 = vadd.f32 %v3544, %v3581
        %v3584 = vadd.f32 %v3545, %v3581
        %v3585 = vadd.f32 %v3546, %v3581
        %v3586 = vadd.f32 %v3547, %v3581
        %v3587 = vadd.f32 %v3548, %v3581
        %v3588 = vadd.f32 %v3549, %v3581
        %v3589 = vadd.f32 %v3550, %v3581
        %v3590 = vadd.f32 %v3551, %v3581
        %v3591 = vadd.f32 %v3552, %v3581
        %v3592 = vadd.f32 %v3553, %v3581
        %v3593 = vadd.f32 %v3554, %v3581
        %v3594 = vadd.f32 %v3555, %v3581
        %v3595 = vadd.f32 %v3556, %v3581
        %v3596 = vadd.f32 %v3557, %v3581
        %v3597 = vadd.f32 %v3558, %v3581
        %v3598 = vadd.f32 %v3559, %v3581
        %v3599 = vadd.f32 %v3560, %v3581
        %v3600 = vadd.f32 %v3561, %v3581
        %v3601 = vadd.f32 %v3562, %v3581
        %v3602 = vadd.f32 %v3563, %v3581
        %v3603 = vadd.f32 %v3564, %v3581
        %v3604 = vadd.f32 %v3565, %v3581
        %v3605 = vadd.f32 %v3566, %v3581
        %v3606 = vadd.f32 %v3567, %v3581
        %v3607 = vadd.f32 %v3568, %v3581
        %v3608 = vadd.f32 %v3569, %v3581
        %v3609 = vadd.f32 %v3570, %v3581
        %v3610 = vadd.f32 %v3571, %v3581
        %v3611 = vadd.f32 %v3572, %v3581
        %v3612 = vadd.f32 %v3573, %v3581
        %v3613 = vadd.f32 %v3574, %v3581
        %v3614 = vadd.f32 %v3575, %v3581
        %vm3615 = vcmp.gt.f32.partialorder %v3583, 0.0
        %vm3616 = vcmp.gt.f32.partialorder %v3584, 0.0
        %vm3617 = vcmp.gt.f32.partialorder %v3585, 0.0
        %vm3618 = vcmp.gt.f32.partialorder %v3586, 0.0
        %vm3619 = vcmp.gt.f32.partialorder %v3587, 0.0
        %vm3620 = vcmp.gt.f32.partialorder %v3588, 0.0
        %vm3621 = vcmp.gt.f32.partialorder %v3589, 0.0
        %vm3622 = vcmp.gt.f32.partialorder %v3590, 0.0
        %vm3623 = vcmp.gt.f32.partialorder %v3591, 0.0
        %vm3624 = vcmp.gt.f32.partialorder %v3592, 0.0
        %vm3625 = vcmp.gt.f32.partialorder %v3593, 0.0
        %vm3626 = vcmp.gt.f32.partialorder %v3594, 0.0
        %vm3627 = vcmp.gt.f32.partialorder %v3595, 0.0
        %vm3628 = vcmp.gt.f32.partialorder %v3596, 0.0
        %vm3629 = vcmp.gt.f32.partialorder %v3597, 0.0
        %vm3630 = vcmp.gt.f32.partialorder %v3598, 0.0
        %vm3631 = vcmp.gt.f32.partialorder %v3599, 0.0
        %vm3632 = vcmp.gt.f32.partialorder %v3600, 0.0
        %vm3633 = vcmp.gt.f32.partialorder %v3601, 0.0
        %vm3634 = vcmp.gt.f32.partialorder %v3602, 0.0
        %vm3635 = vcmp.gt.f32.partialorder %v3603, 0.0
        %vm3636 = vcmp.gt.f32.partialorder %v3604, 0.0
        %vm3637 = vcmp.gt.f32.partialorder %v3605, 0.0
        %vm3638 = vcmp.gt.f32.partialorder %v3606, 0.0
        %vm3639 = vcmp.gt.f32.partialorder %v3607, 0.0
        %vm3640 = vcmp.gt.f32.partialorder %v3608, 0.0
        %vm3641 = vcmp.gt.f32.partialorder %v3609, 0.0
        %vm3642 = vcmp.gt.f32.partialorder %v3610, 0.0
        %vm3643 = vcmp.gt.f32.partialorder %v3611, 0.0
        %vm3644 = vcmp.gt.f32.partialorder %v3612, 0.0
        %vm3645 = vcmp.gt.f32.partialorder %v3613, 0.0
        %vm3646 = vcmp.gt.f32.partialorder %v3614, 0.0
        %v3647 = vmin.f32 %v3583, 0.0
        %v3648 = vmin.f32 %v3584, 0.0
        %v3649 = vmin.f32 %v3585, 0.0
        %v3650 = vmin.f32 %v3586, 0.0
        %v3651 = vmin.f32 %v3587, 0.0
        %v3652 = vmin.f32 %v3588, 0.0
        %v3653 = vmin.f32 %v3589, 0.0
        %v3654 = vmin.f32 %v3590, 0.0
        %v3655 = vmin.f32 %v3591, 0.0
        %v3656 = vmin.f32 %v3592, 0.0
        %v3657 = vmin.f32 %v3593, 0.0
        %v3658 = vmin.f32 %v3594, 0.0
        %v3659 = vmin.f32 %v3595, 0.0
        %v3660 = vmin.f32 %v3596, 0.0
        %v3661 = vmin.f32 %v3597, 0.0
        %v3662 = vmin.f32 %v3598, 0.0
        %v3663 = vmin.f32 %v3599, 0.0
        %v3664 = vmin.f32 %v3600, 0.0
        %v3665 = vmin.f32 %v3601, 0.0
        %v3666 = vmin.f32 %v3602, 0.0
        %v3667 = vmin.f32 %v3603, 0.0
        %v3668 = vmin.f32 %v3604, 0.0
        %v3669 = vmin.f32 %v3605, 0.0
        %v3670 = vmin.f32 %v3606, 0.0
        %v3671 = vmin.f32 %v3607, 0.0
        %v3672 = vmin.f32 %v3608, 0.0
        %v3673 = vmin.f32 %v3609, 0.0
        %v3674 = vmin.f32 %v3610, 0.0
        %v3675 = vmin.f32 %v3611, 0.0
        %v3676 = vmin.f32 %v3612, 0.0
        %v3677 = vmin.f32 %v3613, 0.0
        %v3678 = vmin.f32 %v3614, 0.0
        %v3679 = vmul.f32 %v3647, 1.442695
        %v3680 = vpow.pop %v3679
        %v3681 = vmul.f32 %v3648, 1.442695
        %v3682 = vpow.pop %v3681
        %v3683 = vmul.f32 %v3649, 1.442695
        %v3684 = vpow.pop %v3683
        %v3685 = vmul.f32 %v3650, 1.442695
        %v3686 = vpow.pop %v3685
        %v3687 = vmul.f32 %v3651, 1.442695
        %v3688 = vpow.pop %v3687
        %v3689 = vmul.f32 %v3652, 1.442695
        %v3690 = vpow.pop %v3689
        %v3691 = vmul.f32 %v3653, 1.442695
        %v3692 = vpow.pop %v3691
        %v3693 = vmul.f32 %v3654, 1.442695
        %v3694 = vpow.pop %v3693
        %v3695 = vmul.f32 %v3655, 1.442695
        %v3696 = vpow.pop %v3695
        %v3697 = vmul.f32 %v3656, 1.442695
        %v3698 = vpow.pop %v3697
        %v3699 = vmul.f32 %v3657, 1.442695
        %v3700 = vpow.pop %v3699
        %v3701 = vmul.f32 %v3658, 1.442695
        %v3702 = vpow.pop %v3701
        %v3703 = vmul.f32 %v3659, 1.442695
        %v3704 = vpow.pop %v3703
        %v3705 = vmul.f32 %v3660, 1.442695
        %v3706 = vpow.pop %v3705
        %v3707 = vmul.f32 %v3661, 1.442695
        %v3708 = vpow.pop %v3707
        %v3709 = vmul.f32 %v3662, 1.442695
        %v3710 = vpow.pop %v3709
        %v3711 = vmul.f32 %v3663, 1.442695
        %v3712 = vpow.pop %v3711
        %v3713 = vmul.f32 %v3664, 1.442695
        %v3714 = vpow.pop %v3713
        %v3715 = vmul.f32 %v3665, 1.442695
        %v3716 = vpow.pop %v3715
        %v3717 = vmul.f32 %v3666, 1.442695
        %v3718 = vpow.pop %v3717
        %v3719 = vmul.f32 %v3667, 1.442695
        %v3720 = vpow.pop %v3719
        %v3721 = vmul.f32 %v3668, 1.442695
        %v3722 = vpow.pop %v3721
        %v3723 = vmul.f32 %v3669, 1.442695
        %v3724 = vpow.pop %v3723
        %v3725 = vmul.f32 %v3670, 1.442695
        %v3726 = vpow.pop %v3725
        %v3727 = vmul.f32 %v3671, 1.442695
        %v3728 = vpow.pop %v3727
        %v3729 = vmul.f32 %v3672, 1.442695
        %v3730 = vpow.pop %v3729
        %v3731 = vmul.f32 %v3673, 1.442695
        %v3732 = vpow.pop %v3731
        %v3733 = vmul.f32 %v3674, 1.442695
        %v3734 = vpow.pop %v3733
        %v3735 = vmul.f32 %v3675, 1.442695
        %v3736 = vpow.pop %v3735
        %v3737 = vmul.f32 %v3676, 1.442695
        %v3738 = vpow.pop %v3737
        %v3739 = vmul.f32 %v3677, 1.442695
        %v3740 = vpow.pop %v3739
        %v3741 = vmul.f32 %v3678, 1.442695
        %v3742 = vpow.pop %v3741
        %v3743 = vsub.f32 %v3680, 1.0
        %v3744 = vsub.f32 %v3682, 1.0
        %v3745 = vsub.f32 %v3684, 1.0
        %v3746 = vsub.f32 %v3686, 1.0
        %v3747 = vsub.f32 %v3688, 1.0
        %v3748 = vsub.f32 %v3690, 1.0
        %v3749 = vsub.f32 %v3692, 1.0
        %v3750 = vsub.f32 %v3694, 1.0
        %v3751 = vsub.f32 %v3696, 1.0
        %v3752 = vsub.f32 %v3698, 1.0
        %v3753 = vsub.f32 %v3700, 1.0
        %v3754 = vsub.f32 %v3702, 1.0
        %v3755 = vsub.f32 %v3704, 1.0
        %v3756 = vsub.f32 %v3706, 1.0
        %v3757 = vsub.f32 %v3708, 1.0
        %v3758 = vsub.f32 %v3710, 1.0
        %v3759 = vsub.f32 %v3712, 1.0
        %v3760 = vsub.f32 %v3714, 1.0
        %v3761 = vsub.f32 %v3716, 1.0
        %v3762 = vsub.f32 %v3718, 1.0
        %v3763 = vsub.f32 %v3720, 1.0
        %v3764 = vsub.f32 %v3722, 1.0
        %v3765 = vsub.f32 %v3724, 1.0
        %v3766 = vsub.f32 %v3726, 1.0
        %v3767 = vsub.f32 %v3728, 1.0
        %v3768 = vsub.f32 %v3730, 1.0
        %v3769 = vsub.f32 %v3732, 1.0
        %v3770 = vsub.f32 %v3734, 1.0
        %v3771 = vsub.f32 %v3736, 1.0
        %v3772 = vsub.f32 %v3738, 1.0
        %v3773 = vsub.f32 %v3740, 1.0
        %v3774 = vsub.f32 %v3742, 1.0
        %v3775 = vsel %vm3615, %v3583, %v3743
        %v3776 = vsel %vm3616, %v3584, %v3744
        %v3777 = vsel %vm3617, %v3585, %v3745
        %v3778 = vsel %vm3618, %v3586, %v3746
        %v3779 = vsel %vm3619, %v3587, %v3747
        %v3780 = vsel %vm3620, %v3588, %v3748
        %v3781 = vsel %vm3621, %v3589, %v3749
        %v3782 = vsel %vm3622, %v3590, %v3750
        %v3783 = vsel %vm3623, %v3591, %v3751
        %v3784 = vsel %vm3624, %v3592, %v3752
        %v3785 = vsel %vm3625, %v3593, %v3753
        %v3786 = vsel %vm3626, %v3594, %v3754
        %v3787 = vsel %vm3627, %v3595, %v3755
        %v3788 = vsel %vm3628, %v3596, %v3756
        %v3789 = vsel %vm3629, %v3597, %v3757
        %v3790 = vsel %vm3630, %v3598, %v3758
        %v3791 = vsel %vm3631, %v3599, %v3759
        %v3792 = vsel %vm3632, %v3600, %v3760
        %v3793 = vsel %vm3633, %v3601, %v3761
        %v3794 = vsel %vm3634, %v3602, %v3762
        %v3795 = vsel %vm3635, %v3603, %v3763
        %v3796 = vsel %vm3636, %v3604, %v3764
        %v3797 = vsel %vm3637, %v3605, %v3765
        %v3798 = vsel %vm3638, %v3606, %v3766
        %v3799 = vsel %vm3639, %v3607, %v3767
        %v3800 = vsel %vm3640, %v3608, %v3768
        %v3801 = vsel %vm3641, %v3609, %v3769
        %v3802 = vsel %vm3642, %v3610, %v3770
        %v3803 = vsel %vm3643, %v3611, %v3771
        %v3804 = vsel %vm3644, %v3612, %v3772
        %v3805 = vsel %vm3645, %v3613, %v3773
        %v3806 = vsel %vm3646, %v3614, %v3774
        %v3807 = vpack.c.bf16 %v3776, %v3775
        %v3808 = vpack.c.bf16 %v3778, %v3777
        %v3809 = vpack.c.bf16 %v3780, %v3779
        %v3810 = vpack.c.bf16 %v3782, %v3781
        %v3811 = vpack.c.bf16 %v3784, %v3783
        %v3812 = vpack.c.bf16 %v3786, %v3785
        %v3813 = vpack.c.bf16 %v3788, %v3787
        %v3814 = vpack.c.bf16 %v3790, %v3789
        %v3815 = vpack.c.bf16 %v3792, %v3791
        %v3816 = vpack.c.bf16 %v3794, %v3793
        %v3817 = vpack.c.bf16 %v3796, %v3795
        %v3818 = vpack.c.bf16 %v3798, %v3797
        %v3819 = vpack.c.bf16 %v3800, %v3799
        %v3820 = vpack.c.bf16 %v3802, %v3801
        %v3821 = vpack.c.bf16 %v3804, %v3803
        %v3822 = vpack.c.bf16 %v3805, %v3805
        %v3823 = vld [vmem:[#allocation10] sm:$0xf]
        %v3824 = vld [vmem:[#allocation10 + $0x4] sm:$0xf]
        %v3825 = vld [vmem:[#allocation10 + $0x8] sm:$0xf]
        %v3826 = vld [vmem:[#allocation10 + $0xc] sm:$0xf]
        %v3827 = vld [vmem:[#allocation10 + $0x10] sm:$0xf]
        %v3828 = vld [vmem:[#allocation10 + $0x14] sm:$0xf]
        %v3829 = vld [vmem:[#allocation10 + $0x18] sm:$0xf]
        %v3830 = vld [vmem:[#allocation10 + $0x1c] sm:$0xf]
        %v3831 = vpack.c.bf16 %v3806, %v3805
        %s3832 = scalar_lea.vmem [#allocation10], 32
        %v3833 = vld [vmem:[%s3832] sm:$0xf]
        %v3834 = vld [vmem:[%s3832 + $0x4] sm:$0xf]
        %v3835 = vld [vmem:[%s3832 + $0x8] sm:$0xf]
        %v3836 = vld [vmem:[%s3832 + $0xc] sm:$0xf]
        %v3837 = vld [vmem:[%s3832 + $0x10] sm:$0xf]
        %v3838 = vld [vmem:[%s3832 + $0x14] sm:$0xf]
        %v3839 = vld [vmem:[%s3832 + $0x18] sm:$0xf]
        %v3840 = vld [vmem:[%s3832 + $0x1c] sm:$0xf]
        %v3842 = vshrl.u32 %v3807, 16
        %v3844 = vshll.u32 %v3807, 16
        %v3846 = vrot.slane %v3844, 1
        %v3847 = vor.u32 %v3842, %v3846
        %v3849 = vshll.u32 %v3808, 16
        %v3851 = vrot.slane %v3849, 1
        %v3852 = vsel %vm2103, %v3847, %v3851
        %v3853 = vshrl.u32 %v3808, 16
        %v3855 = vor.u32 %v3853, %v3851
        %v3857 = vshll.u32 %v3809, 16
        %v3859 = vrot.slane %v3857, 1
        %v3860 = vsel %vm2103, %v3855, %v3859
        %v3861 = vshrl.u32 %v3809, 16
        %v3863 = vor.u32 %v3861, %v3859
        %v3865 = vshll.u32 %v3810, 16
        %v3867 = vrot.slane %v3865, 1
        %v3868 = vsel %vm2103, %v3863, %v3867
        %v3869 = vshrl.u32 %v3810, 16
        %v3871 = vor.u32 %v3869, %v3867
        %v3873 = vshll.u32 %v3811, 16
        %v3875 = vrot.slane %v3873, 1
        %v3876 = vsel %vm2103, %v3871, %v3875
        %v3877 = vshrl.u32 %v3811, 16
        %v3879 = vor.u32 %v3877, %v3875
        %v3881 = vshll.u32 %v3812, 16
        %v3883 = vrot.slane %v3881, 1
        %v3884 = vsel %vm2103, %v3879, %v3883
        %v3885 = vshrl.u32 %v3812, 16
        %v3887 = vor.u32 %v3885, %v3883
        %v3889 = vshll.u32 %v3813, 16
        %v3891 = vrot.slane %v3889, 1
        %v3892 = vsel %vm2103, %v3887, %v3891
        %v3893 = vshrl.u32 %v3813, 16
        %v3895 = vor.u32 %v3893, %v3891
        %v3897 = vshll.u32 %v3814, 16
        %v3899 = vrot.slane %v3897, 1
        %v3900 = vsel %vm2103, %v3895, %v3899
        %v3901 = vshrl.u32 %v3814, 16
        %v3903 = vor.u32 %v3901, %v3899
        %v3905 = vshll.u32 %v3815, 16
        %v3907 = vrot.slane %v3905, 1
        %v3908 = vsel %vm2103, %v3903, %v3907
        %v3909 = vshrl.u32 %v3815, 16
        %v3911 = vor.u32 %v3909, %v3907
        %v3913 = vshll.u32 %v3816, 16
        %v3915 = vrot.slane %v3913, 1
        %v3916 = vsel %vm2103, %v3911, %v3915
        %v3917 = vshrl.u32 %v3816, 16
        %v3919 = vor.u32 %v3917, %v3915
        %v3921 = vshll.u32 %v3817, 16
        %v3923 = vrot.slane %v3921, 1
        %v3924 = vsel %vm2103, %v3919, %v3923
        %v3925 = vshrl.u32 %v3817, 16
        %v3927 = vor.u32 %v3925, %v3923
        %v3929 = vshll.u32 %v3818, 16
        %v3931 = vrot.slane %v3929, 1
        %v3932 = vsel %vm2103, %v3927, %v3931
        %v3933 = vshrl.u32 %v3818, 16
        %v3935 = vor.u32 %v3933, %v3931
        %v3937 = vshll.u32 %v3819, 16
        %v3939 = vrot.slane %v3937, 1
        %v3940 = vsel %vm2103, %v3935, %v3939
        %v3941 = vshrl.u32 %v3819, 16
        %v3943 = vor.u32 %v3941, %v3939
        %v3945 = vshll.u32 %v3820, 16
        %v3947 = vrot.slane %v3945, 1
        %v3948 = vsel %vm2103, %v3943, %v3947
        %v3949 = vshrl.u32 %v3820, 16
        %v3951 = vor.u32 %v3949, %v3947
        %v3953 = vshll.u32 %v3821, 16
        %v3955 = vrot.slane %v3953, 1
        %v3956 = vsel %vm2103, %v3951, %v3955
        %v3957 = vshrl.u32 %v3821, 16
        %v3959 = vor.u32 %v3957, %v3955
        %v3961 = vshll.u32 %v3831, 16
        %v3963 = vrot.slane %v3961, 1
        %v3964 = vsel %vm2103, %v3959, %v3963
        %v3965 = vshrl.u32 %v3831, 16
        %v3967 = vor.u32 %v3965, %v3963
        %v3976 = vunpack.c.l.b16 %v3833
        %v3977 = vunpack.c.l.b16 %v3834
        %v3978 = vunpack.c.l.b16 %v3835
        %v3979 = vunpack.c.l.b16 %v3836
        %v3980 = vunpack.c.l.b16 %v3837
        %v3981 = vunpack.c.l.b16 %v3838
        %v3982 = vunpack.c.l.b16 %v3839
        %v3983 = vunpack.c.l.b16 %v3840
        %v3984 = vpack.c.b16 %v3977, %v3976
        %v3985 = vpack.c.b16 %v3979, %v3978
        %v3986 = vpack.c.b16 %v3981, %v3980
        %v3987 = vpack.c.b16 %v3983, %v3982
        %vm3992 = vcmask 523264
        %v3994 = vsel %vm3992, %v3852, 0
        %v3997 = vsel %vm3992, %v3860, 0
        %v4000 = vsel %vm3992, %v3868, 0
        %v4003 = vsel %vm3992, %v3876, 0
        %v4006 = vsel %vm3992, %v3884, 0
        %v4009 = vsel %vm3992, %v3892, 0
        %v4012 = vsel %vm3992, %v3900, 0
        %v4015 = vsel %vm3992, %v3908, 0
        %v4018 = vsel %vm3992, %v3916, 0
        %v4021 = vsel %vm3992, %v3924, 0
        %v4024 = vsel %vm3992, %v3932, 0
        %v4027 = vsel %vm3992, %v3940, 0
        %v4030 = vsel %vm3992, %v3948, 0
        %v4033 = vsel %vm3992, %v3956, 0
        %v4036 = vsel %vm3992, %v3964, 0
        %v4039 = vsel %vm3992, %v3967, 0
        %4041 = vmatprep.subr.bf16.mxu0 0
        %4042 = vmatpush1.bf16.msra.mxu0 0
        %4043 = vmatprep.subr.bf16.mxu0 0
        %4044 = vmatpush1.bf16.msra.mxu0 0
        %4045 = vmatprep.subr.bf16.mxu0 0
        %4046 = vmatpush1.bf16.msra.mxu0 0
        %4047 = vmatprep.subr.bf16.mxu0 0
        %4048 = vmatpush1.bf16.msra.mxu0 0
        %4049 = vmatprep.subr.bf16.mxu0 0
        %4050 = vmatpush1.bf16.msra.mxu0 %v3987
        %4051 = vmatprep.subr.bf16.mxu0 0
        %4052 = vmatpush1.bf16.msra.mxu0 %v3986
        %4053 = vmatprep.subr.bf16.mxu0 0
        %4054 = vmatpush1.bf16.msra.mxu0 %v3985
        %4055 = vmatprep.subr.bf16.mxu0 0
        %4056 = vmatpush1.bf16.msra.mxu0 %v3984
        %4057 = vmatprep.subr.bf16.mxu0 0
        %4058 = vmatpush2.bf16.msra.mxu0 0
        %4059 = vmatprep.subr.bf16.mxu0 0
        %4060 = vmatpush2.bf16.msra.mxu0 0
        %4061 = vmatprep.subr.bf16.mxu0 0
        %4062 = vmatpush2.bf16.msra.mxu0 0
        %4063 = vmatprep.subr.bf16.mxu0 0
        %4064 = vmatpush2.bf16.msra.mxu0 0
        %4065 = vmatprep.subr.bf16.mxu0 0
        %4066 = vmatpush2.bf16.msra.mxu0 0
        %4067 = vmatprep.subr.bf16.mxu0 0
        %4068 = vmatpush2.bf16.msra.mxu0 0
        %4069 = vmatprep.subr.bf16.mxu0 0
        %4070 = vmatpush2.bf16.msra.mxu0 0
        %4071 = vmatprep.subr.bf16.mxu0 0
        %4072 = vmatpush2.bf16.msra.mxu0 0
        %4073 = vmatprep.mubr.bf16.mxu0 0
        %4074 = vmatmul.mubr.bf16.gmra.mxu0 %v3994
        %v4075 = vpop.f32.mrf.mxu0
        %v4076 = vadd.f32 0.0, %v4075
        %v4077 = vpop.f32.mrf.mxu0
        %v4078 = vpop.f32.mrf.mxu0
        %v4079 = vadd.f32 0.0, %v4078
        %v4080 = vpop.f32.mrf.mxu0
        %4081 = vmatprep.mubr.bf16.mxu0 0
        %4082 = vmatmul.mubr.bf16.gmra.mxu0 %v3997
        %v4083 = vpop.f32.mrf.mxu0
        %v4084 = vadd.f32 0.0, %v4083
        %v4085 = vpop.f32.mrf.mxu0
        %v4086 = vpop.f32.mrf.mxu0
        %v4087 = vadd.f32 0.0, %v4086
        %v4088 = vpop.f32.mrf.mxu0
        %4089 = vmatprep.mubr.bf16.mxu0 0
        %4090 = vmatmul.mubr.bf16.gmra.mxu0 %v4000
        %v4091 = vpop.f32.mrf.mxu0
        %v4092 = vadd.f32 0.0, %v4091
        %v4093 = vpop.f32.mrf.mxu0
        %v4094 = vpop.f32.mrf.mxu0
        %v4095 = vadd.f32 0.0, %v4094
        %v4096 = vpop.f32.mrf.mxu0
        %4097 = vmatprep.mubr.bf16.mxu0 0
        %4098 = vmatmul.mubr.bf16.gmra.mxu0 %v4003
        %v4099 = vpop.f32.mrf.mxu0
        %v4100 = vadd.f32 0.0, %v4099
        %v4101 = vpop.f32.mrf.mxu0
        %v4102 = vpop.f32.mrf.mxu0
        %v4103 = vadd.f32 0.0, %v4102
        %v4104 = vpop.f32.mrf.mxu0
        %4105 = vmatprep.mubr.bf16.mxu0 0
        %4106 = vmatmul.mubr.bf16.gmra.mxu0 %v4006
        %v4107 = vpop.f32.mrf.mxu0
        %v4108 = vadd.f32 0.0, %v4107
        %v4109 = vpop.f32.mrf.mxu0
        %v4110 = vpop.f32.mrf.mxu0
        %v4111 = vadd.f32 0.0, %v4110
        %v4112 = vpop.f32.mrf.mxu0
        %4113 = vmatprep.mubr.bf16.mxu0 0
        %4114 = vmatmul.mubr.bf16.gmra.mxu0 %v4009
        %v4115 = vpop.f32.mrf.mxu0
        %v4116 = vadd.f32 0.0, %v4115
        %v4117 = vpop.f32.mrf.mxu0
        %v4118 = vpop.f32.mrf.mxu0
        %v4119 = vadd.f32 0.0, %v4118
        %v4120 = vpop.f32.mrf.mxu0
        %4121 = vmatprep.mubr.bf16.mxu0 0
        %4122 = vmatmul.mubr.bf16.gmra.mxu0 %v4012
        %v4123 = vpop.f32.mrf.mxu0
        %v4124 = vadd.f32 0.0, %v4123
        %v4125 = vpop.f32.mrf.mxu0
        %v4126 = vpop.f32.mrf.mxu0
        %v4127 = vadd.f32 0.0, %v4126
        %v4128 = vpop.f32.mrf.mxu0
        %4129 = vmatprep.mubr.bf16.mxu0 0
        %4130 = vmatmul.mubr.bf16.gmra.mxu0 %v4015
        %v4131 = vpop.f32.mrf.mxu0
        %v4132 = vadd.f32 0.0, %v4131
        %v4133 = vpop.f32.mrf.mxu0
        %v4134 = vpop.f32.mrf.mxu0
        %v4135 = vadd.f32 0.0, %v4134
        %v4136 = vpop.f32.mrf.mxu0
        %4137 = vmatprep.mubr.bf16.mxu0 0
        %4138 = vmatmul.mubr.bf16.gmra.mxu0 %v4018
        %v4139 = vpop.f32.mrf.mxu0
        %v4140 = vadd.f32 0.0, %v4139
        %v4141 = vpop.f32.mrf.mxu0
        %v4142 = vpop.f32.mrf.mxu0
        %v4143 = vadd.f32 0.0, %v4142
        %v4144 = vpop.f32.mrf.mxu0
        %4145 = vmatprep.mubr.bf16.mxu0 0
        %4146 = vmatmul.mubr.bf16.gmra.mxu0 %v4021
        %v4147 = vpop.f32.mrf.mxu0
        %v4148 = vadd.f32 0.0, %v4147
        %v4149 = vpop.f32.mrf.mxu0
        %v4150 = vpop.f32.mrf.mxu0
        %v4151 = vadd.f32 0.0, %v4150
        %v4152 = vpop.f32.mrf.mxu0
        %4153 = vmatprep.mubr.bf16.mxu0 0
        %4154 = vmatmul.mubr.bf16.gmra.mxu0 %v4024
        %v4155 = vpop.f32.mrf.mxu0
        %v4156 = vadd.f32 0.0, %v4155
        %v4157 = vpop.f32.mrf.mxu0
        %v4158 = vpop.f32.mrf.mxu0
        %v4159 = vadd.f32 0.0, %v4158
        %v4160 = vpop.f32.mrf.mxu0
        %4161 = vmatprep.mubr.bf16.mxu0 0
        %4162 = vmatmul.mubr.bf16.gmra.mxu0 %v4027
        %v4163 = vpop.f32.mrf.mxu0
        %v4164 = vadd.f32 0.0, %v4163
        %v4165 = vpop.f32.mrf.mxu0
        %v4166 = vpop.f32.mrf.mxu0
        %v4167 = vadd.f32 0.0, %v4166
        %v4168 = vpop.f32.mrf.mxu0
        %4169 = vmatprep.mubr.bf16.mxu0 0
        %4170 = vmatmul.mubr.bf16.gmra.mxu0 %v4030
        %v4171 = vpop.f32.mrf.mxu0
        %v4172 = vadd.f32 0.0, %v4171
        %v4173 = vpop.f32.mrf.mxu0
        %v4174 = vpop.f32.mrf.mxu0
        %v4175 = vadd.f32 0.0, %v4174
        %v4176 = vpop.f32.mrf.mxu0
        %4177 = vmatprep.mubr.bf16.mxu0 0
        %4178 = vmatmul.mubr.bf16.gmra.mxu0 %v4033
        %v4179 = vpop.f32.mrf.mxu0
        %v4180 = vadd.f32 0.0, %v4179
        %v4181 = vpop.f32.mrf.mxu0
        %v4182 = vpop.f32.mrf.mxu0
        %v4183 = vadd.f32 0.0, %v4182
        %v4184 = vpop.f32.mrf.mxu0
        %4185 = vmatprep.mubr.bf16.mxu0 0
        %4186 = vmatmul.mubr.bf16.gmra.mxu0 %v4036
        %v4187 = vpop.f32.mrf.mxu0
        %v4188 = vadd.f32 0.0, %v4187
        %v4189 = vpop.f32.mrf.mxu0
        %v4190 = vpop.f32.mrf.mxu0
        %v4191 = vadd.f32 0.0, %v4190
        %v4192 = vpop.f32.mrf.mxu0
        %4193 = vmatprep.mubr.bf16.mxu0 0
        %4194 = vmatmul.mubr.bf16.gmra.mxu0 %v4039
        %v4195 = vpop.f32.mrf.mxu0
        %v4196 = vadd.f32 0.0, %v4195
        %v4197 = vpop.f32.mrf.mxu0
        %v4198 = vpop.f32.mrf.mxu0
        %v4199 = vpop.f32.mrf.mxu0
        %4200 = vdwg.mxu0
        %v4209 = vunpack.c.l.b16 %v3823
        %v4210 = vunpack.c.l.b16 %v3824
        %v4211 = vunpack.c.l.b16 %v3825
        %v4212 = vunpack.c.l.b16 %v3826
        %v4213 = vunpack.c.l.b16 %v3827
        %v4214 = vunpack.c.l.b16 %v3828
        %v4215 = vunpack.c.l.b16 %v3829
        %v4216 = vunpack.c.l.b16 %v3830
        %v4217 = vpack.c.b16 %v4210, %v4209
        %v4218 = vpack.c.b16 %v4212, %v4211
        %v4219 = vpack.c.b16 %v4214, %v4213
        %v4220 = vpack.c.b16 %v4216, %v4215
        %v4225 = vsel %vm3992, %v3807, 0
        %v4227 = vsel %vm3992, %v3808, 0
        %v4229 = vsel %vm3992, %v3809, 0
        %v4231 = vsel %vm3992, %v3810, 0
        %v4233 = vsel %vm3992, %v3811, 0
        %v4235 = vsel %vm3992, %v3812, 0
        %v4237 = vsel %vm3992, %v3813, 0
        %v4239 = vsel %vm3992, %v3814, 0
        %v4241 = vsel %vm3992, %v3815, 0
        %v4243 = vsel %vm3992, %v3816, 0
        %v4245 = vsel %vm3992, %v3817, 0
        %v4247 = vsel %vm3992, %v3818, 0
        %v4249 = vsel %vm3992, %v3819, 0
        %v4251 = vsel %vm3992, %v3820, 0
        %v4253 = vsel %vm3992, %v3821, 0
        %v4256 = vsel %vm3992, %v3822, 0
        %4258 = vmatprep.subr.bf16.mxu0 0
        %4259 = vmatpush1.bf16.msra.mxu0 0
        %4260 = vmatprep.subr.bf16.mxu0 0
        %4261 = vmatpush1.bf16.msra.mxu0 0
        %4262 = vmatprep.subr.bf16.mxu0 0
        %4263 = vmatpush1.bf16.msra.mxu0 0
        %4264 = vmatprep.subr.bf16.mxu0 0
        %4265 = vmatpush1.bf16.msra.mxu0 0
        %4266 = vmatprep.subr.bf16.mxu0 0
        %4267 = vmatpush1.bf16.msra.mxu0 %v4220
        %4268 = vmatprep.subr.bf16.mxu0 0
        %4269 = vmatpush1.bf16.msra.mxu0 %v4219
        %4270 = vmatprep.subr.bf16.mxu0 0
        %4271 = vmatpush1.bf16.msra.mxu0 %v4218
        %4272 = vmatprep.subr.bf16.mxu0 0
        %4273 = vmatpush1.bf16.msra.mxu0 %v4217
        %4274 = vmatprep.subr.bf16.mxu0 0
        %4275 = vmatpush2.bf16.msra.mxu0 0
        %4276 = vmatprep.subr.bf16.mxu0 0
        %4277 = vmatpush2.bf16.msra.mxu0 0
        %4278 = vmatprep.subr.bf16.mxu0 0
        %4279 = vmatpush2.bf16.msra.mxu0 0
        %4280 = vmatprep.subr.bf16.mxu0 0
        %4281 = vmatpush2.bf16.msra.mxu0 0
        %4282 = vmatprep.subr.bf16.mxu0 0
        %4283 = vmatpush2.bf16.msra.mxu0 0
        %4284 = vmatprep.subr.bf16.mxu0 0
        %4285 = vmatpush2.bf16.msra.mxu0 0
        %4286 = vmatprep.subr.bf16.mxu0 0
        %4287 = vmatpush2.bf16.msra.mxu0 0
        %4288 = vmatprep.subr.bf16.mxu0 0
        %4289 = vmatpush2.bf16.msra.mxu0 0
        %4290 = vmatprep.mubr.bf16.mxu0 0
        %4291 = vmatmul.mubr.bf16.gmra.mxu0 %v4225
        %v4292 = vpop.f32.mrf.mxu0
        %v4293 = vadd.f32 %v4076, %v4292
        %v4294 = vpop.f32.mrf.mxu0
        %v4295 = vpop.f32.mrf.mxu0
        %v4296 = vadd.f32 %v4079, %v4295
        %v4297 = vpop.f32.mrf.mxu0
        %4298 = vmatprep.mubr.bf16.mxu0 0
        %4299 = vmatmul.mubr.bf16.gmra.mxu0 %v4227
        %v4300 = vpop.f32.mrf.mxu0
        %v4301 = vadd.f32 %v4084, %v4300
        %v4302 = vpop.f32.mrf.mxu0
        %v4303 = vpop.f32.mrf.mxu0
        %v4304 = vadd.f32 %v4087, %v4303
        %v4305 = vpop.f32.mrf.mxu0
        %4306 = vmatprep.mubr.bf16.mxu0 0
        %4307 = vmatmul.mubr.bf16.gmra.mxu0 %v4229
        %v4308 = vpop.f32.mrf.mxu0
        %v4309 = vadd.f32 %v4092, %v4308
        %v4310 = vpop.f32.mrf.mxu0
        %v4311 = vpop.f32.mrf.mxu0
        %v4312 = vadd.f32 %v4095, %v4311
        %v4313 = vpop.f32.mrf.mxu0
        %4314 = vmatprep.mubr.bf16.mxu0 0
        %4315 = vmatmul.mubr.bf16.gmra.mxu0 %v4231
        %v4316 = vpop.f32.mrf.mxu0
        %v4317 = vadd.f32 %v4100, %v4316
        %v4318 = vpop.f32.mrf.mxu0
        %v4319 = vpop.f32.mrf.mxu0
        %v4320 = vadd.f32 %v4103, %v4319
        %v4321 = vpop.f32.mrf.mxu0
        %4322 = vmatprep.mubr.bf16.mxu0 0
        %4323 = vmatmul.mubr.bf16.gmra.mxu0 %v4233
        %v4324 = vpop.f32.mrf.mxu0
        %v4325 = vadd.f32 %v4108, %v4324
        %v4326 = vpop.f32.mrf.mxu0
        %v4327 = vpop.f32.mrf.mxu0
        %v4328 = vadd.f32 %v4111, %v4327
        %v4329 = vpop.f32.mrf.mxu0
        %4330 = vmatprep.mubr.bf16.mxu0 0
        %4331 = vmatmul.mubr.bf16.gmra.mxu0 %v4235
        %v4332 = vpop.f32.mrf.mxu0
        %v4333 = vadd.f32 %v4116, %v4332
        %v4334 = vpop.f32.mrf.mxu0
        %v4335 = vpop.f32.mrf.mxu0
        %v4336 = vadd.f32 %v4119, %v4335
        %v4337 = vpop.f32.mrf.mxu0
        %4338 = vmatprep.mubr.bf16.mxu0 0
        %4339 = vmatmul.mubr.bf16.gmra.mxu0 %v4237
        %v4340 = vpop.f32.mrf.mxu0
        %v4341 = vadd.f32 %v4124, %v4340
        %v4342 = vpop.f32.mrf.mxu0
        %v4343 = vpop.f32.mrf.mxu0
        %v4344 = vadd.f32 %v4127, %v4343
        %v4345 = vpop.f32.mrf.mxu0
        %4346 = vmatprep.mubr.bf16.mxu0 0
        %4347 = vmatmul.mubr.bf16.gmra.mxu0 %v4239
        %v4348 = vpop.f32.mrf.mxu0
        %v4349 = vadd.f32 %v4132, %v4348
        %v4350 = vpop.f32.mrf.mxu0
        %v4351 = vpop.f32.mrf.mxu0
        %v4352 = vadd.f32 %v4135, %v4351
        %v4353 = vpop.f32.mrf.mxu0
        %4354 = vmatprep.mubr.bf16.mxu0 0
        %4355 = vmatmul.mubr.bf16.gmra.mxu0 %v4241
        %v4356 = vpop.f32.mrf.mxu0
        %v4357 = vadd.f32 %v4140, %v4356
        %v4358 = vpop.f32.mrf.mxu0
        %v4359 = vpop.f32.mrf.mxu0
        %v4360 = vadd.f32 %v4143, %v4359
        %v4361 = vpop.f32.mrf.mxu0
        %4362 = vmatprep.mubr.bf16.mxu0 0
        %4363 = vmatmul.mubr.bf16.gmra.mxu0 %v4243
        %v4364 = vpop.f32.mrf.mxu0
        %v4365 = vadd.f32 %v4148, %v4364
        %v4366 = vpop.f32.mrf.mxu0
        %v4367 = vpop.f32.mrf.mxu0
        %v4368 = vadd.f32 %v4151, %v4367
        %v4369 = vpop.f32.mrf.mxu0
        %4370 = vmatprep.mubr.bf16.mxu0 0
        %4371 = vmatmul.mubr.bf16.gmra.mxu0 %v4245
        %v4372 = vpop.f32.mrf.mxu0
        %v4373 = vadd.f32 %v4156, %v4372
        %v4374 = vpop.f32.mrf.mxu0
        %v4375 = vpop.f32.mrf.mxu0
        %v4376 = vadd.f32 %v4159, %v4375
        %v4377 = vpop.f32.mrf.mxu0
        %4378 = vmatprep.mubr.bf16.mxu0 0
        %4379 = vmatmul.mubr.bf16.gmra.mxu0 %v4247
        %v4380 = vpop.f32.mrf.mxu0
        %v4381 = vadd.f32 %v4164, %v4380
        %v4382 = vpop.f32.mrf.mxu0
        %v4383 = vpop.f32.mrf.mxu0
        %v4384 = vadd.f32 %v4167, %v4383
        %v4385 = vpop.f32.mrf.mxu0
        %4386 = vmatprep.mubr.bf16.mxu0 0
        %4387 = vmatmul.mubr.bf16.gmra.mxu0 %v4249
        %v4388 = vpop.f32.mrf.mxu0
        %v4389 = vadd.f32 %v4172, %v4388
        %v4390 = vpop.f32.mrf.mxu0
        %v4391 = vpop.f32.mrf.mxu0
        %v4392 = vadd.f32 %v4175, %v4391
        %v4393 = vpop.f32.mrf.mxu0
        %4394 = vmatprep.mubr.bf16.mxu0 0
        %4395 = vmatmul.mubr.bf16.gmra.mxu0 %v4251
        %v4396 = vpop.f32.mrf.mxu0
        %v4397 = vadd.f32 %v4180, %v4396
        %v4398 = vpop.f32.mrf.mxu0
        %v4399 = vpop.f32.mrf.mxu0
        %v4400 = vadd.f32 %v4183, %v4399
        %v4401 = vpop.f32.mrf.mxu0
        %4402 = vmatprep.mubr.bf16.mxu0 0
        %4403 = vmatmul.mubr.bf16.gmra.mxu0 %v4253
        %v4404 = vpop.f32.mrf.mxu0
        %v4405 = vadd.f32 %v4188, %v4404
        %v4406 = vpop.f32.mrf.mxu0
        %v4407 = vpop.f32.mrf.mxu0
        %v4408 = vadd.f32 %v4191, %v4407
        %v4409 = vpop.f32.mrf.mxu0
        %4410 = vmatprep.mubr.bf16.mxu0 0
        %4411 = vmatmul.mubr.bf16.gmra.mxu0 %v4256
        %v4412 = vpop.f32.mrf.mxu0
        %v4413 = vadd.f32 %v4196, %v4412
        %v4414 = vpop.f32.mrf.mxu0
        %v4415 = vpop.f32.mrf.mxu0
        %v4416 = vpop.f32.mrf.mxu0
        %4417 = vdwg.mxu0
        %s4418 = scalar_lea.vmem [#allocation10], 64
        %v4419 = vld [vmem:[%s4418] sm:$0xf]
        %v4420 = vld [vmem:[%s4418 + $0x4] sm:$0xf]
        %v4421 = vld [vmem:[%s4418 + $0x8] sm:$0xf]
        %v4422 = vld [vmem:[%s4418 + $0xc] sm:$0xf]
        %v4423 = vld [vmem:[%s4418 + $0x10] sm:$0xf]
        %v4424 = vld [vmem:[%s4418 + $0x14] sm:$0xf]
        %v4425 = vld [vmem:[%s4418 + $0x18] sm:$0xf]
        %v4426 = vld [vmem:[%s4418 + $0x1c] sm:$0xf]
        %v4443 = vrot.slane %v3807, 1
        %v4444 = vrot.slane %v3808, 1
        %v4445 = vsel %vm2679, %v4443, %v4444
        %v4446 = vrot.slane %v3809, 1
        %v4447 = vsel %vm2679, %v4444, %v4446
        %v4448 = vrot.slane %v3810, 1
        %v4449 = vsel %vm2679, %v4446, %v4448
        %v4450 = vrot.slane %v3811, 1
        %v4451 = vsel %vm2679, %v4448, %v4450
        %v4452 = vrot.slane %v3812, 1
        %v4453 = vsel %vm2679, %v4450, %v4452
        %v4454 = vrot.slane %v3813, 1
        %v4455 = vsel %vm2679, %v4452, %v4454
        %v4456 = vrot.slane %v3814, 1
        %v4457 = vsel %vm2679, %v4454, %v4456
        %v4458 = vrot.slane %v3815, 1
        %v4459 = vsel %vm2679, %v4456, %v4458
        %v4460 = vrot.slane %v3816, 1
        %v4461 = vsel %vm2679, %v4458, %v4460
        %v4462 = vrot.slane %v3817, 1
        %v4463 = vsel %vm2679, %v4460, %v4462
        %v4464 = vrot.slane %v3818, 1
        %v4465 = vsel %vm2679, %v4462, %v4464
        %v4466 = vrot.slane %v3819, 1
        %v4467 = vsel %vm2679, %v4464, %v4466
        %v4468 = vrot.slane %v3820, 1
        %v4469 = vsel %vm2679, %v4466, %v4468
        %v4470 = vrot.slane %v3821, 1
        %v4471 = vsel %vm2679, %v4468, %v4470
        %v4472 = vrot.slane %v3831, 1
        %v4473 = vsel %vm2679, %v4470, %v4472
        %v4482 = vunpack.c.l.b16 %v4419
        %v4483 = vunpack.c.l.b16 %v4420
        %v4484 = vunpack.c.l.b16 %v4421
        %v4485 = vunpack.c.l.b16 %v4422
        %v4486 = vunpack.c.l.b16 %v4423
        %v4487 = vunpack.c.l.b16 %v4424
        %v4488 = vunpack.c.l.b16 %v4425
        %v4489 = vunpack.c.l.b16 %v4426
        %v4490 = vpack.c.b16 %v4483, %v4482
        %v4491 = vpack.c.b16 %v4485, %v4484
        %v4492 = vpack.c.b16 %v4487, %v4486
        %v4493 = vpack.c.b16 %v4489, %v4488
        %v4499 = vsel %vm3992, %v4445, 0
        %v4502 = vsel %vm3992, %v4447, 0
        %v4505 = vsel %vm3992, %v4449, 0
        %v4508 = vsel %vm3992, %v4451, 0
        %v4511 = vsel %vm3992, %v4453, 0
        %v4514 = vsel %vm3992, %v4455, 0
        %v4517 = vsel %vm3992, %v4457, 0
        %v4520 = vsel %vm3992, %v4459, 0
        %v4523 = vsel %vm3992, %v4461, 0
        %v4526 = vsel %vm3992, %v4463, 0
        %v4529 = vsel %vm3992, %v4465, 0
        %v4532 = vsel %vm3992, %v4467, 0
        %v4535 = vsel %vm3992, %v4469, 0
        %v4538 = vsel %vm3992, %v4471, 0
        %v4541 = vsel %vm3992, %v4473, 0
        %v4544 = vsel %vm3992, %v4472, 0
        %4546 = vmatprep.subr.bf16.mxu0 0
        %4547 = vmatpush1.bf16.msra.mxu0 0
        %4548 = vmatprep.subr.bf16.mxu0 0
        %4549 = vmatpush1.bf16.msra.mxu0 0
        %4550 = vmatprep.subr.bf16.mxu0 0
        %4551 = vmatpush1.bf16.msra.mxu0 0
        %4552 = vmatprep.subr.bf16.mxu0 0
        %4553 = vmatpush1.bf16.msra.mxu0 0
        %4554 = vmatprep.subr.bf16.mxu0 0
        %4555 = vmatpush1.bf16.msra.mxu0 %v4493
        %4556 = vmatprep.subr.bf16.mxu0 0
        %4557 = vmatpush1.bf16.msra.mxu0 %v4492
        %4558 = vmatprep.subr.bf16.mxu0 0
        %4559 = vmatpush1.bf16.msra.mxu0 %v4491
        %4560 = vmatprep.subr.bf16.mxu0 0
        %4561 = vmatpush1.bf16.msra.mxu0 %v4490
        %4562 = vmatprep.subr.bf16.mxu0 0
        %4563 = vmatpush2.bf16.msra.mxu0 0
        %4564 = vmatprep.subr.bf16.mxu0 0
        %4565 = vmatpush2.bf16.msra.mxu0 0
        %4566 = vmatprep.subr.bf16.mxu0 0
        %4567 = vmatpush2.bf16.msra.mxu0 0
        %4568 = vmatprep.subr.bf16.mxu0 0
        %4569 = vmatpush2.bf16.msra.mxu0 0
        %4570 = vmatprep.subr.bf16.mxu0 0
        %4571 = vmatpush2.bf16.msra.mxu0 0
        %4572 = vmatprep.subr.bf16.mxu0 0
        %4573 = vmatpush2.bf16.msra.mxu0 0
        %4574 = vmatprep.subr.bf16.mxu0 0
        %4575 = vmatpush2.bf16.msra.mxu0 0
        %4576 = vmatprep.subr.bf16.mxu0 0
        %4577 = vmatpush2.bf16.msra.mxu0 0
        %4578 = vmatprep.mubr.bf16.mxu0 0
        %4579 = vmatmul.mubr.bf16.gmra.mxu0 %v4499
        %v4580 = vpop.f32.mrf.mxu0
        %v4581 = vadd.f32 0.0, %v4580
        %v4582 = vpop.f32.mrf.mxu0
        %v4583 = vpop.f32.mrf.mxu0
        %v4584 = vadd.f32 0.0, %v4583
        %v4585 = vpop.f32.mrf.mxu0
        %4586 = vmatprep.mubr.bf16.mxu0 0
        %4587 = vmatmul.mubr.bf16.gmra.mxu0 %v4502
        %v4588 = vpop.f32.mrf.mxu0
        %v4589 = vadd.f32 0.0, %v4588
        %v4590 = vpop.f32.mrf.mxu0
        %v4591 = vpop.f32.mrf.mxu0
        %v4592 = vadd.f32 0.0, %v4591
        %v4593 = vpop.f32.mrf.mxu0
        %4594 = vmatprep.mubr.bf16.mxu0 0
        %4595 = vmatmul.mubr.bf16.gmra.mxu0 %v4505
        %v4596 = vpop.f32.mrf.mxu0
        %v4597 = vadd.f32 0.0, %v4596
        %v4598 = vpop.f32.mrf.mxu0
        %v4599 = vpop.f32.mrf.mxu0
        %v4600 = vadd.f32 0.0, %v4599
        %v4601 = vpop.f32.mrf.mxu0
        %4602 = vmatprep.mubr.bf16.mxu0 0
        %4603 = vmatmul.mubr.bf16.gmra.mxu0 %v4508
        %v4604 = vpop.f32.mrf.mxu0
        %v4605 = vadd.f32 0.0, %v4604
        %v4606 = vpop.f32.mrf.mxu0
        %v4607 = vpop.f32.mrf.mxu0
        %v4608 = vadd.f32 0.0, %v4607
        %v4609 = vpop.f32.mrf.mxu0
        %4610 = vmatprep.mubr.bf16.mxu0 0
        %4611 = vmatmul.mubr.bf16.gmra.mxu0 %v4511
        %v4612 = vpop.f32.mrf.mxu0
        %v4613 = vadd.f32 0.0, %v4612
        %v4614 = vpop.f32.mrf.mxu0
        %v4615 = vpop.f32.mrf.mxu0
        %v4616 = vadd.f32 0.0, %v4615
        %v4617 = vpop.f32.mrf.mxu0
        %4618 = vmatprep.mubr.bf16.mxu0 0
        %4619 = vmatmul.mubr.bf16.gmra.mxu0 %v4514
        %v4620 = vpop.f32.mrf.mxu0
        %v4621 = vadd.f32 0.0, %v4620
        %v4622 = vpop.f32.mrf.mxu0
        %v4623 = vpop.f32.mrf.mxu0
        %v4624 = vadd.f32 0.0, %v4623
        %v4625 = vpop.f32.mrf.mxu0
        %4626 = vmatprep.mubr.bf16.mxu0 0
        %4627 = vmatmul.mubr.bf16.gmra.mxu0 %v4517
        %v4628 = vpop.f32.mrf.mxu0
        %v4629 = vadd.f32 0.0, %v4628
        %v4630 = vpop.f32.mrf.mxu0
        %v4631 = vpop.f32.mrf.mxu0
        %v4632 = vadd.f32 0.0, %v4631
        %v4633 = vpop.f32.mrf.mxu0
        %4634 = vmatprep.mubr.bf16.mxu0 0
        %4635 = vmatmul.mubr.bf16.gmra.mxu0 %v4520
        %v4636 = vpop.f32.mrf.mxu0
        %v4637 = vadd.f32 0.0, %v4636
        %v4638 = vpop.f32.mrf.mxu0
        %v4639 = vpop.f32.mrf.mxu0
        %v4640 = vadd.f32 0.0, %v4639
        %v4641 = vpop.f32.mrf.mxu0
        %4642 = vmatprep.mubr.bf16.mxu0 0
        %4643 = vmatmul.mubr.bf16.gmra.mxu0 %v4523
        %v4644 = vpop.f32.mrf.mxu0
        %v4645 = vadd.f32 0.0, %v4644
        %v4646 = vpop.f32.mrf.mxu0
        %v4647 = vpop.f32.mrf.mxu0
        %v4648 = vadd.f32 0.0, %v4647
        %v4649 = vpop.f32.mrf.mxu0
        %4650 = vmatprep.mubr.bf16.mxu0 0
        %4651 = vmatmul.mubr.bf16.gmra.mxu0 %v4526
        %v4652 = vpop.f32.mrf.mxu0
        %v4653 = vadd.f32 0.0, %v4652
        %v4654 = vpop.f32.mrf.mxu0
        %v4655 = vpop.f32.mrf.mxu0
        %v4656 = vadd.f32 0.0, %v4655
        %v4657 = vpop.f32.mrf.mxu0
        %4658 = vmatprep.mubr.bf16.mxu0 0
        %4659 = vmatmul.mubr.bf16.gmra.mxu0 %v4529
        %v4660 = vpop.f32.mrf.mxu0
        %v4661 = vadd.f32 0.0, %v4660
        %v4662 = vpop.f32.mrf.mxu0
        %v4663 = vpop.f32.mrf.mxu0
        %v4664 = vadd.f32 0.0, %v4663
        %v4665 = vpop.f32.mrf.mxu0
        %4666 = vmatprep.mubr.bf16.mxu0 0
        %4667 = vmatmul.mubr.bf16.gmra.mxu0 %v4532
        %v4668 = vpop.f32.mrf.mxu0
        %v4669 = vadd.f32 0.0, %v4668
        %v4670 = vpop.f32.mrf.mxu0
        %v4671 = vpop.f32.mrf.mxu0
        %v4672 = vadd.f32 0.0, %v4671
        %v4673 = vpop.f32.mrf.mxu0
        %4674 = vmatprep.mubr.bf16.mxu0 0
        %4675 = vmatmul.mubr.bf16.gmra.mxu0 %v4535
        %v4676 = vpop.f32.mrf.mxu0
        %v4677 = vadd.f32 0.0, %v4676
        %v4678 = vpop.f32.mrf.mxu0
        %v4679 = vpop.f32.mrf.mxu0
        %v4680 = vadd.f32 0.0, %v4679
        %v4681 = vpop.f32.mrf.mxu0
        %4682 = vmatprep.mubr.bf16.mxu0 0
        %4683 = vmatmul.mubr.bf16.gmra.mxu0 %v4538
        %v4684 = vpop.f32.mrf.mxu0
        %v4685 = vadd.f32 0.0, %v4684
        %v4686 = vpop.f32.mrf.mxu0
        %v4687 = vpop.f32.mrf.mxu0
        %v4688 = vadd.f32 0.0, %v4687
        %v4689 = vpop.f32.mrf.mxu0
        %4690 = vmatprep.mubr.bf16.mxu0 0
        %4691 = vmatmul.mubr.bf16.gmra.mxu0 %v4541
        %v4692 = vpop.f32.mrf.mxu0
        %v4693 = vadd.f32 0.0, %v4692
        %v4694 = vpop.f32.mrf.mxu0
        %v4695 = vpop.f32.mrf.mxu0
        %v4696 = vadd.f32 0.0, %v4695
        %v4697 = vpop.f32.mrf.mxu0
        %4698 = vmatprep.mubr.bf16.mxu0 0
        %4699 = vmatmul.mubr.bf16.gmra.mxu0 %v4544
        %v4700 = vpop.f32.mrf.mxu0
        %v4701 = vadd.f32 0.0, %v4700
        %v4702 = vpop.f32.mrf.mxu0
        %v4703 = vpop.f32.mrf.mxu0
        %v4704 = vpop.f32.mrf.mxu0
        %4705 = vdwg.mxu0
        %v4706 = vadd.f32 %v4293, %v4581
        %v4707 = vadd.f32 %v4296, %v4584
        %v4708 = vadd.f32 %v4301, %v4589
        %v4709 = vadd.f32 %v4304, %v4592
        %v4710 = vadd.f32 %v4309, %v4597
        %v4711 = vadd.f32 %v4312, %v4600
        %v4712 = vadd.f32 %v4317, %v4605
        %v4713 = vadd.f32 %v4320, %v4608
        %v4714 = vadd.f32 %v4325, %v4613
        %v4715 = vadd.f32 %v4328, %v4616
        %v4716 = vadd.f32 %v4333, %v4621
        %v4717 = vadd.f32 %v4336, %v4624
        %v4718 = vadd.f32 %v4341, %v4629
        %v4719 = vadd.f32 %v4344, %v4632
        %v4720 = vadd.f32 %v4349, %v4637
        %v4721 = vadd.f32 %v4352, %v4640
        %v4722 = vadd.f32 %v4357, %v4645
        %v4723 = vadd.f32 %v4360, %v4648
        %v4724 = vadd.f32 %v4365, %v4653
        %v4725 = vadd.f32 %v4368, %v4656
        %v4726 = vadd.f32 %v4373, %v4661
        %v4727 = vadd.f32 %v4376, %v4664
        %v4728 = vadd.f32 %v4381, %v4669
        %v4729 = vadd.f32 %v4384, %v4672
        %v4730 = vadd.f32 %v4389, %v4677
        %v4731 = vadd.f32 %v4392, %v4680
        %v4732 = vadd.f32 %v4397, %v4685
        %v4733 = vadd.f32 %v4400, %v4688
        %v4734 = vadd.f32 %v4405, %v4693
        %v4735 = vadd.f32 %v4408, %v4696
        %v4736 = vadd.f32 %v4413, %v4701
        %s4737 = scalar_lea.vmem [#allocation10], 96
        %v4738 = vld [vmem:[%s4737] sm:$0xf]
        %v4739 = vld [vmem:[%s4737 + $0x4] sm:$0xf]
        %v4740 = vld [vmem:[%s4737 + $0x8] sm:$0xf]
        %v4741 = vld [vmem:[%s4737 + $0xc] sm:$0xf]
        %v4742 = vld [vmem:[%s4737 + $0x10] sm:$0xf]
        %v4743 = vld [vmem:[%s4737 + $0x14] sm:$0xf]
        %v4744 = vld [vmem:[%s4737 + $0x18] sm:$0xf]
        %v4745 = vld [vmem:[%s4737 + $0x1c] sm:$0xf]
        %v4746 = vrot.slane %v3842, 1
        %v4747 = vrot.slane %v3844, 2
        %v4748 = vor.u32 %v4746, %v4747
        %v4749 = vrot.slane %v3853, 1
        %v4750 = vrot.slane %v3849, 2
        %v4751 = vor.u32 %v4749, %v4750
        %v4752 = vsel %vm2969, %v4748, %v4751
        %v4753 = vrot.slane %v3861, 1
        %v4754 = vrot.slane %v3857, 2
        %v4755 = vor.u32 %v4753, %v4754
        %v4756 = vsel %vm2969, %v4751, %v4755
        %v4757 = vrot.slane %v3869, 1
        %v4758 = vrot.slane %v3865, 2
        %v4759 = vor.u32 %v4757, %v4758
        %v4760 = vsel %vm2969, %v4755, %v4759
        %v4761 = vrot.slane %v3877, 1
        %v4762 = vrot.slane %v3873, 2
        %v4763 = vor.u32 %v4761, %v4762
        %v4764 = vsel %vm2969, %v4759, %v4763
        %v4765 = vrot.slane %v3885, 1
        %v4766 = vrot.slane %v3881, 2
        %v4767 = vor.u32 %v4765, %v4766
        %v4768 = vsel %vm2969, %v4763, %v4767
        %v4769 = vrot.slane %v3893, 1
        %v4770 = vrot.slane %v3889, 2
        %v4771 = vor.u32 %v4769, %v4770
        %v4772 = vsel %vm2969, %v4767, %v4771
        %v4773 = vrot.slane %v3901, 1
        %v4774 = vrot.slane %v3897, 2
        %v4775 = vor.u32 %v4773, %v4774
        %v4776 = vsel %vm2969, %v4771, %v4775
        %v4777 = vrot.slane %v3909, 1
        %v4778 = vrot.slane %v3905, 2
        %v4779 = vor.u32 %v4777, %v4778
        %v4780 = vsel %vm2969, %v4775, %v4779
        %v4781 = vrot.slane %v3917, 1
        %v4782 = vrot.slane %v3913, 2
        %v4783 = vor.u32 %v4781, %v4782
        %v4784 = vsel %vm2969, %v4779, %v4783
        %v4785 = vrot.slane %v3925, 1
        %v4786 = vrot.slane %v3921, 2
        %v4787 = vor.u32 %v4785, %v4786
        %v4788 = vsel %vm2969, %v4783, %v4787
        %v4789 = vrot.slane %v3933, 1
        %v4790 = vrot.slane %v3929, 2
        %v4791 = vor.u32 %v4789, %v4790
        %v4792 = vsel %vm2969, %v4787, %v4791
        %v4793 = vrot.slane %v3941, 1
        %v4794 = vrot.slane %v3937, 2
        %v4795 = vor.u32 %v4793, %v4794
        %v4796 = vsel %vm2969, %v4791, %v4795
        %v4797 = vrot.slane %v3949, 1
        %v4798 = vrot.slane %v3945, 2
        %v4799 = vor.u32 %v4797, %v4798
        %v4800 = vsel %vm2969, %v4795, %v4799
        %v4801 = vrot.slane %v3957, 1
        %v4802 = vrot.slane %v3953, 2
        %v4803 = vor.u32 %v4801, %v4802
        %v4804 = vsel %vm2969, %v4799, %v4803
        %v4805 = vrot.slane %v3965, 1
        %v4806 = vrot.slane %v3961, 2
        %v4807 = vor.u32 %v4805, %v4806
        %v4808 = vsel %vm2969, %v4803, %v4807
        %v4817 = vunpack.c.l.b16 %v4738
        %v4818 = vunpack.c.l.b16 %v4739
        %v4819 = vunpack.c.l.b16 %v4740
        %v4820 = vunpack.c.l.b16 %v4741
        %v4821 = vunpack.c.l.b16 %v4742
        %v4822 = vunpack.c.l.b16 %v4743
        %v4823 = vunpack.c.l.b16 %v4744
        %v4824 = vunpack.c.l.b16 %v4745
        %v4825 = vpack.c.b16 %v4818, %v4817
        %v4826 = vpack.c.b16 %v4820, %v4819
        %v4827 = vpack.c.b16 %v4822, %v4821
        %v4828 = vpack.c.b16 %v4824, %v4823
        %v4834 = vsel %vm3992, %v4752, 0
        %v4837 = vsel %vm3992, %v4756, 0
        %v4840 = vsel %vm3992, %v4760, 0
        %v4843 = vsel %vm3992, %v4764, 0
        %v4846 = vsel %vm3992, %v4768, 0
        %v4849 = vsel %vm3992, %v4772, 0
        %v4852 = vsel %vm3992, %v4776, 0
        %v4855 = vsel %vm3992, %v4780, 0
        %v4858 = vsel %vm3992, %v4784, 0
        %v4861 = vsel %vm3992, %v4788, 0
        %v4864 = vsel %vm3992, %v4792, 0
        %v4867 = vsel %vm3992, %v4796, 0
        %v4870 = vsel %vm3992, %v4800, 0
        %v4873 = vsel %vm3992, %v4804, 0
        %v4876 = vsel %vm3992, %v4808, 0
        %v4879 = vsel %vm3992, %v4807, 0
        %4881 = vmatprep.subr.bf16.mxu0 0
        %4882 = vmatpush1.bf16.msra.mxu0 0
        %4883 = vmatprep.subr.bf16.mxu0 0
        %4884 = vmatpush1.bf16.msra.mxu0 0
        %4885 = vmatprep.subr.bf16.mxu0 0
        %4886 = vmatpush1.bf16.msra.mxu0 0
        %4887 = vmatprep.subr.bf16.mxu0 0
        %4888 = vmatpush1.bf16.msra.mxu0 0
        %4889 = vmatprep.subr.bf16.mxu0 0
        %4890 = vmatpush1.bf16.msra.mxu0 %v4828
        %4891 = vmatprep.subr.bf16.mxu0 0
        %4892 = vmatpush1.bf16.msra.mxu0 %v4827
        %4893 = vmatprep.subr.bf16.mxu0 0
        %4894 = vmatpush1.bf16.msra.mxu0 %v4826
        %4895 = vmatprep.subr.bf16.mxu0 0
        %4896 = vmatpush1.bf16.msra.mxu0 %v4825
        %4897 = vmatprep.subr.bf16.mxu0 0
        %4898 = vmatpush2.bf16.msra.mxu0 0
        %4899 = vmatprep.subr.bf16.mxu0 0
        %4900 = vmatpush2.bf16.msra.mxu0 0
        %4901 = vmatprep.subr.bf16.mxu0 0
        %4902 = vmatpush2.bf16.msra.mxu0 0
        %4903 = vmatprep.subr.bf16.mxu0 0
        %4904 = vmatpush2.bf16.msra.mxu0 0
        %4905 = vmatprep.subr.bf16.mxu0 0
        %4906 = vmatpush2.bf16.msra.mxu0 0
        %4907 = vmatprep.subr.bf16.mxu0 0
        %4908 = vmatpush2.bf16.msra.mxu0 0
        %4909 = vmatprep.subr.bf16.mxu0 0
        %4910 = vmatpush2.bf16.msra.mxu0 0
        %4911 = vmatprep.subr.bf16.mxu0 0
        %4912 = vmatpush2.bf16.msra.mxu0 0
        %4913 = vmatprep.mubr.bf16.mxu0 0
        %4914 = vmatmul.mubr.bf16.gmra.mxu0 %v4834
        %v4915 = vpop.f32.mrf.mxu0
        %v4916 = vadd.f32 0.0, %v4915
        %v4917 = vpop.f32.mrf.mxu0
        %v4918 = vpop.f32.mrf.mxu0
        %v4919 = vadd.f32 0.0, %v4918
        %v4920 = vpop.f32.mrf.mxu0
        %4921 = vmatprep.mubr.bf16.mxu0 0
        %4922 = vmatmul.mubr.bf16.gmra.mxu0 %v4837
        %v4923 = vpop.f32.mrf.mxu0
        %v4924 = vadd.f32 0.0, %v4923
        %v4925 = vpop.f32.mrf.mxu0
        %v4926 = vpop.f32.mrf.mxu0
        %v4927 = vadd.f32 0.0, %v4926
        %v4928 = vpop.f32.mrf.mxu0
        %4929 = vmatprep.mubr.bf16.mxu0 0
        %4930 = vmatmul.mubr.bf16.gmra.mxu0 %v4840
        %v4931 = vpop.f32.mrf.mxu0
        %v4932 = vadd.f32 0.0, %v4931
        %v4933 = vpop.f32.mrf.mxu0
        %v4934 = vpop.f32.mrf.mxu0
        %v4935 = vadd.f32 0.0, %v4934
        %v4936 = vpop.f32.mrf.mxu0
        %4937 = vmatprep.mubr.bf16.mxu0 0
        %4938 = vmatmul.mubr.bf16.gmra.mxu0 %v4843
        %v4939 = vpop.f32.mrf.mxu0
        %v4940 = vadd.f32 0.0, %v4939
        %v4941 = vpop.f32.mrf.mxu0
        %v4942 = vpop.f32.mrf.mxu0
        %v4943 = vadd.f32 0.0, %v4942
        %v4944 = vpop.f32.mrf.mxu0
        %4945 = vmatprep.mubr.bf16.mxu0 0
        %4946 = vmatmul.mubr.bf16.gmra.mxu0 %v4846
        %v4947 = vpop.f32.mrf.mxu0
        %v4948 = vadd.f32 0.0, %v4947
        %v4949 = vpop.f32.mrf.mxu0
        %v4950 = vpop.f32.mrf.mxu0
        %v4951 = vadd.f32 0.0, %v4950
        %v4952 = vpop.f32.mrf.mxu0
        %4953 = vmatprep.mubr.bf16.mxu0 0
        %4954 = vmatmul.mubr.bf16.gmra.mxu0 %v4849
        %v4955 = vpop.f32.mrf.mxu0
        %v4956 = vadd.f32 0.0, %v4955
        %v4957 = vpop.f32.mrf.mxu0
        %v4958 = vpop.f32.mrf.mxu0
        %v4959 = vadd.f32 0.0, %v4958
        %v4960 = vpop.f32.mrf.mxu0
        %4961 = vmatprep.mubr.bf16.mxu0 0
        %4962 = vmatmul.mubr.bf16.gmra.mxu0 %v4852
        %v4963 = vpop.f32.mrf.mxu0
        %v4964 = vadd.f32 0.0, %v4963
        %v4965 = vpop.f32.mrf.mxu0
        %v4966 = vpop.f32.mrf.mxu0
        %v4967 = vadd.f32 0.0, %v4966
        %v4968 = vpop.f32.mrf.mxu0
        %4969 = vmatprep.mubr.bf16.mxu0 0
        %4970 = vmatmul.mubr.bf16.gmra.mxu0 %v4855
        %v4971 = vpop.f32.mrf.mxu0
        %v4972 = vadd.f32 0.0, %v4971
        %v4973 = vpop.f32.mrf.mxu0
        %v4974 = vpop.f32.mrf.mxu0
        %v4975 = vadd.f32 0.0, %v4974
        %v4976 = vpop.f32.mrf.mxu0
        %4977 = vmatprep.mubr.bf16.mxu0 0
        %4978 = vmatmul.mubr.bf16.gmra.mxu0 %v4858
        %v4979 = vpop.f32.mrf.mxu0
        %v4980 = vadd.f32 0.0, %v4979
        %v4981 = vpop.f32.mrf.mxu0
        %v4982 = vpop.f32.mrf.mxu0
        %v4983 = vadd.f32 0.0, %v4982
        %v4984 = vpop.f32.mrf.mxu0
        %4985 = vmatprep.mubr.bf16.mxu0 0
        %4986 = vmatmul.mubr.bf16.gmra.mxu0 %v4861
        %v4987 = vpop.f32.mrf.mxu0
        %v4988 = vadd.f32 0.0, %v4987
        %v4989 = vpop.f32.mrf.mxu0
        %v4990 = vpop.f32.mrf.mxu0
        %v4991 = vadd.f32 0.0, %v4990
        %v4992 = vpop.f32.mrf.mxu0
        %4993 = vmatprep.mubr.bf16.mxu0 0
        %4994 = vmatmul.mubr.bf16.gmra.mxu0 %v4864
        %v4995 = vpop.f32.mrf.mxu0
        %v4996 = vadd.f32 0.0, %v4995
        %v4997 = vpop.f32.mrf.mxu0
        %v4998 = vpop.f32.mrf.mxu0
        %v4999 = vadd.f32 0.0, %v4998
        %v5000 = vpop.f32.mrf.mxu0
        %5001 = vmatprep.mubr.bf16.mxu0 0
        %5002 = vmatmul.mubr.bf16.gmra.mxu0 %v4867
        %v5003 = vpop.f32.mrf.mxu0
        %v5004 = vadd.f32 0.0, %v5003
        %v5005 = vpop.f32.mrf.mxu0
        %v5006 = vpop.f32.mrf.mxu0
        %v5007 = vadd.f32 0.0, %v5006
        %v5008 = vpop.f32.mrf.mxu0
        %5009 = vmatprep.mubr.bf16.mxu0 0
        %5010 = vmatmul.mubr.bf16.gmra.mxu0 %v4870
        %v5011 = vpop.f32.mrf.mxu0
        %v5012 = vadd.f32 0.0, %v5011
        %v5013 = vpop.f32.mrf.mxu0
        %v5014 = vpop.f32.mrf.mxu0
        %v5015 = vadd.f32 0.0, %v5014
        %v5016 = vpop.f32.mrf.mxu0
        %5017 = vmatprep.mubr.bf16.mxu0 0
        %5018 = vmatmul.mubr.bf16.gmra.mxu0 %v4873
        %v5019 = vpop.f32.mrf.mxu0
        %v5020 = vadd.f32 0.0, %v5019
        %v5021 = vpop.f32.mrf.mxu0
        %v5022 = vpop.f32.mrf.mxu0
        %v5023 = vadd.f32 0.0, %v5022
        %v5024 = vpop.f32.mrf.mxu0
        %5025 = vmatprep.mubr.bf16.mxu0 0
        %5026 = vmatmul.mubr.bf16.gmra.mxu0 %v4876
        %v5027 = vpop.f32.mrf.mxu0
        %v5028 = vadd.f32 0.0, %v5027
        %v5029 = vpop.f32.mrf.mxu0
        %v5030 = vpop.f32.mrf.mxu0
        %v5031 = vadd.f32 0.0, %v5030
        %v5032 = vpop.f32.mrf.mxu0
        %5033 = vmatprep.mubr.bf16.mxu0 0
        %5034 = vmatmul.mubr.bf16.gmra.mxu0 %v4879
        %v5035 = vpop.f32.mrf.mxu0
        %v5036 = vadd.f32 0.0, %v5035
        %v5037 = vpop.f32.mrf.mxu0
        %v5038 = vpop.f32.mrf.mxu0
        %v5039 = vpop.f32.mrf.mxu0
        %5040 = vdwg.mxu0
        %v5041 = vadd.f32 %v4706, %v4916
        %v5042 = vadd.f32 %v4707, %v4919
        %v5043 = vadd.f32 %v4708, %v4924
        %v5044 = vadd.f32 %v4709, %v4927
        %v5045 = vadd.f32 %v4710, %v4932
        %v5046 = vadd.f32 %v4711, %v4935
        %v5047 = vadd.f32 %v4712, %v4940
        %v5048 = vadd.f32 %v4713, %v4943
        %v5049 = vadd.f32 %v4714, %v4948
        %v5050 = vadd.f32 %v4715, %v4951
        %v5051 = vadd.f32 %v4716, %v4956
        %v5052 = vadd.f32 %v4717, %v4959
        %v5053 = vadd.f32 %v4718, %v4964
        %v5054 = vadd.f32 %v4719, %v4967
        %v5055 = vadd.f32 %v4720, %v4972
        %v5056 = vadd.f32 %v4721, %v4975
        %v5057 = vadd.f32 %v4722, %v4980
        %v5058 = vadd.f32 %v4723, %v4983
        %v5059 = vadd.f32 %v4724, %v4988
        %v5060 = vadd.f32 %v4725, %v4991
        %v5061 = vadd.f32 %v4726, %v4996
        %v5062 = vadd.f32 %v4727, %v4999
        %v5063 = vadd.f32 %v4728, %v5004
        %v5064 = vadd.f32 %v4729, %v5007
        %v5065 = vadd.f32 %v4730, %v5012
        %v5066 = vadd.f32 %v4731, %v5015
        %v5067 = vadd.f32 %v4732, %v5020
        %v5068 = vadd.f32 %v4733, %v5023
        %v5069 = vadd.f32 %v4734, %v5028
        %v5070 = vadd.f32 %v4735, %v5031
        %v5071 = vadd.f32 %v4736, %v5036
        %s5072 = scalar_lea.vmem [#allocation10], 128
        %v5073 = vld [vmem:[%s5072] sm:$0xf]
        %v5074 = vld [vmem:[%s5072 + $0x4] sm:$0xf]
        %v5075 = vld [vmem:[%s5072 + $0x8] sm:$0xf]
        %v5076 = vld [vmem:[%s5072 + $0xc] sm:$0xf]
        %v5077 = vld [vmem:[%s5072 + $0x10] sm:$0xf]
        %v5078 = vld [vmem:[%s5072 + $0x14] sm:$0xf]
        %v5079 = vld [vmem:[%s5072 + $0x18] sm:$0xf]
        %v5080 = vld [vmem:[%s5072 + $0x1c] sm:$0xf]
        %v5081 = vrot.slane %v3807, 2
        %v5082 = vrot.slane %v3808, 2
        %v5083 = vsel %vm3291, %v5081, %v5082
        %v5084 = vrot.slane %v3809, 2
        %v5085 = vsel %vm3291, %v5082, %v5084
        %v5086 = vrot.slane %v3810, 2
        %v5087 = vsel %vm3291, %v5084, %v5086
        %v5088 = vrot.slane %v3811, 2
        %v5089 = vsel %vm3291, %v5086, %v5088
        %v5090 = vrot.slane %v3812, 2
        %v5091 = vsel %vm3291, %v5088, %v5090
        %v5092 = vrot.slane %v3813, 2
        %v5093 = vsel %vm3291, %v5090, %v5092
        %v5094 = vrot.slane %v3814, 2
        %v5095 = vsel %vm3291, %v5092, %v5094
        %v5096 = vrot.slane %v3815, 2
        %v5097 = vsel %vm3291, %v5094, %v5096
        %v5098 = vrot.slane %v3816, 2
        %v5099 = vsel %vm3291, %v5096, %v5098
        %v5100 = vrot.slane %v3817, 2
        %v5101 = vsel %vm3291, %v5098, %v5100
        %v5102 = vrot.slane %v3818, 2
        %v5103 = vsel %vm3291, %v5100, %v5102
        %v5104 = vrot.slane %v3819, 2
        %v5105 = vsel %vm3291, %v5102, %v5104
        %v5106 = vrot.slane %v3820, 2
        %v5107 = vsel %vm3291, %v5104, %v5106
        %v5108 = vrot.slane %v3821, 2
        %v5109 = vsel %vm3291, %v5106, %v5108
        %v5110 = vrot.slane %v3831, 2
        %v5111 = vsel %vm3291, %v5108, %v5110
        %v5120 = vunpack.c.l.b16 %v5073
        %v5121 = vunpack.c.l.b16 %v5074
        %v5122 = vunpack.c.l.b16 %v5075
        %v5123 = vunpack.c.l.b16 %v5076
        %v5124 = vunpack.c.l.b16 %v5077
        %v5125 = vunpack.c.l.b16 %v5078
        %v5126 = vunpack.c.l.b16 %v5079
        %v5127 = vunpack.c.l.b16 %v5080
        %v5128 = vpack.c.b16 %v5121, %v5120
        %v5129 = vpack.c.b16 %v5123, %v5122
        %v5130 = vpack.c.b16 %v5125, %v5124
        %v5131 = vpack.c.b16 %v5127, %v5126
        %v5137 = vsel %vm3992, %v5083, 0
        %v5140 = vsel %vm3992, %v5085, 0
        %v5143 = vsel %vm3992, %v5087, 0
        %v5146 = vsel %vm3992, %v5089, 0
        %v5149 = vsel %vm3992, %v5091, 0
        %v5152 = vsel %vm3992, %v5093, 0
        %v5155 = vsel %vm3992, %v5095, 0
        %v5158 = vsel %vm3992, %v5097, 0
        %v5161 = vsel %vm3992, %v5099, 0
        %v5164 = vsel %vm3992, %v5101, 0
        %v5167 = vsel %vm3992, %v5103, 0
        %v5170 = vsel %vm3992, %v5105, 0
        %v5173 = vsel %vm3992, %v5107, 0
        %v5176 = vsel %vm3992, %v5109, 0
        %v5179 = vsel %vm3992, %v5111, 0
        %v5182 = vsel %vm3992, %v5110, 0
        %5184 = vmatprep.subr.bf16.mxu0 0
        %5185 = vmatpush1.bf16.msra.mxu0 0
        %5186 = vmatprep.subr.bf16.mxu0 0
        %5187 = vmatpush1.bf16.msra.mxu0 0
        %5188 = vmatprep.subr.bf16.mxu0 0
        %5189 = vmatpush1.bf16.msra.mxu0 0
        %5190 = vmatprep.subr.bf16.mxu0 0
        %5191 = vmatpush1.bf16.msra.mxu0 0
        %5192 = vmatprep.subr.bf16.mxu0 0
        %5193 = vmatpush1.bf16.msra.mxu0 %v5131
        %5194 = vmatprep.subr.bf16.mxu0 0
        %5195 = vmatpush1.bf16.msra.mxu0 %v5130
        %5196 = vmatprep.subr.bf16.mxu0 0
        %5197 = vmatpush1.bf16.msra.mxu0 %v5129
        %5198 = vmatprep.subr.bf16.mxu0 0
        %5199 = vmatpush1.bf16.msra.mxu0 %v5128
        %5200 = vmatprep.subr.bf16.mxu0 0
        %5201 = vmatpush2.bf16.msra.mxu0 0
        %5202 = vmatprep.subr.bf16.mxu0 0
        %5203 = vmatpush2.bf16.msra.mxu0 0
        %5204 = vmatprep.subr.bf16.mxu0 0
        %5205 = vmatpush2.bf16.msra.mxu0 0
        %5206 = vmatprep.subr.bf16.mxu0 0
        %5207 = vmatpush2.bf16.msra.mxu0 0
        %5208 = vmatprep.subr.bf16.mxu0 0
        %5209 = vmatpush2.bf16.msra.mxu0 0
        %5210 = vmatprep.subr.bf16.mxu0 0
        %5211 = vmatpush2.bf16.msra.mxu0 0
        %5212 = vmatprep.subr.bf16.mxu0 0
        %5213 = vmatpush2.bf16.msra.mxu0 0
        %5214 = vmatprep.subr.bf16.mxu0 0
        %5215 = vmatpush2.bf16.msra.mxu0 0
        %5216 = vmatprep.mubr.bf16.mxu0 0
        %5217 = vmatmul.mubr.bf16.gmra.mxu0 %v5137
        %v5218 = vpop.f32.mrf.mxu0
        %v5219 = vadd.f32 0.0, %v5218
        %v5220 = vpop.f32.mrf.mxu0
        %v5221 = vpop.f32.mrf.mxu0
        %v5222 = vadd.f32 0.0, %v5221
        %v5223 = vpop.f32.mrf.mxu0
        %5224 = vmatprep.mubr.bf16.mxu0 0
        %5225 = vmatmul.mubr.bf16.gmra.mxu0 %v5140
        %v5226 = vpop.f32.mrf.mxu0
        %v5227 = vadd.f32 0.0, %v5226
        %v5228 = vpop.f32.mrf.mxu0
        %v5229 = vpop.f32.mrf.mxu0
        %v5230 = vadd.f32 0.0, %v5229
        %v5231 = vpop.f32.mrf.mxu0
        %5232 = vmatprep.mubr.bf16.mxu0 0
        %5233 = vmatmul.mubr.bf16.gmra.mxu0 %v5143
        %v5234 = vpop.f32.mrf.mxu0
        %v5235 = vadd.f32 0.0, %v5234
        %v5236 = vpop.f32.mrf.mxu0
        %v5237 = vpop.f32.mrf.mxu0
        %v5238 = vadd.f32 0.0, %v5237
        %v5239 = vpop.f32.mrf.mxu0
        %5240 = vmatprep.mubr.bf16.mxu0 0
        %5241 = vmatmul.mubr.bf16.gmra.mxu0 %v5146
        %v5242 = vpop.f32.mrf.mxu0
        %v5243 = vadd.f32 0.0, %v5242
        %v5244 = vpop.f32.mrf.mxu0
        %v5245 = vpop.f32.mrf.mxu0
        %v5246 = vadd.f32 0.0, %v5245
        %v5247 = vpop.f32.mrf.mxu0
        %5248 = vmatprep.mubr.bf16.mxu0 0
        %5249 = vmatmul.mubr.bf16.gmra.mxu0 %v5149
        %v5250 = vpop.f32.mrf.mxu0
        %v5251 = vadd.f32 0.0, %v5250
        %v5252 = vpop.f32.mrf.mxu0
        %v5253 = vpop.f32.mrf.mxu0
        %v5254 = vadd.f32 0.0, %v5253
        %v5255 = vpop.f32.mrf.mxu0
        %5256 = vmatprep.mubr.bf16.mxu0 0
        %5257 = vmatmul.mubr.bf16.gmra.mxu0 %v5152
        %v5258 = vpop.f32.mrf.mxu0
        %v5259 = vadd.f32 0.0, %v5258
        %v5260 = vpop.f32.mrf.mxu0
        %v5261 = vpop.f32.mrf.mxu0
        %v5262 = vadd.f32 0.0, %v5261
        %v5263 = vpop.f32.mrf.mxu0
        %5264 = vmatprep.mubr.bf16.mxu0 0
        %5265 = vmatmul.mubr.bf16.gmra.mxu0 %v5155
        %v5266 = vpop.f32.mrf.mxu0
        %v5267 = vadd.f32 0.0, %v5266
        %v5268 = vpop.f32.mrf.mxu0
        %v5269 = vpop.f32.mrf.mxu0
        %v5270 = vadd.f32 0.0, %v5269
        %v5271 = vpop.f32.mrf.mxu0
        %5272 = vmatprep.mubr.bf16.mxu0 0
        %5273 = vmatmul.mubr.bf16.gmra.mxu0 %v5158
        %v5274 = vpop.f32.mrf.mxu0
        %v5275 = vadd.f32 0.0, %v5274
        %v5276 = vpop.f32.mrf.mxu0
        %v5277 = vpop.f32.mrf.mxu0
        %v5278 = vadd.f32 0.0, %v5277
        %v5279 = vpop.f32.mrf.mxu0
        %5280 = vmatprep.mubr.bf16.mxu0 0
        %5281 = vmatmul.mubr.bf16.gmra.mxu0 %v5161
        %v5282 = vpop.f32.mrf.mxu0
        %v5283 = vadd.f32 0.0, %v5282
        %v5284 = vpop.f32.mrf.mxu0
        %v5285 = vpop.f32.mrf.mxu0
        %v5286 = vadd.f32 0.0, %v5285
        %v5287 = vpop.f32.mrf.mxu0
        %5288 = vmatprep.mubr.bf16.mxu0 0
        %5289 = vmatmul.mubr.bf16.gmra.mxu0 %v5164
        %v5290 = vpop.f32.mrf.mxu0
        %v5291 = vadd.f32 0.0, %v5290
        %v5292 = vpop.f32.mrf.mxu0
        %v5293 = vpop.f32.mrf.mxu0
        %v5294 = vadd.f32 0.0, %v5293
        %v5295 = vpop.f32.mrf.mxu0
        %5296 = vmatprep.mubr.bf16.mxu0 0
        %5297 = vmatmul.mubr.bf16.gmra.mxu0 %v5167
        %v5298 = vpop.f32.mrf.mxu0
        %v5299 = vadd.f32 0.0, %v5298
        %v5300 = vpop.f32.mrf.mxu0
        %v5301 = vpop.f32.mrf.mxu0
        %v5302 = vadd.f32 0.0, %v5301
        %v5303 = vpop.f32.mrf.mxu0
        %5304 = vmatprep.mubr.bf16.mxu0 0
        %5305 = vmatmul.mubr.bf16.gmra.mxu0 %v5170
        %v5306 = vpop.f32.mrf.mxu0
        %v5307 = vadd.f32 0.0, %v5306
        %v5308 = vpop.f32.mrf.mxu0
        %v5309 = vpop.f32.mrf.mxu0
        %v5310 = vadd.f32 0.0, %v5309
        %v5311 = vpop.f32.mrf.mxu0
        %5312 = vmatprep.mubr.bf16.mxu0 0
        %5313 = vmatmul.mubr.bf16.gmra.mxu0 %v5173
        %v5314 = vpop.f32.mrf.mxu0
        %v5315 = vadd.f32 0.0, %v5314
        %v5316 = vpop.f32.mrf.mxu0
        %v5317 = vpop.f32.mrf.mxu0
        %v5318 = vadd.f32 0.0, %v5317
        %v5319 = vpop.f32.mrf.mxu0
        %5320 = vmatprep.mubr.bf16.mxu0 0
        %5321 = vmatmul.mubr.bf16.gmra.mxu0 %v5176
        %v5322 = vpop.f32.mrf.mxu0
        %v5323 = vadd.f32 0.0, %v5322
        %v5324 = vpop.f32.mrf.mxu0
        %v5325 = vpop.f32.mrf.mxu0
        %v5326 = vadd.f32 0.0, %v5325
        %v5327 = vpop.f32.mrf.mxu0
        %5328 = vmatprep.mubr.bf16.mxu0 0
        %5329 = vmatmul.mubr.bf16.gmra.mxu0 %v5179
        %v5330 = vpop.f32.mrf.mxu0
        %v5331 = vadd.f32 0.0, %v5330
        %v5332 = vpop.f32.mrf.mxu0
        %v5333 = vpop.f32.mrf.mxu0
        %v5334 = vadd.f32 0.0, %v5333
        %v5335 = vpop.f32.mrf.mxu0
        %5336 = vmatprep.mubr.bf16.mxu0 0
        %5337 = vmatmul.mubr.bf16.gmra.mxu0 %v5182
        %v5338 = vpop.f32.mrf.mxu0
        %v5339 = vadd.f32 0.0, %v5338
        %v5340 = vpop.f32.mrf.mxu0
        %v5341 = vpop.f32.mrf.mxu0
        %v5342 = vpop.f32.mrf.mxu0
        %5343 = vdwg.mxu0
        %v5344 = vadd.f32 %v5041, %v5219
        %v5345 = vadd.f32 %v5042, %v5222
        %v5346 = vadd.f32 %v5043, %v5227
        %v5347 = vadd.f32 %v5044, %v5230
        %v5348 = vadd.f32 %v5045, %v5235
        %v5349 = vadd.f32 %v5046, %v5238
        %v5350 = vadd.f32 %v5047, %v5243
        %v5351 = vadd.f32 %v5048, %v5246
        %v5352 = vadd.f32 %v5049, %v5251
        %v5353 = vadd.f32 %v5050, %v5254
        %v5354 = vadd.f32 %v5051, %v5259
        %v5355 = vadd.f32 %v5052, %v5262
        %v5356 = vadd.f32 %v5053, %v5267
        %v5357 = vadd.f32 %v5054, %v5270
        %v5358 = vadd.f32 %v5055, %v5275
        %v5359 = vadd.f32 %v5056, %v5278
        %v5360 = vadd.f32 %v5057, %v5283
        %v5361 = vadd.f32 %v5058, %v5286
        %v5362 = vadd.f32 %v5059, %v5291
        %v5363 = vadd.f32 %v5060, %v5294
        %v5364 = vadd.f32 %v5061, %v5299
        %v5365 = vadd.f32 %v5062, %v5302
        %v5366 = vadd.f32 %v5063, %v5307
        %v5367 = vadd.f32 %v5064, %v5310
        %v5368 = vadd.f32 %v5065, %v5315
        %v5369 = vadd.f32 %v5066, %v5318
        %v5370 = vadd.f32 %v5067, %v5323
        %v5371 = vadd.f32 %v5068, %v5326
        %v5372 = vadd.f32 %v5069, %v5331
        %v5373 = vadd.f32 %v5070, %v5334
        %v5374 = vadd.f32 %v5071, %v5339
        %v5375 = vld [vmem:[#allocation11] sm:$0x1]
        %v5377 = vlaneseq
        %v5378 = vshrl.u32 %v5377, 7
        %v5379 = vsub.s32 0, %v5378
        %v5380 = vrot.slane %v5375, %v5379
        %v5382 = vadd.f32 %v5344, %v5380
        %v5383 = vadd.f32 %v5345, %v5380
        %v5384 = vadd.f32 %v5346, %v5380
        %v5385 = vadd.f32 %v5347, %v5380
        %v5386 = vadd.f32 %v5348, %v5380
        %v5387 = vadd.f32 %v5349, %v5380
        %v5388 = vadd.f32 %v5350, %v5380
        %v5389 = vadd.f32 %v5351, %v5380
        %v5390 = vadd.f32 %v5352, %v5380
        %v5391 = vadd.f32 %v5353, %v5380
        %v5392 = vadd.f32 %v5354, %v5380
        %v5393 = vadd.f32 %v5355, %v5380
        %v5394 = vadd.f32 %v5356, %v5380
        %v5395 = vadd.f32 %v5357, %v5380
        %v5396 = vadd.f32 %v5358, %v5380
        %v5397 = vadd.f32 %v5359, %v5380
        %v5398 = vadd.f32 %v5360, %v5380
        %v5399 = vadd.f32 %v5361, %v5380
        %v5400 = vadd.f32 %v5362, %v5380
        %v5401 = vadd.f32 %v5363, %v5380
        %v5402 = vadd.f32 %v5364, %v5380
        %v5403 = vadd.f32 %v5365, %v5380
        %v5404 = vadd.f32 %v5366, %v5380
        %v5405 = vadd.f32 %v5367, %v5380
        %v5406 = vadd.f32 %v5368, %v5380
        %v5407 = vadd.f32 %v5369, %v5380
        %v5408 = vadd.f32 %v5370, %v5380
        %v5409 = vadd.f32 %v5371, %v5380
        %v5410 = vadd.f32 %v5372, %v5380
        %v5411 = vadd.f32 %v5373, %v5380
        %v5412 = vadd.f32 %v5374, %v5380
        %vm5413 = vcmp.gt.f32.partialorder %v5382, 0.0
        %vm5414 = vcmp.gt.f32.partialorder %v5383, 0.0
        %vm5415 = vcmp.gt.f32.partialorder %v5384, 0.0
        %vm5416 = vcmp.gt.f32.partialorder %v5385, 0.0
        %vm5417 = vcmp.gt.f32.partialorder %v5386, 0.0
        %vm5418 = vcmp.gt.f32.partialorder %v5387, 0.0
        %vm5419 = vcmp.gt.f32.partialorder %v5388, 0.0
        %vm5420 = vcmp.gt.f32.partialorder %v5389, 0.0
        %vm5421 = vcmp.gt.f32.partialorder %v5390, 0.0
        %vm5422 = vcmp.gt.f32.partialorder %v5391, 0.0
        %vm5423 = vcmp.gt.f32.partialorder %v5392, 0.0
        %vm5424 = vcmp.gt.f32.partialorder %v5393, 0.0
        %vm5425 = vcmp.gt.f32.partialorder %v5394, 0.0
        %vm5426 = vcmp.gt.f32.partialorder %v5395, 0.0
        %vm5427 = vcmp.gt.f32.partialorder %v5396, 0.0
        %vm5428 = vcmp.gt.f32.partialorder %v5397, 0.0
        %vm5429 = vcmp.gt.f32.partialorder %v5398, 0.0
        %vm5430 = vcmp.gt.f32.partialorder %v5399, 0.0
        %vm5431 = vcmp.gt.f32.partialorder %v5400, 0.0
        %vm5432 = vcmp.gt.f32.partialorder %v5401, 0.0
        %vm5433 = vcmp.gt.f32.partialorder %v5402, 0.0
        %vm5434 = vcmp.gt.f32.partialorder %v5403, 0.0
        %vm5435 = vcmp.gt.f32.partialorder %v5404, 0.0
        %vm5436 = vcmp.gt.f32.partialorder %v5405, 0.0
        %vm5437 = vcmp.gt.f32.partialorder %v5406, 0.0
        %vm5438 = vcmp.gt.f32.partialorder %v5407, 0.0
        %vm5439 = vcmp.gt.f32.partialorder %v5408, 0.0
        %vm5440 = vcmp.gt.f32.partialorder %v5409, 0.0
        %vm5441 = vcmp.gt.f32.partialorder %v5410, 0.0
        %vm5442 = vcmp.gt.f32.partialorder %v5411, 0.0
        %vm5443 = vcmp.gt.f32.partialorder %v5412, 0.0
        %v5444 = vmin.f32 %v5382, 0.0
        %v5445 = vmin.f32 %v5383, 0.0
        %v5446 = vmin.f32 %v5384, 0.0
        %v5447 = vmin.f32 %v5385, 0.0
        %v5448 = vmin.f32 %v5386, 0.0
        %v5449 = vmin.f32 %v5387, 0.0
        %v5450 = vmin.f32 %v5388, 0.0
        %v5451 = vmin.f32 %v5389, 0.0
        %v5452 = vmin.f32 %v5390, 0.0
        %v5453 = vmin.f32 %v5391, 0.0
        %v5454 = vmin.f32 %v5392, 0.0
        %v5455 = vmin.f32 %v5393, 0.0
        %v5456 = vmin.f32 %v5394, 0.0
        %v5457 = vmin.f32 %v5395, 0.0
        %v5458 = vmin.f32 %v5396, 0.0
        %v5459 = vmin.f32 %v5397, 0.0
        %v5460 = vmin.f32 %v5398, 0.0
        %v5461 = vmin.f32 %v5399, 0.0
        %v5462 = vmin.f32 %v5400, 0.0
        %v5463 = vmin.f32 %v5401, 0.0
        %v5464 = vmin.f32 %v5402, 0.0
        %v5465 = vmin.f32 %v5403, 0.0
        %v5466 = vmin.f32 %v5404, 0.0
        %v5467 = vmin.f32 %v5405, 0.0
        %v5468 = vmin.f32 %v5406, 0.0
        %v5469 = vmin.f32 %v5407, 0.0
        %v5470 = vmin.f32 %v5408, 0.0
        %v5471 = vmin.f32 %v5409, 0.0
        %v5472 = vmin.f32 %v5410, 0.0
        %v5473 = vmin.f32 %v5411, 0.0
        %v5474 = vmin.f32 %v5412, 0.0
        %v5475 = vmul.f32 %v5444, 1.442695
        %v5476 = vpow.pop %v5475
        %v5477 = vmul.f32 %v5445, 1.442695
        %v5478 = vpow.pop %v5477
        %v5479 = vmul.f32 %v5446, 1.442695
        %v5480 = vpow.pop %v5479
        %v5481 = vmul.f32 %v5447, 1.442695
        %v5482 = vpow.pop %v5481
        %v5483 = vmul.f32 %v5448, 1.442695
        %v5484 = vpow.pop %v5483
        %v5485 = vmul.f32 %v5449, 1.442695
        %v5486 = vpow.pop %v5485
        %v5487 = vmul.f32 %v5450, 1.442695
        %v5488 = vpow.pop %v5487
        %v5489 = vmul.f32 %v5451, 1.442695
        %v5490 = vpow.pop %v5489
        %v5491 = vmul.f32 %v5452, 1.442695
        %v5492 = vpow.pop %v5491
        %v5493 = vmul.f32 %v5453, 1.442695
        %v5494 = vpow.pop %v5493
        %v5495 = vmul.f32 %v5454, 1.442695
        %v5496 = vpow.pop %v5495
        %v5497 = vmul.f32 %v5455, 1.442695
        %v5498 = vpow.pop %v5497
        %v5499 = vmul.f32 %v5456, 1.442695
        %v5500 = vpow.pop %v5499
        %v5501 = vmul.f32 %v5457, 1.442695
        %v5502 = vpow.pop %v5501
        %v5503 = vmul.f32 %v5458, 1.442695
        %v5504 = vpow.pop %v5503
        %v5505 = vmul.f32 %v5459, 1.442695
        %v5506 = vpow.pop %v5505
        %v5507 = vmul.f32 %v5460, 1.442695
        %v5508 = vpow.pop %v5507
        %v5509 = vmul.f32 %v5461, 1.442695
        %v5510 = vpow.pop %v5509
        %v5511 = vmul.f32 %v5462, 1.442695
        %v5512 = vpow.pop %v5511
        %v5513 = vmul.f32 %v5463, 1.442695
        %v5514 = vpow.pop %v5513
        %v5515 = vmul.f32 %v5464, 1.442695
        %v5516 = vpow.pop %v5515
        %v5517 = vmul.f32 %v5465, 1.442695
        %v5518 = vpow.pop %v5517
        %v5519 = vmul.f32 %v5466, 1.442695
        %v5520 = vpow.pop %v5519
        %v5521 = vmul.f32 %v5467, 1.442695
        %v5522 = vpow.pop %v5521
        %v5523 = vmul.f32 %v5468, 1.442695
        %v5524 = vpow.pop %v5523
        %v5525 = vmul.f32 %v5469, 1.442695
        %v5526 = vpow.pop %v5525
        %v5527 = vmul.f32 %v5470, 1.442695
        %v5528 = vpow.pop %v5527
        %v5529 = vmul.f32 %v5471, 1.442695
        %v5530 = vpow.pop %v5529
        %v5531 = vmul.f32 %v5472, 1.442695
        %v5532 = vpow.pop %v5531
        %v5533 = vmul.f32 %v5473, 1.442695
        %v5534 = vpow.pop %v5533
        %v5535 = vmul.f32 %v5474, 1.442695
        %v5536 = vpow.pop %v5535
        %v5537 = vsub.f32 %v5476, 1.0
        %v5538 = vsub.f32 %v5478, 1.0
        %v5539 = vsub.f32 %v5480, 1.0
        %v5540 = vsub.f32 %v5482, 1.0
        %v5541 = vsub.f32 %v5484, 1.0
        %v5542 = vsub.f32 %v5486, 1.0
        %v5543 = vsub.f32 %v5488, 1.0
        %v5544 = vsub.f32 %v5490, 1.0
        %v5545 = vsub.f32 %v5492, 1.0
        %v5546 = vsub.f32 %v5494, 1.0
        %v5547 = vsub.f32 %v5496, 1.0
        %v5548 = vsub.f32 %v5498, 1.0
        %v5549 = vsub.f32 %v5500, 1.0
        %v5550 = vsub.f32 %v5502, 1.0
        %v5551 = vsub.f32 %v5504, 1.0
        %v5552 = vsub.f32 %v5506, 1.0
        %v5553 = vsub.f32 %v5508, 1.0
        %v5554 = vsub.f32 %v5510, 1.0
        %v5555 = vsub.f32 %v5512, 1.0
        %v5556 = vsub.f32 %v5514, 1.0
        %v5557 = vsub.f32 %v5516, 1.0
        %v5558 = vsub.f32 %v5518, 1.0
        %v5559 = vsub.f32 %v5520, 1.0
        %v5560 = vsub.f32 %v5522, 1.0
        %v5561 = vsub.f32 %v5524, 1.0
        %v5562 = vsub.f32 %v5526, 1.0
        %v5563 = vsub.f32 %v5528, 1.0
        %v5564 = vsub.f32 %v5530, 1.0
        %v5565 = vsub.f32 %v5532, 1.0
        %v5566 = vsub.f32 %v5534, 1.0
        %v5567 = vsub.f32 %v5536, 1.0
        %v5568 = vsel %vm5413, %v5382, %v5537
        %v5569 = vsel %vm5414, %v5383, %v5538
        %v5570 = vsel %vm5415, %v5384, %v5539
        %v5571 = vsel %vm5416, %v5385, %v5540
        %v5572 = vsel %vm5417, %v5386, %v5541
        %v5573 = vsel %vm5418, %v5387, %v5542
        %v5574 = vsel %vm5419, %v5388, %v5543
        %v5575 = vsel %vm5420, %v5389, %v5544
        %v5576 = vsel %vm5421, %v5390, %v5545
        %v5577 = vsel %vm5422, %v5391, %v5546
        %v5578 = vsel %vm5423, %v5392, %v5547
        %v5579 = vsel %vm5424, %v5393, %v5548
        %v5580 = vsel %vm5425, %v5394, %v5549
        %v5581 = vsel %vm5426, %v5395, %v5550
        %v5582 = vsel %vm5427, %v5396, %v5551
        %v5583 = vsel %vm5428, %v5397, %v5552
        %v5584 = vsel %vm5429, %v5398, %v5553
        %v5585 = vsel %vm5430, %v5399, %v5554
        %v5586 = vsel %vm5431, %v5400, %v5555
        %v5587 = vsel %vm5432, %v5401, %v5556
        %v5588 = vsel %vm5433, %v5402, %v5557
        %v5589 = vsel %vm5434, %v5403, %v5558
        %v5590 = vsel %vm5435, %v5404, %v5559
        %v5591 = vsel %vm5436, %v5405, %v5560
        %v5592 = vsel %vm5437, %v5406, %v5561
        %v5593 = vsel %vm5438, %v5407, %v5562
        %v5594 = vsel %vm5439, %v5408, %v5563
        %v5595 = vsel %vm5440, %v5409, %v5564
        %v5596 = vsel %vm5441, %v5410, %v5565
        %v5597 = vsel %vm5442, %v5411, %v5566
        %v5598 = vsel %vm5443, %v5412, %v5567
        %v5599 = vrot.slane %v5568, 4
        %v5600 = vmax.f32 %v5568, %v5599
        %v5601 = vrot.slane %v5600, 2
        %v5602 = vmax.f32 %v5600, %v5601
        %v5603 = vrot.slane %v5602, 1
        %v5604 = vmax.f32 %v5602, %v5603
        %vm5605 = vcmask 1047558
        %v5606 = vsel %vm5605, %v5569, -inf
        %vm5607 = vcmask 1045504
        %v5608 = vsel %vm5607, %v5570, -inf
        %v5609 = vmax.f32 %v5606, %v5608
        %v5610 = vrot.slane %v5609, 4
        %v5611 = vmax.f32 %v5609, %v5610
        %v5612 = vrot.slane %v5611, 2
        %v5613 = vmax.f32 %v5611, %v5612
        %v5614 = vrot.slane %v5613, 1
        %v5615 = vmax.f32 %v5613, %v5614
        %vm5616 = vcmask 1047556
        %v5617 = vsel %vm5616, %v5571, -inf
        %vm5618 = vcmask 1043456
        %v5619 = vsel %vm5618, %v5572, -inf
        %v5620 = vmax.f32 %v5617, %v5619
        %v5621 = vrot.slane %v5620, 4
        %v5622 = vmax.f32 %v5620, %v5621
        %v5623 = vrot.slane %v5622, 2
        %v5624 = vmax.f32 %v5622, %v5623
        %v5625 = vrot.slane %v5624, 1
        %v5626 = vmax.f32 %v5624, %v5625
        %vm5627 = vcmask 1047554
        %v5628 = vsel %vm5627, %v5573, -inf
        %vm5629 = vcmask 1041408
        %v5630 = vsel %vm5629, %v5574, -inf
        %v5631 = vmax.f32 %v5628, %v5630
        %v5632 = vrot.slane %v5631, 4
        %v5633 = vmax.f32 %v5631, %v5632
        %v5634 = vrot.slane %v5633, 2
        %v5635 = vmax.f32 %v5633, %v5634
        %v5636 = vrot.slane %v5635, 1
        %v5637 = vmax.f32 %v5635, %v5636
        %v5638 = vrot.slane %v5575, 4
        %v5639 = vmax.f32 %v5575, %v5638
        %v5640 = vrot.slane %v5639, 2
        %v5641 = vmax.f32 %v5639, %v5640
        %v5642 = vrot.slane %v5641, 1
        %v5643 = vmax.f32 %v5641, %v5642
        %v5644 = vsel %vm5605, %v5576, -inf
        %v5645 = vsel %vm5607, %v5577, -inf
        %v5646 = vmax.f32 %v5644, %v5645
        %v5647 = vrot.slane %v5646, 4
        %v5648 = vmax.f32 %v5646, %v5647
        %v5649 = vrot.slane %v5648, 2
        %v5650 = vmax.f32 %v5648, %v5649
        %v5651 = vrot.slane %v5650, 1
        %v5652 = vmax.f32 %v5650, %v5651
        %v5653 = vsel %vm5616, %v5578, -inf
        %v5654 = vsel %vm5618, %v5579, -inf
        %v5655 = vmax.f32 %v5653, %v5654
        %v5656 = vrot.slane %v5655, 4
        %v5657 = vmax.f32 %v5655, %v5656
        %v5658 = vrot.slane %v5657, 2
        %v5659 = vmax.f32 %v5657, %v5658
        %v5660 = vrot.slane %v5659, 1
        %v5661 = vmax.f32 %v5659, %v5660
        %v5662 = vsel %vm5627, %v5580, -inf
        %v5663 = vsel %vm5629, %v5581, -inf
        %v5664 = vmax.f32 %v5662, %v5663
        %v5665 = vrot.slane %v5664, 4
        %v5666 = vmax.f32 %v5664, %v5665
        %v5667 = vrot.slane %v5666, 2
        %v5668 = vmax.f32 %v5666, %v5667
        %v5669 = vrot.slane %v5668, 1
        %v5670 = vmax.f32 %v5668, %v5669
        %v5671 = vrot.slane %v5582, 4
        %v5672 = vmax.f32 %v5582, %v5671
        %v5673 = vrot.slane %v5672, 2
        %v5674 = vmax.f32 %v5672, %v5673
        %v5675 = vrot.slane %v5674, 1
        %v5676 = vmax.f32 %v5674, %v5675
        %v5677 = vsel %vm5605, %v5583, -inf
        %v5678 = vsel %vm5607, %v5584, -inf
        %v5679 = vmax.f32 %v5677, %v5678
        %v5680 = vrot.slane %v5679, 4
        %v5681 = vmax.f32 %v5679, %v5680
        %v5682 = vrot.slane %v5681, 2
        %v5683 = vmax.f32 %v5681, %v5682
        %v5684 = vrot.slane %v5683, 1
        %v5685 = vmax.f32 %v5683, %v5684
        %v5686 = vsel %vm5616, %v5585, -inf
        %v5687 = vsel %vm5618, %v5586, -inf
        %v5688 = vmax.f32 %v5686, %v5687
        %v5689 = vrot.slane %v5688, 4
        %v5690 = vmax.f32 %v5688, %v5689
        %v5691 = vrot.slane %v5690, 2
        %v5692 = vmax.f32 %v5690, %v5691
        %v5693 = vrot.slane %v5692, 1
        %v5694 = vmax.f32 %v5692, %v5693
        %v5695 = vsel %vm5627, %v5587, -inf
        %v5696 = vsel %vm5629, %v5588, -inf
        %v5697 = vmax.f32 %v5695, %v5696
        %v5698 = vrot.slane %v5697, 4
        %v5699 = vmax.f32 %v5697, %v5698
        %v5700 = vrot.slane %v5699, 2
        %v5701 = vmax.f32 %v5699, %v5700
        %v5702 = vrot.slane %v5701, 1
        %v5703 = vmax.f32 %v5701, %v5702
        %v5704 = vrot.slane %v5589, 4
        %v5705 = vmax.f32 %v5589, %v5704
        %v5706 = vrot.slane %v5705, 2
        %v5707 = vmax.f32 %v5705, %v5706
        %v5708 = vrot.slane %v5707, 1
        %v5709 = vmax.f32 %v5707, %v5708
        %v5710 = vsel %vm5605, %v5590, -inf
        %v5711 = vsel %vm5607, %v5591, -inf
        %v5712 = vmax.f32 %v5710, %v5711
        %v5713 = vrot.slane %v5712, 4
        %v5714 = vmax.f32 %v5712, %v5713
        %v5715 = vrot.slane %v5714, 2
        %v5716 = vmax.f32 %v5714, %v5715
        %v5717 = vrot.slane %v5716, 1
        %v5718 = vmax.f32 %v5716, %v5717
        %v5719 = vsel %vm5616, %v5592, -inf
        %v5720 = vsel %vm5618, %v5593, -inf
        %v5721 = vmax.f32 %v5719, %v5720
        %v5722 = vrot.slane %v5721, 4
        %v5723 = vmax.f32 %v5721, %v5722
        %v5724 = vrot.slane %v5723, 2
        %v5725 = vmax.f32 %v5723, %v5724
        %v5726 = vrot.slane %v5725, 1
        %v5727 = vmax.f32 %v5725, %v5726
        %v5728 = vsel %vm5627, %v5594, -inf
        %v5729 = vsel %vm5629, %v5595, -inf
        %v5730 = vmax.f32 %v5728, %v5729
        %v5731 = vrot.slane %v5730, 4
        %v5732 = vmax.f32 %v5730, %v5731
        %v5733 = vrot.slane %v5732, 2
        %v5734 = vmax.f32 %v5732, %v5733
        %v5735 = vrot.slane %v5734, 1
        %v5736 = vmax.f32 %v5734, %v5735
        %v5737 = vrot.slane %v5596, 4
        %v5738 = vmax.f32 %v5596, %v5737
        %v5739 = vrot.slane %v5738, 2
        %v5740 = vmax.f32 %v5738, %v5739
        %v5741 = vrot.slane %v5740, 1
        %v5742 = vmax.f32 %v5740, %v5741
        %v5743 = vsel %vm5605, %v5597, -inf
        %v5744 = vsel %vm5607, %v5598, -inf
        %v5745 = vmax.f32 %v5743, %v5744
        %v5746 = vrot.slane %v5745, 4
        %v5747 = vmax.f32 %v5745, %v5746
        %v5748 = vrot.slane %v5747, 2
        %v5749 = vmax.f32 %v5747, %v5748
        %v5750 = vrot.slane %v5749, 1
        %v5751 = vmax.f32 %v5749, %v5750
        %vm5752 = vcmask 1040384
        %v5753 = vsel %vm5752, %v5604, %v5615
        %v5754 = vsel %vm5629, %v5753, %v5626
        %vm5755 = vcmask 1042432
        %v5756 = vsel %vm5755, %v5754, %v5637
        %v5757 = vsel %vm5618, %v5756, %v5643
        %vm5758 = vcmask 1044480
        %v5759 = vsel %vm5758, %v5757, %v5652
        %v5760 = vsel %vm5607, %v5759, %v5661
        %vm5761 = vcmask 1046528
        %v5762 = vsel %vm5761, %v5760, %v5670
        %v5763 = vsel %vm5752, %v5676, %v5685
        %v5764 = vsel %vm5629, %v5763, %v5694
        %v5765 = vsel %vm5755, %v5764, %v5703
        %v5766 = vsel %vm5618, %v5765, %v5709
        %v5767 = vsel %vm5758, %v5766, %v5718
        %v5768 = vsel %vm5607, %v5767, %v5727
        %v5769 = vsel %vm5761, %v5768, %v5736
        %v5770 = vsel %vm5752, %v5742, %v5751
        %v5771 = vpack.c.bf16 %v5769, %v5762
        %v5772 = vpack.c.bf16 %v5770, %v5770
        %v5773 = vld [vmem:[#allocation13] sm:$0xff]
        %v5774 = vld [vmem:[#allocation13 + $0x8] sm:$0xf]
        %v5775 = vld [vmem:[#allocation13 + $0xc] sm:$0xff]
        %v5776 = vld [vmem:[#allocation13 + $0x14] sm:$0xf]
        %v5777 = vld [vmem:[#allocation13 + $0x18] sm:$0xff]
        %v5778 = vld [vmem:[#allocation13 + $0x20] sm:$0xf]
        %v5779 = vld [vmem:[#allocation13 + $0x24] sm:$0xff]
        %v5780 = vld [vmem:[#allocation13 + $0x2c] sm:$0xf]
        %v5781 = vld [vmem:[#allocation13 + $0x30] sm:$0xff]
        %v5782 = vld [vmem:[#allocation13 + $0x38] sm:$0xf]
        %v5783 = vld [vmem:[#allocation13 + $0x3c] sm:$0xff]
        %v5784 = vld [vmem:[#allocation13 + $0x44] sm:$0xf]
        %v5785 = vld [vmem:[#allocation13 + $0x48] sm:$0xff]
        %v5786 = vld [vmem:[#allocation13 + $0x50] sm:$0xf]
        %v5787 = vld [vmem:[#allocation13 + $0x54] sm:$0xff]
        %v5788 = vld [vmem:[#allocation13 + $0x5c] sm:$0xf]
        %v5789 = vld [vmem:[#allocation13 + $0x60] sm:$0xff]
        %v5790 = vld [vmem:[#allocation13 + $0x68] sm:$0xf]
        %v5791 = vld [vmem:[#allocation13 + $0x6c] sm:$0xff]
        %v5792 = vld [vmem:[#allocation13 + $0x74] sm:$0xf]
        %v5793 = vld [vmem:[#allocation13 + $0x78] sm:$0xff]
        %v5794 = vld [vmem:[#allocation13 + $0x80] sm:$0xf]
        %v5795 = vld [vmem:[#allocation13 + $0x84] sm:$0xff]
        %v5796 = vld [vmem:[#allocation13 + $0x8c] sm:$0xf]
        %v5797 = vld [vmem:[#allocation13 + $0x90] sm:$0xff]
        %v5798 = vld [vmem:[#allocation13 + $0x98] sm:$0xf]
        %v5799 = vld [vmem:[#allocation13 + $0x9c] sm:$0xff]
        %v5800 = vld [vmem:[#allocation13 + $0xa4] sm:$0xf]
        %v5801 = vld [vmem:[#allocation13 + $0xa8] sm:$0xff]
        %v5802 = vld [vmem:[#allocation13 + $0xb0] sm:$0xf]
        %v5803 = vld [vmem:[#allocation13 + $0xb4] sm:$0xff]
        %v5804 = vld [vmem:[#allocation13 + $0xbc] sm:$0xf]
        %v5805 = vld [vmem:[#allocation14] sm:$0x7]
        %v5807 = vlaneseq
        %v5808 = vshrl.u32 %v5807, 7
        %v5809 = vsub.s32 0, %v5808
        %v5810 = vrot.slane %v5805, %v5809
        %v5811 = vlaneseq
        %v5812 = vshrl.u32 %v5811, 7
        %v5813 = vsub.s32 1, %v5812
        %v5814 = vrot.slane %v5805, %v5813
        %v5815 = vlaneseq
        %v5816 = vshrl.u32 %v5815, 7
        %v5817 = vsub.s32 2, %v5816
        %v5818 = vrot.slane %v5805, %v5817
        %v5854 = vunpack.c.l.b16 %v5773
        %v5855 = vunpack.c.h.b16 %v5773
        %v5856 = vunpack.c.l.b16 %v5774
        %v5857 = vunpack.c.l.b16 %v5775
        %v5858 = vunpack.c.h.b16 %v5775
        %v5859 = vunpack.c.l.b16 %v5776
        %v5860 = vunpack.c.l.b16 %v5777
        %v5861 = vunpack.c.h.b16 %v5777
        %v5862 = vunpack.c.l.b16 %v5778
        %v5863 = vunpack.c.l.b16 %v5779
        %v5864 = vunpack.c.h.b16 %v5779
        %v5865 = vunpack.c.l.b16 %v5780
        %v5866 = vunpack.c.l.b16 %v5781
        %v5867 = vunpack.c.h.b16 %v5781
        %v5868 = vunpack.c.l.b16 %v5782
        %v5869 = vunpack.c.l.b16 %v5783
        %v5870 = vunpack.c.h.b16 %v5783
        %v5871 = vunpack.c.l.b16 %v5784
        %v5872 = vunpack.c.l.b16 %v5785
        %v5873 = vunpack.c.h.b16 %v5785
        %v5874 = vunpack.c.l.b16 %v5786
        %v5875 = vunpack.c.l.b16 %v5787
        %v5876 = vunpack.c.h.b16 %v5787
        %v5877 = vunpack.c.l.b16 %v5788
        %v5878 = vunpack.c.l.b16 %v5789
        %v5879 = vunpack.c.h.b16 %v5789
        %v5880 = vunpack.c.l.b16 %v5790
        %v5881 = vunpack.c.l.b16 %v5791
        %v5882 = vunpack.c.h.b16 %v5791
        %v5883 = vunpack.c.l.b16 %v5792
        %v5884 = vunpack.c.l.b16 %v5793
        %v5885 = vunpack.c.h.b16 %v5793
        %v5886 = vunpack.c.l.b16 %v5794
        %v5887 = vunpack.c.l.b16 %v5795
        %v5888 = vunpack.c.h.b16 %v5795
        %v5889 = vunpack.c.l.b16 %v5796
        %v5890 = vunpack.c.l.b16 %v5797
        %v5891 = vunpack.c.h.b16 %v5797
        %v5892 = vunpack.c.l.b16 %v5798
        %v5893 = vunpack.c.l.b16 %v5799
        %v5894 = vunpack.c.h.b16 %v5799
        %v5895 = vunpack.c.l.b16 %v5800
        %v5896 = vunpack.c.l.b16 %v5801
        %v5897 = vunpack.c.h.b16 %v5801
        %v5898 = vunpack.c.l.b16 %v5802
        %v5899 = vunpack.c.l.b16 %v5803
        %v5900 = vunpack.c.h.b16 %v5803
        %v5901 = vunpack.c.l.b16 %v5804
        %v5902 = vpack.c.b16 %v5857, %v5854
        %v5903 = vpack.c.b16 %v5858, %v5855
        %v5904 = vpack.c.b16 %v5859, %v5856
        %v5905 = vpack.c.b16 %v5863, %v5860
        %v5906 = vpack.c.b16 %v5864, %v5861
        %v5907 = vpack.c.b16 %v5865, %v5862
        %v5908 = vpack.c.b16 %v5869, %v5866
        %v5909 = vpack.c.b16 %v5870, %v5867
        %v5910 = vpack.c.b16 %v5871, %v5868
        %v5911 = vpack.c.b16 %v5875, %v5872
        %v5912 = vpack.c.b16 %v5876, %v5873
        %v5913 = vpack.c.b16 %v5877, %v5874
        %v5914 = vpack.c.b16 %v5881, %v5878
        %v5915 = vpack.c.b16 %v5882, %v5879
        %v5916 = vpack.c.b16 %v5883, %v5880
        %v5917 = vpack.c.b16 %v5887, %v5884
        %v5918 = vpack.c.b16 %v5888, %v5885
        %v5919 = vpack.c.b16 %v5889, %v5886
        %v5920 = vpack.c.b16 %v5893, %v5890
        %v5921 = vpack.c.b16 %v5894, %v5891
        %v5922 = vpack.c.b16 %v5895, %v5892
        %v5923 = vpack.c.b16 %v5899, %v5896
        %v5924 = vpack.c.b16 %v5900, %v5897
        %v5925 = vpack.c.b16 %v5901, %v5898
        %5950 = vmatprep.subr.bf16.mxu0 %v5924
        %5951 = vmatpush1.bf16.msra.mxu0 %v5923
        %5952 = vmatprep.subr.bf16.mxu0 %v5921
        %5953 = vmatpush1.bf16.msra.mxu0 %v5920
        %5954 = vmatprep.subr.bf16.mxu0 %v5918
        %5955 = vmatpush1.bf16.msra.mxu0 %v5917
        %5956 = vmatprep.subr.bf16.mxu0 %v5915
        %5957 = vmatpush1.bf16.msra.mxu0 %v5914
        %5958 = vmatprep.subr.bf16.mxu0 %v5912
        %5959 = vmatpush1.bf16.msra.mxu0 %v5911
        %5960 = vmatprep.subr.bf16.mxu0 %v5909
        %5961 = vmatpush1.bf16.msra.mxu0 %v5908
        %5962 = vmatprep.subr.bf16.mxu0 %v5906
        %5963 = vmatpush1.bf16.msra.mxu0 %v5905
        %5964 = vmatprep.subr.bf16.mxu0 %v5903
        %5965 = vmatpush1.bf16.msra.mxu0 %v5902
        %5966 = vmatprep.subr.bf16.mxu0 0
        %5967 = vmatpush2.bf16.msra.mxu0 0
        %5968 = vmatprep.subr.bf16.mxu0 0
        %5969 = vmatpush2.bf16.msra.mxu0 0
        %5970 = vmatprep.subr.bf16.mxu0 0
        %5971 = vmatpush2.bf16.msra.mxu0 0
        %5972 = vmatprep.subr.bf16.mxu0 0
        %5973 = vmatpush2.bf16.msra.mxu0 0
        %5974 = vmatprep.subr.bf16.mxu0 0
        %5975 = vmatpush2.bf16.msra.mxu0 0
        %5976 = vmatprep.subr.bf16.mxu0 0
        %5977 = vmatpush2.bf16.msra.mxu0 0
        %5978 = vmatprep.subr.bf16.mxu0 0
        %5979 = vmatpush2.bf16.msra.mxu0 0
        %5980 = vmatprep.subr.bf16.mxu0 0
        %5981 = vmatpush2.bf16.msra.mxu0 0
        %5982 = vmatprep.mubr.bf16.mxu0 0
        %5983 = vmatmul.mubr.bf16.gmra.mxu0 %v5771
        %v5984 = vpop.f32.mrf.mxu0
        %v5985 = vadd.f32 %v5810, %v5984
        %v5986 = vpop.f32.mrf.mxu0
        %v5987 = vadd.f32 %v5814, %v5986
        %v5988 = vpop.f32.mrf.mxu0
        %v5989 = vadd.f32 %v5810, %v5988
        %v5990 = vpop.f32.mrf.mxu0
        %v5991 = vadd.f32 %v5814, %v5990
        %5992 = vmatprep.mubr.bf16.mxu0 0
        %5993 = vmatmul.mubr.bf16.gmra.mxu0 %v5772
        %v5994 = vpop.f32.mrf.mxu0
        %v5995 = vadd.f32 %v5810, %v5994
        %v5996 = vpop.f32.mrf.mxu0
        %v5997 = vadd.f32 %v5814, %v5996
        %v5998 = vpop.f32.mrf.mxu0
        %v5999 = vpop.f32.mrf.mxu0
        %6000 = vdwg.mxu0
        %6001 = vmatprep.subr.bf16.mxu0 0
        %6002 = vmatpush1.bf16.msra.mxu0 %v5925
        %6003 = vmatprep.subr.bf16.mxu0 0
        %6004 = vmatpush1.bf16.msra.mxu0 %v5922
        %6005 = vmatprep.subr.bf16.mxu0 0
        %6006 = vmatpush1.bf16.msra.mxu0 %v5919
        %6007 = vmatprep.subr.bf16.mxu0 0
        %6008 = vmatpush1.bf16.msra.mxu0 %v5916
        %6009 = vmatprep.subr.bf16.mxu0 0
        %6010 = vmatpush1.bf16.msra.mxu0 %v5913
        %6011 = vmatprep.subr.bf16.mxu0 0
        %6012 = vmatpush1.bf16.msra.mxu0 %v5910
        %6013 = vmatprep.subr.bf16.mxu0 0
        %6014 = vmatpush1.bf16.msra.mxu0 %v5907
        %6015 = vmatprep.subr.bf16.mxu0 0
        %6016 = vmatpush1.bf16.msra.mxu0 %v5904
        %6017 = vmatprep.subr.bf16.mxu0 0
        %6018 = vmatpush2.bf16.msra.mxu0 0
        %6019 = vmatprep.subr.bf16.mxu0 0
        %6020 = vmatpush2.bf16.msra.mxu0 0
        %6021 = vmatprep.subr.bf16.mxu0 0
        %6022 = vmatpush2.bf16.msra.mxu0 0
        %6023 = vmatprep.subr.bf16.mxu0 0
        %6024 = vmatpush2.bf16.msra.mxu0 0
        %6025 = vmatprep.subr.bf16.mxu0 0
        %6026 = vmatpush2.bf16.msra.mxu0 0
        %6027 = vmatprep.subr.bf16.mxu0 0
        %6028 = vmatpush2.bf16.msra.mxu0 0
        %6029 = vmatprep.subr.bf16.mxu0 0
        %6030 = vmatpush2.bf16.msra.mxu0 0
        %6031 = vmatprep.subr.bf16.mxu0 0
        %6032 = vmatpush2.bf16.msra.mxu0 0
        %6033 = vmatprep.mubr.bf16.mxu0 0
        %6034 = vmatmul.mubr.bf16.gmra.mxu0 %v5771
        %v6035 = vpop.f32.mrf.mxu0
        %v6036 = vadd.f32 %v5818, %v6035
        %v6037 = vpop.f32.mrf.mxu0
        %v6038 = vpop.f32.mrf.mxu0
        %v6039 = vadd.f32 %v5818, %v6038
        %v6040 = vpop.f32.mrf.mxu0
        %6041 = vmatprep.mubr.bf16.mxu0 0
        %6042 = vmatmul.mubr.bf16.gmra.mxu0 %v5772
        %v6043 = vpop.f32.mrf.mxu0
        %v6044 = vadd.f32 %v5818, %v6043
        %v6045 = vpop.f32.mrf.mxu0
        %v6046 = vpop.f32.mrf.mxu0
        %v6047 = vpop.f32.mrf.mxu0
        %6048 = vdwg.mxu0
        %v6052 = vrot.slane %v5985, 6
        %v6053 = vrot.slane %v5989, 6
        %v6054 = vsel %vm5629, %v6052, %v6053
        %v6055 = vrot.slane %v5995, 6
        %v6056 = vsel %vm5629, %v6053, %v6055
        %6057 = vrot.lane.b32.xlu0 %v6052, 112
        %v6058 = vpop.permute.xlu0 %6057
        %6059 = vrot.lane.b32.xlu0 %v6054, 112
        %v6060 = vpop.permute.xlu0 %6059
        %6061 = vrot.lane.b32.xlu0 %v6056, 112
        %v6062 = vpop.permute.xlu0 %6061
        %v6066 = vrot.slane %v5985, 4
        %v6067 = vrot.slane %v5989, 4
        %v6068 = vsel %vm5618, %v6066, %v6067
        %v6069 = vrot.slane %v5995, 4
        %v6070 = vsel %vm5618, %v6067, %v6069
        %6071 = vrot.lane.b32.xlu0 %v6066, 96
        %v6072 = vpop.permute.xlu0 %6071
        %6073 = vrot.lane.b32.xlu0 %v6068, 96
        %v6074 = vpop.permute.xlu0 %6073
        %6075 = vrot.lane.b32.xlu0 %v6070, 96
        %v6076 = vpop.permute.xlu0 %6075
        %v6080 = vrot.slane %v5985, 2
        %v6081 = vrot.slane %v5989, 2
        %v6082 = vsel %vm5607, %v6080, %v6081
        %v6083 = vrot.slane %v5995, 2
        %v6084 = vsel %vm5607, %v6081, %v6083
        %6085 = vrot.lane.b32.xlu0 %v6080, 80
        %v6086 = vpop.permute.xlu0 %6085
        %6087 = vrot.lane.b32.xlu0 %v6082, 80
        %v6088 = vpop.permute.xlu0 %6087
        %6089 = vrot.lane.b32.xlu0 %v6084, 80
        %v6090 = vpop.permute.xlu0 %6089
        %6094 = vrot.lane.b32.xlu0 %v5985, 64
        %v6095 = vpop.permute.xlu0 %6094
        %6096 = vrot.lane.b32.xlu0 %v5989, 64
        %v6097 = vpop.permute.xlu0 %6096
        %6098 = vrot.lane.b32.xlu0 %v5995, 64
        %v6099 = vpop.permute.xlu0 %6098
        %6103 = vrot.lane.b32.xlu0 %v6052, 48
        %v6104 = vpop.permute.xlu0 %6103
        %6105 = vrot.lane.b32.xlu0 %v6054, 48
        %v6106 = vpop.permute.xlu0 %6105
        %6107 = vrot.lane.b32.xlu0 %v6056, 48
        %v6108 = vpop.permute.xlu0 %6107
        %6112 = vrot.lane.b32.xlu0 %v6066, 32
        %v6113 = vpop.permute.xlu0 %6112
        %6114 = vrot.lane.b32.xlu0 %v6068, 32
        %v6115 = vpop.permute.xlu0 %6114
        %6116 = vrot.lane.b32.xlu0 %v6070, 32
        %v6117 = vpop.permute.xlu0 %6116
        %6121 = vrot.lane.b32.xlu0 %v6080, 16
        %v6122 = vpop.permute.xlu0 %6121
        %6123 = vrot.lane.b32.xlu0 %v6082, 16
        %v6124 = vpop.permute.xlu0 %6123
        %6125 = vrot.lane.b32.xlu0 %v6084, 16
        %v6126 = vpop.permute.xlu0 %6125
        %v6130 = vsel %vm5629, %v5995, %v6058
        %v6131 = vsel %vm5618, %v6062, %v6072
        %v6132 = vsel %vm5607, %v6076, %v6086
        %v6133 = vsel %vm5629, %v6099, %v6104
        %v6134 = vsel %vm5618, %v6108, %v6113
        %v6135 = vsel %vm5607, %v6117, %v6122
        %v6136 = vmul.f32 %v5985, 0.25
        %v6137 = vmul.f32 %v5989, 0.25
        %v6138 = vmul.f32 %v6130, 0.25
        %v6139 = vmul.f32 %v6060, 0.25
        %v6140 = vmul.f32 %v6131, 0.25
        %v6141 = vmul.f32 %v6074, 0.25
        %v6142 = vmul.f32 %v6132, 0.25
        %v6143 = vmul.f32 %v6088, 0.25
        %v6144 = vmul.f32 %v6090, 0.25
        %v6145 = vmul.f32 %v6095, 0.25
        %v6146 = vmul.f32 %v6097, 0.25
        %v6147 = vmul.f32 %v6133, 0.25
        %v6148 = vmul.f32 %v6106, 0.25
        %v6149 = vmul.f32 %v6134, 0.25
        %v6150 = vmul.f32 %v6115, 0.25
        %v6151 = vmul.f32 %v6135, 0.25
        %v6152 = vmul.f32 %v6124, 0.25
        %v6153 = vmul.f32 %v6126, 0.25
        %v6157 = vrot.slane %v5987, 6
        %v6158 = vrot.slane %v5991, 6
        %v6159 = vsel %vm5629, %v6157, %v6158
        %v6160 = vrot.slane %v5997, 6
        %v6161 = vsel %vm5629, %v6158, %v6160
        %6162 = vrot.lane.b32.xlu0 %v6157, 112
        %v6163 = vpop.permute.xlu0 %6162
        %6164 = vrot.lane.b32.xlu0 %v6159, 112
        %v6165 = vpop.permute.xlu0 %6164
        %6166 = vrot.lane.b32.xlu0 %v6161, 112
        %v6167 = vpop.permute.xlu0 %6166
        %v6171 = vrot.slane %v5987, 4
        %v6172 = vrot.slane %v5991, 4
        %v6173 = vsel %vm5618, %v6171, %v6172
        %v6174 = vrot.slane %v5997, 4
        %v6175 = vsel %vm5618, %v6172, %v6174
        %6176 = vrot.lane.b32.xlu0 %v6171, 96
        %v6177 = vpop.permute.xlu0 %6176
        %6178 = vrot.lane.b32.xlu0 %v6173, 96
        %v6179 = vpop.permute.xlu0 %6178
        %6180 = vrot.lane.b32.xlu0 %v6175, 96
        %v6181 = vpop.permute.xlu0 %6180
        %v6185 = vrot.slane %v5987, 2
        %v6186 = vrot.slane %v5991, 2
        %v6187 = vsel %vm5607, %v6185, %v6186
        %v6188 = vrot.slane %v5997, 2
        %v6189 = vsel %vm5607, %v6186, %v6188
        %6190 = vrot.lane.b32.xlu0 %v6185, 80
        %v6191 = vpop.permute.xlu0 %6190
        %6192 = vrot.lane.b32.xlu0 %v6187, 80
        %v6193 = vpop.permute.xlu0 %6192
        %6194 = vrot.lane.b32.xlu0 %v6189, 80
        %v6195 = vpop.permute.xlu0 %6194
        %6199 = vrot.lane.b32.xlu0 %v5987, 64
        %v6200 = vpop.permute.xlu0 %6199
        %6201 = vrot.lane.b32.xlu0 %v5991, 64
        %v6202 = vpop.permute.xlu0 %6201
        %6203 = vrot.lane.b32.xlu0 %v5997, 64
        %v6204 = vpop.permute.xlu0 %6203
        %6208 = vrot.lane.b32.xlu0 %v6157, 48
        %v6209 = vpop.permute.xlu0 %6208
        %6210 = vrot.lane.b32.xlu0 %v6159, 48
        %v6211 = vpop.permute.xlu0 %6210
        %6212 = vrot.lane.b32.xlu0 %v6161, 48
        %v6213 = vpop.permute.xlu0 %6212
        %6217 = vrot.lane.b32.xlu0 %v6171, 32
        %v6218 = vpop.permute.xlu0 %6217
        %6219 = vrot.lane.b32.xlu0 %v6173, 32
        %v6220 = vpop.permute.xlu0 %6219
        %6221 = vrot.lane.b32.xlu0 %v6175, 32
        %v6222 = vpop.permute.xlu0 %6221
        %6226 = vrot.lane.b32.xlu0 %v6185, 16
        %v6227 = vpop.permute.xlu0 %6226
        %6228 = vrot.lane.b32.xlu0 %v6187, 16
        %v6229 = vpop.permute.xlu0 %6228
        %6230 = vrot.lane.b32.xlu0 %v6189, 16
        %v6231 = vpop.permute.xlu0 %6230
        %v6235 = vsel %vm5629, %v5997, %v6163
        %v6236 = vsel %vm5618, %v6167, %v6177
        %v6237 = vsel %vm5607, %v6181, %v6191
        %v6238 = vsel %vm5629, %v6204, %v6209
        %v6239 = vsel %vm5618, %v6213, %v6218
        %v6240 = vsel %vm5607, %v6222, %v6227
        %v6244 = vrot.slane %v6036, 6
        %v6245 = vrot.slane %v6039, 6
        %v6246 = vsel %vm5629, %v6244, %v6245
        %v6247 = vrot.slane %v6044, 6
        %v6248 = vsel %vm5629, %v6245, %v6247
        %6249 = vrot.lane.b32.xlu0 %v6244, 112
        %v6250 = vpop.permute.xlu0 %6249
        %6251 = vrot.lane.b32.xlu0 %v6246, 112
        %v6252 = vpop.permute.xlu0 %6251
        %6253 = vrot.lane.b32.xlu0 %v6248, 112
        %v6254 = vpop.permute.xlu0 %6253
        %v6258 = vrot.slane %v6036, 4
        %v6259 = vrot.slane %v6039, 4
        %v6260 = vsel %vm5618, %v6258, %v6259
        %v6261 = vrot.slane %v6044, 4
        %v6262 = vsel %vm5618, %v6259, %v6261
        %6263 = vrot.lane.b32.xlu0 %v6258, 96
        %v6264 = vpop.permute.xlu0 %6263
        %6265 = vrot.lane.b32.xlu0 %v6260, 96
        %v6266 = vpop.permute.xlu0 %6265
        %6267 = vrot.lane.b32.xlu0 %v6262, 96
        %v6268 = vpop.permute.xlu0 %6267
        %v6272 = vrot.slane %v6036, 2
        %v6273 = vrot.slane %v6039, 2
        %v6274 = vsel %vm5607, %v6272, %v6273
        %v6275 = vrot.slane %v6044, 2
        %v6276 = vsel %vm5607, %v6273, %v6275
        %6277 = vrot.lane.b32.xlu0 %v6272, 80
        %v6278 = vpop.permute.xlu0 %6277
        %6279 = vrot.lane.b32.xlu0 %v6274, 80
        %v6280 = vpop.permute.xlu0 %6279
        %6281 = vrot.lane.b32.xlu0 %v6276, 80
        %v6282 = vpop.permute.xlu0 %6281
        %6286 = vrot.lane.b32.xlu0 %v6036, 64
        %v6287 = vpop.permute.xlu0 %6286
        %6288 = vrot.lane.b32.xlu0 %v6039, 64
        %v6289 = vpop.permute.xlu0 %6288
        %6290 = vrot.lane.b32.xlu0 %v6044, 64
        %v6291 = vpop.permute.xlu0 %6290
        %6295 = vrot.lane.b32.xlu0 %v6244, 48
        %v6296 = vpop.permute.xlu0 %6295
        %6297 = vrot.lane.b32.xlu0 %v6246, 48
        %v6298 = vpop.permute.xlu0 %6297
        %6299 = vrot.lane.b32.xlu0 %v6248, 48
        %v6300 = vpop.permute.xlu0 %6299
        %6304 = vrot.lane.b32.xlu0 %v6258, 32
        %v6305 = vpop.permute.xlu0 %6304
        %6306 = vrot.lane.b32.xlu0 %v6260, 32
        %v6307 = vpop.permute.xlu0 %6306
        %6308 = vrot.lane.b32.xlu0 %v6262, 32
        %v6309 = vpop.permute.xlu0 %6308
        %6313 = vrot.lane.b32.xlu0 %v6272, 16
        %v6314 = vpop.permute.xlu0 %6313
        %6315 = vrot.lane.b32.xlu0 %v6274, 16
        %v6316 = vpop.permute.xlu0 %6315
        %6317 = vrot.lane.b32.xlu0 %v6276, 16
        %v6318 = vpop.permute.xlu0 %6317
        %v6322 = vsel %vm5629, %v6044, %v6250
        %v6323 = vsel %vm5618, %v6254, %v6264
        %v6324 = vsel %vm5607, %v6268, %v6278
        %v6325 = vsel %vm5629, %v6291, %v6296
        %v6326 = vsel %vm5618, %v6300, %v6305
        %v6327 = vsel %vm5607, %v6309, %v6314
        %v6328 = vpack.c.bf16 %v6137, %v6136
        %v6329 = vpack.c.bf16 %v6139, %v6138
        %v6330 = vpack.c.bf16 %v6141, %v6140
        %v6331 = vpack.c.bf16 %v6143, %v6142
        %v6332 = vpack.c.bf16 %v6145, %v6144
        %v6333 = vpack.c.bf16 %v6147, %v6146
        %v6334 = vpack.c.bf16 %v6149, %v6148
        %v6335 = vpack.c.bf16 %v6151, %v6150
        %v6336 = vpack.c.bf16 %v6153, %v6152
        %v6337 = vpack.c.bf16 %v5991, %v5987
        %v6338 = vpack.c.bf16 %v6165, %v6235
        %v6339 = vpack.c.bf16 %v6179, %v6236
        %v6340 = vpack.c.bf16 %v6193, %v6237
        %v6341 = vpack.c.bf16 %v6200, %v6195
        %v6342 = vpack.c.bf16 %v6238, %v6202
        %v6343 = vpack.c.bf16 %v6239, %v6211
        %v6344 = vpack.c.bf16 %v6240, %v6220
        %v6345 = vpack.c.bf16 %v6231, %v6229
        %v6346 = vld [vmem:[%s19] sm:$0xff]
        %v6347 = vld [vmem:[%s19 + $0x8] sm:$0xff]
        %v6348 = vld [vmem:[%s19 + $0x10] sm:$0xff]
        %v6349 = vld [vmem:[%s19 + $0x18] sm:$0xff]
        %v6350 = vld [vmem:[%s19 + $0x20] sm:$0xff]
        %v6351 = vld [vmem:[%s19 + $0x28] sm:$0xff]
        %v6352 = vld [vmem:[%s19 + $0x30] sm:$0xff]
        %v6353 = vld [vmem:[%s19 + $0x38] sm:$0xff]
        %v6354 = vld [vmem:[%s19 + $0x40] sm:$0xff]
        %v6355 = vld [vmem:[%s19 + $0x48] sm:$0xff]
        %v6356 = vld [vmem:[%s19 + $0x50] sm:$0xff]
        %v6357 = vld [vmem:[%s19 + $0x58] sm:$0xff]
        %v6358 = vld [vmem:[%s19 + $0x60] sm:$0xff]
        %v6359 = vld [vmem:[%s19 + $0x68] sm:$0xff]
        %v6360 = vld [vmem:[%s19 + $0x70] sm:$0xff]
        %v6361 = vld [vmem:[%s19 + $0x78] sm:$0xff]
        %v6362 = vld [vmem:[%s19 + $0x80] sm:$0xff]
        %v6363 = vld [vmem:[%s19 + $0x88] sm:$0xff]
        %v6364 = vld [vmem:[%s19 + $0x90] sm:$0xff]
        %v6365 = vld [vmem:[%s19 + $0x98] sm:$0xff]
        %v6366 = vld [vmem:[%s19 + $0xa0] sm:$0xff]
        %v6367 = vld [vmem:[%s19 + $0xa8] sm:$0xff]
        %v6368 = vld [vmem:[%s19 + $0xb0] sm:$0xff]
        %v6369 = vld [vmem:[%s19 + $0xb8] sm:$0xff]
        %v6370 = vld [vmem:[%s19 + $0xc0] sm:$0xff]
        %v6371 = vld [vmem:[%s19 + $0xc8] sm:$0xff]
        %v6372 = vld [vmem:[%s19 + $0xd0] sm:$0xff]
        %v6373 = vld [vmem:[%s19 + $0xd8] sm:$0xff]
        %v6374 = vld [vmem:[%s19 + $0xe0] sm:$0xff]
        %v6375 = vld [vmem:[%s19 + $0xe8] sm:$0xff]
        %v6376 = vld [vmem:[%s19 + $0xf0] sm:$0xff]
        %v6377 = vld [vmem:[%s19 + $0xf8] sm:$0xff]
        %v6378 = vld [vmem:[%s19 + $0x100] sm:$0xff]
        %v6379 = vld [vmem:[%s19 + $0x108] sm:$0xff]
        %v6380 = vld [vmem:[%s19 + $0x110] sm:$0xff]
        %v6381 = vld [vmem:[%s19 + $0x118] sm:$0xff]
        %vm6382 = vcmask 130048
        %v6384 = vsel %vm6382, %v6328, 0
        %v6387 = vsel %vm6382, %v6329, 0
        %v6390 = vsel %vm6382, %v6330, 0
        %v6393 = vsel %vm6382, %v6331, 0
        %v6396 = vsel %vm6382, %v6332, 0
        %v6399 = vsel %vm6382, %v6333, 0
        %v6402 = vsel %vm6382, %v6334, 0
        %v6405 = vsel %vm6382, %v6335, 0
        %v6408 = vsel %vm6382, %v6336, 0
        %v6411 = vsel %vm6382, %v6337, 0
        %v6414 = vsel %vm6382, %v6338, 0
        %v6417 = vsel %vm6382, %v6339, 0
        %v6420 = vsel %vm6382, %v6340, 0
        %v6423 = vsel %vm6382, %v6341, 0
        %v6426 = vsel %vm6382, %v6342, 0
        %v6429 = vsel %vm6382, %v6343, 0
        %v6432 = vsel %vm6382, %v6344, 0
        %v6435 = vsel %vm6382, %v6345, 0
        %6437 = vmatprep.subr.bf16.mxu0 0
        %6438 = vmatpush1.bf16.xpose.msra.mxu0 %v6432
        %6439 = vmatprep.subr.bf16.mxu0 0
        %6440 = vmatpush1.bf16.xpose.msra.mxu0 %v6429
        %6441 = vmatprep.subr.bf16.mxu0 0
        %6442 = vmatpush1.bf16.xpose.msra.mxu0 %v6426
        %6443 = vmatprep.subr.bf16.mxu0 0
        %6444 = vmatpush1.bf16.xpose.msra.mxu0 %v6423
        %6445 = vmatprep.subr.bf16.mxu0 0
        %6446 = vmatpush1.bf16.xpose.msra.mxu0 %v6420
        %6447 = vmatprep.subr.bf16.mxu0 0
        %6448 = vmatpush1.bf16.xpose.msra.mxu0 %v6417
        %6449 = vmatprep.subr.bf16.mxu0 0
        %6450 = vmatpush1.bf16.xpose.msra.mxu0 %v6414
        %6451 = vmatprep.subr.bf16.mxu0 0
        %6452 = vmatpush1.bf16.xpose.msra.mxu0 %v6411
        %6453 = vmatprep.subr.bf16.mxu0 0
        %6454 = vmatpush2.bf16.xpose.msra.mxu0 0
        %6455 = vmatprep.subr.bf16.mxu0 0
        %6456 = vmatpush2.bf16.xpose.msra.mxu0 0
        %6457 = vmatprep.subr.bf16.mxu0 0
        %6458 = vmatpush2.bf16.xpose.msra.mxu0 0
        %6459 = vmatprep.subr.bf16.mxu0 0
        %6460 = vmatpush2.bf16.xpose.msra.mxu0 0
        %6461 = vmatprep.subr.bf16.mxu0 0
        %6462 = vmatpush2.bf16.xpose.msra.mxu0 0
        %6463 = vmatprep.subr.bf16.mxu0 0
        %6464 = vmatpush2.bf16.xpose.msra.mxu0 0
        %6465 = vmatprep.subr.bf16.mxu0 0
        %6466 = vmatpush2.bf16.xpose.msra.mxu0 0
        %6467 = vmatprep.subr.bf16.mxu0 0
        %6468 = vmatpush2.bf16.xpose.msra.mxu0 %v6435
        %6469 = vmatprep.mubr.bf16.mxu0 0
        %6470 = vmatmul.mubr.bf16.gmra.mxu0 %v6384
        %v6471 = vpop.f32.mrf.mxu0
        %v6472 = vadd.f32 %v6346, %v6471
        %v6473 = vpop.f32.mrf.mxu0
        %v6474 = vadd.f32 %v6347, %v6473
        %v6475 = vpop.f32.mrf.mxu0
        %v6476 = vadd.f32 %v6348, %v6475
        %v6477 = vpop.f32.mrf.mxu0
        %v6478 = vadd.f32 %v6349, %v6477
        %6479 = vmatprep.mubr.bf16.mxu0 0
        %6480 = vmatmul.mubr.bf16.gmra.mxu0 %v6387
        %v6481 = vpop.f32.mrf.mxu0
        %v6482 = vadd.f32 %v6350, %v6481
        %v6483 = vpop.f32.mrf.mxu0
        %v6484 = vadd.f32 %v6351, %v6483
        %v6485 = vpop.f32.mrf.mxu0
        %v6486 = vadd.f32 %v6352, %v6485
        %v6487 = vpop.f32.mrf.mxu0
        %v6488 = vadd.f32 %v6353, %v6487
        %6489 = vmatprep.mubr.bf16.mxu0 0
        %6490 = vmatmul.mubr.bf16.gmra.mxu0 %v6390
        %v6491 = vpop.f32.mrf.mxu0
        %v6492 = vadd.f32 %v6354, %v6491
        %v6493 = vpop.f32.mrf.mxu0
        %v6494 = vadd.f32 %v6355, %v6493
        %v6495 = vpop.f32.mrf.mxu0
        %v6496 = vadd.f32 %v6356, %v6495
        %v6497 = vpop.f32.mrf.mxu0
        %v6498 = vadd.f32 %v6357, %v6497
        %6499 = vmatprep.mubr.bf16.mxu0 0
        %6500 = vmatmul.mubr.bf16.gmra.mxu0 %v6393
        %v6501 = vpop.f32.mrf.mxu0
        %v6502 = vadd.f32 %v6358, %v6501
        %v6503 = vpop.f32.mrf.mxu0
        %v6504 = vadd.f32 %v6359, %v6503
        %v6505 = vpop.f32.mrf.mxu0
        %v6506 = vadd.f32 %v6360, %v6505
        %v6507 = vpop.f32.mrf.mxu0
        %v6508 = vadd.f32 %v6361, %v6507
        %6509 = vmatprep.mubr.bf16.mxu0 0
        %6510 = vmatmul.mubr.bf16.gmra.mxu0 %v6396
        %v6511 = vpop.f32.mrf.mxu0
        %v6512 = vadd.f32 %v6362, %v6511
        %v6513 = vpop.f32.mrf.mxu0
        %v6514 = vadd.f32 %v6363, %v6513
        %v6515 = vpop.f32.mrf.mxu0
        %v6516 = vadd.f32 %v6364, %v6515
        %v6517 = vpop.f32.mrf.mxu0
        %v6518 = vadd.f32 %v6365, %v6517
        %6519 = vmatprep.mubr.bf16.mxu0 0
        %6520 = vmatmul.mubr.bf16.gmra.mxu0 %v6399
        %v6521 = vpop.f32.mrf.mxu0
        %v6522 = vadd.f32 %v6366, %v6521
        %v6523 = vpop.f32.mrf.mxu0
        %v6524 = vadd.f32 %v6367, %v6523
        %v6525 = vpop.f32.mrf.mxu0
        %v6526 = vadd.f32 %v6368, %v6525
        %v6527 = vpop.f32.mrf.mxu0
        %v6528 = vadd.f32 %v6369, %v6527
        %6529 = vmatprep.mubr.bf16.mxu0 0
        %6530 = vmatmul.mubr.bf16.gmra.mxu0 %v6402
        %v6531 = vpop.f32.mrf.mxu0
        %v6532 = vadd.f32 %v6370, %v6531
        %v6533 = vpop.f32.mrf.mxu0
        %v6534 = vadd.f32 %v6371, %v6533
        %v6535 = vpop.f32.mrf.mxu0
        %v6536 = vadd.f32 %v6372, %v6535
        %v6537 = vpop.f32.mrf.mxu0
        %v6538 = vadd.f32 %v6373, %v6537
        %6539 = vmatprep.mubr.bf16.mxu0 0
        %6540 = vmatmul.mubr.bf16.gmra.mxu0 %v6405
        %v6541 = vpop.f32.mrf.mxu0
        %v6542 = vadd.f32 %v6374, %v6541
        %v6543 = vpop.f32.mrf.mxu0
        %v6544 = vadd.f32 %v6375, %v6543
        %v6545 = vpop.f32.mrf.mxu0
        %v6546 = vadd.f32 %v6376, %v6545
        %v6547 = vpop.f32.mrf.mxu0
        %v6548 = vadd.f32 %v6377, %v6547
        %6549 = vmatprep.mubr.bf16.mxu0 0
        %6550 = vmatmul.mubr.bf16.gmra.mxu0 %v6408
        %v6551 = vpop.f32.mrf.mxu0
        %v6552 = vadd.f32 %v6378, %v6551
        %v6553 = vpop.f32.mrf.mxu0
        %v6554 = vadd.f32 %v6379, %v6553
        %v6555 = vpop.f32.mrf.mxu0
        %v6556 = vadd.f32 %v6380, %v6555
        %v6557 = vpop.f32.mrf.mxu0
        %v6558 = vadd.f32 %v6381, %v6557
        %6559 = vdwg.mxu0
        %v6560 = vsel %vm6382, %v6474, -inf
        %v6561 = vmax.f32 %v6472, %v6560
        %6562 = vmax.xlane.f32.xlu0 %v6561
        %v6563 = vpop.xlane.xlu0 %6562
        %v6564 = vsel %vm6382, %v6478, -inf
        %v6565 = vmax.f32 %v6476, %v6564
        %6566 = vmax.xlane.f32.xlu0 %v6565
        %v6567 = vpop.xlane.xlu0 %6566
        %v6568 = vsel %vm6382, %v6484, -inf
        %v6569 = vmax.f32 %v6482, %v6568
        %6570 = vmax.xlane.f32.xlu0 %v6569
        %v6571 = vpop.xlane.xlu0 %6570
        %v6572 = vsel %vm6382, %v6488, -inf
        %v6573 = vmax.f32 %v6486, %v6572
        %6574 = vmax.xlane.f32.xlu0 %v6573
        %v6575 = vpop.xlane.xlu0 %6574
        %v6576 = vsel %vm6382, %v6494, -inf
        %v6577 = vmax.f32 %v6492, %v6576
        %6578 = vmax.xlane.f32.xlu0 %v6577
        %v6579 = vpop.xlane.xlu0 %6578
        %v6580 = vsel %vm6382, %v6498, -inf
        %v6581 = vmax.f32 %v6496, %v6580
        %6582 = vmax.xlane.f32.xlu0 %v6581
        %v6583 = vpop.xlane.xlu0 %6582
        %v6584 = vsel %vm6382, %v6504, -inf
        %v6585 = vmax.f32 %v6502, %v6584
        %6586 = vmax.xlane.f32.xlu0 %v6585
        %v6587 = vpop.xlane.xlu0 %6586
        %v6588 = vsel %vm6382, %v6508, -inf
        %v6589 = vmax.f32 %v6506, %v6588
        %6590 = vmax.xlane.f32.xlu0 %v6589
        %v6591 = vpop.xlane.xlu0 %6590
        %v6592 = vsel %vm6382, %v6514, -inf
        %v6593 = vmax.f32 %v6512, %v6592
        %6594 = vmax.xlane.f32.xlu0 %v6593
        %v6595 = vpop.xlane.xlu0 %6594
        %v6596 = vsel %vm6382, %v6518, -inf
        %v6597 = vmax.f32 %v6516, %v6596
        %6598 = vmax.xlane.f32.xlu0 %v6597
        %v6599 = vpop.xlane.xlu0 %6598
        %v6600 = vsel %vm6382, %v6524, -inf
        %v6601 = vmax.f32 %v6522, %v6600
        %6602 = vmax.xlane.f32.xlu0 %v6601
        %v6603 = vpop.xlane.xlu0 %6602
        %v6604 = vsel %vm6382, %v6528, -inf
        %v6605 = vmax.f32 %v6526, %v6604
        %6606 = vmax.xlane.f32.xlu0 %v6605
        %v6607 = vpop.xlane.xlu0 %6606
        %v6608 = vsel %vm6382, %v6534, -inf
        %v6609 = vmax.f32 %v6532, %v6608
        %6610 = vmax.xlane.f32.xlu0 %v6609
        %v6611 = vpop.xlane.xlu0 %6610
        %v6612 = vsel %vm6382, %v6538, -inf
        %v6613 = vmax.f32 %v6536, %v6612
        %6614 = vmax.xlane.f32.xlu0 %v6613
        %v6615 = vpop.xlane.xlu0 %6614
        %v6616 = vsel %vm6382, %v6544, -inf
        %v6617 = vmax.f32 %v6542, %v6616
        %6618 = vmax.xlane.f32.xlu0 %v6617
        %v6619 = vpop.xlane.xlu0 %6618
        %v6620 = vsel %vm6382, %v6548, -inf
        %v6621 = vmax.f32 %v6546, %v6620
        %6622 = vmax.xlane.f32.xlu0 %v6621
        %v6623 = vpop.xlane.xlu0 %6622
        %v6624 = vsel %vm6382, %v6554, -inf
        %v6625 = vmax.f32 %v6552, %v6624
        %6626 = vmax.xlane.f32.xlu0 %v6625
        %v6627 = vpop.xlane.xlu0 %6626
        %v6628 = vsel %vm6382, %v6558, -inf
        %v6629 = vmax.f32 %v6556, %v6628
        %6630 = vmax.xlane.f32.xlu0 %v6629
        %v6631 = vpop.xlane.xlu0 %6630
        %v6632 = vsub.f32 %v6472, %v6563
        %v6633 = vsub.f32 %v6474, %v6563
        %v6634 = vsub.f32 %v6476, %v6567
        %v6635 = vsub.f32 %v6478, %v6567
        %v6636 = vsub.f32 %v6482, %v6571
        %v6637 = vsub.f32 %v6484, %v6571
        %v6638 = vsub.f32 %v6486, %v6575
        %v6639 = vsub.f32 %v6488, %v6575
        %v6640 = vsub.f32 %v6492, %v6579
        %v6641 = vsub.f32 %v6494, %v6579
        %v6642 = vsub.f32 %v6496, %v6583
        %v6643 = vsub.f32 %v6498, %v6583
        %v6644 = vsub.f32 %v6502, %v6587
        %v6645 = vsub.f32 %v6504, %v6587
        %v6646 = vsub.f32 %v6506, %v6591
        %v6647 = vsub.f32 %v6508, %v6591
        %v6648 = vsub.f32 %v6512, %v6595
        %v6649 = vsub.f32 %v6514, %v6595
        %v6650 = vsub.f32 %v6516, %v6599
        %v6651 = vsub.f32 %v6518, %v6599
        %v6652 = vsub.f32 %v6522, %v6603
        %v6653 = vsub.f32 %v6524, %v6603
        %v6654 = vsub.f32 %v6526, %v6607
        %v6655 = vsub.f32 %v6528, %v6607
        %v6656 = vsub.f32 %v6532, %v6611
        %v6657 = vsub.f32 %v6534, %v6611
        %v6658 = vsub.f32 %v6536, %v6615
        %v6659 = vsub.f32 %v6538, %v6615
        %v6660 = vsub.f32 %v6542, %v6619
        %v6661 = vsub.f32 %v6544, %v6619
        %v6662 = vsub.f32 %v6546, %v6623
        %v6663 = vsub.f32 %v6548, %v6623
        %v6664 = vsub.f32 %v6552, %v6627
        %v6665 = vsub.f32 %v6554, %v6627
        %v6666 = vsub.f32 %v6556, %v6631
        %v6667 = vsub.f32 %v6558, %v6631
        %v6668 = vmul.f32 %v6632, 1.442695
        %v6669 = vpow.pop %v6668
        %v6670 = vmul.f32 %v6633, 1.442695
        %v6671 = vpow.pop %v6670
        %v6672 = vmul.f32 %v6634, 1.442695
        %v6673 = vpow.pop %v6672
        %v6674 = vmul.f32 %v6635, 1.442695
        %v6675 = vpow.pop %v6674
        %v6676 = vmul.f32 %v6636, 1.442695
        %v6677 = vpow.pop %v6676
        %v6678 = vmul.f32 %v6637, 1.442695
        %v6679 = vpow.pop %v6678
        %v6680 = vmul.f32 %v6638, 1.442695
        %v6681 = vpow.pop %v6680
        %v6682 = vmul.f32 %v6639, 1.442695
        %v6683 = vpow.pop %v6682
        %v6684 = vmul.f32 %v6640, 1.442695
        %v6685 = vpow.pop %v6684
        %v6686 = vmul.f32 %v6641, 1.442695
        %v6687 = vpow.pop %v6686
        %v6688 = vmul.f32 %v6642, 1.442695
        %v6689 = vpow.pop %v6688
        %v6690 = vmul.f32 %v6643, 1.442695
        %v6691 = vpow.pop %v6690
        %v6692 = vmul.f32 %v6644, 1.442695
        %v6693 = vpow.pop %v6692
        %v6694 = vmul.f32 %v6645, 1.442695
        %v6695 = vpow.pop %v6694
        %v6696 = vmul.f32 %v6646, 1.442695
        %v6697 = vpow.pop %v6696
        %v6698 = vmul.f32 %v6647, 1.442695
        %v6699 = vpow.pop %v6698
        %v6700 = vmul.f32 %v6648, 1.442695
        %v6701 = vpow.pop %v6700
        %v6702 = vmul.f32 %v6649, 1.442695
        %v6703 = vpow.pop %v6702
        %v6704 = vmul.f32 %v6650, 1.442695
        %v6705 = vpow.pop %v6704
        %v6706 = vmul.f32 %v6651, 1.442695
        %v6707 = vpow.pop %v6706
        %v6708 = vmul.f32 %v6652, 1.442695
        %v6709 = vpow.pop %v6708
        %v6710 = vmul.f32 %v6653, 1.442695
        %v6711 = vpow.pop %v6710
        %v6712 = vmul.f32 %v6654, 1.442695
        %v6713 = vpow.pop %v6712
        %v6714 = vmul.f32 %v6655, 1.442695
        %v6715 = vpow.pop %v6714
        %v6716 = vmul.f32 %v6656, 1.442695
        %v6717 = vpow.pop %v6716
        %v6718 = vmul.f32 %v6657, 1.442695
        %v6719 = vpow.pop %v6718
        %v6720 = vmul.f32 %v6658, 1.442695
        %v6721 = vpow.pop %v6720
        %v6722 = vmul.f32 %v6659, 1.442695
        %v6723 = vpow.pop %v6722
        %v6724 = vmul.f32 %v6660, 1.442695
        %v6725 = vpow.pop %v6724
        %v6726 = vmul.f32 %v6661, 1.442695
        %v6727 = vpow.pop %v6726
        %v6728 = vmul.f32 %v6662, 1.442695
        %v6729 = vpow.pop %v6728
        %v6730 = vmul.f32 %v6663, 1.442695
        %v6731 = vpow.pop %v6730
        %v6732 = vmul.f32 %v6664, 1.442695
        %v6733 = vpow.pop %v6732
        %v6734 = vmul.f32 %v6665, 1.442695
        %v6735 = vpow.pop %v6734
        %v6736 = vmul.f32 %v6666, 1.442695
        %v6737 = vpow.pop %v6736
        %v6738 = vmul.f32 %v6667, 1.442695
        %v6739 = vpow.pop %v6738
        %v6740 = vsel %vm6382, %v6671, 0.0
        %v6741 = vadd.f32 %v6669, %v6740
        %6742 = vadd.xlane.f32.xlu0 %v6741
        %v6743 = vpop.xlane.xlu0 %6742
        %v6744 = vsel %vm6382, %v6675, 0.0
        %v6745 = vadd.f32 %v6673, %v6744
        %6746 = vadd.xlane.f32.xlu0 %v6745
        %v6747 = vpop.xlane.xlu0 %6746
        %v6748 = vsel %vm6382, %v6679, 0.0
        %v6749 = vadd.f32 %v6677, %v6748
        %6750 = vadd.xlane.f32.xlu0 %v6749
        %v6751 = vpop.xlane.xlu0 %6750
        %v6752 = vsel %vm6382, %v6683, 0.0
        %v6753 = vadd.f32 %v6681, %v6752
        %6754 = vadd.xlane.f32.xlu0 %v6753
        %v6755 = vpop.xlane.xlu0 %6754
        %v6756 = vsel %vm6382, %v6687, 0.0
        %v6757 = vadd.f32 %v6685, %v6756
        %6758 = vadd.xlane.f32.xlu0 %v6757
        %v6759 = vpop.xlane.xlu0 %6758
        %v6760 = vsel %vm6382, %v6691, 0.0
        %v6761 = vadd.f32 %v6689, %v6760
        %6762 = vadd.xlane.f32.xlu0 %v6761
        %v6763 = vpop.xlane.xlu0 %6762
        %v6764 = vsel %vm6382, %v6695, 0.0
        %v6765 = vadd.f32 %v6693, %v6764
        %6766 = vadd.xlane.f32.xlu0 %v6765
        %v6767 = vpop.xlane.xlu0 %6766
        %v6768 = vsel %vm6382, %v6699, 0.0
        %v6769 = vadd.f32 %v6697, %v6768
        %6770 = vadd.xlane.f32.xlu0 %v6769
        %v6771 = vpop.xlane.xlu0 %6770
        %v6772 = vsel %vm6382, %v6703, 0.0
        %v6773 = vadd.f32 %v6701, %v6772
        %6774 = vadd.xlane.f32.xlu0 %v6773
        %v6775 = vpop.xlane.xlu0 %6774
        %v6776 = vsel %vm6382, %v6707, 0.0
        %v6777 = vadd.f32 %v6705, %v6776
        %6778 = vadd.xlane.f32.xlu0 %v6777
        %v6779 = vpop.xlane.xlu0 %6778
        %v6780 = vsel %vm6382, %v6711, 0.0
        %v6781 = vadd.f32 %v6709, %v6780
        %6782 = vadd.xlane.f32.xlu0 %v6781
        %v6783 = vpop.xlane.xlu0 %6782
        %v6784 = vsel %vm6382, %v6715, 0.0
        %v6785 = vadd.f32 %v6713, %v6784
        %6786 = vadd.xlane.f32.xlu0 %v6785
        %v6787 = vpop.xlane.xlu0 %6786
        %v6788 = vsel %vm6382, %v6719, 0.0
        %v6789 = vadd.f32 %v6717, %v6788
        %6790 = vadd.xlane.f32.xlu0 %v6789
        %v6791 = vpop.xlane.xlu0 %6790
        %v6792 = vsel %vm6382, %v6723, 0.0
        %v6793 = vadd.f32 %v6721, %v6792
        %6794 = vadd.xlane.f32.xlu0 %v6793
        %v6795 = vpop.xlane.xlu0 %6794
        %v6796 = vsel %vm6382, %v6727, 0.0
        %v6797 = vadd.f32 %v6725, %v6796
        %6798 = vadd.xlane.f32.xlu0 %v6797
        %v6799 = vpop.xlane.xlu0 %6798
        %v6800 = vsel %vm6382, %v6731, 0.0
        %v6801 = vadd.f32 %v6729, %v6800
        %6802 = vadd.xlane.f32.xlu0 %v6801
        %v6803 = vpop.xlane.xlu0 %6802
        %v6804 = vsel %vm6382, %v6735, 0.0
        %v6805 = vadd.f32 %v6733, %v6804
        %6806 = vadd.xlane.f32.xlu0 %v6805
        %v6807 = vpop.xlane.xlu0 %6806
        %v6808 = vsel %vm6382, %v6739, 0.0
        %v6809 = vadd.f32 %v6737, %v6808
        %6810 = vadd.xlane.f32.xlu0 %v6809
        %v6811 = vpop.xlane.xlu0 %6810
        %v6812 = vrcp.pop %v6743
        %v6813 = vmul.f32 %v6669, %v6812
        %v6814 = vmul.f32 %v6671, %v6812
        %v6815 = vrcp.pop %v6747
        %v6816 = vmul.f32 %v6673, %v6815
        %v6817 = vmul.f32 %v6675, %v6815
        %v6818 = vrcp.pop %v6751
        %v6819 = vmul.f32 %v6677, %v6818
        %v6820 = vmul.f32 %v6679, %v6818
        %v6821 = vrcp.pop %v6755
        %v6822 = vmul.f32 %v6681, %v6821
        %v6823 = vmul.f32 %v6683, %v6821
        %v6824 = vrcp.pop %v6759
        %v6825 = vmul.f32 %v6685, %v6824
        %v6826 = vmul.f32 %v6687, %v6824
        %v6827 = vrcp.pop %v6763
        %v6828 = vmul.f32 %v6689, %v6827
        %v6829 = vmul.f32 %v6691, %v6827
        %v6830 = vrcp.pop %v6767
        %v6831 = vmul.f32 %v6693, %v6830
        %v6832 = vmul.f32 %v6695, %v6830
        %v6833 = vrcp.pop %v6771
        %v6834 = vmul.f32 %v6697, %v6833
        %v6835 = vmul.f32 %v6699, %v6833
        %v6836 = vrcp.pop %v6775
        %v6837 = vmul.f32 %v6701, %v6836
        %v6838 = vmul.f32 %v6703, %v6836
        %v6839 = vrcp.pop %v6779
        %v6840 = vmul.f32 %v6705, %v6839
        %v6841 = vmul.f32 %v6707, %v6839
        %v6842 = vrcp.pop %v6783
        %v6843 = vmul.f32 %v6709, %v6842
        %v6844 = vmul.f32 %v6711, %v6842
        %v6845 = vrcp.pop %v6787
        %v6846 = vmul.f32 %v6713, %v6845
        %v6847 = vmul.f32 %v6715, %v6845
        %v6848 = vrcp.pop %v6791
        %v6849 = vmul.f32 %v6717, %v6848
        %v6850 = vmul.f32 %v6719, %v6848
        %v6851 = vrcp.pop %v6795
        %v6852 = vmul.f32 %v6721, %v6851
        %v6853 = vmul.f32 %v6723, %v6851
        %v6854 = vrcp.pop %v6799
        %v6855 = vmul.f32 %v6725, %v6854
        %v6856 = vmul.f32 %v6727, %v6854
        %v6857 = vrcp.pop %v6803
        %v6858 = vmul.f32 %v6729, %v6857
        %v6859 = vmul.f32 %v6731, %v6857
        %v6860 = vrcp.pop %v6807
        %v6861 = vmul.f32 %v6733, %v6860
        %v6862 = vmul.f32 %v6735, %v6860
        %v6863 = vrcp.pop %v6811
        %v6864 = vmul.f32 %v6737, %v6863
        %v6865 = vmul.f32 %v6739, %v6863
        %v6866 = vpack.c.bf16 %v6816, %v6813
        %v6867 = vpack.c.bf16 %v6817, %v6814
        %v6868 = vpack.c.bf16 %v6822, %v6819
        %v6869 = vpack.c.bf16 %v6823, %v6820
        %v6870 = vpack.c.bf16 %v6828, %v6825
        %v6871 = vpack.c.bf16 %v6829, %v6826
        %v6872 = vpack.c.bf16 %v6834, %v6831
        %v6873 = vpack.c.bf16 %v6835, %v6832
        %v6874 = vpack.c.bf16 %v6840, %v6837
        %v6875 = vpack.c.bf16 %v6841, %v6838
        %v6876 = vpack.c.bf16 %v6846, %v6843
        %v6877 = vpack.c.bf16 %v6847, %v6844
        %v6878 = vpack.c.bf16 %v6852, %v6849
        %v6879 = vpack.c.bf16 %v6853, %v6850
        %v6880 = vpack.c.bf16 %v6858, %v6855
        %v6881 = vpack.c.bf16 %v6859, %v6856
        %v6882 = vpack.c.bf16 %v6864, %v6861
        %v6883 = vpack.c.bf16 %v6865, %v6862
        %v6884 = vpack.c.bf16 %v6039, %v6036
        %v6885 = vpack.c.bf16 %v6252, %v6322
        %v6886 = vpack.c.bf16 %v6266, %v6323
        %v6887 = vpack.c.bf16 %v6280, %v6324
        %v6888 = vpack.c.bf16 %v6287, %v6282
        %v6889 = vpack.c.bf16 %v6325, %v6289
        %v6890 = vpack.c.bf16 %v6326, %v6298
        %v6891 = vpack.c.bf16 %v6327, %v6307
        %v6892 = vpack.c.bf16 %v6318, %v6316
        %v6894 = vsel %vm6382, %v6867, 0
        %v6897 = vsel %vm6382, %v6869, 0
        %v6900 = vsel %vm6382, %v6871, 0
        %v6903 = vsel %vm6382, %v6873, 0
        %v6906 = vsel %vm6382, %v6875, 0
        %v6909 = vsel %vm6382, %v6877, 0
        %v6912 = vsel %vm6382, %v6879, 0
        %v6915 = vsel %vm6382, %v6881, 0
        %v6918 = vsel %vm6382, %v6883, 0
        %6920 = vmatprep.subr.bf16.mxu0 0
        %6921 = vmatpush1.bf16.msra.mxu0 %v6891
        %6922 = vmatprep.subr.bf16.mxu0 0
        %6923 = vmatpush1.bf16.msra.mxu0 %v6890
        %6924 = vmatprep.subr.bf16.mxu0 0
        %6925 = vmatpush1.bf16.msra.mxu0 %v6889
        %6926 = vmatprep.subr.bf16.mxu0 0
        %6927 = vmatpush1.bf16.msra.mxu0 %v6888
        %6928 = vmatprep.subr.bf16.mxu0 0
        %6929 = vmatpush1.bf16.msra.mxu0 %v6887
        %6930 = vmatprep.subr.bf16.mxu0 0
        %6931 = vmatpush1.bf16.msra.mxu0 %v6886
        %6932 = vmatprep.subr.bf16.mxu0 0
        %6933 = vmatpush1.bf16.msra.mxu0 %v6885
        %6934 = vmatprep.subr.bf16.mxu0 0
        %6935 = vmatpush1.bf16.msra.mxu0 %v6884
        %6936 = vmatprep.subr.bf16.mxu0 0
        %6937 = vmatpush2.bf16.msra.mxu0 0
        %6938 = vmatprep.subr.bf16.mxu0 0
        %6939 = vmatpush2.bf16.msra.mxu0 0
        %6940 = vmatprep.subr.bf16.mxu0 0
        %6941 = vmatpush2.bf16.msra.mxu0 0
        %6942 = vmatprep.subr.bf16.mxu0 0
        %6943 = vmatpush2.bf16.msra.mxu0 0
        %6944 = vmatprep.subr.bf16.mxu0 0
        %6945 = vmatpush2.bf16.msra.mxu0 0
        %6946 = vmatprep.subr.bf16.mxu0 0
        %6947 = vmatpush2.bf16.msra.mxu0 0
        %6948 = vmatprep.subr.bf16.mxu0 0
        %6949 = vmatpush2.bf16.msra.mxu0 0
        %6950 = vmatprep.subr.bf16.mxu0 0
        %6951 = vmatpush2.bf16.msra.mxu0 %v6892
        %6952 = vmatprep.mubr.bf16.mxu0 %v6894
        %6953 = vmatmul.mubr.bf16.gmra.mxu0 %v6866
        %v6954 = vpop.f32.mrf.mxu0
        %v6955 = vadd.f32 0.0, %v6954
        %v6956 = vpop.f32.mrf.mxu0
        %v6957 = vpop.f32.mrf.mxu0
        %v6958 = vadd.f32 0.0, %v6957
        %v6959 = vpop.f32.mrf.mxu0
        %6960 = vmatprep.mubr.bf16.mxu0 %v6897
        %6961 = vmatmul.mubr.bf16.gmra.mxu0 %v6868
        %v6962 = vpop.f32.mrf.mxu0
        %v6963 = vadd.f32 0.0, %v6962
        %v6964 = vpop.f32.mrf.mxu0
        %v6965 = vpop.f32.mrf.mxu0
        %v6966 = vadd.f32 0.0, %v6965
        %v6967 = vpop.f32.mrf.mxu0
        %6968 = vmatprep.mubr.bf16.mxu0 %v6900
        %6969 = vmatmul.mubr.bf16.gmra.mxu0 %v6870
        %v6970 = vpop.f32.mrf.mxu0
        %v6971 = vadd.f32 0.0, %v6970
        %v6972 = vpop.f32.mrf.mxu0
        %v6973 = vpop.f32.mrf.mxu0
        %v6974 = vadd.f32 0.0, %v6973
        %v6975 = vpop.f32.mrf.mxu0
        %6976 = vmatprep.mubr.bf16.mxu0 %v6903
        %6977 = vmatmul.mubr.bf16.gmra.mxu0 %v6872
        %v6978 = vpop.f32.mrf.mxu0
        %v6979 = vadd.f32 0.0, %v6978
        %v6980 = vpop.f32.mrf.mxu0
        %v6981 = vpop.f32.mrf.mxu0
        %v6982 = vadd.f32 0.0, %v6981
        %v6983 = vpop.f32.mrf.mxu0
        %6984 = vmatprep.mubr.bf16.mxu0 %v6906
        %6985 = vmatmul.mubr.bf16.gmra.mxu0 %v6874
        %v6986 = vpop.f32.mrf.mxu0
        %v6987 = vadd.f32 0.0, %v6986
        %v6988 = vpop.f32.mrf.mxu0
        %v6989 = vpop.f32.mrf.mxu0
        %v6990 = vadd.f32 0.0, %v6989
        %v6991 = vpop.f32.mrf.mxu0
        %6992 = vmatprep.mubr.bf16.mxu0 %v6909
        %6993 = vmatmul.mubr.bf16.gmra.mxu0 %v6876
        %v6994 = vpop.f32.mrf.mxu0
        %v6995 = vadd.f32 0.0, %v6994
        %v6996 = vpop.f32.mrf.mxu0
        %v6997 = vpop.f32.mrf.mxu0
        %v6998 = vadd.f32 0.0, %v6997
        %v6999 = vpop.f32.mrf.mxu0
        %7000 = vmatprep.mubr.bf16.mxu0 %v6912
        %7001 = vmatmul.mubr.bf16.gmra.mxu0 %v6878
        %v7002 = vpop.f32.mrf.mxu0
        %v7003 = vadd.f32 0.0, %v7002
        %v7004 = vpop.f32.mrf.mxu0
        %v7005 = vpop.f32.mrf.mxu0
        %v7006 = vadd.f32 0.0, %v7005
        %v7007 = vpop.f32.mrf.mxu0
        %7008 = vmatprep.mubr.bf16.mxu0 %v6915
        %7009 = vmatmul.mubr.bf16.gmra.mxu0 %v6880
        %v7010 = vpop.f32.mrf.mxu0
        %v7011 = vadd.f32 0.0, %v7010
        %v7012 = vpop.f32.mrf.mxu0
        %v7013 = vpop.f32.mrf.mxu0
        %v7014 = vadd.f32 0.0, %v7013
        %v7015 = vpop.f32.mrf.mxu0
        %7016 = vmatprep.mubr.bf16.mxu0 %v6918
        %7017 = vmatmul.mubr.bf16.gmra.mxu0 %v6882
        %v7018 = vpop.f32.mrf.mxu0
        %v7019 = vadd.f32 0.0, %v7018
        %v7020 = vpop.f32.mrf.mxu0
        %v7021 = vpop.f32.mrf.mxu0
        %v7022 = vadd.f32 0.0, %v7021
        %v7023 = vpop.f32.mrf.mxu0
        %7024 = vdwg.mxu0
        %v7028 = vrot.slane %v6963, 2
        %v7029 = vrot.slane %v6966, 2
        %v7030 = vsel %vm5607, %v7028, %v7029
        %v7031 = vrot.slane %v6971, 2
        %v7032 = vsel %vm5607, %v7029, %v7031
        %7033 = vrot.lane.b32.xlu0 %v7030, 16
        %v7034 = vpop.permute.xlu0 %7033
        %7035 = vrot.lane.b32.xlu0 %v7032, 16
        %v7036 = vpop.permute.xlu0 %7035
        %7037 = vrot.lane.b32.xlu0 %v7031, 16
        %v7038 = vpop.permute.xlu0 %7037
        %v7044 = vrot.slane %v6971, 4
        %v7045 = vrot.slane %v6974, 4
        %v7046 = vsel %vm5618, %v7044, %v7045
        %v7047 = vrot.slane %v6979, 4
        %v7048 = vsel %vm5618, %v7045, %v7047
        %7049 = vrot.lane.b32.xlu0 %v7046, 32
        %v7050 = vpop.permute.xlu0 %7049
        %7051 = vrot.lane.b32.xlu0 %v7048, 32
        %v7052 = vpop.permute.xlu0 %7051
        %7053 = vrot.lane.b32.xlu0 %v7047, 32
        %v7054 = vpop.permute.xlu0 %7053
        %v7060 = vrot.slane %v6979, 6
        %v7061 = vrot.slane %v6982, 6
        %v7062 = vsel %vm5629, %v7060, %v7061
        %v7063 = vrot.slane %v6987, 6
        %v7064 = vsel %vm5629, %v7061, %v7063
        %7065 = vrot.lane.b32.xlu0 %v7062, 48
        %v7066 = vpop.permute.xlu0 %7065
        %7067 = vrot.lane.b32.xlu0 %v7064, 48
        %v7068 = vpop.permute.xlu0 %7067
        %7069 = vrot.lane.b32.xlu0 %v7063, 48
        %v7070 = vpop.permute.xlu0 %7069
        %7077 = vrot.lane.b32.xlu0 %v6990, 64
        %v7078 = vpop.permute.xlu0 %7077
        %7079 = vrot.lane.b32.xlu0 %v6995, 64
        %v7080 = vpop.permute.xlu0 %7079
        %7081 = vrot.lane.b32.xlu0 %v6998, 64
        %v7082 = vpop.permute.xlu0 %7081
        %v7088 = vrot.slane %v6998, 2
        %v7089 = vrot.slane %v7003, 2
        %v7090 = vsel %vm5607, %v7088, %v7089
        %v7091 = vrot.slane %v7006, 2
        %v7092 = vsel %vm5607, %v7089, %v7091
        %7093 = vrot.lane.b32.xlu0 %v7090, 80
        %v7094 = vpop.permute.xlu0 %7093
        %7095 = vrot.lane.b32.xlu0 %v7092, 80
        %v7096 = vpop.permute.xlu0 %7095
        %7097 = vrot.lane.b32.xlu0 %v7091, 80
        %v7098 = vpop.permute.xlu0 %7097
        %v7104 = vrot.slane %v7006, 4
        %v7105 = vrot.slane %v7011, 4
        %v7106 = vsel %vm5618, %v7104, %v7105
        %v7107 = vrot.slane %v7014, 4
        %v7108 = vsel %vm5618, %v7105, %v7107
        %7109 = vrot.lane.b32.xlu0 %v7106, 96
        %v7110 = vpop.permute.xlu0 %7109
        %7111 = vrot.lane.b32.xlu0 %v7108, 96
        %v7112 = vpop.permute.xlu0 %7111
        %7113 = vrot.lane.b32.xlu0 %v7107, 96
        %v7114 = vpop.permute.xlu0 %7113
        %v7120 = vrot.slane %v7014, 6
        %v7121 = vrot.slane %v7019, 6
        %v7122 = vsel %vm5629, %v7120, %v7121
        %v7123 = vrot.slane %v7022, 6
        %v7124 = vsel %vm5629, %v7121, %v7123
        %7125 = vrot.lane.b32.xlu0 %v7122, 112
        %v7126 = vpop.permute.xlu0 %7125
        %7127 = vrot.lane.b32.xlu0 %v7124, 112
        %v7128 = vpop.permute.xlu0 %7127
        %7129 = vrot.lane.b32.xlu0 %v7123, 112
        %v7130 = vpop.permute.xlu0 %7129
        %v7134 = vsel %vm6382, %v6955, %v7034
        %v7135 = vsel %vm6382, %v6958, %v7036
        %v7136 = vsel %vm6382, %v6963, %v7038
        %v7137 = vsel %vm2243, %v7134, %v7050
        %v7138 = vsel %vm2243, %v7135, %v7052
        %v7139 = vsel %vm2243, %v7136, %v7054
        %vm7140 = vcmask 392192
        %v7141 = vsel %vm7140, %v7137, %v7066
        %v7142 = vsel %vm7140, %v7138, %v7068
        %v7143 = vsel %vm7140, %v7139, %v7070
        %v7144 = vsel %vm3992, %v7141, %v7078
        %v7145 = vsel %vm3992, %v7142, %v7080
        %v7146 = vsel %vm3992, %v7143, %v7082
        %vm7147 = vcmask 654336
        %v7148 = vsel %vm7147, %v7144, %v7094
        %v7149 = vsel %vm7147, %v7145, %v7096
        %v7150 = vsel %vm7147, %v7146, %v7098
        %vm7151 = vcmask 785408
        %v7152 = vsel %vm7151, %v7148, %v7110
        %v7153 = vsel %vm7151, %v7149, %v7112
        %v7154 = vsel %vm7151, %v7150, %v7114
        %vm7155 = vcmask 916480
        %v7156 = vsel %vm7155, %v7152, %v7126
        %v7157 = vsel %vm7155, %v7153, %v7128
        %v7158 = vsel %vm7155, %v7154, %v7130
        %v7159 = vpack.c.bf16 %v7157, %v7156
        %v7160 = vpack.c.bf16 %v7158, %v7158
        %v7161 = vld [vmem:[#allocation16] sm:$0xf]
        %v7162 = vld [vmem:[#allocation16 + $0x4] sm:$0xf]
        %v7163 = vld [vmem:[#allocation16 + $0x8] sm:$0xf]
        %v7164 = vld [vmem:[#allocation16 + $0xc] sm:$0xf]
        %v7165 = vld [vmem:[#allocation16 + $0x10] sm:$0xf]
        %v7166 = vld [vmem:[#allocation16 + $0x14] sm:$0xf]
        %v7167 = vld [vmem:[#allocation16 + $0x18] sm:$0xf]
        %v7168 = vld [vmem:[#allocation16 + $0x1c] sm:$0xf]
        %v7169 = vld [vmem:[#allocation16 + $0x20] sm:$0xf]
        %v7170 = vld [vmem:[#allocation16 + $0x24] sm:$0xf]
        %v7171 = vld [vmem:[#allocation16 + $0x28] sm:$0xf]
        %v7172 = vld [vmem:[#allocation16 + $0x2c] sm:$0xf]
        %v7173 = vld [vmem:[#allocation16 + $0x30] sm:$0xf]
        %v7174 = vld [vmem:[#allocation16 + $0x34] sm:$0xf]
        %v7175 = vld [vmem:[#allocation16 + $0x38] sm:$0xf]
        %v7176 = vld [vmem:[#allocation16 + $0x3c] sm:$0xf]
        %v7177 = vld [vmem:[#allocation17] sm:$0x1]
        %v7179 = vlaneseq
        %v7180 = vshrl.u32 %v7179, 7
        %v7181 = vsub.s32 0, %v7180
        %v7182 = vrot.slane %v7177, %v7181
        %v7200 = vunpack.c.l.b16 %v7161
        %v7201 = vunpack.c.l.b16 %v7162
        %v7202 = vunpack.c.l.b16 %v7163
        %v7203 = vunpack.c.l.b16 %v7164
        %v7204 = vunpack.c.l.b16 %v7165
        %v7205 = vunpack.c.l.b16 %v7166
        %v7206 = vunpack.c.l.b16 %v7167
        %v7207 = vunpack.c.l.b16 %v7168
        %v7208 = vunpack.c.l.b16 %v7169
        %v7209 = vunpack.c.l.b16 %v7170
        %v7210 = vunpack.c.l.b16 %v7171
        %v7211 = vunpack.c.l.b16 %v7172
        %v7212 = vunpack.c.l.b16 %v7173
        %v7213 = vunpack.c.l.b16 %v7174
        %v7214 = vunpack.c.l.b16 %v7175
        %v7215 = vunpack.c.l.b16 %v7176
        %v7216 = vpack.c.b16 %v7201, %v7200
        %v7217 = vpack.c.b16 %v7203, %v7202
        %v7218 = vpack.c.b16 %v7205, %v7204
        %v7219 = vpack.c.b16 %v7207, %v7206
        %v7220 = vpack.c.b16 %v7209, %v7208
        %v7221 = vpack.c.b16 %v7211, %v7210
        %v7222 = vpack.c.b16 %v7213, %v7212
        %v7223 = vpack.c.b16 %v7215, %v7214
        %7232 = vmatprep.subr.bf16.mxu0 0
        %7233 = vmatpush1.bf16.msra.mxu0 %v7223
        %7234 = vmatprep.subr.bf16.mxu0 0
        %7235 = vmatpush1.bf16.msra.mxu0 %v7222
        %7236 = vmatprep.subr.bf16.mxu0 0
        %7237 = vmatpush1.bf16.msra.mxu0 %v7221
        %7238 = vmatprep.subr.bf16.mxu0 0
        %7239 = vmatpush1.bf16.msra.mxu0 %v7220
        %7240 = vmatprep.subr.bf16.mxu0 0
        %7241 = vmatpush1.bf16.msra.mxu0 %v7219
        %7242 = vmatprep.subr.bf16.mxu0 0
        %7243 = vmatpush1.bf16.msra.mxu0 %v7218
        %7244 = vmatprep.subr.bf16.mxu0 0
        %7245 = vmatpush1.bf16.msra.mxu0 %v7217
        %7246 = vmatprep.subr.bf16.mxu0 0
        %7247 = vmatpush1.bf16.msra.mxu0 %v7216
        %7248 = vmatprep.subr.bf16.mxu0 0
        %7249 = vmatpush2.bf16.msra.mxu0 0
        %7250 = vmatprep.subr.bf16.mxu0 0
        %7251 = vmatpush2.bf16.msra.mxu0 0
        %7252 = vmatprep.subr.bf16.mxu0 0
        %7253 = vmatpush2.bf16.msra.mxu0 0
        %7254 = vmatprep.subr.bf16.mxu0 0
        %7255 = vmatpush2.bf16.msra.mxu0 0
        %7256 = vmatprep.subr.bf16.mxu0 0
        %7257 = vmatpush2.bf16.msra.mxu0 0
        %7258 = vmatprep.subr.bf16.mxu0 0
        %7259 = vmatpush2.bf16.msra.mxu0 0
        %7260 = vmatprep.subr.bf16.mxu0 0
        %7261 = vmatpush2.bf16.msra.mxu0 0
        %7262 = vmatprep.subr.bf16.mxu0 0
        %7263 = vmatpush2.bf16.msra.mxu0 0
        %7264 = vmatprep.mubr.bf16.mxu0 0
        %7265 = vmatmul.mubr.bf16.gmra.mxu0 %v7159
        %v7266 = vpop.f32.mrf.mxu0
        %v7267 = vadd.f32 %v7182, %v7266
        %v7268 = vpop.f32.mrf.mxu0
        %v7269 = vpop.f32.mrf.mxu0
        %v7270 = vadd.f32 %v7182, %v7269
        %v7271 = vpop.f32.mrf.mxu0
        %7272 = vmatprep.mubr.bf16.mxu0 0
        %7273 = vmatmul.mubr.bf16.gmra.mxu0 %v7160
        %v7274 = vpop.f32.mrf.mxu0
        %v7275 = vadd.f32 %v7182, %v7274
        %v7276 = vpop.f32.mrf.mxu0
        %v7277 = vpop.f32.mrf.mxu0
        %v7278 = vpop.f32.mrf.mxu0
        %7279 = vdwg.mxu0
        %v7281 = vrot.slane %v7267, 1
        %v7283 = vrot.slane %v7267, 2
        %v7285 = vrot.slane %v7267, 3
        %v7287 = vrot.slane %v7267, 4
        %v7289 = vrot.slane %v7267, 5
        %v7291 = vrot.slane %v7267, 6
        %v7293 = vrot.slane %v7267, 7
        %v7296 = vrot.slane %v7270, 1
        %v7298 = vrot.slane %v7270, 2
        %v7300 = vrot.slane %v7270, 3
        %v7302 = vrot.slane %v7270, 4
        %v7304 = vrot.slane %v7270, 5
        %v7306 = vrot.slane %v7270, 6
        %v7308 = vrot.slane %v7270, 7
        %v7311 = vrot.slane %v7275, 1
        %v7313 = vpack.c.bf16 %v7267, %v7267
        %v7314 = vpack.c.bf16 %v7281, %v7281
        %v7315 = vpack.c.bf16 %v7283, %v7283
        %v7316 = vpack.c.bf16 %v7285, %v7285
        %v7317 = vpack.c.bf16 %v7287, %v7287
        %v7318 = vpack.c.bf16 %v7289, %v7289
        %v7319 = vpack.c.bf16 %v7291, %v7291
        %v7320 = vpack.c.bf16 %v7293, %v7293
        %v7321 = vpack.c.bf16 %v7270, %v7270
        %v7322 = vpack.c.bf16 %v7296, %v7296
        %v7323 = vpack.c.bf16 %v7298, %v7298
        %v7324 = vpack.c.bf16 %v7300, %v7300
        %v7325 = vpack.c.bf16 %v7302, %v7302
        %v7326 = vpack.c.bf16 %v7304, %v7304
        %v7327 = vpack.c.bf16 %v7306, %v7306
        %v7328 = vpack.c.bf16 %v7308, %v7308
        %v7329 = vpack.c.bf16 %v7275, %v7275
        %v7330 = vpack.c.bf16 %v7311, %v7311
        %v7331 = vld [vmem:[#allocation19] sm:$0xff]
        %v7332 = vld [vmem:[#allocation19 + $0x8] sm:$0xff]
        %v7333 = vld [vmem:[#allocation19 + $0x10] sm:$0xff]
        %v7334 = vld [vmem:[#allocation19 + $0x18] sm:$0xff]
        %v7335 = vld [vmem:[#allocation19 + $0x20] sm:$0xff]
        %v7336 = vld [vmem:[#allocation19 + $0x28] sm:$0xff]
        %v7337 = vld [vmem:[#allocation19 + $0x30] sm:$0xff]
        %v7338 = vld [vmem:[#allocation19 + $0x38] sm:$0xff]
        %v7339 = vld [vmem:[#allocation19 + $0x40] sm:$0xff]
        %v7340 = vld [vmem:[#allocation19 + $0x48] sm:$0xff]
        %v7341 = vld [vmem:[#allocation19 + $0x50] sm:$0xff]
        %v7342 = vld [vmem:[#allocation19 + $0x58] sm:$0xff]
        %v7343 = vld [vmem:[#allocation19 + $0x60] sm:$0xff]
        %v7344 = vld [vmem:[#allocation19 + $0x68] sm:$0xff]
        %v7345 = vld [vmem:[#allocation19 + $0x70] sm:$0xff]
        %v7346 = vld [vmem:[#allocation19 + $0x78] sm:$0xff]
        %v7347 = vld [vmem:[#allocation19 + $0x80] sm:$0xff]
        %v7348 = vld [vmem:[#allocation19 + $0x88] sm:$0xff]
        %v7349 = vld [vmem:[#allocation19 + $0x90] sm:$0xff]
        %v7350 = vld [vmem:[#allocation19 + $0x98] sm:$0xff]
        %v7351 = vld [vmem:[#allocation19 + $0xa0] sm:$0xff]
        %v7352 = vld [vmem:[#allocation19 + $0xa8] sm:$0xff]
        %v7353 = vld [vmem:[#allocation19 + $0xb0] sm:$0xff]
        %v7354 = vld [vmem:[#allocation19 + $0xb8] sm:$0xff]
        %v7355 = vld [vmem:[#allocation19 + $0xc0] sm:$0xff]
        %v7356 = vld [vmem:[#allocation19 + $0xc8] sm:$0xff]
        %v7357 = vld [vmem:[#allocation19 + $0xd0] sm:$0xff]
        %v7358 = vld [vmem:[#allocation19 + $0xd8] sm:$0xff]
        %v7359 = vld [vmem:[#allocation19 + $0xe0] sm:$0xff]
        %v7360 = vld [vmem:[#allocation19 + $0xe8] sm:$0xff]
        %v7361 = vld [vmem:[#allocation19 + $0xf0] sm:$0xff]
        %v7362 = vld [vmem:[#allocation19 + $0xf8] sm:$0xff]
        %v7363 = vld [vmem:[#allocation19 + $0x100] sm:$0xff]
        %v7364 = vld [vmem:[#allocation19 + $0x108] sm:$0xff]
        %v7365 = vld [vmem:[#allocation19 + $0x110] sm:$0xff]
        %v7366 = vld [vmem:[#allocation19 + $0x118] sm:$0xff]
        %v7367 = vld [vmem:[#allocation19 + $0x120] sm:$0xff]
        %v7368 = vld [vmem:[#allocation19 + $0x128] sm:$0xff]
        %v7369 = vld [vmem:[#allocation19 + $0x130] sm:$0xff]
        %v7370 = vld [vmem:[#allocation19 + $0x138] sm:$0xff]
        %v7371 = vld [vmem:[#allocation19 + $0x140] sm:$0xff]
        %v7372 = vld [vmem:[#allocation19 + $0x148] sm:$0xff]
        %v7373 = vld [vmem:[#allocation19 + $0x150] sm:$0xff]
        %v7374 = vld [vmem:[#allocation19 + $0x158] sm:$0xff]
        %v7375 = vld [vmem:[#allocation19 + $0x160] sm:$0xff]
        %v7376 = vld [vmem:[#allocation19 + $0x168] sm:$0xff]
        %v7377 = vld [vmem:[#allocation19 + $0x170] sm:$0xff]
        %v7378 = vld [vmem:[#allocation19 + $0x178] sm:$0xff]
        %v7379 = vld [vmem:[#allocation19 + $0x180] sm:$0xff]
        %v7380 = vld [vmem:[#allocation19 + $0x188] sm:$0xff]
        %v7381 = vld [vmem:[#allocation19 + $0x190] sm:$0xff]
        %v7382 = vld [vmem:[#allocation19 + $0x198] sm:$0xff]
        %v7383 = vld [vmem:[#allocation19 + $0x1a0] sm:$0xff]
        %v7384 = vld [vmem:[#allocation19 + $0x1a8] sm:$0xff]
        %v7385 = vld [vmem:[#allocation19 + $0x1b0] sm:$0xff]
        %v7386 = vld [vmem:[#allocation19 + $0x1b8] sm:$0xff]
        %v7387 = vld [vmem:[#allocation19 + $0x1c0] sm:$0xff]
        %v7388 = vld [vmem:[#allocation19 + $0x1c8] sm:$0xff]
        %v7389 = vld [vmem:[#allocation19 + $0x1d0] sm:$0xff]
        %v7390 = vld [vmem:[#allocation19 + $0x1d8] sm:$0xff]
        %v7391 = vld [vmem:[#allocation19 + $0x1e0] sm:$0xff]
        %v7392 = vld [vmem:[#allocation19 + $0x1e8] sm:$0xff]
        %v7393 = vld [vmem:[#allocation19 + $0x1f0] sm:$0xff]
        %v7394 = vld [vmem:[#allocation19 + $0x1f8] sm:$0xff]
        %v7395 = vld [vmem:[#allocation19 + $0x200] sm:$0xff]
        %v7396 = vld [vmem:[#allocation19 + $0x208] sm:$0xff]
        %v7397 = vld [vmem:[#allocation19 + $0x210] sm:$0xff]
        %v7398 = vld [vmem:[#allocation19 + $0x218] sm:$0xff]
        %v7399 = vld [vmem:[#allocation19 + $0x220] sm:$0xff]
        %v7400 = vld [vmem:[#allocation19 + $0x228] sm:$0xff]
        %v7401 = vld [vmem:[#allocation19 + $0x230] sm:$0xff]
        %v7402 = vld [vmem:[#allocation19 + $0x238] sm:$0xff]
        %v7403 = vld [vmem:[#allocation19 + $0x240] sm:$0xff]
        %v7404 = vld [vmem:[#allocation19 + $0x248] sm:$0xff]
        %v7405 = vld [vmem:[#allocation19 + $0x250] sm:$0xff]
        %v7406 = vld [vmem:[#allocation19 + $0x258] sm:$0xff]
        %v7407 = vld [vmem:[#allocation19 + $0x260] sm:$0xff]
        %v7408 = vld [vmem:[#allocation19 + $0x268] sm:$0xff]
        %v7409 = vld [vmem:[#allocation19 + $0x270] sm:$0xff]
        %v7410 = vld [vmem:[#allocation19 + $0x278] sm:$0xff]
        %v7411 = vld [vmem:[#allocation19 + $0x280] sm:$0xff]
        %v7412 = vld [vmem:[#allocation19 + $0x288] sm:$0xff]
        %v7413 = vld [vmem:[#allocation19 + $0x290] sm:$0xff]
        %v7414 = vld [vmem:[#allocation19 + $0x298] sm:$0xff]
        %v7415 = vld [vmem:[#allocation19 + $0x2a0] sm:$0xff]
        %v7416 = vld [vmem:[#allocation19 + $0x2a8] sm:$0xff]
        %v7417 = vld [vmem:[#allocation19 + $0x2b0] sm:$0xff]
        %v7418 = vld [vmem:[#allocation19 + $0x2b8] sm:$0xff]
        %v7419 = vld [vmem:[#allocation19 + $0x2c0] sm:$0xff]
        %v7420 = vld [vmem:[#allocation19 + $0x2c8] sm:$0xff]
        %v7421 = vld [vmem:[#allocation19 + $0x2d0] sm:$0xff]
        %v7422 = vld [vmem:[#allocation19 + $0x2d8] sm:$0xff]
        %v7423 = vld [vmem:[#allocation19 + $0x2e0] sm:$0xff]
        %v7424 = vld [vmem:[#allocation19 + $0x2e8] sm:$0xff]
        %v7425 = vld [vmem:[#allocation19 + $0x2f0] sm:$0xff]
        %v7426 = vld [vmem:[#allocation19 + $0x2f8] sm:$0xff]
        %v7427 = vld [vmem:[#allocation19 + $0x300] sm:$0xff]
        %v7428 = vld [vmem:[#allocation19 + $0x308] sm:$0xff]
        %v7429 = vld [vmem:[#allocation19 + $0x310] sm:$0xff]
        %v7430 = vld [vmem:[#allocation19 + $0x318] sm:$0xff]
        %v7431 = vld [vmem:[#allocation19 + $0x320] sm:$0xff]
        %v7432 = vld [vmem:[#allocation19 + $0x328] sm:$0xff]
        %v7433 = vld [vmem:[#allocation19 + $0x330] sm:$0xff]
        %v7434 = vld [vmem:[#allocation19 + $0x338] sm:$0xff]
        %v7435 = vld [vmem:[#allocation19 + $0x340] sm:$0xff]
        %v7436 = vld [vmem:[#allocation19 + $0x348] sm:$0xff]
        %v7437 = vld [vmem:[#allocation19 + $0x350] sm:$0xff]
        %v7438 = vld [vmem:[#allocation19 + $0x358] sm:$0xff]
        %v7439 = vld [vmem:[#allocation19 + $0x360] sm:$0xff]
        %v7440 = vld [vmem:[#allocation19 + $0x368] sm:$0xff]
        %v7441 = vld [vmem:[#allocation19 + $0x370] sm:$0xff]
        %v7442 = vld [vmem:[#allocation19 + $0x378] sm:$0xff]
        %v7443 = vld [vmem:[#allocation19 + $0x380] sm:$0xff]
        %v7444 = vld [vmem:[#allocation19 + $0x388] sm:$0xff]
        %v7445 = vld [vmem:[#allocation19 + $0x390] sm:$0xff]
        %v7446 = vld [vmem:[#allocation19 + $0x398] sm:$0xff]
        %v7447 = vld [vmem:[#allocation19 + $0x3a0] sm:$0xff]
        %v7448 = vld [vmem:[#allocation19 + $0x3a8] sm:$0xff]
        %v7449 = vld [vmem:[#allocation19 + $0x3b0] sm:$0xff]
        %v7450 = vld [vmem:[#allocation19 + $0x3b8] sm:$0xff]
        %v7451 = vld [vmem:[#allocation19 + $0x3c0] sm:$0xff]
        %v7452 = vld [vmem:[#allocation19 + $0x3c8] sm:$0xff]
        %v7453 = vld [vmem:[#allocation19 + $0x3d0] sm:$0xff]
        %v7454 = vld [vmem:[#allocation19 + $0x3d8] sm:$0xff]
        %v7455 = vld [vmem:[#allocation19 + $0x3e0] sm:$0xff]
        %v7456 = vld [vmem:[#allocation19 + $0x3e8] sm:$0xff]
        %v7457 = vld [vmem:[#allocation19 + $0x3f0] sm:$0xff]
        %v7458 = vld [vmem:[#allocation19 + $0x3f8] sm:$0xff]
        %v7459 = vld [vmem:[#allocation19 + $0x400] sm:$0xff]
        %v7460 = vld [vmem:[#allocation19 + $0x408] sm:$0xff]
        %v7461 = vld [vmem:[#allocation19 + $0x410] sm:$0xff]
        %v7462 = vld [vmem:[#allocation19 + $0x418] sm:$0xff]
        %v7463 = vld [vmem:[#allocation19 + $0x420] sm:$0xff]
        %v7464 = vld [vmem:[#allocation19 + $0x428] sm:$0xff]
        %v7465 = vld [vmem:[#allocation19 + $0x430] sm:$0xff]
        %v7466 = vld [vmem:[#allocation19 + $0x438] sm:$0xff]
        %v7467 = vld [vmem:[#allocation19 + $0x440] sm:$0xff]
        %v7468 = vld [vmem:[#allocation19 + $0x448] sm:$0xff]
        %v7469 = vld [vmem:[#allocation19 + $0x450] sm:$0xff]
        %v7470 = vld [vmem:[#allocation19 + $0x458] sm:$0xff]
        %v7471 = vld [vmem:[#allocation19 + $0x460] sm:$0xff]
        %v7472 = vld [vmem:[#allocation19 + $0x468] sm:$0xff]
        %v7473 = vld [vmem:[#allocation19 + $0x470] sm:$0xff]
        %v7474 = vld [vmem:[#allocation19 + $0x478] sm:$0xff]
        %v7475 = vld [vmem:[#allocation19 + $0x480] sm:$0xff]
        %v7476 = vld [vmem:[#allocation19 + $0x488] sm:$0xff]
        %v7477 = vld [vmem:[#allocation19 + $0x490] sm:$0xff]
        %v7478 = vld [vmem:[#allocation19 + $0x498] sm:$0xff]
        %v7479 = vld [vmem:[#allocation19 + $0x4a0] sm:$0xff]
        %v7480 = vld [vmem:[#allocation19 + $0x4a8] sm:$0xff]
        %v7481 = vld [vmem:[#allocation19 + $0x4b0] sm:$0xff]
        %v7482 = vld [vmem:[#allocation19 + $0x4b8] sm:$0xff]
        %v7483 = vld [vmem:[#allocation19 + $0x4c0] sm:$0xff]
        %v7484 = vld [vmem:[#allocation19 + $0x4c8] sm:$0xff]
        %v7485 = vld [vmem:[#allocation19 + $0x4d0] sm:$0xff]
        %v7486 = vld [vmem:[#allocation19 + $0x4d8] sm:$0xff]
        %v7487 = vld [vmem:[#allocation19 + $0x4e0] sm:$0xff]
        %v7488 = vld [vmem:[#allocation19 + $0x4e8] sm:$0xff]
        %v7489 = vld [vmem:[#allocation19 + $0x4f0] sm:$0xff]
        %v7490 = vld [vmem:[#allocation19 + $0x4f8] sm:$0xff]
        %v7491 = vld [vmem:[#allocation19 + $0x500] sm:$0xff]
        %v7492 = vld [vmem:[#allocation19 + $0x508] sm:$0xff]
        %v7493 = vld [vmem:[#allocation19 + $0x510] sm:$0xff]
        %v7494 = vld [vmem:[#allocation19 + $0x518] sm:$0xff]
        %v7495 = vld [vmem:[#allocation19 + $0x520] sm:$0xff]
        %v7496 = vld [vmem:[#allocation19 + $0x528] sm:$0xff]
        %v7497 = vld [vmem:[#allocation19 + $0x530] sm:$0xff]
        %v7498 = vld [vmem:[#allocation19 + $0x538] sm:$0xff]
        %v7499 = vld [vmem:[#allocation19 + $0x540] sm:$0xff]
        %v7500 = vld [vmem:[#allocation19 + $0x548] sm:$0xff]
        %v7501 = vld [vmem:[#allocation19 + $0x550] sm:$0xff]
        %v7502 = vld [vmem:[#allocation19 + $0x558] sm:$0xff]
        %v7503 = vld [vmem:[#allocation19 + $0x560] sm:$0xff]
        %v7504 = vld [vmem:[#allocation19 + $0x568] sm:$0xff]
        %v7505 = vld [vmem:[#allocation19 + $0x570] sm:$0xff]
        %v7506 = vld [vmem:[#allocation19 + $0x578] sm:$0xff]
        %v7507 = vld [vmem:[#allocation19 + $0x580] sm:$0xff]
        %v7508 = vld [vmem:[#allocation19 + $0x588] sm:$0xff]
        %v7509 = vld [vmem:[#allocation19 + $0x590] sm:$0xff]
        %v7510 = vld [vmem:[#allocation19 + $0x598] sm:$0xff]
        %v7511 = vld [vmem:[#allocation19 + $0x5a0] sm:$0xff]
        %v7512 = vld [vmem:[#allocation19 + $0x5a8] sm:$0xff]
        %v7513 = vld [vmem:[#allocation19 + $0x5b0] sm:$0xff]
        %v7514 = vld [vmem:[#allocation19 + $0x5b8] sm:$0xff]
        %v7515 = vld [vmem:[#allocation19 + $0x5c0] sm:$0xff]
        %v7516 = vld [vmem:[#allocation19 + $0x5c8] sm:$0xff]
        %v7517 = vld [vmem:[#allocation19 + $0x5d0] sm:$0xff]
        %v7518 = vld [vmem:[#allocation19 + $0x5d8] sm:$0xff]
        %v7519 = vld [vmem:[#allocation19 + $0x5e0] sm:$0xff]
        %v7520 = vld [vmem:[#allocation19 + $0x5e8] sm:$0xff]
        %v7521 = vld [vmem:[#allocation19 + $0x5f0] sm:$0xff]
        %v7522 = vld [vmem:[#allocation19 + $0x5f8] sm:$0xff]
        %v7523 = vld [vmem:[#allocation19 + $0x600] sm:$0xff]
        %v7524 = vld [vmem:[#allocation19 + $0x608] sm:$0xff]
        %v7525 = vld [vmem:[#allocation19 + $0x610] sm:$0xff]
        %v7526 = vld [vmem:[#allocation19 + $0x618] sm:$0xff]
        %v7527 = vld [vmem:[#allocation19 + $0x620] sm:$0xff]
        %v7528 = vld [vmem:[#allocation19 + $0x628] sm:$0xff]
        %v7529 = vld [vmem:[#allocation19 + $0x630] sm:$0xff]
        %v7530 = vld [vmem:[#allocation19 + $0x638] sm:$0xff]
        %v7531 = vld [vmem:[#allocation19 + $0x640] sm:$0xff]
        %v7532 = vld [vmem:[#allocation19 + $0x648] sm:$0xff]
        %v7533 = vld [vmem:[#allocation19 + $0x650] sm:$0xff]
        %v7534 = vld [vmem:[#allocation19 + $0x658] sm:$0xff]
        %v7535 = vld [vmem:[#allocation19 + $0x660] sm:$0xff]
        %v7536 = vld [vmem:[#allocation19 + $0x668] sm:$0xff]
        %v7537 = vld [vmem:[#allocation19 + $0x670] sm:$0xff]
        %v7538 = vld [vmem:[#allocation19 + $0x678] sm:$0xff]
        %v7539 = vld [vmem:[#allocation19 + $0x680] sm:$0xff]
        %v7540 = vld [vmem:[#allocation19 + $0x688] sm:$0xff]
        %v7541 = vld [vmem:[#allocation19 + $0x690] sm:$0xff]
        %v7542 = vld [vmem:[#allocation19 + $0x698] sm:$0xff]
        %v7543 = vld [vmem:[#allocation19 + $0x6a0] sm:$0xff]
        %v7544 = vld [vmem:[#allocation19 + $0x6a8] sm:$0xff]
        %v7545 = vld [vmem:[#allocation19 + $0x6b0] sm:$0xff]
        %v7546 = vld [vmem:[#allocation19 + $0x6b8] sm:$0xff]
        %v7547 = vld [vmem:[#allocation19 + $0x6c0] sm:$0xff]
        %v7548 = vld [vmem:[#allocation19 + $0x6c8] sm:$0xff]
        %v7549 = vld [vmem:[#allocation19 + $0x6d0] sm:$0xff]
        %v7550 = vld [vmem:[#allocation19 + $0x6d8] sm:$0xff]
        %v7551 = vld [vmem:[#allocation19 + $0x6e0] sm:$0xff]
        %v7552 = vld [vmem:[#allocation19 + $0x6e8] sm:$0xff]
        %v7553 = vld [vmem:[#allocation19 + $0x6f0] sm:$0xff]
        %v7554 = vld [vmem:[#allocation19 + $0x6f8] sm:$0xff]
        %v7555 = vld [vmem:[#allocation19 + $0x700] sm:$0xff]
        %v7556 = vld [vmem:[#allocation19 + $0x708] sm:$0xff]
        %v7557 = vld [vmem:[#allocation19 + $0x710] sm:$0xff]
        %v7558 = vld [vmem:[#allocation19 + $0x718] sm:$0xff]
        %v7559 = vld [vmem:[#allocation19 + $0x720] sm:$0xff]
        %v7560 = vld [vmem:[#allocation19 + $0x728] sm:$0xff]
        %v7561 = vld [vmem:[#allocation19 + $0x730] sm:$0xff]
        %v7562 = vld [vmem:[#allocation19 + $0x738] sm:$0xff]
        %v7563 = vld [vmem:[#allocation19 + $0x740] sm:$0xff]
        %v7564 = vld [vmem:[#allocation19 + $0x748] sm:$0xff]
        %v7565 = vld [vmem:[#allocation19 + $0x750] sm:$0xff]
        %v7566 = vld [vmem:[#allocation19 + $0x758] sm:$0xff]
        %v7567 = vld [vmem:[#allocation19 + $0x760] sm:$0xff]
        %v7568 = vld [vmem:[#allocation19 + $0x768] sm:$0xff]
        %v7569 = vld [vmem:[#allocation19 + $0x770] sm:$0xff]
        %v7570 = vld [vmem:[#allocation19 + $0x778] sm:$0xff]
        %v7571 = vld [vmem:[#allocation19 + $0x780] sm:$0xff]
        %v7572 = vld [vmem:[#allocation19 + $0x788] sm:$0xff]
        %v7573 = vld [vmem:[#allocation19 + $0x790] sm:$0xff]
        %v7574 = vld [vmem:[#allocation19 + $0x798] sm:$0xff]
        %v7575 = vld [vmem:[#allocation19 + $0x7a0] sm:$0xff]
        %v7576 = vld [vmem:[#allocation19 + $0x7a8] sm:$0xff]
        %v7577 = vld [vmem:[#allocation19 + $0x7b0] sm:$0xff]
        %v7578 = vld [vmem:[#allocation19 + $0x7b8] sm:$0xff]
        %v7579 = vld [vmem:[#allocation19 + $0x7c0] sm:$0xff]
        %v7580 = vld [vmem:[#allocation19 + $0x7c8] sm:$0xff]
        %v7581 = vld [vmem:[#allocation19 + $0x7d0] sm:$0xff]
        %v7582 = vld [vmem:[#allocation19 + $0x7d8] sm:$0xff]
        %v7583 = vld [vmem:[#allocation19 + $0x7e0] sm:$0xff]
        %v7584 = vld [vmem:[#allocation19 + $0x7e8] sm:$0xff]
        %v7585 = vld [vmem:[#allocation19 + $0x7f0] sm:$0xff]
        %v7586 = vld [vmem:[#allocation19 + $0x7f8] sm:$0xff]
        %v7587 = vld [vmem:[#allocation19 + $0x800] sm:$0xff]
        %v7588 = vld [vmem:[#allocation19 + $0x808] sm:$0xff]
        %v7589 = vld [vmem:[#allocation19 + $0x810] sm:$0xff]
        %v7590 = vld [vmem:[#allocation19 + $0x818] sm:$0xff]
        %v7591 = vld [vmem:[#allocation19 + $0x820] sm:$0xff]
        %v7592 = vld [vmem:[#allocation19 + $0x828] sm:$0xff]
        %v7593 = vld [vmem:[#allocation19 + $0x830] sm:$0xff]
        %v7594 = vld [vmem:[#allocation19 + $0x838] sm:$0xff]
        %v7595 = vld [vmem:[#allocation19 + $0x840] sm:$0xff]
        %v7596 = vld [vmem:[#allocation19 + $0x848] sm:$0xff]
        %v7597 = vld [vmem:[#allocation19 + $0x850] sm:$0xff]
        %v7598 = vld [vmem:[#allocation19 + $0x858] sm:$0xff]
        %v7599 = vld [vmem:[#allocation19 + $0x860] sm:$0xff]
        %v7600 = vld [vmem:[#allocation19 + $0x868] sm:$0xff]
        %v7601 = vld [vmem:[#allocation19 + $0x870] sm:$0xff]
        %v7602 = vld [vmem:[#allocation19 + $0x878] sm:$0xff]
        %v7603 = vld [vmem:[#allocation19 + $0x880] sm:$0xff]
        %v7604 = vld [vmem:[#allocation19 + $0x888] sm:$0xff]
        %v7605 = vld [vmem:[#allocation19 + $0x890] sm:$0xff]
        %v7606 = vld [vmem:[#allocation19 + $0x898] sm:$0xff]
        %v7607 = vld [vmem:[#allocation19 + $0x8a0] sm:$0xff]
        %v7608 = vld [vmem:[#allocation19 + $0x8a8] sm:$0xff]
        %v7609 = vld [vmem:[#allocation19 + $0x8b0] sm:$0xff]
        %v7610 = vld [vmem:[#allocation19 + $0x8b8] sm:$0xff]
        %v7611 = vld [vmem:[#allocation19 + $0x8c0] sm:$0xff]
        %v7612 = vld [vmem:[#allocation19 + $0x8c8] sm:$0xff]
        %v7613 = vld [vmem:[#allocation19 + $0x8d0] sm:$0xff]
        %v7614 = vld [vmem:[#allocation19 + $0x8d8] sm:$0xff]
        %v7615 = vld [vmem:[#allocation19 + $0x8e0] sm:$0xff]
        %v7616 = vld [vmem:[#allocation19 + $0x8e8] sm:$0xff]
        %v7617 = vld [vmem:[#allocation19 + $0x8f0] sm:$0xff]
        %v7618 = vld [vmem:[#allocation19 + $0x8f8] sm:$0xff]
        %v7619 = vld [vmem:[#allocation20] sm:$0x3]
        %v7908 = vunpack.c.l.b16 %v7331
        %v7909 = vunpack.c.h.b16 %v7331
        %v7910 = vunpack.c.l.b16 %v7332
        %v7911 = vunpack.c.h.b16 %v7332
        %v7912 = vunpack.c.l.b16 %v7333
        %v7913 = vunpack.c.h.b16 %v7333
        %v7914 = vunpack.c.l.b16 %v7334
        %v7915 = vunpack.c.h.b16 %v7334
        %v7916 = vunpack.c.l.b16 %v7335
        %v7917 = vunpack.c.h.b16 %v7335
        %v7918 = vunpack.c.l.b16 %v7336
        %v7919 = vunpack.c.h.b16 %v7336
        %v7920 = vunpack.c.l.b16 %v7337
        %v7921 = vunpack.c.h.b16 %v7337
        %v7922 = vunpack.c.l.b16 %v7338
        %v7923 = vunpack.c.h.b16 %v7338
        %v7924 = vunpack.c.l.b16 %v7339
        %v7925 = vunpack.c.h.b16 %v7339
        %v7926 = vunpack.c.l.b16 %v7340
        %v7927 = vunpack.c.h.b16 %v7340
        %v7928 = vunpack.c.l.b16 %v7341
        %v7929 = vunpack.c.h.b16 %v7341
        %v7930 = vunpack.c.l.b16 %v7342
        %v7931 = vunpack.c.h.b16 %v7342
        %v7932 = vunpack.c.l.b16 %v7343
        %v7933 = vunpack.c.h.b16 %v7343
        %v7934 = vunpack.c.l.b16 %v7344
        %v7935 = vunpack.c.h.b16 %v7344
        %v7936 = vunpack.c.l.b16 %v7345
        %v7937 = vunpack.c.h.b16 %v7345
        %v7938 = vunpack.c.l.b16 %v7346
        %v7939 = vunpack.c.h.b16 %v7346
        %v7940 = vunpack.c.l.b16 %v7347
        %v7941 = vunpack.c.h.b16 %v7347
        %v7942 = vunpack.c.l.b16 %v7348
        %v7943 = vunpack.c.h.b16 %v7348
        %v7944 = vunpack.c.l.b16 %v7349
        %v7945 = vunpack.c.h.b16 %v7349
        %v7946 = vunpack.c.l.b16 %v7350
        %v7947 = vunpack.c.h.b16 %v7350
        %v7948 = vunpack.c.l.b16 %v7351
        %v7949 = vunpack.c.h.b16 %v7351
        %v7950 = vunpack.c.l.b16 %v7352
        %v7951 = vunpack.c.h.b16 %v7352
        %v7952 = vunpack.c.l.b16 %v7353
        %v7953 = vunpack.c.h.b16 %v7353
        %v7954 = vunpack.c.l.b16 %v7354
        %v7955 = vunpack.c.h.b16 %v7354
        %v7956 = vunpack.c.l.b16 %v7355
        %v7957 = vunpack.c.h.b16 %v7355
        %v7958 = vunpack.c.l.b16 %v7356
        %v7959 = vunpack.c.h.b16 %v7356
        %v7960 = vunpack.c.l.b16 %v7357
        %v7961 = vunpack.c.h.b16 %v7357
        %v7962 = vunpack.c.l.b16 %v7358
        %v7963 = vunpack.c.h.b16 %v7358
        %v7964 = vunpack.c.l.b16 %v7359
        %v7965 = vunpack.c.h.b16 %v7359
        %v7966 = vunpack.c.l.b16 %v7360
        %v7967 = vunpack.c.h.b16 %v7360
        %v7968 = vunpack.c.l.b16 %v7361
        %v7969 = vunpack.c.h.b16 %v7361
        %v7970 = vunpack.c.l.b16 %v7362
        %v7971 = vunpack.c.h.b16 %v7362
        %v7972 = vunpack.c.l.b16 %v7363
        %v7973 = vunpack.c.h.b16 %v7363
        %v7974 = vunpack.c.l.b16 %v7364
        %v7975 = vunpack.c.h.b16 %v7364
        %v7976 = vunpack.c.l.b16 %v7365
        %v7977 = vunpack.c.h.b16 %v7365
        %v7978 = vunpack.c.l.b16 %v7366
        %v7979 = vunpack.c.h.b16 %v7366
        %v7980 = vunpack.c.l.b16 %v7367
        %v7981 = vunpack.c.h.b16 %v7367
        %v7982 = vunpack.c.l.b16 %v7368
        %v7983 = vunpack.c.h.b16 %v7368
        %v7984 = vunpack.c.l.b16 %v7369
        %v7985 = vunpack.c.h.b16 %v7369
        %v7986 = vunpack.c.l.b16 %v7370
        %v7987 = vunpack.c.h.b16 %v7370
        %v7988 = vunpack.c.l.b16 %v7371
        %v7989 = vunpack.c.h.b16 %v7371
        %v7990 = vunpack.c.l.b16 %v7372
        %v7991 = vunpack.c.h.b16 %v7372
        %v7992 = vunpack.c.l.b16 %v7373
        %v7993 = vunpack.c.h.b16 %v7373
        %v7994 = vunpack.c.l.b16 %v7374
        %v7995 = vunpack.c.h.b16 %v7374
        %v7996 = vunpack.c.l.b16 %v7375
        %v7997 = vunpack.c.h.b16 %v7375
        %v7998 = vunpack.c.l.b16 %v7376
        %v7999 = vunpack.c.h.b16 %v7376
        %v8000 = vunpack.c.l.b16 %v7377
        %v8001 = vunpack.c.h.b16 %v7377
        %v8002 = vunpack.c.l.b16 %v7378
        %v8003 = vunpack.c.h.b16 %v7378
        %v8004 = vunpack.c.l.b16 %v7379
        %v8005 = vunpack.c.h.b16 %v7379
        %v8006 = vunpack.c.l.b16 %v7380
        %v8007 = vunpack.c.h.b16 %v7380
        %v8008 = vunpack.c.l.b16 %v7381
        %v8009 = vunpack.c.h.b16 %v7381
        %v8010 = vunpack.c.l.b16 %v7382
        %v8011 = vunpack.c.h.b16 %v7382
        %v8012 = vunpack.c.l.b16 %v7383
        %v8013 = vunpack.c.h.b16 %v7383
        %v8014 = vunpack.c.l.b16 %v7384
        %v8015 = vunpack.c.h.b16 %v7384
        %v8016 = vunpack.c.l.b16 %v7385
        %v8017 = vunpack.c.h.b16 %v7385
        %v8018 = vunpack.c.l.b16 %v7386
        %v8019 = vunpack.c.h.b16 %v7386
        %v8020 = vunpack.c.l.b16 %v7387
        %v8021 = vunpack.c.h.b16 %v7387
        %v8022 = vunpack.c.l.b16 %v7388
        %v8023 = vunpack.c.h.b16 %v7388
        %v8024 = vunpack.c.l.b16 %v7389
        %v8025 = vunpack.c.h.b16 %v7389
        %v8026 = vunpack.c.l.b16 %v7390
        %v8027 = vunpack.c.h.b16 %v7390
        %v8028 = vunpack.c.l.b16 %v7391
        %v8029 = vunpack.c.h.b16 %v7391
        %v8030 = vunpack.c.l.b16 %v7392
        %v8031 = vunpack.c.h.b16 %v7392
        %v8032 = vunpack.c.l.b16 %v7393
        %v8033 = vunpack.c.h.b16 %v7393
        %v8034 = vunpack.c.l.b16 %v7394
        %v8035 = vunpack.c.h.b16 %v7394
        %v8036 = vunpack.c.l.b16 %v7395
        %v8037 = vunpack.c.h.b16 %v7395
        %v8038 = vunpack.c.l.b16 %v7396
        %v8039 = vunpack.c.h.b16 %v7396
        %v8040 = vunpack.c.l.b16 %v7397
        %v8041 = vunpack.c.h.b16 %v7397
        %v8042 = vunpack.c.l.b16 %v7398
        %v8043 = vunpack.c.h.b16 %v7398
        %v8044 = vunpack.c.l.b16 %v7399
        %v8045 = vunpack.c.h.b16 %v7399
        %v8046 = vunpack.c.l.b16 %v7400
        %v8047 = vunpack.c.h.b16 %v7400
        %v8048 = vunpack.c.l.b16 %v7401
        %v8049 = vunpack.c.h.b16 %v7401
        %v8050 = vunpack.c.l.b16 %v7402
        %v8051 = vunpack.c.h.b16 %v7402
        %v8052 = vunpack.c.l.b16 %v7403
        %v8053 = vunpack.c.h.b16 %v7403
        %v8054 = vunpack.c.l.b16 %v7404
        %v8055 = vunpack.c.h.b16 %v7404
        %v8056 = vunpack.c.l.b16 %v7405
        %v8057 = vunpack.c.h.b16 %v7405
        %v8058 = vunpack.c.l.b16 %v7406
        %v8059 = vunpack.c.h.b16 %v7406
        %v8060 = vunpack.c.l.b16 %v7407
        %v8061 = vunpack.c.h.b16 %v7407
        %v8062 = vunpack.c.l.b16 %v7408
        %v8063 = vunpack.c.h.b16 %v7408
        %v8064 = vunpack.c.l.b16 %v7409
        %v8065 = vunpack.c.h.b16 %v7409
        %v8066 = vunpack.c.l.b16 %v7410
        %v8067 = vunpack.c.h.b16 %v7410
        %v8068 = vunpack.c.l.b16 %v7411
        %v8069 = vunpack.c.h.b16 %v7411
        %v8070 = vunpack.c.l.b16 %v7412
        %v8071 = vunpack.c.h.b16 %v7412
        %v8072 = vunpack.c.l.b16 %v7413
        %v8073 = vunpack.c.h.b16 %v7413
        %v8074 = vunpack.c.l.b16 %v7414
        %v8075 = vunpack.c.h.b16 %v7414
        %v8076 = vunpack.c.l.b16 %v7415
        %v8077 = vunpack.c.h.b16 %v7415
        %v8078 = vunpack.c.l.b16 %v7416
        %v8079 = vunpack.c.h.b16 %v7416
        %v8080 = vunpack.c.l.b16 %v7417
        %v8081 = vunpack.c.h.b16 %v7417
        %v8082 = vunpack.c.l.b16 %v7418
        %v8083 = vunpack.c.h.b16 %v7418
        %v8084 = vunpack.c.l.b16 %v7419
        %v8085 = vunpack.c.h.b16 %v7419
        %v8086 = vunpack.c.l.b16 %v7420
        %v8087 = vunpack.c.h.b16 %v7420
        %v8088 = vunpack.c.l.b16 %v7421
        %v8089 = vunpack.c.h.b16 %v7421
        %v8090 = vunpack.c.l.b16 %v7422
        %v8091 = vunpack.c.h.b16 %v7422
        %v8092 = vunpack.c.l.b16 %v7423
        %v8093 = vunpack.c.h.b16 %v7423
        %v8094 = vunpack.c.l.b16 %v7424
        %v8095 = vunpack.c.h.b16 %v7424
        %v8096 = vunpack.c.l.b16 %v7425
        %v8097 = vunpack.c.h.b16 %v7425
        %v8098 = vunpack.c.l.b16 %v7426
        %v8099 = vunpack.c.h.b16 %v7426
        %v8100 = vunpack.c.l.b16 %v7427
        %v8101 = vunpack.c.h.b16 %v7427
        %v8102 = vunpack.c.l.b16 %v7428
        %v8103 = vunpack.c.h.b16 %v7428
        %v8104 = vunpack.c.l.b16 %v7429
        %v8105 = vunpack.c.h.b16 %v7429
        %v8106 = vunpack.c.l.b16 %v7430
        %v8107 = vunpack.c.h.b16 %v7430
        %v8108 = vunpack.c.l.b16 %v7431
        %v8109 = vunpack.c.h.b16 %v7431
        %v8110 = vunpack.c.l.b16 %v7432
        %v8111 = vunpack.c.h.b16 %v7432
        %v8112 = vunpack.c.l.b16 %v7433
        %v8113 = vunpack.c.h.b16 %v7433
        %v8114 = vunpack.c.l.b16 %v7434
        %v8115 = vunpack.c.h.b16 %v7434
        %v8116 = vunpack.c.l.b16 %v7435
        %v8117 = vunpack.c.h.b16 %v7435
        %v8118 = vunpack.c.l.b16 %v7436
        %v8119 = vunpack.c.h.b16 %v7436
        %v8120 = vunpack.c.l.b16 %v7437
        %v8121 = vunpack.c.h.b16 %v7437
        %v8122 = vunpack.c.l.b16 %v7438
        %v8123 = vunpack.c.h.b16 %v7438
        %v8124 = vunpack.c.l.b16 %v7439
        %v8125 = vunpack.c.h.b16 %v7439
        %v8126 = vunpack.c.l.b16 %v7440
        %v8127 = vunpack.c.h.b16 %v7440
        %v8128 = vunpack.c.l.b16 %v7441
        %v8129 = vunpack.c.h.b16 %v7441
        %v8130 = vunpack.c.l.b16 %v7442
        %v8131 = vunpack.c.h.b16 %v7442
        %v8132 = vunpack.c.l.b16 %v7443
        %v8133 = vunpack.c.h.b16 %v7443
        %v8134 = vunpack.c.l.b16 %v7444
        %v8135 = vunpack.c.h.b16 %v7444
        %v8136 = vunpack.c.l.b16 %v7445
        %v8137 = vunpack.c.h.b16 %v7445
        %v8138 = vunpack.c.l.b16 %v7446
        %v8139 = vunpack.c.h.b16 %v7446
        %v8140 = vunpack.c.l.b16 %v7447
        %v8141 = vunpack.c.h.b16 %v7447
        %v8142 = vunpack.c.l.b16 %v7448
        %v8143 = vunpack.c.h.b16 %v7448
        %v8144 = vunpack.c.l.b16 %v7449
        %v8145 = vunpack.c.h.b16 %v7449
        %v8146 = vunpack.c.l.b16 %v7450
        %v8147 = vunpack.c.h.b16 %v7450
        %v8148 = vunpack.c.l.b16 %v7451
        %v8149 = vunpack.c.h.b16 %v7451
        %v8150 = vunpack.c.l.b16 %v7452
        %v8151 = vunpack.c.h.b16 %v7452
        %v8152 = vunpack.c.l.b16 %v7453
        %v8153 = vunpack.c.h.b16 %v7453
        %v8154 = vunpack.c.l.b16 %v7454
        %v8155 = vunpack.c.h.b16 %v7454
        %v8156 = vunpack.c.l.b16 %v7455
        %v8157 = vunpack.c.h.b16 %v7455
        %v8158 = vunpack.c.l.b16 %v7456
        %v8159 = vunpack.c.h.b16 %v7456
        %v8160 = vunpack.c.l.b16 %v7457
        %v8161 = vunpack.c.h.b16 %v7457
        %v8162 = vunpack.c.l.b16 %v7458
        %v8163 = vunpack.c.h.b16 %v7458
        %v8164 = vunpack.c.l.b16 %v7459
        %v8165 = vunpack.c.h.b16 %v7459
        %v8166 = vunpack.c.l.b16 %v7460
        %v8167 = vunpack.c.h.b16 %v7460
        %v8168 = vunpack.c.l.b16 %v7461
        %v8169 = vunpack.c.h.b16 %v7461
        %v8170 = vunpack.c.l.b16 %v7462
        %v8171 = vunpack.c.h.b16 %v7462
        %v8172 = vunpack.c.l.b16 %v7463
        %v8173 = vunpack.c.h.b16 %v7463
        %v8174 = vunpack.c.l.b16 %v7464
        %v8175 = vunpack.c.h.b16 %v7464
        %v8176 = vunpack.c.l.b16 %v7465
        %v8177 = vunpack.c.h.b16 %v7465
        %v8178 = vunpack.c.l.b16 %v7466
        %v8179 = vunpack.c.h.b16 %v7466
        %v8180 = vunpack.c.l.b16 %v7467
        %v8181 = vunpack.c.h.b16 %v7467
        %v8182 = vunpack.c.l.b16 %v7468
        %v8183 = vunpack.c.h.b16 %v7468
        %v8184 = vunpack.c.l.b16 %v7469
        %v8185 = vunpack.c.h.b16 %v7469
        %v8186 = vunpack.c.l.b16 %v7470
        %v8187 = vunpack.c.h.b16 %v7470
        %v8188 = vunpack.c.l.b16 %v7471
        %v8189 = vunpack.c.h.b16 %v7471
        %v8190 = vunpack.c.l.b16 %v7472
        %v8191 = vunpack.c.h.b16 %v7472
        %v8192 = vunpack.c.l.b16 %v7473
        %v8193 = vunpack.c.h.b16 %v7473
        %v8194 = vunpack.c.l.b16 %v7474
        %v8195 = vunpack.c.h.b16 %v7474
        %v8196 = vunpack.c.l.b16 %v7475
        %v8197 = vunpack.c.h.b16 %v7475
        %v8198 = vunpack.c.l.b16 %v7476
        %v8199 = vunpack.c.h.b16 %v7476
        %v8200 = vunpack.c.l.b16 %v7477
        %v8201 = vunpack.c.h.b16 %v7477
        %v8202 = vunpack.c.l.b16 %v7478
        %v8203 = vunpack.c.h.b16 %v7478
        %v8204 = vunpack.c.l.b16 %v7479
        %v8205 = vunpack.c.h.b16 %v7479
        %v8206 = vunpack.c.l.b16 %v7480
        %v8207 = vunpack.c.h.b16 %v7480
        %v8208 = vunpack.c.l.b16 %v7481
        %v8209 = vunpack.c.h.b16 %v7481
        %v8210 = vunpack.c.l.b16 %v7482
        %v8211 = vunpack.c.h.b16 %v7482
        %v8212 = vunpack.c.l.b16 %v7483
        %v8213 = vunpack.c.h.b16 %v7483
        %v8214 = vunpack.c.l.b16 %v7484
        %v8215 = vunpack.c.h.b16 %v7484
        %v8216 = vunpack.c.l.b16 %v7485
        %v8217 = vunpack.c.h.b16 %v7485
        %v8218 = vunpack.c.l.b16 %v7486
        %v8219 = vunpack.c.h.b16 %v7486
        %v8220 = vunpack.c.l.b16 %v7487
        %v8221 = vunpack.c.h.b16 %v7487
        %v8222 = vunpack.c.l.b16 %v7488
        %v8223 = vunpack.c.h.b16 %v7488
        %v8224 = vunpack.c.l.b16 %v7489
        %v8225 = vunpack.c.h.b16 %v7489
        %v8226 = vunpack.c.l.b16 %v7490
        %v8227 = vunpack.c.h.b16 %v7490
        %v8228 = vunpack.c.l.b16 %v7491
        %v8229 = vunpack.c.h.b16 %v7491
        %v8230 = vunpack.c.l.b16 %v7492
        %v8231 = vunpack.c.h.b16 %v7492
        %v8232 = vunpack.c.l.b16 %v7493
        %v8233 = vunpack.c.h.b16 %v7493
        %v8234 = vunpack.c.l.b16 %v7494
        %v8235 = vunpack.c.h.b16 %v7494
        %v8236 = vunpack.c.l.b16 %v7495
        %v8237 = vunpack.c.h.b16 %v7495
        %v8238 = vunpack.c.l.b16 %v7496
        %v8239 = vunpack.c.h.b16 %v7496
        %v8240 = vunpack.c.l.b16 %v7497
        %v8241 = vunpack.c.h.b16 %v7497
        %v8242 = vunpack.c.l.b16 %v7498
        %v8243 = vunpack.c.h.b16 %v7498
        %v8244 = vunpack.c.l.b16 %v7499
        %v8245 = vunpack.c.h.b16 %v7499
        %v8246 = vunpack.c.l.b16 %v7500
        %v8247 = vunpack.c.h.b16 %v7500
        %v8248 = vunpack.c.l.b16 %v7501
        %v8249 = vunpack.c.h.b16 %v7501
        %v8250 = vunpack.c.l.b16 %v7502
        %v8251 = vunpack.c.h.b16 %v7502
        %v8252 = vunpack.c.l.b16 %v7503
        %v8253 = vunpack.c.h.b16 %v7503
        %v8254 = vunpack.c.l.b16 %v7504
        %v8255 = vunpack.c.h.b16 %v7504
        %v8256 = vunpack.c.l.b16 %v7505
        %v8257 = vunpack.c.h.b16 %v7505
        %v8258 = vunpack.c.l.b16 %v7506
        %v8259 = vunpack.c.h.b16 %v7506
        %v8260 = vunpack.c.l.b16 %v7507
        %v8261 = vunpack.c.h.b16 %v7507
        %v8262 = vunpack.c.l.b16 %v7508
        %v8263 = vunpack.c.h.b16 %v7508
        %v8264 = vunpack.c.l.b16 %v7509
        %v8265 = vunpack.c.h.b16 %v7509
        %v8266 = vunpack.c.l.b16 %v7510
        %v8267 = vunpack.c.h.b16 %v7510
        %v8268 = vunpack.c.l.b16 %v7511
        %v8269 = vunpack.c.h.b16 %v7511
        %v8270 = vunpack.c.l.b16 %v7512
        %v8271 = vunpack.c.h.b16 %v7512
        %v8272 = vunpack.c.l.b16 %v7513
        %v8273 = vunpack.c.h.b16 %v7513
        %v8274 = vunpack.c.l.b16 %v7514
        %v8275 = vunpack.c.h.b16 %v7514
        %v8276 = vunpack.c.l.b16 %v7515
        %v8277 = vunpack.c.h.b16 %v7515
        %v8278 = vunpack.c.l.b16 %v7516
        %v8279 = vunpack.c.h.b16 %v7516
        %v8280 = vunpack.c.l.b16 %v7517
        %v8281 = vunpack.c.h.b16 %v7517
        %v8282 = vunpack.c.l.b16 %v7518
        %v8283 = vunpack.c.h.b16 %v7518
        %v8284 = vunpack.c.l.b16 %v7519
        %v8285 = vunpack.c.h.b16 %v7519
        %v8286 = vunpack.c.l.b16 %v7520
        %v8287 = vunpack.c.h.b16 %v7520
        %v8288 = vunpack.c.l.b16 %v7521
        %v8289 = vunpack.c.h.b16 %v7521
        %v8290 = vunpack.c.l.b16 %v7522
        %v8291 = vunpack.c.h.b16 %v7522
        %v8292 = vunpack.c.l.b16 %v7523
        %v8293 = vunpack.c.h.b16 %v7523
        %v8294 = vunpack.c.l.b16 %v7524
        %v8295 = vunpack.c.h.b16 %v7524
        %v8296 = vunpack.c.l.b16 %v7525
        %v8297 = vunpack.c.h.b16 %v7525
        %v8298 = vunpack.c.l.b16 %v7526
        %v8299 = vunpack.c.h.b16 %v7526
        %v8300 = vunpack.c.l.b16 %v7527
        %v8301 = vunpack.c.h.b16 %v7527
        %v8302 = vunpack.c.l.b16 %v7528
        %v8303 = vunpack.c.h.b16 %v7528
        %v8304 = vunpack.c.l.b16 %v7529
        %v8305 = vunpack.c.h.b16 %v7529
        %v8306 = vunpack.c.l.b16 %v7530
        %v8307 = vunpack.c.h.b16 %v7530
        %v8308 = vunpack.c.l.b16 %v7531
        %v8309 = vunpack.c.h.b16 %v7531
        %v8310 = vunpack.c.l.b16 %v7532
        %v8311 = vunpack.c.h.b16 %v7532
        %v8312 = vunpack.c.l.b16 %v7533
        %v8313 = vunpack.c.h.b16 %v7533
        %v8314 = vunpack.c.l.b16 %v7534
        %v8315 = vunpack.c.h.b16 %v7534
        %v8316 = vunpack.c.l.b16 %v7535
        %v8317 = vunpack.c.h.b16 %v7535
        %v8318 = vunpack.c.l.b16 %v7536
        %v8319 = vunpack.c.h.b16 %v7536
        %v8320 = vunpack.c.l.b16 %v7537
        %v8321 = vunpack.c.h.b16 %v7537
        %v8322 = vunpack.c.l.b16 %v7538
        %v8323 = vunpack.c.h.b16 %v7538
        %v8324 = vunpack.c.l.b16 %v7539
        %v8325 = vunpack.c.h.b16 %v7539
        %v8326 = vunpack.c.l.b16 %v7540
        %v8327 = vunpack.c.h.b16 %v7540
        %v8328 = vunpack.c.l.b16 %v7541
        %v8329 = vunpack.c.h.b16 %v7541
        %v8330 = vunpack.c.l.b16 %v7542
        %v8331 = vunpack.c.h.b16 %v7542
        %v8332 = vunpack.c.l.b16 %v7543
        %v8333 = vunpack.c.h.b16 %v7543
        %v8334 = vunpack.c.l.b16 %v7544
        %v8335 = vunpack.c.h.b16 %v7544
        %v8336 = vunpack.c.l.b16 %v7545
        %v8337 = vunpack.c.h.b16 %v7545
        %v8338 = vunpack.c.l.b16 %v7546
        %v8339 = vunpack.c.h.b16 %v7546
        %v8340 = vunpack.c.l.b16 %v7547
        %v8341 = vunpack.c.h.b16 %v7547
        %v8342 = vunpack.c.l.b16 %v7548
        %v8343 = vunpack.c.h.b16 %v7548
        %v8344 = vunpack.c.l.b16 %v7549
        %v8345 = vunpack.c.h.b16 %v7549
        %v8346 = vunpack.c.l.b16 %v7550
        %v8347 = vunpack.c.h.b16 %v7550
        %v8348 = vunpack.c.l.b16 %v7551
        %v8349 = vunpack.c.h.b16 %v7551
        %v8350 = vunpack.c.l.b16 %v7552
        %v8351 = vunpack.c.h.b16 %v7552
        %v8352 = vunpack.c.l.b16 %v7553
        %v8353 = vunpack.c.h.b16 %v7553
        %v8354 = vunpack.c.l.b16 %v7554
        %v8355 = vunpack.c.h.b16 %v7554
        %v8356 = vunpack.c.l.b16 %v7555
        %v8357 = vunpack.c.h.b16 %v7555
        %v8358 = vunpack.c.l.b16 %v7556
        %v8359 = vunpack.c.h.b16 %v7556
        %v8360 = vunpack.c.l.b16 %v7557
        %v8361 = vunpack.c.h.b16 %v7557
        %v8362 = vunpack.c.l.b16 %v7558
        %v8363 = vunpack.c.h.b16 %v7558
        %v8364 = vunpack.c.l.b16 %v7559
        %v8365 = vunpack.c.h.b16 %v7559
        %v8366 = vunpack.c.l.b16 %v7560
        %v8367 = vunpack.c.h.b16 %v7560
        %v8368 = vunpack.c.l.b16 %v7561
        %v8369 = vunpack.c.h.b16 %v7561
        %v8370 = vunpack.c.l.b16 %v7562
        %v8371 = vunpack.c.h.b16 %v7562
        %v8372 = vunpack.c.l.b16 %v7563
        %v8373 = vunpack.c.h.b16 %v7563
        %v8374 = vunpack.c.l.b16 %v7564
        %v8375 = vunpack.c.h.b16 %v7564
        %v8376 = vunpack.c.l.b16 %v7565
        %v8377 = vunpack.c.h.b16 %v7565
        %v8378 = vunpack.c.l.b16 %v7566
        %v8379 = vunpack.c.h.b16 %v7566
        %v8380 = vunpack.c.l.b16 %v7567
        %v8381 = vunpack.c.h.b16 %v7567
        %v8382 = vunpack.c.l.b16 %v7568
        %v8383 = vunpack.c.h.b16 %v7568
        %v8384 = vunpack.c.l.b16 %v7569
        %v8385 = vunpack.c.h.b16 %v7569
        %v8386 = vunpack.c.l.b16 %v7570
        %v8387 = vunpack.c.h.b16 %v7570
        %v8388 = vunpack.c.l.b16 %v7571
        %v8389 = vunpack.c.h.b16 %v7571
        %v8390 = vunpack.c.l.b16 %v7572
        %v8391 = vunpack.c.h.b16 %v7572
        %v8392 = vunpack.c.l.b16 %v7573
        %v8393 = vunpack.c.h.b16 %v7573
        %v8394 = vunpack.c.l.b16 %v7574
        %v8395 = vunpack.c.h.b16 %v7574
        %v8396 = vunpack.c.l.b16 %v7575
        %v8397 = vunpack.c.h.b16 %v7575
        %v8398 = vunpack.c.l.b16 %v7576
        %v8399 = vunpack.c.h.b16 %v7576
        %v8400 = vunpack.c.l.b16 %v7577
        %v8401 = vunpack.c.h.b16 %v7577
        %v8402 = vunpack.c.l.b16 %v7578
        %v8403 = vunpack.c.h.b16 %v7578
        %v8404 = vunpack.c.l.b16 %v7579
        %v8405 = vunpack.c.h.b16 %v7579
        %v8406 = vunpack.c.l.b16 %v7580
        %v8407 = vunpack.c.h.b16 %v7580
        %v8408 = vunpack.c.l.b16 %v7581
        %v8409 = vunpack.c.h.b16 %v7581
        %v8410 = vunpack.c.l.b16 %v7582
        %v8411 = vunpack.c.h.b16 %v7582
        %v8412 = vunpack.c.l.b16 %v7583
        %v8413 = vunpack.c.h.b16 %v7583
        %v8414 = vunpack.c.l.b16 %v7584
        %v8415 = vunpack.c.h.b16 %v7584
        %v8416 = vunpack.c.l.b16 %v7585
        %v8417 = vunpack.c.h.b16 %v7585
        %v8418 = vunpack.c.l.b16 %v7586
        %v8419 = vunpack.c.h.b16 %v7586
        %v8420 = vunpack.c.l.b16 %v7587
        %v8421 = vunpack.c.h.b16 %v7587
        %v8422 = vunpack.c.l.b16 %v7588
        %v8423 = vunpack.c.h.b16 %v7588
        %v8424 = vunpack.c.l.b16 %v7589
        %v8425 = vunpack.c.h.b16 %v7589
        %v8426 = vunpack.c.l.b16 %v7590
        %v8427 = vunpack.c.h.b16 %v7590
        %v8428 = vunpack.c.l.b16 %v7591
        %v8429 = vunpack.c.h.b16 %v7591
        %v8430 = vunpack.c.l.b16 %v7592
        %v8431 = vunpack.c.h.b16 %v7592
        %v8432 = vunpack.c.l.b16 %v7593
        %v8433 = vunpack.c.h.b16 %v7593
        %v8434 = vunpack.c.l.b16 %v7594
        %v8435 = vunpack.c.h.b16 %v7594
        %v8436 = vunpack.c.l.b16 %v7595
        %v8437 = vunpack.c.h.b16 %v7595
        %v8438 = vunpack.c.l.b16 %v7596
        %v8439 = vunpack.c.h.b16 %v7596
        %v8440 = vunpack.c.l.b16 %v7597
        %v8441 = vunpack.c.h.b16 %v7597
        %v8442 = vunpack.c.l.b16 %v7598
        %v8443 = vunpack.c.h.b16 %v7598
        %v8444 = vunpack.c.l.b16 %v7599
        %v8445 = vunpack.c.h.b16 %v7599
        %v8446 = vunpack.c.l.b16 %v7600
        %v8447 = vunpack.c.h.b16 %v7600
        %v8448 = vunpack.c.l.b16 %v7601
        %v8449 = vunpack.c.h.b16 %v7601
        %v8450 = vunpack.c.l.b16 %v7602
        %v8451 = vunpack.c.h.b16 %v7602
        %v8452 = vunpack.c.l.b16 %v7603
        %v8453 = vunpack.c.h.b16 %v7603
        %v8454 = vunpack.c.l.b16 %v7604
        %v8455 = vunpack.c.h.b16 %v7604
        %v8456 = vunpack.c.l.b16 %v7605
        %v8457 = vunpack.c.h.b16 %v7605
        %v8458 = vunpack.c.l.b16 %v7606
        %v8459 = vunpack.c.h.b16 %v7606
        %v8460 = vunpack.c.l.b16 %v7607
        %v8461 = vunpack.c.h.b16 %v7607
        %v8462 = vunpack.c.l.b16 %v7608
        %v8463 = vunpack.c.h.b16 %v7608
        %v8464 = vunpack.c.l.b16 %v7609
        %v8465 = vunpack.c.h.b16 %v7609
        %v8466 = vunpack.c.l.b16 %v7610
        %v8467 = vunpack.c.h.b16 %v7610
        %v8468 = vunpack.c.l.b16 %v7611
        %v8469 = vunpack.c.h.b16 %v7611
        %v8470 = vunpack.c.l.b16 %v7612
        %v8471 = vunpack.c.h.b16 %v7612
        %v8472 = vunpack.c.l.b16 %v7613
        %v8473 = vunpack.c.h.b16 %v7613
        %v8474 = vunpack.c.l.b16 %v7614
        %v8475 = vunpack.c.h.b16 %v7614
        %v8476 = vunpack.c.l.b16 %v7615
        %v8477 = vunpack.c.h.b16 %v7615
        %v8478 = vunpack.c.l.b16 %v7616
        %v8479 = vunpack.c.h.b16 %v7616
        %v8480 = vunpack.c.l.b16 %v7617
        %v8481 = vunpack.c.h.b16 %v7617
        %v8482 = vunpack.c.l.b16 %v7618
        %v8483 = vunpack.c.h.b16 %v7618
        %v8484 = vpack.c.b16 %v7910, %v7908
        %v8485 = vpack.c.b16 %v7911, %v7909
        %v8486 = vpack.c.b16 %v7914, %v7912
        %v8487 = vpack.c.b16 %v7915, %v7913
        %v8488 = vpack.c.b16 %v7918, %v7916
        %v8489 = vpack.c.b16 %v7919, %v7917
        %v8490 = vpack.c.b16 %v7922, %v7920
        %v8491 = vpack.c.b16 %v7923, %v7921
        %v8492 = vpack.c.b16 %v7926, %v7924
        %v8493 = vpack.c.b16 %v7927, %v7925
        %v8494 = vpack.c.b16 %v7930, %v7928
        %v8495 = vpack.c.b16 %v7931, %v7929
        %v8496 = vpack.c.b16 %v7934, %v7932
        %v8497 = vpack.c.b16 %v7935, %v7933
        %v8498 = vpack.c.b16 %v7938, %v7936
        %v8499 = vpack.c.b16 %v7939, %v7937
        %v8500 = vpack.c.b16 %v7942, %v7940
        %v8501 = vpack.c.b16 %v7943, %v7941
        %v8502 = vpack.c.b16 %v7946, %v7944
        %v8503 = vpack.c.b16 %v7947, %v7945
        %v8504 = vpack.c.b16 %v7950, %v7948
        %v8505 = vpack.c.b16 %v7951, %v7949
        %v8506 = vpack.c.b16 %v7954, %v7952
        %v8507 = vpack.c.b16 %v7955, %v7953
        %v8508 = vpack.c.b16 %v7958, %v7956
        %v8509 = vpack.c.b16 %v7959, %v7957
        %v8510 = vpack.c.b16 %v7962, %v7960
        %v8511 = vpack.c.b16 %v7963, %v7961
        %v8512 = vpack.c.b16 %v7966, %v7964
        %v8513 = vpack.c.b16 %v7967, %v7965
        %v8514 = vpack.c.b16 %v7970, %v7968
        %v8515 = vpack.c.b16 %v7971, %v7969
        %v8516 = vpack.c.b16 %v7974, %v7972
        %v8517 = vpack.c.b16 %v7975, %v7973
        %v8518 = vpack.c.b16 %v7978, %v7976
        %v8519 = vpack.c.b16 %v7979, %v7977
        %v8520 = vpack.c.b16 %v7982, %v7980
        %v8521 = vpack.c.b16 %v7983, %v7981
        %v8522 = vpack.c.b16 %v7986, %v7984
        %v8523 = vpack.c.b16 %v7987, %v7985
        %v8524 = vpack.c.b16 %v7990, %v7988
        %v8525 = vpack.c.b16 %v7991, %v7989
        %v8526 = vpack.c.b16 %v7994, %v7992
        %v8527 = vpack.c.b16 %v7995, %v7993
        %v8528 = vpack.c.b16 %v7998, %v7996
        %v8529 = vpack.c.b16 %v7999, %v7997
        %v8530 = vpack.c.b16 %v8002, %v8000
        %v8531 = vpack.c.b16 %v8003, %v8001
        %v8532 = vpack.c.b16 %v8006, %v8004
        %v8533 = vpack.c.b16 %v8007, %v8005
        %v8534 = vpack.c.b16 %v8010, %v8008
        %v8535 = vpack.c.b16 %v8011, %v8009
        %v8536 = vpack.c.b16 %v8014, %v8012
        %v8537 = vpack.c.b16 %v8015, %v8013
        %v8538 = vpack.c.b16 %v8018, %v8016
        %v8539 = vpack.c.b16 %v8019, %v8017
        %v8540 = vpack.c.b16 %v8022, %v8020
        %v8541 = vpack.c.b16 %v8023, %v8021
        %v8542 = vpack.c.b16 %v8026, %v8024
        %v8543 = vpack.c.b16 %v8027, %v8025
        %v8544 = vpack.c.b16 %v8030, %v8028
        %v8545 = vpack.c.b16 %v8031, %v8029
        %v8546 = vpack.c.b16 %v8034, %v8032
        %v8547 = vpack.c.b16 %v8035, %v8033
        %v8548 = vpack.c.b16 %v8038, %v8036
        %v8549 = vpack.c.b16 %v8039, %v8037
        %v8550 = vpack.c.b16 %v8042, %v8040
        %v8551 = vpack.c.b16 %v8043, %v8041
        %v8552 = vpack.c.b16 %v8046, %v8044
        %v8553 = vpack.c.b16 %v8047, %v8045
        %v8554 = vpack.c.b16 %v8050, %v8048
        %v8555 = vpack.c.b16 %v8051, %v8049
        %v8556 = vpack.c.b16 %v8054, %v8052
        %v8557 = vpack.c.b16 %v8055, %v8053
        %v8558 = vpack.c.b16 %v8058, %v8056
        %v8559 = vpack.c.b16 %v8059, %v8057
        %v8560 = vpack.c.b16 %v8062, %v8060
        %v8561 = vpack.c.b16 %v8063, %v8061
        %v8562 = vpack.c.b16 %v8066, %v8064
        %v8563 = vpack.c.b16 %v8067, %v8065
        %v8564 = vpack.c.b16 %v8070, %v8068
        %v8565 = vpack.c.b16 %v8071, %v8069
        %v8566 = vpack.c.b16 %v8074, %v8072
        %v8567 = vpack.c.b16 %v8075, %v8073
        %v8568 = vpack.c.b16 %v8078, %v8076
        %v8569 = vpack.c.b16 %v8079, %v8077
        %v8570 = vpack.c.b16 %v8082, %v8080
        %v8571 = vpack.c.b16 %v8083, %v8081
        %v8572 = vpack.c.b16 %v8086, %v8084
        %v8573 = vpack.c.b16 %v8087, %v8085
        %v8574 = vpack.c.b16 %v8090, %v8088
        %v8575 = vpack.c.b16 %v8091, %v8089
        %v8576 = vpack.c.b16 %v8094, %v8092
        %v8577 = vpack.c.b16 %v8095, %v8093
        %v8578 = vpack.c.b16 %v8098, %v8096
        %v8579 = vpack.c.b16 %v8099, %v8097
        %v8580 = vpack.c.b16 %v8102, %v8100
        %v8581 = vpack.c.b16 %v8103, %v8101
        %v8582 = vpack.c.b16 %v8106, %v8104
        %v8583 = vpack.c.b16 %v8107, %v8105
        %v8584 = vpack.c.b16 %v8110, %v8108
        %v8585 = vpack.c.b16 %v8111, %v8109
        %v8586 = vpack.c.b16 %v8114, %v8112
        %v8587 = vpack.c.b16 %v8115, %v8113
        %v8588 = vpack.c.b16 %v8118, %v8116
        %v8589 = vpack.c.b16 %v8119, %v8117
        %v8590 = vpack.c.b16 %v8122, %v8120
        %v8591 = vpack.c.b16 %v8123, %v8121
        %v8592 = vpack.c.b16 %v8126, %v8124
        %v8593 = vpack.c.b16 %v8127, %v8125
        %v8594 = vpack.c.b16 %v8130, %v8128
        %v8595 = vpack.c.b16 %v8131, %v8129
        %v8596 = vpack.c.b16 %v8134, %v8132
        %v8597 = vpack.c.b16 %v8135, %v8133
        %v8598 = vpack.c.b16 %v8138, %v8136
        %v8599 = vpack.c.b16 %v8139, %v8137
        %v8600 = vpack.c.b16 %v8142, %v8140
        %v8601 = vpack.c.b16 %v8143, %v8141
        %v8602 = vpack.c.b16 %v8146, %v8144
        %v8603 = vpack.c.b16 %v8147, %v8145
        %v8604 = vpack.c.b16 %v8150, %v8148
        %v8605 = vpack.c.b16 %v8151, %v8149
        %v8606 = vpack.c.b16 %v8154, %v8152
        %v8607 = vpack.c.b16 %v8155, %v8153
        %v8608 = vpack.c.b16 %v8158, %v8156
        %v8609 = vpack.c.b16 %v8159, %v8157
        %v8610 = vpack.c.b16 %v8162, %v8160
        %v8611 = vpack.c.b16 %v8163, %v8161
        %v8612 = vpack.c.b16 %v8166, %v8164
        %v8613 = vpack.c.b16 %v8167, %v8165
        %v8614 = vpack.c.b16 %v8170, %v8168
        %v8615 = vpack.c.b16 %v8171, %v8169
        %v8616 = vpack.c.b16 %v8174, %v8172
        %v8617 = vpack.c.b16 %v8175, %v8173
        %v8618 = vpack.c.b16 %v8178, %v8176
        %v8619 = vpack.c.b16 %v8179, %v8177
        %v8620 = vpack.c.b16 %v8182, %v8180
        %v8621 = vpack.c.b16 %v8183, %v8181
        %v8622 = vpack.c.b16 %v8186, %v8184
        %v8623 = vpack.c.b16 %v8187, %v8185
        %v8624 = vpack.c.b16 %v8190, %v8188
        %v8625 = vpack.c.b16 %v8191, %v8189
        %v8626 = vpack.c.b16 %v8194, %v8192
        %v8627 = vpack.c.b16 %v8195, %v8193
        %v8628 = vpack.c.b16 %v8198, %v8196
        %v8629 = vpack.c.b16 %v8199, %v8197
        %v8630 = vpack.c.b16 %v8202, %v8200
        %v8631 = vpack.c.b16 %v8203, %v8201
        %v8632 = vpack.c.b16 %v8206, %v8204
        %v8633 = vpack.c.b16 %v8207, %v8205
        %v8634 = vpack.c.b16 %v8210, %v8208
        %v8635 = vpack.c.b16 %v8211, %v8209
        %v8636 = vpack.c.b16 %v8214, %v8212
        %v8637 = vpack.c.b16 %v8215, %v8213
        %v8638 = vpack.c.b16 %v8218, %v8216
        %v8639 = vpack.c.b16 %v8219, %v8217
        %v8640 = vpack.c.b16 %v8222, %v8220
        %v8641 = vpack.c.b16 %v8223, %v8221
        %v8642 = vpack.c.b16 %v8226, %v8224
        %v8643 = vpack.c.b16 %v8227, %v8225
        %v8644 = vpack.c.b16 %v8230, %v8228
        %v8645 = vpack.c.b16 %v8231, %v8229
        %v8646 = vpack.c.b16 %v8234, %v8232
        %v8647 = vpack.c.b16 %v8235, %v8233
        %v8648 = vpack.c.b16 %v8238, %v8236
        %v8649 = vpack.c.b16 %v8239, %v8237
        %v8650 = vpack.c.b16 %v8242, %v8240
        %v8651 = vpack.c.b16 %v8243, %v8241
        %v8652 = vpack.c.b16 %v8246, %v8244
        %v8653 = vpack.c.b16 %v8247, %v8245
        %v8654 = vpack.c.b16 %v8250, %v8248
        %v8655 = vpack.c.b16 %v8251, %v8249
        %v8656 = vpack.c.b16 %v8254, %v8252
        %v8657 = vpack.c.b16 %v8255, %v8253
        %v8658 = vpack.c.b16 %v8258, %v8256
        %v8659 = vpack.c.b16 %v8259, %v8257
        %v8660 = vpack.c.b16 %v8262, %v8260
        %v8661 = vpack.c.b16 %v8263, %v8261
        %v8662 = vpack.c.b16 %v8266, %v8264
        %v8663 = vpack.c.b16 %v8267, %v8265
        %v8664 = vpack.c.b16 %v8270, %v8268
        %v8665 = vpack.c.b16 %v8271, %v8269
        %v8666 = vpack.c.b16 %v8274, %v8272
        %v8667 = vpack.c.b16 %v8275, %v8273
        %v8668 = vpack.c.b16 %v8278, %v8276
        %v8669 = vpack.c.b16 %v8279, %v8277
        %v8670 = vpack.c.b16 %v8282, %v8280
        %v8671 = vpack.c.b16 %v8283, %v8281
        %v8672 = vpack.c.b16 %v8286, %v8284
        %v8673 = vpack.c.b16 %v8287, %v8285
        %v8674 = vpack.c.b16 %v8290, %v8288
        %v8675 = vpack.c.b16 %v8291, %v8289
        %v8676 = vpack.c.b16 %v8294, %v8292
        %v8677 = vpack.c.b16 %v8295, %v8293
        %v8678 = vpack.c.b16 %v8298, %v8296
        %v8679 = vpack.c.b16 %v8299, %v8297
        %v8680 = vpack.c.b16 %v8302, %v8300
        %v8681 = vpack.c.b16 %v8303, %v8301
        %v8682 = vpack.c.b16 %v8306, %v8304
        %v8683 = vpack.c.b16 %v8307, %v8305
        %v8684 = vpack.c.b16 %v8310, %v8308
        %v8685 = vpack.c.b16 %v8311, %v8309
        %v8686 = vpack.c.b16 %v8314, %v8312
        %v8687 = vpack.c.b16 %v8315, %v8313
        %v8688 = vpack.c.b16 %v8318, %v8316
        %v8689 = vpack.c.b16 %v8319, %v8317
        %v8690 = vpack.c.b16 %v8322, %v8320
        %v8691 = vpack.c.b16 %v8323, %v8321
        %v8692 = vpack.c.b16 %v8326, %v8324
        %v8693 = vpack.c.b16 %v8327, %v8325
        %v8694 = vpack.c.b16 %v8330, %v8328
        %v8695 = vpack.c.b16 %v8331, %v8329
        %v8696 = vpack.c.b16 %v8334, %v8332
        %v8697 = vpack.c.b16 %v8335, %v8333
        %v8698 = vpack.c.b16 %v8338, %v8336
        %v8699 = vpack.c.b16 %v8339, %v8337
        %v8700 = vpack.c.b16 %v8342, %v8340
        %v8701 = vpack.c.b16 %v8343, %v8341
        %v8702 = vpack.c.b16 %v8346, %v8344
        %v8703 = vpack.c.b16 %v8347, %v8345
        %v8704 = vpack.c.b16 %v8350, %v8348
        %v8705 = vpack.c.b16 %v8351, %v8349
        %v8706 = vpack.c.b16 %v8354, %v8352
        %v8707 = vpack.c.b16 %v8355, %v8353
        %v8708 = vpack.c.b16 %v8358, %v8356
        %v8709 = vpack.c.b16 %v8359, %v8357
        %v8710 = vpack.c.b16 %v8362, %v8360
        %v8711 = vpack.c.b16 %v8363, %v8361
        %v8712 = vpack.c.b16 %v8366, %v8364
        %v8713 = vpack.c.b16 %v8367, %v8365
        %v8714 = vpack.c.b16 %v8370, %v8368
        %v8715 = vpack.c.b16 %v8371, %v8369
        %v8716 = vpack.c.b16 %v8374, %v8372
        %v8717 = vpack.c.b16 %v8375, %v8373
        %v8718 = vpack.c.b16 %v8378, %v8376
        %v8719 = vpack.c.b16 %v8379, %v8377
        %v8720 = vpack.c.b16 %v8382, %v8380
        %v8721 = vpack.c.b16 %v8383, %v8381
        %v8722 = vpack.c.b16 %v8386, %v8384
        %v8723 = vpack.c.b16 %v8387, %v8385
        %v8724 = vpack.c.b16 %v8390, %v8388
        %v8725 = vpack.c.b16 %v8391, %v8389
        %v8726 = vpack.c.b16 %v8394, %v8392
        %v8727 = vpack.c.b16 %v8395, %v8393
        %v8728 = vpack.c.b16 %v8398, %v8396
        %v8729 = vpack.c.b16 %v8399, %v8397
        %v8730 = vpack.c.b16 %v8402, %v8400
        %v8731 = vpack.c.b16 %v8403, %v8401
        %v8732 = vpack.c.b16 %v8406, %v8404
        %v8733 = vpack.c.b16 %v8407, %v8405
        %v8734 = vpack.c.b16 %v8410, %v8408
        %v8735 = vpack.c.b16 %v8411, %v8409
        %v8736 = vpack.c.b16 %v8414, %v8412
        %v8737 = vpack.c.b16 %v8415, %v8413
        %v8738 = vpack.c.b16 %v8418, %v8416
        %v8739 = vpack.c.b16 %v8419, %v8417
        %v8740 = vpack.c.b16 %v8422, %v8420
        %v8741 = vpack.c.b16 %v8423, %v8421
        %v8742 = vpack.c.b16 %v8426, %v8424
        %v8743 = vpack.c.b16 %v8427, %v8425
        %v8744 = vpack.c.b16 %v8430, %v8428
        %v8745 = vpack.c.b16 %v8431, %v8429
        %v8746 = vpack.c.b16 %v8434, %v8432
        %v8747 = vpack.c.b16 %v8435, %v8433
        %v8748 = vpack.c.b16 %v8438, %v8436
        %v8749 = vpack.c.b16 %v8439, %v8437
        %v8750 = vpack.c.b16 %v8442, %v8440
        %v8751 = vpack.c.b16 %v8443, %v8441
        %v8752 = vpack.c.b16 %v8446, %v8444
        %v8753 = vpack.c.b16 %v8447, %v8445
        %v8754 = vpack.c.b16 %v8450, %v8448
        %v8755 = vpack.c.b16 %v8451, %v8449
        %v8756 = vpack.c.b16 %v8454, %v8452
        %v8757 = vpack.c.b16 %v8455, %v8453
        %v8758 = vpack.c.b16 %v8458, %v8456
        %v8759 = vpack.c.b16 %v8459, %v8457
        %v8760 = vpack.c.b16 %v8462, %v8460
        %v8761 = vpack.c.b16 %v8463, %v8461
        %v8762 = vpack.c.b16 %v8466, %v8464
        %v8763 = vpack.c.b16 %v8467, %v8465
        %v8764 = vpack.c.b16 %v8470, %v8468
        %v8765 = vpack.c.b16 %v8471, %v8469
        %v8766 = vpack.c.b16 %v8474, %v8472
        %v8767 = vpack.c.b16 %v8475, %v8473
        %v8768 = vpack.c.b16 %v8478, %v8476
        %v8769 = vpack.c.b16 %v8479, %v8477
        %v8770 = vpack.c.b16 %v8482, %v8480
        %v8771 = vpack.c.b16 %v8483, %v8481
        %v9061 = vlaneseq
        %v9062 = vshrl.u32 %v9061, 7
        %v9063 = vsub.s32 0, %v9062
        %v9064 = vrot.slane %v7619, %v9063
        %v9065 = vlaneseq
        %v9066 = vshrl.u32 %v9065, 7
        %v9067 = vsub.s32 1, %v9066
        %v9068 = vrot.slane %v7619, %v9067
        %9071 = vmatprep.subr.bf16.mxu0 %v8499
        %9072 = vmatpush1.bf16.msra.mxu0 %v8498
        %9073 = vmatprep.subr.bf16.mxu0 %v8497
        %9074 = vmatpush1.bf16.msra.mxu0 %v8496
        %9075 = vmatprep.subr.bf16.mxu0 %v8495
        %9076 = vmatpush1.bf16.msra.mxu0 %v8494
        %9077 = vmatprep.subr.bf16.mxu0 %v8493
        %9078 = vmatpush1.bf16.msra.mxu0 %v8492
        %9079 = vmatprep.subr.bf16.mxu0 %v8491
        %9080 = vmatpush1.bf16.msra.mxu0 %v8490
        %9081 = vmatprep.subr.bf16.mxu0 %v8489
        %9082 = vmatpush1.bf16.msra.mxu0 %v8488
        %9083 = vmatprep.subr.bf16.mxu0 %v8487
        %9084 = vmatpush1.bf16.msra.mxu0 %v8486
        %9085 = vmatprep.subr.bf16.mxu0 %v8485
        %9086 = vmatpush1.bf16.msra.mxu0 %v8484
        %9087 = vmatprep.subr.bf16.mxu0 %v8515
        %9088 = vmatpush2.bf16.msra.mxu0 %v8514
        %9089 = vmatprep.subr.bf16.mxu0 %v8513
        %9090 = vmatpush2.bf16.msra.mxu0 %v8512
        %9091 = vmatprep.subr.bf16.mxu0 %v8511
        %9092 = vmatpush2.bf16.msra.mxu0 %v8510
        %9093 = vmatprep.subr.bf16.mxu0 %v8509
        %9094 = vmatpush2.bf16.msra.mxu0 %v8508
        %9095 = vmatprep.subr.bf16.mxu0 %v8507
        %9096 = vmatpush2.bf16.msra.mxu0 %v8506
        %9097 = vmatprep.subr.bf16.mxu0 %v8505
        %9098 = vmatpush2.bf16.msra.mxu0 %v8504
        %9099 = vmatprep.subr.bf16.mxu0 %v8503
        %9100 = vmatpush2.bf16.msra.mxu0 %v8502
        %9101 = vmatprep.subr.bf16.mxu0 %v8501
        %9102 = vmatpush2.bf16.msra.mxu0 %v8500
        %9103 = vmatprep.mubr.bf16.mxu0 %v7314
        %9104 = vmatmul.mubr.bf16.gmra.mxu0 %v7313
        %v9105 = vpop.f32.mrf.mxu0
        %v9106 = vadd.f32 %v9064, %v9105
        %v9107 = vpop.f32.mrf.mxu0
        %v9108 = vadd.f32 %v9068, %v9107
        %v9109 = vpop.f32.mrf.mxu0
        %v9110 = vpop.f32.mrf.mxu0
        %9111 = vdwg.mxu0
        %9112 = vmatprep.subr.bf16.mxu0 %v8531
        %9113 = vmatpush1.bf16.msra.mxu0 %v8530
        %9114 = vmatprep.subr.bf16.mxu0 %v8529
        %9115 = vmatpush1.bf16.msra.mxu0 %v8528
        %9116 = vmatprep.subr.bf16.mxu0 %v8527
        %9117 = vmatpush1.bf16.msra.mxu0 %v8526
        %9118 = vmatprep.subr.bf16.mxu0 %v8525
        %9119 = vmatpush1.bf16.msra.mxu0 %v8524
        %9120 = vmatprep.subr.bf16.mxu0 %v8523
        %9121 = vmatpush1.bf16.msra.mxu0 %v8522
        %9122 = vmatprep.subr.bf16.mxu0 %v8521
        %9123 = vmatpush1.bf16.msra.mxu0 %v8520
        %9124 = vmatprep.subr.bf16.mxu0 %v8519
        %9125 = vmatpush1.bf16.msra.mxu0 %v8518
        %9126 = vmatprep.subr.bf16.mxu0 %v8517
        %9127 = vmatpush1.bf16.msra.mxu0 %v8516
        %9128 = vmatprep.subr.bf16.mxu0 %v8547
        %9129 = vmatpush2.bf16.msra.mxu0 %v8546
        %9130 = vmatprep.subr.bf16.mxu0 %v8545
        %9131 = vmatpush2.bf16.msra.mxu0 %v8544
        %9132 = vmatprep.subr.bf16.mxu0 %v8543
        %9133 = vmatpush2.bf16.msra.mxu0 %v8542
        %9134 = vmatprep.subr.bf16.mxu0 %v8541
        %9135 = vmatpush2.bf16.msra.mxu0 %v8540
        %9136 = vmatprep.subr.bf16.mxu0 %v8539
        %9137 = vmatpush2.bf16.msra.mxu0 %v8538
        %9138 = vmatprep.subr.bf16.mxu0 %v8537
        %9139 = vmatpush2.bf16.msra.mxu0 %v8536
        %9140 = vmatprep.subr.bf16.mxu0 %v8535
        %9141 = vmatpush2.bf16.msra.mxu0 %v8534
        %9142 = vmatprep.subr.bf16.mxu0 %v8533
        %9143 = vmatpush2.bf16.msra.mxu0 %v8532
        %9144 = vmatprep.mubr.bf16.mxu0 %v7316
        %9145 = vmatmul.mubr.bf16.gmra.mxu0 %v7315
        %v9146 = vpop.f32.mrf.mxu0
        %v9147 = vadd.f32 %v9106, %v9146
        %v9148 = vpop.f32.mrf.mxu0
        %v9149 = vadd.f32 %v9108, %v9148
        %v9150 = vpop.f32.mrf.mxu0
        %v9151 = vpop.f32.mrf.mxu0
        %9152 = vdwg.mxu0
        %9153 = vmatprep.subr.bf16.mxu0 %v8563
        %9154 = vmatpush1.bf16.msra.mxu0 %v8562
        %9155 = vmatprep.subr.bf16.mxu0 %v8561
        %9156 = vmatpush1.bf16.msra.mxu0 %v8560
        %9157 = vmatprep.subr.bf16.mxu0 %v8559
        %9158 = vmatpush1.bf16.msra.mxu0 %v8558
        %9159 = vmatprep.subr.bf16.mxu0 %v8557
        %9160 = vmatpush1.bf16.msra.mxu0 %v8556
        %9161 = vmatprep.subr.bf16.mxu0 %v8555
        %9162 = vmatpush1.bf16.msra.mxu0 %v8554
        %9163 = vmatprep.subr.bf16.mxu0 %v8553
        %9164 = vmatpush1.bf16.msra.mxu0 %v8552
        %9165 = vmatprep.subr.bf16.mxu0 %v8551
        %9166 = vmatpush1.bf16.msra.mxu0 %v8550
        %9167 = vmatprep.subr.bf16.mxu0 %v8549
        %9168 = vmatpush1.bf16.msra.mxu0 %v8548
        %9169 = vmatprep.subr.bf16.mxu0 %v8579
        %9170 = vmatpush2.bf16.msra.mxu0 %v8578
        %9171 = vmatprep.subr.bf16.mxu0 %v8577
        %9172 = vmatpush2.bf16.msra.mxu0 %v8576
        %9173 = vmatprep.subr.bf16.mxu0 %v8575
        %9174 = vmatpush2.bf16.msra.mxu0 %v8574
        %9175 = vmatprep.subr.bf16.mxu0 %v8573
        %9176 = vmatpush2.bf16.msra.mxu0 %v8572
        %9177 = vmatprep.subr.bf16.mxu0 %v8571
        %9178 = vmatpush2.bf16.msra.mxu0 %v8570
        %9179 = vmatprep.subr.bf16.mxu0 %v8569
        %9180 = vmatpush2.bf16.msra.mxu0 %v8568
        %9181 = vmatprep.subr.bf16.mxu0 %v8567
        %9182 = vmatpush2.bf16.msra.mxu0 %v8566
        %9183 = vmatprep.subr.bf16.mxu0 %v8565
        %9184 = vmatpush2.bf16.msra.mxu0 %v8564
        %9185 = vmatprep.mubr.bf16.mxu0 %v7318
        %9186 = vmatmul.mubr.bf16.gmra.mxu0 %v7317
        %v9187 = vpop.f32.mrf.mxu0
        %v9188 = vadd.f32 %v9147, %v9187
        %v9189 = vpop.f32.mrf.mxu0
        %v9190 = vadd.f32 %v9149, %v9189
        %v9191 = vpop.f32.mrf.mxu0
        %v9192 = vpop.f32.mrf.mxu0
        %9193 = vdwg.mxu0
        %9194 = vmatprep.subr.bf16.mxu0 %v8595
        %9195 = vmatpush1.bf16.msra.mxu0 %v8594
        %9196 = vmatprep.subr.bf16.mxu0 %v8593
        %9197 = vmatpush1.bf16.msra.mxu0 %v8592
        %9198 = vmatprep.subr.bf16.mxu0 %v8591
        %9199 = vmatpush1.bf16.msra.mxu0 %v8590
        %9200 = vmatprep.subr.bf16.mxu0 %v8589
        %9201 = vmatpush1.bf16.msra.mxu0 %v8588
        %9202 = vmatprep.subr.bf16.mxu0 %v8587
        %9203 = vmatpush1.bf16.msra.mxu0 %v8586
        %9204 = vmatprep.subr.bf16.mxu0 %v8585
        %9205 = vmatpush1.bf16.msra.mxu0 %v8584
        %9206 = vmatprep.subr.bf16.mxu0 %v8583
        %9207 = vmatpush1.bf16.msra.mxu0 %v8582
        %9208 = vmatprep.subr.bf16.mxu0 %v8581
        %9209 = vmatpush1.bf16.msra.mxu0 %v8580
        %9210 = vmatprep.subr.bf16.mxu0 %v8611
        %9211 = vmatpush2.bf16.msra.mxu0 %v8610
        %9212 = vmatprep.subr.bf16.mxu0 %v8609
        %9213 = vmatpush2.bf16.msra.mxu0 %v8608
        %9214 = vmatprep.subr.bf16.mxu0 %v8607
        %9215 = vmatpush2.bf16.msra.mxu0 %v8606
        %9216 = vmatprep.subr.bf16.mxu0 %v8605
        %9217 = vmatpush2.bf16.msra.mxu0 %v8604
        %9218 = vmatprep.subr.bf16.mxu0 %v8603
        %9219 = vmatpush2.bf16.msra.mxu0 %v8602
        %9220 = vmatprep.subr.bf16.mxu0 %v8601
        %9221 = vmatpush2.bf16.msra.mxu0 %v8600
        %9222 = vmatprep.subr.bf16.mxu0 %v8599
        %9223 = vmatpush2.bf16.msra.mxu0 %v8598
        %9224 = vmatprep.subr.bf16.mxu0 %v8597
        %9225 = vmatpush2.bf16.msra.mxu0 %v8596
        %9226 = vmatprep.mubr.bf16.mxu0 %v7320
        %9227 = vmatmul.mubr.bf16.gmra.mxu0 %v7319
        %v9228 = vpop.f32.mrf.mxu0
        %v9229 = vadd.f32 %v9188, %v9228
        %v9230 = vpop.f32.mrf.mxu0
        %v9231 = vadd.f32 %v9190, %v9230
        %v9232 = vpop.f32.mrf.mxu0
        %v9233 = vpop.f32.mrf.mxu0
        %9234 = vdwg.mxu0
        %9235 = vmatprep.subr.bf16.mxu0 %v8627
        %9236 = vmatpush1.bf16.msra.mxu0 %v8626
        %9237 = vmatprep.subr.bf16.mxu0 %v8625
        %9238 = vmatpush1.bf16.msra.mxu0 %v8624
        %9239 = vmatprep.subr.bf16.mxu0 %v8623
        %9240 = vmatpush1.bf16.msra.mxu0 %v8622
        %9241 = vmatprep.subr.bf16.mxu0 %v8621
        %9242 = vmatpush1.bf16.msra.mxu0 %v8620
        %9243 = vmatprep.subr.bf16.mxu0 %v8619
        %9244 = vmatpush1.bf16.msra.mxu0 %v8618
        %9245 = vmatprep.subr.bf16.mxu0 %v8617
        %9246 = vmatpush1.bf16.msra.mxu0 %v8616
        %9247 = vmatprep.subr.bf16.mxu0 %v8615
        %9248 = vmatpush1.bf16.msra.mxu0 %v8614
        %9249 = vmatprep.subr.bf16.mxu0 %v8613
        %9250 = vmatpush1.bf16.msra.mxu0 %v8612
        %9251 = vmatprep.subr.bf16.mxu0 %v8643
        %9252 = vmatpush2.bf16.msra.mxu0 %v8642
        %9253 = vmatprep.subr.bf16.mxu0 %v8641
        %9254 = vmatpush2.bf16.msra.mxu0 %v8640
        %9255 = vmatprep.subr.bf16.mxu0 %v8639
        %9256 = vmatpush2.bf16.msra.mxu0 %v8638
        %9257 = vmatprep.subr.bf16.mxu0 %v8637
        %9258 = vmatpush2.bf16.msra.mxu0 %v8636
        %9259 = vmatprep.subr.bf16.mxu0 %v8635
        %9260 = vmatpush2.bf16.msra.mxu0 %v8634
        %9261 = vmatprep.subr.bf16.mxu0 %v8633
        %9262 = vmatpush2.bf16.msra.mxu0 %v8632
        %9263 = vmatprep.subr.bf16.mxu0 %v8631
        %9264 = vmatpush2.bf16.msra.mxu0 %v8630
        %9265 = vmatprep.subr.bf16.mxu0 %v8629
        %9266 = vmatpush2.bf16.msra.mxu0 %v8628
        %9267 = vmatprep.mubr.bf16.mxu0 %v7322
        %9268 = vmatmul.mubr.bf16.gmra.mxu0 %v7321
        %v9269 = vpop.f32.mrf.mxu0
        %v9270 = vadd.f32 %v9229, %v9269
        %v9271 = vpop.f32.mrf.mxu0
        %v9272 = vadd.f32 %v9231, %v9271
        %v9273 = vpop.f32.mrf.mxu0
        %v9274 = vpop.f32.mrf.mxu0
        %9275 = vdwg.mxu0
        %9276 = vmatprep.subr.bf16.mxu0 %v8659
        %9277 = vmatpush1.bf16.msra.mxu0 %v8658
        %9278 = vmatprep.subr.bf16.mxu0 %v8657
        %9279 = vmatpush1.bf16.msra.mxu0 %v8656
        %9280 = vmatprep.subr.bf16.mxu0 %v8655
        %9281 = vmatpush1.bf16.msra.mxu0 %v8654
        %9282 = vmatprep.subr.bf16.mxu0 %v8653
        %9283 = vmatpush1.bf16.msra.mxu0 %v8652
        %9284 = vmatprep.subr.bf16.mxu0 %v8651
        %9285 = vmatpush1.bf16.msra.mxu0 %v8650
        %9286 = vmatprep.subr.bf16.mxu0 %v8649
        %9287 = vmatpush1.bf16.msra.mxu0 %v8648
        %9288 = vmatprep.subr.bf16.mxu0 %v8647
        %9289 = vmatpush1.bf16.msra.mxu0 %v8646
        %9290 = vmatprep.subr.bf16.mxu0 %v8645
        %9291 = vmatpush1.bf16.msra.mxu0 %v8644
        %9292 = vmatprep.subr.bf16.mxu0 %v8675
        %9293 = vmatpush2.bf16.msra.mxu0 %v8674
        %9294 = vmatprep.subr.bf16.mxu0 %v8673
        %9295 = vmatpush2.bf16.msra.mxu0 %v8672
        %9296 = vmatprep.subr.bf16.mxu0 %v8671
        %9297 = vmatpush2.bf16.msra.mxu0 %v8670
        %9298 = vmatprep.subr.bf16.mxu0 %v8669
        %9299 = vmatpush2.bf16.msra.mxu0 %v8668
        %9300 = vmatprep.subr.bf16.mxu0 %v8667
        %9301 = vmatpush2.bf16.msra.mxu0 %v8666
        %9302 = vmatprep.subr.bf16.mxu0 %v8665
        %9303 = vmatpush2.bf16.msra.mxu0 %v8664
        %9304 = vmatprep.subr.bf16.mxu0 %v8663
        %9305 = vmatpush2.bf16.msra.mxu0 %v8662
        %9306 = vmatprep.subr.bf16.mxu0 %v8661
        %9307 = vmatpush2.bf16.msra.mxu0 %v8660
        %9308 = vmatprep.mubr.bf16.mxu0 %v7324
        %9309 = vmatmul.mubr.bf16.gmra.mxu0 %v7323
        %v9310 = vpop.f32.mrf.mxu0
        %v9311 = vadd.f32 %v9270, %v9310
        %v9312 = vpop.f32.mrf.mxu0
        %v9313 = vadd.f32 %v9272, %v9312
        %v9314 = vpop.f32.mrf.mxu0
        %v9315 = vpop.f32.mrf.mxu0
        %9316 = vdwg.mxu0
        %9317 = vmatprep.subr.bf16.mxu0 %v8691
        %9318 = vmatpush1.bf16.msra.mxu0 %v8690
        %9319 = vmatprep.subr.bf16.mxu0 %v8689
        %9320 = vmatpush1.bf16.msra.mxu0 %v8688
        %9321 = vmatprep.subr.bf16.mxu0 %v8687
        %9322 = vmatpush1.bf16.msra.mxu0 %v8686
        %9323 = vmatprep.subr.bf16.mxu0 %v8685
        %9324 = vmatpush1.bf16.msra.mxu0 %v8684
        %9325 = vmatprep.subr.bf16.mxu0 %v8683
        %9326 = vmatpush1.bf16.msra.mxu0 %v8682
        %9327 = vmatprep.subr.bf16.mxu0 %v8681
        %9328 = vmatpush1.bf16.msra.mxu0 %v8680
        %9329 = vmatprep.subr.bf16.mxu0 %v8679
        %9330 = vmatpush1.bf16.msra.mxu0 %v8678
        %9331 = vmatprep.subr.bf16.mxu0 %v8677
        %9332 = vmatpush1.bf16.msra.mxu0 %v8676
        %9333 = vmatprep.subr.bf16.mxu0 %v8707
        %9334 = vmatpush2.bf16.msra.mxu0 %v8706
        %9335 = vmatprep.subr.bf16.mxu0 %v8705
        %9336 = vmatpush2.bf16.msra.mxu0 %v8704
        %9337 = vmatprep.subr.bf16.mxu0 %v8703
        %9338 = vmatpush2.bf16.msra.mxu0 %v8702
        %9339 = vmatprep.subr.bf16.mxu0 %v8701
        %9340 = vmatpush2.bf16.msra.mxu0 %v8700
        %9341 = vmatprep.subr.bf16.mxu0 %v8699
        %9342 = vmatpush2.bf16.msra.mxu0 %v8698
        %9343 = vmatprep.subr.bf16.mxu0 %v8697
        %9344 = vmatpush2.bf16.msra.mxu0 %v8696
        %9345 = vmatprep.subr.bf16.mxu0 %v8695
        %9346 = vmatpush2.bf16.msra.mxu0 %v8694
        %9347 = vmatprep.subr.bf16.mxu0 %v8693
        %9348 = vmatpush2.bf16.msra.mxu0 %v8692
        %9349 = vmatprep.mubr.bf16.mxu0 %v7326
        %9350 = vmatmul.mubr.bf16.gmra.mxu0 %v7325
        %v9351 = vpop.f32.mrf.mxu0
        %v9352 = vadd.f32 %v9311, %v9351
        %v9353 = vpop.f32.mrf.mxu0
        %v9354 = vadd.f32 %v9313, %v9353
        %v9355 = vpop.f32.mrf.mxu0
        %v9356 = vpop.f32.mrf.mxu0
        %9357 = vdwg.mxu0
        %9358 = vmatprep.subr.bf16.mxu0 %v8723
        %9359 = vmatpush1.bf16.msra.mxu0 %v8722
        %9360 = vmatprep.subr.bf16.mxu0 %v8721
        %9361 = vmatpush1.bf16.msra.mxu0 %v8720
        %9362 = vmatprep.subr.bf16.mxu0 %v8719
        %9363 = vmatpush1.bf16.msra.mxu0 %v8718
        %9364 = vmatprep.subr.bf16.mxu0 %v8717
        %9365 = vmatpush1.bf16.msra.mxu0 %v8716
        %9366 = vmatprep.subr.bf16.mxu0 %v8715
        %9367 = vmatpush1.bf16.msra.mxu0 %v8714
        %9368 = vmatprep.subr.bf16.mxu0 %v8713
        %9369 = vmatpush1.bf16.msra.mxu0 %v8712
        %9370 = vmatprep.subr.bf16.mxu0 %v8711
        %9371 = vmatpush1.bf16.msra.mxu0 %v8710
        %9372 = vmatprep.subr.bf16.mxu0 %v8709
        %9373 = vmatpush1.bf16.msra.mxu0 %v8708
        %9374 = vmatprep.subr.bf16.mxu0 %v8739
        %9375 = vmatpush2.bf16.msra.mxu0 %v8738
        %9376 = vmatprep.subr.bf16.mxu0 %v8737
        %9377 = vmatpush2.bf16.msra.mxu0 %v8736
        %9378 = vmatprep.subr.bf16.mxu0 %v8735
        %9379 = vmatpush2.bf16.msra.mxu0 %v8734
        %9380 = vmatprep.subr.bf16.mxu0 %v8733
        %9381 = vmatpush2.bf16.msra.mxu0 %v8732
        %9382 = vmatprep.subr.bf16.mxu0 %v8731
        %9383 = vmatpush2.bf16.msra.mxu0 %v8730
        %9384 = vmatprep.subr.bf16.mxu0 %v8729
        %9385 = vmatpush2.bf16.msra.mxu0 %v8728
        %9386 = vmatprep.subr.bf16.mxu0 %v8727
        %9387 = vmatpush2.bf16.msra.mxu0 %v8726
        %9388 = vmatprep.subr.bf16.mxu0 %v8725
        %9389 = vmatpush2.bf16.msra.mxu0 %v8724
        %9390 = vmatprep.mubr.bf16.mxu0 %v7328
        %9391 = vmatmul.mubr.bf16.gmra.mxu0 %v7327
        %v9392 = vpop.f32.mrf.mxu0
        %v9393 = vadd.f32 %v9352, %v9392
        %v9394 = vpop.f32.mrf.mxu0
        %v9395 = vadd.f32 %v9354, %v9394
        %v9396 = vpop.f32.mrf.mxu0
        %v9397 = vpop.f32.mrf.mxu0
        %9398 = vdwg.mxu0
        %9399 = vmatprep.subr.bf16.mxu0 %v8755
        %9400 = vmatpush1.bf16.msra.mxu0 %v8754
        %9401 = vmatprep.subr.bf16.mxu0 %v8753
        %9402 = vmatpush1.bf16.msra.mxu0 %v8752
        %9403 = vmatprep.subr.bf16.mxu0 %v8751
        %9404 = vmatpush1.bf16.msra.mxu0 %v8750
        %9405 = vmatprep.subr.bf16.mxu0 %v8749
        %9406 = vmatpush1.bf16.msra.mxu0 %v8748
        %9407 = vmatprep.subr.bf16.mxu0 %v8747
        %9408 = vmatpush1.bf16.msra.mxu0 %v8746
        %9409 = vmatprep.subr.bf16.mxu0 %v8745
        %9410 = vmatpush1.bf16.msra.mxu0 %v8744
        %9411 = vmatprep.subr.bf16.mxu0 %v8743
        %9412 = vmatpush1.bf16.msra.mxu0 %v8742
        %9413 = vmatprep.subr.bf16.mxu0 %v8741
        %9414 = vmatpush1.bf16.msra.mxu0 %v8740
        %9415 = vmatprep.subr.bf16.mxu0 %v8771
        %9416 = vmatpush2.bf16.msra.mxu0 %v8770
        %9417 = vmatprep.subr.bf16.mxu0 %v8769
        %9418 = vmatpush2.bf16.msra.mxu0 %v8768
        %9419 = vmatprep.subr.bf16.mxu0 %v8767
        %9420 = vmatpush2.bf16.msra.mxu0 %v8766
        %9421 = vmatprep.subr.bf16.mxu0 %v8765
        %9422 = vmatpush2.bf16.msra.mxu0 %v8764
        %9423 = vmatprep.subr.bf16.mxu0 %v8763
        %9424 = vmatpush2.bf16.msra.mxu0 %v8762
        %9425 = vmatprep.subr.bf16.mxu0 %v8761
        %9426 = vmatpush2.bf16.msra.mxu0 %v8760
        %9427 = vmatprep.subr.bf16.mxu0 %v8759
        %9428 = vmatpush2.bf16.msra.mxu0 %v8758
        %9429 = vmatprep.subr.bf16.mxu0 %v8757
        %9430 = vmatpush2.bf16.msra.mxu0 %v8756
        %9431 = vmatprep.mubr.bf16.mxu0 %v7330
        %9432 = vmatmul.mubr.bf16.gmra.mxu0 %v7329
        %v9433 = vpop.f32.mrf.mxu0
        %v9434 = vadd.f32 %v9393, %v9433
        %v9435 = vpop.f32.mrf.mxu0
        %v9436 = vadd.f32 %v9395, %v9435
        %v9437 = vpop.f32.mrf.mxu0
        %v9438 = vpop.f32.mrf.mxu0
        %9439 = vdwg.mxu0
        %vm9440 = vcmp.gt.f32.partialorder %v9434, 0.0
        %vm9441 = vcmp.gt.f32.partialorder %v9436, 0.0
        %v9442 = vmin.f32 %v9434, 0.0
        %v9443 = vmin.f32 %v9436, 0.0
        %v9444 = vmul.f32 %v9442, 1.442695
        %v9445 = vpow.pop %v9444
        %v9446 = vmul.f32 %v9443, 1.442695
        %v9447 = vpow.pop %v9446
        %v9448 = vsub.f32 %v9445, 1.0
        %v9449 = vsub.f32 %v9447, 1.0
        %v9450 = vsel %vm9440, %v9434, %v9448
        %v9451 = vsel %vm9441, %v9436, %v9449
        %v9452 = vpack.c.bf16 %v9450, %v9450
        %v9453 = vpack.c.bf16 %v9451, %v9451
        %v9454 = vld [vmem:[#allocation22] sm:$0xff]
        %v9455 = vld [vmem:[#allocation22 + $0x8] sm:$0xff]
        %v9456 = vld [vmem:[#allocation22 + $0x10] sm:$0xff]
        %v9457 = vld [vmem:[#allocation22 + $0x18] sm:$0xff]
        %v9458 = vld [vmem:[#allocation22 + $0x20] sm:$0xff]
        %v9459 = vld [vmem:[#allocation22 + $0x28] sm:$0xff]
        %v9460 = vld [vmem:[#allocation22 + $0x30] sm:$0xff]
        %v9461 = vld [vmem:[#allocation22 + $0x38] sm:$0xff]
        %v9462 = vld [vmem:[#allocation22 + $0x40] sm:$0xff]
        %v9463 = vld [vmem:[#allocation22 + $0x48] sm:$0xff]
        %v9464 = vld [vmem:[#allocation22 + $0x50] sm:$0xff]
        %v9465 = vld [vmem:[#allocation22 + $0x58] sm:$0xff]
        %v9466 = vld [vmem:[#allocation22 + $0x60] sm:$0xff]
        %v9467 = vld [vmem:[#allocation22 + $0x68] sm:$0xff]
        %v9468 = vld [vmem:[#allocation22 + $0x70] sm:$0xff]
        %v9469 = vld [vmem:[#allocation22 + $0x78] sm:$0xff]
        %v9470 = vld [vmem:[#allocation22 + $0x80] sm:$0xff]
        %v9471 = vld [vmem:[#allocation22 + $0x88] sm:$0xff]
        %v9472 = vld [vmem:[#allocation22 + $0x90] sm:$0xff]
        %v9473 = vld [vmem:[#allocation22 + $0x98] sm:$0xff]
        %v9474 = vld [vmem:[#allocation22 + $0xa0] sm:$0xff]
        %v9475 = vld [vmem:[#allocation22 + $0xa8] sm:$0xff]
        %v9476 = vld [vmem:[#allocation22 + $0xb0] sm:$0xff]
        %v9477 = vld [vmem:[#allocation22 + $0xb8] sm:$0xff]
        %v9478 = vld [vmem:[#allocation22 + $0xc0] sm:$0xff]
        %v9479 = vld [vmem:[#allocation22 + $0xc8] sm:$0xff]
        %v9480 = vld [vmem:[#allocation22 + $0xd0] sm:$0xff]
        %v9481 = vld [vmem:[#allocation22 + $0xd8] sm:$0xff]
        %v9482 = vld [vmem:[#allocation22 + $0xe0] sm:$0xff]
        %v9483 = vld [vmem:[#allocation22 + $0xe8] sm:$0xff]
        %v9484 = vld [vmem:[#allocation22 + $0xf0] sm:$0xff]
        %v9485 = vld [vmem:[#allocation22 + $0xf8] sm:$0xff]
        %v9486 = vld [vmem:[#allocation23] sm:$0x3]
        %v9519 = vunpack.c.l.b16 %v9454
        %v9520 = vunpack.c.h.b16 %v9454
        %v9521 = vunpack.c.l.b16 %v9455
        %v9522 = vunpack.c.h.b16 %v9455
        %v9523 = vunpack.c.l.b16 %v9456
        %v9524 = vunpack.c.h.b16 %v9456
        %v9525 = vunpack.c.l.b16 %v9457
        %v9526 = vunpack.c.h.b16 %v9457
        %v9527 = vunpack.c.l.b16 %v9458
        %v9528 = vunpack.c.h.b16 %v9458
        %v9529 = vunpack.c.l.b16 %v9459
        %v9530 = vunpack.c.h.b16 %v9459
        %v9531 = vunpack.c.l.b16 %v9460
        %v9532 = vunpack.c.h.b16 %v9460
        %v9533 = vunpack.c.l.b16 %v9461
        %v9534 = vunpack.c.h.b16 %v9461
        %v9535 = vunpack.c.l.b16 %v9462
        %v9536 = vunpack.c.h.b16 %v9462
        %v9537 = vunpack.c.l.b16 %v9463
        %v9538 = vunpack.c.h.b16 %v9463
        %v9539 = vunpack.c.l.b16 %v9464
        %v9540 = vunpack.c.h.b16 %v9464
        %v9541 = vunpack.c.l.b16 %v9465
        %v9542 = vunpack.c.h.b16 %v9465
        %v9543 = vunpack.c.l.b16 %v9466
        %v9544 = vunpack.c.h.b16 %v9466
        %v9545 = vunpack.c.l.b16 %v9467
        %v9546 = vunpack.c.h.b16 %v9467
        %v9547 = vunpack.c.l.b16 %v9468
        %v9548 = vunpack.c.h.b16 %v9468
        %v9549 = vunpack.c.l.b16 %v9469
        %v9550 = vunpack.c.h.b16 %v9469
        %v9551 = vunpack.c.l.b16 %v9470
        %v9552 = vunpack.c.h.b16 %v9470
        %v9553 = vunpack.c.l.b16 %v9471
        %v9554 = vunpack.c.h.b16 %v9471
        %v9555 = vunpack.c.l.b16 %v9472
        %v9556 = vunpack.c.h.b16 %v9472
        %v9557 = vunpack.c.l.b16 %v9473
        %v9558 = vunpack.c.h.b16 %v9473
        %v9559 = vunpack.c.l.b16 %v9474
        %v9560 = vunpack.c.h.b16 %v9474
        %v9561 = vunpack.c.l.b16 %v9475
        %v9562 = vunpack.c.h.b16 %v9475
        %v9563 = vunpack.c.l.b16 %v9476
        %v9564 = vunpack.c.h.b16 %v9476
        %v9565 = vunpack.c.l.b16 %v9477
        %v9566 = vunpack.c.h.b16 %v9477
        %v9567 = vunpack.c.l.b16 %v9478
        %v9568 = vunpack.c.h.b16 %v9478
        %v9569 = vunpack.c.l.b16 %v9479
        %v9570 = vunpack.c.h.b16 %v9479
        %v9571 = vunpack.c.l.b16 %v9480
        %v9572 = vunpack.c.h.b16 %v9480
        %v9573 = vunpack.c.l.b16 %v9481
        %v9574 = vunpack.c.h.b16 %v9481
        %v9575 = vunpack.c.l.b16 %v9482
        %v9576 = vunpack.c.h.b16 %v9482
        %v9577 = vunpack.c.l.b16 %v9483
        %v9578 = vunpack.c.h.b16 %v9483
        %v9579 = vunpack.c.l.b16 %v9484
        %v9580 = vunpack.c.h.b16 %v9484
        %v9581 = vunpack.c.l.b16 %v9485
        %v9582 = vunpack.c.h.b16 %v9485
        %v9583 = vpack.c.b16 %v9521, %v9519
        %v9584 = vpack.c.b16 %v9522, %v9520
        %v9585 = vpack.c.b16 %v9525, %v9523
        %v9586 = vpack.c.b16 %v9526, %v9524
        %v9587 = vpack.c.b16 %v9529, %v9527
        %v9588 = vpack.c.b16 %v9530, %v9528
        %v9589 = vpack.c.b16 %v9533, %v9531
        %v9590 = vpack.c.b16 %v9534, %v9532
        %v9591 = vpack.c.b16 %v9537, %v9535
        %v9592 = vpack.c.b16 %v9538, %v9536
        %v9593 = vpack.c.b16 %v9541, %v9539
        %v9594 = vpack.c.b16 %v9542, %v9540
        %v9595 = vpack.c.b16 %v9545, %v9543
        %v9596 = vpack.c.b16 %v9546, %v9544
        %v9597 = vpack.c.b16 %v9549, %v9547
        %v9598 = vpack.c.b16 %v9550, %v9548
        %v9599 = vpack.c.b16 %v9553, %v9551
        %v9600 = vpack.c.b16 %v9554, %v9552
        %v9601 = vpack.c.b16 %v9557, %v9555
        %v9602 = vpack.c.b16 %v9558, %v9556
        %v9603 = vpack.c.b16 %v9561, %v9559
        %v9604 = vpack.c.b16 %v9562, %v9560
        %v9605 = vpack.c.b16 %v9565, %v9563
        %v9606 = vpack.c.b16 %v9566, %v9564
        %v9607 = vpack.c.b16 %v9569, %v9567
        %v9608 = vpack.c.b16 %v9570, %v9568
        %v9609 = vpack.c.b16 %v9573, %v9571
        %v9610 = vpack.c.b16 %v9574, %v9572
        %v9611 = vpack.c.b16 %v9577, %v9575
        %v9612 = vpack.c.b16 %v9578, %v9576
        %v9613 = vpack.c.b16 %v9581, %v9579
        %v9614 = vpack.c.b16 %v9582, %v9580
        %v9648 = vlaneseq
        %v9649 = vshrl.u32 %v9648, 7
        %v9650 = vsub.s32 0, %v9649
        %v9651 = vrot.slane %v9486, %v9650
        %v9652 = vlaneseq
        %v9653 = vshrl.u32 %v9652, 7
        %v9654 = vsub.s32 1, %v9653
        %v9655 = vrot.slane %v9486, %v9654
        %9658 = vmatprep.subr.bf16.mxu0 %v9598
        %9659 = vmatpush1.bf16.msra.mxu0 %v9597
        %9660 = vmatprep.subr.bf16.mxu0 %v9596
        %9661 = vmatpush1.bf16.msra.mxu0 %v9595
        %9662 = vmatprep.subr.bf16.mxu0 %v9594
        %9663 = vmatpush1.bf16.msra.mxu0 %v9593
        %9664 = vmatprep.subr.bf16.mxu0 %v9592
        %9665 = vmatpush1.bf16.msra.mxu0 %v9591
        %9666 = vmatprep.subr.bf16.mxu0 %v9590
        %9667 = vmatpush1.bf16.msra.mxu0 %v9589
        %9668 = vmatprep.subr.bf16.mxu0 %v9588
        %9669 = vmatpush1.bf16.msra.mxu0 %v9587
        %9670 = vmatprep.subr.bf16.mxu0 %v9586
        %9671 = vmatpush1.bf16.msra.mxu0 %v9585
        %9672 = vmatprep.subr.bf16.mxu0 %v9584
        %9673 = vmatpush1.bf16.msra.mxu0 %v9583
        %9674 = vmatprep.subr.bf16.mxu0 %v9614
        %9675 = vmatpush2.bf16.msra.mxu0 %v9613
        %9676 = vmatprep.subr.bf16.mxu0 %v9612
        %9677 = vmatpush2.bf16.msra.mxu0 %v9611
        %9678 = vmatprep.subr.bf16.mxu0 %v9610
        %9679 = vmatpush2.bf16.msra.mxu0 %v9609
        %9680 = vmatprep.subr.bf16.mxu0 %v9608
        %9681 = vmatpush2.bf16.msra.mxu0 %v9607
        %9682 = vmatprep.subr.bf16.mxu0 %v9606
        %9683 = vmatpush2.bf16.msra.mxu0 %v9605
        %9684 = vmatprep.subr.bf16.mxu0 %v9604
        %9685 = vmatpush2.bf16.msra.mxu0 %v9603
        %9686 = vmatprep.subr.bf16.mxu0 %v9602
        %9687 = vmatpush2.bf16.msra.mxu0 %v9601
        %9688 = vmatprep.subr.bf16.mxu0 %v9600
        %9689 = vmatpush2.bf16.msra.mxu0 %v9599
        %9690 = vmatprep.mubr.bf16.mxu0 %v9453
        %9691 = vmatmul.mubr.bf16.gmra.mxu0 %v9452
        %v9692 = vpop.f32.mrf.mxu0
        %v9693 = vadd.f32 %v9651, %v9692
        %v9694 = vpop.f32.mrf.mxu0
        %v9695 = vadd.f32 %v9655, %v9694
        %v9696 = vpop.f32.mrf.mxu0
        %v9697 = vpop.f32.mrf.mxu0
        %9698 = vdwg.mxu0
        %vm9699 = vcmp.gt.f32.partialorder %v9693, 0.0
        %vm9700 = vcmp.gt.f32.partialorder %v9695, 0.0
        %v9701 = vmin.f32 %v9693, 0.0
        %v9702 = vmin.f32 %v9695, 0.0
        %v9703 = vmul.f32 %v9701, 1.442695
        %v9704 = vpow.pop %v9703
        %v9705 = vmul.f32 %v9702, 1.442695
        %v9706 = vpow.pop %v9705
        %v9707 = vsub.f32 %v9704, 1.0
        %v9708 = vsub.f32 %v9706, 1.0
        %v9709 = vsel %vm9699, %v9693, %v9707
        %v9710 = vsel %vm9700, %v9695, %v9708
        %v9711 = vpack.c.bf16 %v9709, %v9709
        %v9712 = vpack.c.bf16 %v9710, %v9710
        %v9713 = vld [vmem:[#allocation25] sm:$0xff]
        %v9714 = vld [vmem:[#allocation25 + $0x8] sm:$0xff]
        %v9715 = vld [vmem:[#allocation25 + $0x10] sm:$0xff]
        %v9716 = vld [vmem:[#allocation25 + $0x18] sm:$0xff]
        %v9717 = vld [vmem:[#allocation25 + $0x20] sm:$0xff]
        %v9718 = vld [vmem:[#allocation25 + $0x28] sm:$0xff]
        %v9719 = vld [vmem:[#allocation25 + $0x30] sm:$0xff]
        %v9720 = vld [vmem:[#allocation25 + $0x38] sm:$0xff]
        %v9721 = vld [vmem:[#allocation25 + $0x40] sm:$0xff]
        %v9722 = vld [vmem:[#allocation25 + $0x48] sm:$0xff]
        %v9723 = vld [vmem:[#allocation25 + $0x50] sm:$0xff]
        %v9724 = vld [vmem:[#allocation25 + $0x58] sm:$0xff]
        %v9725 = vld [vmem:[#allocation25 + $0x60] sm:$0xff]
        %v9726 = vld [vmem:[#allocation25 + $0x68] sm:$0xff]
        %v9727 = vld [vmem:[#allocation25 + $0x70] sm:$0xff]
        %v9728 = vld [vmem:[#allocation25 + $0x78] sm:$0xff]
        %v9729 = vld [vmem:[#allocation25 + $0x80] sm:$0xff]
        %v9730 = vld [vmem:[#allocation25 + $0x88] sm:$0xff]
        %v9731 = vld [vmem:[#allocation25 + $0x90] sm:$0xff]
        %v9732 = vld [vmem:[#allocation25 + $0x98] sm:$0xff]
        %v9733 = vld [vmem:[#allocation25 + $0xa0] sm:$0xff]
        %v9734 = vld [vmem:[#allocation25 + $0xa8] sm:$0xff]
        %v9735 = vld [vmem:[#allocation25 + $0xb0] sm:$0xff]
        %v9736 = vld [vmem:[#allocation25 + $0xb8] sm:$0xff]
        %v9737 = vld [vmem:[#allocation25 + $0xc0] sm:$0xff]
        %v9738 = vld [vmem:[#allocation25 + $0xc8] sm:$0xff]
        %v9739 = vld [vmem:[#allocation25 + $0xd0] sm:$0xff]
        %v9740 = vld [vmem:[#allocation25 + $0xd8] sm:$0xff]
        %v9741 = vld [vmem:[#allocation25 + $0xe0] sm:$0xff]
        %v9742 = vld [vmem:[#allocation25 + $0xe8] sm:$0xff]
        %v9743 = vld [vmem:[#allocation25 + $0xf0] sm:$0xff]
        %v9744 = vld [vmem:[#allocation25 + $0xf8] sm:$0xff]
        %v9745 = vld [vmem:[#allocation26] sm:$0x3]
        %v9778 = vunpack.c.l.b16 %v9713
        %v9779 = vunpack.c.h.b16 %v9713
        %v9780 = vunpack.c.l.b16 %v9714
        %v9781 = vunpack.c.h.b16 %v9714
        %v9782 = vunpack.c.l.b16 %v9715
        %v9783 = vunpack.c.h.b16 %v9715
        %v9784 = vunpack.c.l.b16 %v9716
        %v9785 = vunpack.c.h.b16 %v9716
        %v9786 = vunpack.c.l.b16 %v9717
        %v9787 = vunpack.c.h.b16 %v9717
        %v9788 = vunpack.c.l.b16 %v9718
        %v9789 = vunpack.c.h.b16 %v9718
        %v9790 = vunpack.c.l.b16 %v9719
        %v9791 = vunpack.c.h.b16 %v9719
        %v9792 = vunpack.c.l.b16 %v9720
        %v9793 = vunpack.c.h.b16 %v9720
        %v9794 = vunpack.c.l.b16 %v9721
        %v9795 = vunpack.c.h.b16 %v9721
        %v9796 = vunpack.c.l.b16 %v9722
        %v9797 = vunpack.c.h.b16 %v9722
        %v9798 = vunpack.c.l.b16 %v9723
        %v9799 = vunpack.c.h.b16 %v9723
        %v9800 = vunpack.c.l.b16 %v9724
        %v9801 = vunpack.c.h.b16 %v9724
        %v9802 = vunpack.c.l.b16 %v9725
        %v9803 = vunpack.c.h.b16 %v9725
        %v9804 = vunpack.c.l.b16 %v9726
        %v9805 = vunpack.c.h.b16 %v9726
        %v9806 = vunpack.c.l.b16 %v9727
        %v9807 = vunpack.c.h.b16 %v9727
        %v9808 = vunpack.c.l.b16 %v9728
        %v9809 = vunpack.c.h.b16 %v9728
        %v9810 = vunpack.c.l.b16 %v9729
        %v9811 = vunpack.c.h.b16 %v9729
        %v9812 = vunpack.c.l.b16 %v9730
        %v9813 = vunpack.c.h.b16 %v9730
        %v9814 = vunpack.c.l.b16 %v9731
        %v9815 = vunpack.c.h.b16 %v9731
        %v9816 = vunpack.c.l.b16 %v9732
        %v9817 = vunpack.c.h.b16 %v9732
        %v9818 = vunpack.c.l.b16 %v9733
        %v9819 = vunpack.c.h.b16 %v9733
        %v9820 = vunpack.c.l.b16 %v9734
        %v9821 = vunpack.c.h.b16 %v9734
        %v9822 = vunpack.c.l.b16 %v9735
        %v9823 = vunpack.c.h.b16 %v9735
        %v9824 = vunpack.c.l.b16 %v9736
        %v9825 = vunpack.c.h.b16 %v9736
        %v9826 = vunpack.c.l.b16 %v9737
        %v9827 = vunpack.c.h.b16 %v9737
        %v9828 = vunpack.c.l.b16 %v9738
        %v9829 = vunpack.c.h.b16 %v9738
        %v9830 = vunpack.c.l.b16 %v9739
        %v9831 = vunpack.c.h.b16 %v9739
        %v9832 = vunpack.c.l.b16 %v9740
        %v9833 = vunpack.c.h.b16 %v9740
        %v9834 = vunpack.c.l.b16 %v9741
        %v9835 = vunpack.c.h.b16 %v9741
        %v9836 = vunpack.c.l.b16 %v9742
        %v9837 = vunpack.c.h.b16 %v9742
        %v9838 = vunpack.c.l.b16 %v9743
        %v9839 = vunpack.c.h.b16 %v9743
        %v9840 = vunpack.c.l.b16 %v9744
        %v9841 = vunpack.c.h.b16 %v9744
        %v9842 = vpack.c.b16 %v9780, %v9778
        %v9843 = vpack.c.b16 %v9781, %v9779
        %v9844 = vpack.c.b16 %v9784, %v9782
        %v9845 = vpack.c.b16 %v9785, %v9783
        %v9846 = vpack.c.b16 %v9788, %v9786
        %v9847 = vpack.c.b16 %v9789, %v9787
        %v9848 = vpack.c.b16 %v9792, %v9790
        %v9849 = vpack.c.b16 %v9793, %v9791
        %v9850 = vpack.c.b16 %v9796, %v9794
        %v9851 = vpack.c.b16 %v9797, %v9795
        %v9852 = vpack.c.b16 %v9800, %v9798
        %v9853 = vpack.c.b16 %v9801, %v9799
        %v9854 = vpack.c.b16 %v9804, %v9802
        %v9855 = vpack.c.b16 %v9805, %v9803
        %v9856 = vpack.c.b16 %v9808, %v9806
        %v9857 = vpack.c.b16 %v9809, %v9807
        %v9858 = vpack.c.b16 %v9812, %v9810
        %v9859 = vpack.c.b16 %v9813, %v9811
        %v9860 = vpack.c.b16 %v9816, %v9814
        %v9861 = vpack.c.b16 %v9817, %v9815
        %v9862 = vpack.c.b16 %v9820, %v9818
        %v9863 = vpack.c.b16 %v9821, %v9819
        %v9864 = vpack.c.b16 %v9824, %v9822
        %v9865 = vpack.c.b16 %v9825, %v9823
        %v9866 = vpack.c.b16 %v9828, %v9826
        %v9867 = vpack.c.b16 %v9829, %v9827
        %v9868 = vpack.c.b16 %v9832, %v9830
        %v9869 = vpack.c.b16 %v9833, %v9831
        %v9870 = vpack.c.b16 %v9836, %v9834
        %v9871 = vpack.c.b16 %v9837, %v9835
        %v9872 = vpack.c.b16 %v9840, %v9838
        %v9873 = vpack.c.b16 %v9841, %v9839
        %v9907 = vlaneseq
        %v9908 = vshrl.u32 %v9907, 7
        %v9909 = vsub.s32 0, %v9908
        %v9910 = vrot.slane %v9745, %v9909
        %v9911 = vlaneseq
        %v9912 = vshrl.u32 %v9911, 7
        %v9913 = vsub.s32 1, %v9912
        %v9914 = vrot.slane %v9745, %v9913
        %9917 = vmatprep.subr.bf16.mxu0 %v9857
        %9918 = vmatpush1.bf16.msra.mxu0 %v9856
        %9919 = vmatprep.subr.bf16.mxu0 %v9855
        %9920 = vmatpush1.bf16.msra.mxu0 %v9854
        %9921 = vmatprep.subr.bf16.mxu0 %v9853
        %9922 = vmatpush1.bf16.msra.mxu0 %v9852
        %9923 = vmatprep.subr.bf16.mxu0 %v9851
        %9924 = vmatpush1.bf16.msra.mxu0 %v9850
        %9925 = vmatprep.subr.bf16.mxu0 %v9849
        %9926 = vmatpush1.bf16.msra.mxu0 %v9848
        %9927 = vmatprep.subr.bf16.mxu0 %v9847
        %9928 = vmatpush1.bf16.msra.mxu0 %v9846
        %9929 = vmatprep.subr.bf16.mxu0 %v9845
        %9930 = vmatpush1.bf16.msra.mxu0 %v9844
        %9931 = vmatprep.subr.bf16.mxu0 %v9843
        %9932 = vmatpush1.bf16.msra.mxu0 %v9842
        %9933 = vmatprep.subr.bf16.mxu0 %v9873
        %9934 = vmatpush2.bf16.msra.mxu0 %v9872
        %9935 = vmatprep.subr.bf16.mxu0 %v9871
        %9936 = vmatpush2.bf16.msra.mxu0 %v9870
        %9937 = vmatprep.subr.bf16.mxu0 %v9869
        %9938 = vmatpush2.bf16.msra.mxu0 %v9868
        %9939 = vmatprep.subr.bf16.mxu0 %v9867
        %9940 = vmatpush2.bf16.msra.mxu0 %v9866
        %9941 = vmatprep.subr.bf16.mxu0 %v9865
        %9942 = vmatpush2.bf16.msra.mxu0 %v9864
        %9943 = vmatprep.subr.bf16.mxu0 %v9863
        %9944 = vmatpush2.bf16.msra.mxu0 %v9862
        %9945 = vmatprep.subr.bf16.mxu0 %v9861
        %9946 = vmatpush2.bf16.msra.mxu0 %v9860
        %9947 = vmatprep.subr.bf16.mxu0 %v9859
        %9948 = vmatpush2.bf16.msra.mxu0 %v9858
        %9949 = vmatprep.mubr.bf16.mxu0 %v9712
        %9950 = vmatmul.mubr.bf16.gmra.mxu0 %v9711
        %v9951 = vpop.f32.mrf.mxu0
        %v9952 = vadd.f32 %v9910, %v9951
        %v9953 = vpop.f32.mrf.mxu0
        %v9954 = vadd.f32 %v9914, %v9953
        %v9955 = vpop.f32.mrf.mxu0
        %v9956 = vpop.f32.mrf.mxu0
        %9957 = vdwg.mxu0
        %v9958 = vadd.f32 %v9952, %v9450
        %v9959 = vadd.f32 %v9954, %v9451
        %vm9960 = vcmp.gt.f32.partialorder %v9958, 0.0
        %vm9961 = vcmp.gt.f32.partialorder %v9959, 0.0
        %v9962 = vmin.f32 %v9958, 0.0
        %v9963 = vmin.f32 %v9959, 0.0
        %v9964 = vmul.f32 %v9962, 1.442695
        %v9965 = vpow.pop %v9964
        %v9966 = vmul.f32 %v9963, 1.442695
        %v9967 = vpow.pop %v9966
        %v9968 = vsub.f32 %v9965, 1.0
        %v9969 = vsub.f32 %v9967, 1.0
        %v9970 = vsel %vm9960, %v9958, %v9968
        %v9971 = vsel %vm9961, %v9959, %v9969
        %v9972 = vpack.c.bf16 %v9970, %v9970
        %v9973 = vpack.c.bf16 %v9971, %v9971
        %v9974 = vld [vmem:[#allocation28] sm:$0xff]
        %v9975 = vld [vmem:[#allocation28 + $0x8] sm:$0xff]
        %v9976 = vld [vmem:[#allocation28 + $0x10] sm:$0xff]
        %v9977 = vld [vmem:[#allocation28 + $0x18] sm:$0xff]
        %v9978 = vld [vmem:[#allocation28 + $0x20] sm:$0xff]
        %v9979 = vld [vmem:[#allocation28 + $0x28] sm:$0xff]
        %v9980 = vld [vmem:[#allocation28 + $0x30] sm:$0xff]
        %v9981 = vld [vmem:[#allocation28 + $0x38] sm:$0xff]
        %v9982 = vld [vmem:[#allocation28 + $0x40] sm:$0xff]
        %v9983 = vld [vmem:[#allocation28 + $0x48] sm:$0xff]
        %v9984 = vld [vmem:[#allocation28 + $0x50] sm:$0xff]
        %v9985 = vld [vmem:[#allocation28 + $0x58] sm:$0xff]
        %v9986 = vld [vmem:[#allocation28 + $0x60] sm:$0xff]
        %v9987 = vld [vmem:[#allocation28 + $0x68] sm:$0xff]
        %v9988 = vld [vmem:[#allocation28 + $0x70] sm:$0xff]
        %v9989 = vld [vmem:[#allocation28 + $0x78] sm:$0xff]
        %v9990 = vld [vmem:[#allocation28 + $0x80] sm:$0xff]
        %v9991 = vld [vmem:[#allocation28 + $0x88] sm:$0xff]
        %v9992 = vld [vmem:[#allocation28 + $0x90] sm:$0xff]
        %v9993 = vld [vmem:[#allocation28 + $0x98] sm:$0xff]
        %v9994 = vld [vmem:[#allocation28 + $0xa0] sm:$0xff]
        %v9995 = vld [vmem:[#allocation28 + $0xa8] sm:$0xff]
        %v9996 = vld [vmem:[#allocation28 + $0xb0] sm:$0xff]
        %v9997 = vld [vmem:[#allocation28 + $0xb8] sm:$0xff]
        %v9998 = vld [vmem:[#allocation28 + $0xc0] sm:$0xff]
        %v9999 = vld [vmem:[#allocation28 + $0xc8] sm:$0xff]
        %v10000 = vld [vmem:[#allocation28 + $0xd0] sm:$0xff]
        %v10001 = vld [vmem:[#allocation28 + $0xd8] sm:$0xff]
        %v10002 = vld [vmem:[#allocation28 + $0xe0] sm:$0xff]
        %v10003 = vld [vmem:[#allocation28 + $0xe8] sm:$0xff]
        %v10004 = vld [vmem:[#allocation28 + $0xf0] sm:$0xff]
        %v10005 = vld [vmem:[#allocation28 + $0xf8] sm:$0xff]
        %v10006 = vld [vmem:[#allocation29] sm:$0x3]
        %v10039 = vunpack.c.l.b16 %v9974
        %v10040 = vunpack.c.h.b16 %v9974
        %v10041 = vunpack.c.l.b16 %v9975
        %v10042 = vunpack.c.h.b16 %v9975
        %v10043 = vunpack.c.l.b16 %v9976
        %v10044 = vunpack.c.h.b16 %v9976
        %v10045 = vunpack.c.l.b16 %v9977
        %v10046 = vunpack.c.h.b16 %v9977
        %v10047 = vunpack.c.l.b16 %v9978
        %v10048 = vunpack.c.h.b16 %v9978
        %v10049 = vunpack.c.l.b16 %v9979
        %v10050 = vunpack.c.h.b16 %v9979
        %v10051 = vunpack.c.l.b16 %v9980
        %v10052 = vunpack.c.h.b16 %v9980
        %v10053 = vunpack.c.l.b16 %v9981
        %v10054 = vunpack.c.h.b16 %v9981
        %v10055 = vunpack.c.l.b16 %v9982
        %v10056 = vunpack.c.h.b16 %v9982
        %v10057 = vunpack.c.l.b16 %v9983
        %v10058 = vunpack.c.h.b16 %v9983
        %v10059 = vunpack.c.l.b16 %v9984
        %v10060 = vunpack.c.h.b16 %v9984
        %v10061 = vunpack.c.l.b16 %v9985
        %v10062 = vunpack.c.h.b16 %v9985
        %v10063 = vunpack.c.l.b16 %v9986
        %v10064 = vunpack.c.h.b16 %v9986
        %v10065 = vunpack.c.l.b16 %v9987
        %v10066 = vunpack.c.h.b16 %v9987
        %v10067 = vunpack.c.l.b16 %v9988
        %v10068 = vunpack.c.h.b16 %v9988
        %v10069 = vunpack.c.l.b16 %v9989
        %v10070 = vunpack.c.h.b16 %v9989
        %v10071 = vunpack.c.l.b16 %v9990
        %v10072 = vunpack.c.h.b16 %v9990
        %v10073 = vunpack.c.l.b16 %v9991
        %v10074 = vunpack.c.h.b16 %v9991
        %v10075 = vunpack.c.l.b16 %v9992
        %v10076 = vunpack.c.h.b16 %v9992
        %v10077 = vunpack.c.l.b16 %v9993
        %v10078 = vunpack.c.h.b16 %v9993
        %v10079 = vunpack.c.l.b16 %v9994
        %v10080 = vunpack.c.h.b16 %v9994
        %v10081 = vunpack.c.l.b16 %v9995
        %v10082 = vunpack.c.h.b16 %v9995
        %v10083 = vunpack.c.l.b16 %v9996
        %v10084 = vunpack.c.h.b16 %v9996
        %v10085 = vunpack.c.l.b16 %v9997
        %v10086 = vunpack.c.h.b16 %v9997
        %v10087 = vunpack.c.l.b16 %v9998
        %v10088 = vunpack.c.h.b16 %v9998
        %v10089 = vunpack.c.l.b16 %v9999
        %v10090 = vunpack.c.h.b16 %v9999
        %v10091 = vunpack.c.l.b16 %v10000
        %v10092 = vunpack.c.h.b16 %v10000
        %v10093 = vunpack.c.l.b16 %v10001
        %v10094 = vunpack.c.h.b16 %v10001
        %v10095 = vunpack.c.l.b16 %v10002
        %v10096 = vunpack.c.h.b16 %v10002
        %v10097 = vunpack.c.l.b16 %v10003
        %v10098 = vunpack.c.h.b16 %v10003
        %v10099 = vunpack.c.l.b16 %v10004
        %v10100 = vunpack.c.h.b16 %v10004
        %v10101 = vunpack.c.l.b16 %v10005
        %v10102 = vunpack.c.h.b16 %v10005
        %v10103 = vpack.c.b16 %v10041, %v10039
        %v10104 = vpack.c.b16 %v10042, %v10040
        %v10105 = vpack.c.b16 %v10045, %v10043
        %v10106 = vpack.c.b16 %v10046, %v10044
        %v10107 = vpack.c.b16 %v10049, %v10047
        %v10108 = vpack.c.b16 %v10050, %v10048
        %v10109 = vpack.c.b16 %v10053, %v10051
        %v10110 = vpack.c.b16 %v10054, %v10052
        %v10111 = vpack.c.b16 %v10057, %v10055
        %v10112 = vpack.c.b16 %v10058, %v10056
        %v10113 = vpack.c.b16 %v10061, %v10059
        %v10114 = vpack.c.b16 %v10062, %v10060
        %v10115 = vpack.c.b16 %v10065, %v10063
        %v10116 = vpack.c.b16 %v10066, %v10064
        %v10117 = vpack.c.b16 %v10069, %v10067
        %v10118 = vpack.c.b16 %v10070, %v10068
        %v10119 = vpack.c.b16 %v10073, %v10071
        %v10120 = vpack.c.b16 %v10074, %v10072
        %v10121 = vpack.c.b16 %v10077, %v10075
        %v10122 = vpack.c.b16 %v10078, %v10076
        %v10123 = vpack.c.b16 %v10081, %v10079
        %v10124 = vpack.c.b16 %v10082, %v10080
        %v10125 = vpack.c.b16 %v10085, %v10083
        %v10126 = vpack.c.b16 %v10086, %v10084
        %v10127 = vpack.c.b16 %v10089, %v10087
        %v10128 = vpack.c.b16 %v10090, %v10088
        %v10129 = vpack.c.b16 %v10093, %v10091
        %v10130 = vpack.c.b16 %v10094, %v10092
        %v10131 = vpack.c.b16 %v10097, %v10095
        %v10132 = vpack.c.b16 %v10098, %v10096
        %v10133 = vpack.c.b16 %v10101, %v10099
        %v10134 = vpack.c.b16 %v10102, %v10100
        %v10168 = vlaneseq
        %v10169 = vshrl.u32 %v10168, 7
        %v10170 = vsub.s32 0, %v10169
        %v10171 = vrot.slane %v10006, %v10170
        %v10172 = vlaneseq
        %v10173 = vshrl.u32 %v10172, 7
        %v10174 = vsub.s32 1, %v10173
        %v10175 = vrot.slane %v10006, %v10174
        %10178 = vmatprep.subr.bf16.mxu0 %v10118
        %10179 = vmatpush1.bf16.msra.mxu0 %v10117
        %10180 = vmatprep.subr.bf16.mxu0 %v10116
        %10181 = vmatpush1.bf16.msra.mxu0 %v10115
        %10182 = vmatprep.subr.bf16.mxu0 %v10114
        %10183 = vmatpush1.bf16.msra.mxu0 %v10113
        %10184 = vmatprep.subr.bf16.mxu0 %v10112
        %10185 = vmatpush1.bf16.msra.mxu0 %v10111
        %10186 = vmatprep.subr.bf16.mxu0 %v10110
        %10187 = vmatpush1.bf16.msra.mxu0 %v10109
        %10188 = vmatprep.subr.bf16.mxu0 %v10108
        %10189 = vmatpush1.bf16.msra.mxu0 %v10107
        %10190 = vmatprep.subr.bf16.mxu0 %v10106
        %10191 = vmatpush1.bf16.msra.mxu0 %v10105
        %10192 = vmatprep.subr.bf16.mxu0 %v10104
        %10193 = vmatpush1.bf16.msra.mxu0 %v10103
        %10194 = vmatprep.subr.bf16.mxu0 %v10134
        %10195 = vmatpush2.bf16.msra.mxu0 %v10133
        %10196 = vmatprep.subr.bf16.mxu0 %v10132
        %10197 = vmatpush2.bf16.msra.mxu0 %v10131
        %10198 = vmatprep.subr.bf16.mxu0 %v10130
        %10199 = vmatpush2.bf16.msra.mxu0 %v10129
        %10200 = vmatprep.subr.bf16.mxu0 %v10128
        %10201 = vmatpush2.bf16.msra.mxu0 %v10127
        %10202 = vmatprep.subr.bf16.mxu0 %v10126
        %10203 = vmatpush2.bf16.msra.mxu0 %v10125
        %10204 = vmatprep.subr.bf16.mxu0 %v10124
        %10205 = vmatpush2.bf16.msra.mxu0 %v10123
        %10206 = vmatprep.subr.bf16.mxu0 %v10122
        %10207 = vmatpush2.bf16.msra.mxu0 %v10121
        %10208 = vmatprep.subr.bf16.mxu0 %v10120
        %10209 = vmatpush2.bf16.msra.mxu0 %v10119
        %10210 = vmatprep.mubr.bf16.mxu0 %v9973
        %10211 = vmatmul.mubr.bf16.gmra.mxu0 %v9972
        %v10212 = vpop.f32.mrf.mxu0
        %v10213 = vadd.f32 %v10171, %v10212
        %v10214 = vpop.f32.mrf.mxu0
        %v10215 = vadd.f32 %v10175, %v10214
        %v10216 = vpop.f32.mrf.mxu0
        %v10217 = vpop.f32.mrf.mxu0
        %10218 = vdwg.mxu0
        %vm10219 = vcmp.gt.f32.partialorder %v10213, 0.0
        %vm10220 = vcmp.gt.f32.partialorder %v10215, 0.0
        %v10221 = vmin.f32 %v10213, 0.0
        %v10222 = vmin.f32 %v10215, 0.0
        %v10223 = vmul.f32 %v10221, 1.442695
        %v10224 = vpow.pop %v10223
        %v10225 = vmul.f32 %v10222, 1.442695
        %v10226 = vpow.pop %v10225
        %v10227 = vsub.f32 %v10224, 1.0
        %v10228 = vsub.f32 %v10226, 1.0
        %v10229 = vsel %vm10219, %v10213, %v10227
        %v10230 = vsel %vm10220, %v10215, %v10228
        %v10231 = vpack.c.bf16 %v10229, %v10229
        %v10232 = vpack.c.bf16 %v10230, %v10230
        %v10233 = vld [vmem:[#allocation31] sm:$0xff]
        %v10234 = vld [vmem:[#allocation31 + $0x8] sm:$0xff]
        %v10235 = vld [vmem:[#allocation31 + $0x10] sm:$0xff]
        %v10236 = vld [vmem:[#allocation31 + $0x18] sm:$0xff]
        %v10237 = vld [vmem:[#allocation31 + $0x20] sm:$0xff]
        %v10238 = vld [vmem:[#allocation31 + $0x28] sm:$0xff]
        %v10239 = vld [vmem:[#allocation31 + $0x30] sm:$0xff]
        %v10240 = vld [vmem:[#allocation31 + $0x38] sm:$0xff]
        %v10241 = vld [vmem:[#allocation31 + $0x40] sm:$0xff]
        %v10242 = vld [vmem:[#allocation31 + $0x48] sm:$0xff]
        %v10243 = vld [vmem:[#allocation31 + $0x50] sm:$0xff]
        %v10244 = vld [vmem:[#allocation31 + $0x58] sm:$0xff]
        %v10245 = vld [vmem:[#allocation31 + $0x60] sm:$0xff]
        %v10246 = vld [vmem:[#allocation31 + $0x68] sm:$0xff]
        %v10247 = vld [vmem:[#allocation31 + $0x70] sm:$0xff]
        %v10248 = vld [vmem:[#allocation31 + $0x78] sm:$0xff]
        %v10249 = vld [vmem:[#allocation31 + $0x80] sm:$0xff]
        %v10250 = vld [vmem:[#allocation31 + $0x88] sm:$0xff]
        %v10251 = vld [vmem:[#allocation31 + $0x90] sm:$0xff]
        %v10252 = vld [vmem:[#allocation31 + $0x98] sm:$0xff]
        %v10253 = vld [vmem:[#allocation31 + $0xa0] sm:$0xff]
        %v10254 = vld [vmem:[#allocation31 + $0xa8] sm:$0xff]
        %v10255 = vld [vmem:[#allocation31 + $0xb0] sm:$0xff]
        %v10256 = vld [vmem:[#allocation31 + $0xb8] sm:$0xff]
        %v10257 = vld [vmem:[#allocation31 + $0xc0] sm:$0xff]
        %v10258 = vld [vmem:[#allocation31 + $0xc8] sm:$0xff]
        %v10259 = vld [vmem:[#allocation31 + $0xd0] sm:$0xff]
        %v10260 = vld [vmem:[#allocation31 + $0xd8] sm:$0xff]
        %v10261 = vld [vmem:[#allocation31 + $0xe0] sm:$0xff]
        %v10262 = vld [vmem:[#allocation31 + $0xe8] sm:$0xff]
        %v10263 = vld [vmem:[#allocation31 + $0xf0] sm:$0xff]
        %v10264 = vld [vmem:[#allocation31 + $0xf8] sm:$0xff]
        %v10265 = vld [vmem:[#allocation32] sm:$0x3]
        %v10298 = vunpack.c.l.b16 %v10233
        %v10299 = vunpack.c.h.b16 %v10233
        %v10300 = vunpack.c.l.b16 %v10234
        %v10301 = vunpack.c.h.b16 %v10234
        %v10302 = vunpack.c.l.b16 %v10235
        %v10303 = vunpack.c.h.b16 %v10235
        %v10304 = vunpack.c.l.b16 %v10236
        %v10305 = vunpack.c.h.b16 %v10236
        %v10306 = vunpack.c.l.b16 %v10237
        %v10307 = vunpack.c.h.b16 %v10237
        %v10308 = vunpack.c.l.b16 %v10238
        %v10309 = vunpack.c.h.b16 %v10238
        %v10310 = vunpack.c.l.b16 %v10239
        %v10311 = vunpack.c.h.b16 %v10239
        %v10312 = vunpack.c.l.b16 %v10240
        %v10313 = vunpack.c.h.b16 %v10240
        %v10314 = vunpack.c.l.b16 %v10241
        %v10315 = vunpack.c.h.b16 %v10241
        %v10316 = vunpack.c.l.b16 %v10242
        %v10317 = vunpack.c.h.b16 %v10242
        %v10318 = vunpack.c.l.b16 %v10243
        %v10319 = vunpack.c.h.b16 %v10243
        %v10320 = vunpack.c.l.b16 %v10244
        %v10321 = vunpack.c.h.b16 %v10244
        %v10322 = vunpack.c.l.b16 %v10245
        %v10323 = vunpack.c.h.b16 %v10245
        %v10324 = vunpack.c.l.b16 %v10246
        %v10325 = vunpack.c.h.b16 %v10246
        %v10326 = vunpack.c.l.b16 %v10247
        %v10327 = vunpack.c.h.b16 %v10247
        %v10328 = vunpack.c.l.b16 %v10248
        %v10329 = vunpack.c.h.b16 %v10248
        %v10330 = vunpack.c.l.b16 %v10249
        %v10331 = vunpack.c.h.b16 %v10249
        %v10332 = vunpack.c.l.b16 %v10250
        %v10333 = vunpack.c.h.b16 %v10250
        %v10334 = vunpack.c.l.b16 %v10251
        %v10335 = vunpack.c.h.b16 %v10251
        %v10336 = vunpack.c.l.b16 %v10252
        %v10337 = vunpack.c.h.b16 %v10252
        %v10338 = vunpack.c.l.b16 %v10253
        %v10339 = vunpack.c.h.b16 %v10253
        %v10340 = vunpack.c.l.b16 %v10254
        %v10341 = vunpack.c.h.b16 %v10254
        %v10342 = vunpack.c.l.b16 %v10255
        %v10343 = vunpack.c.h.b16 %v10255
        %v10344 = vunpack.c.l.b16 %v10256
        %v10345 = vunpack.c.h.b16 %v10256
        %v10346 = vunpack.c.l.b16 %v10257
        %v10347 = vunpack.c.h.b16 %v10257
        %v10348 = vunpack.c.l.b16 %v10258
        %v10349 = vunpack.c.h.b16 %v10258
        %v10350 = vunpack.c.l.b16 %v10259
        %v10351 = vunpack.c.h.b16 %v10259
        %v10352 = vunpack.c.l.b16 %v10260
        %v10353 = vunpack.c.h.b16 %v10260
        %v10354 = vunpack.c.l.b16 %v10261
        %v10355 = vunpack.c.h.b16 %v10261
        %v10356 = vunpack.c.l.b16 %v10262
        %v10357 = vunpack.c.h.b16 %v10262
        %v10358 = vunpack.c.l.b16 %v10263
        %v10359 = vunpack.c.h.b16 %v10263
        %v10360 = vunpack.c.l.b16 %v10264
        %v10361 = vunpack.c.h.b16 %v10264
        %v10362 = vpack.c.b16 %v10300, %v10298
        %v10363 = vpack.c.b16 %v10301, %v10299
        %v10364 = vpack.c.b16 %v10304, %v10302
        %v10365 = vpack.c.b16 %v10305, %v10303
        %v10366 = vpack.c.b16 %v10308, %v10306
        %v10367 = vpack.c.b16 %v10309, %v10307
        %v10368 = vpack.c.b16 %v10312, %v10310
        %v10369 = vpack.c.b16 %v10313, %v10311
        %v10370 = vpack.c.b16 %v10316, %v10314
        %v10371 = vpack.c.b16 %v10317, %v10315
        %v10372 = vpack.c.b16 %v10320, %v10318
        %v10373 = vpack.c.b16 %v10321, %v10319
        %v10374 = vpack.c.b16 %v10324, %v10322
        %v10375 = vpack.c.b16 %v10325, %v10323
        %v10376 = vpack.c.b16 %v10328, %v10326
        %v10377 = vpack.c.b16 %v10329, %v10327
        %v10378 = vpack.c.b16 %v10332, %v10330
        %v10379 = vpack.c.b16 %v10333, %v10331
        %v10380 = vpack.c.b16 %v10336, %v10334
        %v10381 = vpack.c.b16 %v10337, %v10335
        %v10382 = vpack.c.b16 %v10340, %v10338
        %v10383 = vpack.c.b16 %v10341, %v10339
        %v10384 = vpack.c.b16 %v10344, %v10342
        %v10385 = vpack.c.b16 %v10345, %v10343
        %v10386 = vpack.c.b16 %v10348, %v10346
        %v10387 = vpack.c.b16 %v10349, %v10347
        %v10388 = vpack.c.b16 %v10352, %v10350
        %v10389 = vpack.c.b16 %v10353, %v10351
        %v10390 = vpack.c.b16 %v10356, %v10354
        %v10391 = vpack.c.b16 %v10357, %v10355
        %v10392 = vpack.c.b16 %v10360, %v10358
        %v10393 = vpack.c.b16 %v10361, %v10359
        %v10427 = vlaneseq
        %v10428 = vshrl.u32 %v10427, 7
        %v10429 = vsub.s32 0, %v10428
        %v10430 = vrot.slane %v10265, %v10429
        %v10431 = vlaneseq
        %v10432 = vshrl.u32 %v10431, 7
        %v10433 = vsub.s32 1, %v10432
        %v10434 = vrot.slane %v10265, %v10433
        %10437 = vmatprep.subr.bf16.mxu0 %v10377
        %10438 = vmatpush1.bf16.msra.mxu0 %v10376
        %10439 = vmatprep.subr.bf16.mxu0 %v10375
        %10440 = vmatpush1.bf16.msra.mxu0 %v10374
        %10441 = vmatprep.subr.bf16.mxu0 %v10373
        %10442 = vmatpush1.bf16.msra.mxu0 %v10372
        %10443 = vmatprep.subr.bf16.mxu0 %v10371
        %10444 = vmatpush1.bf16.msra.mxu0 %v10370
        %10445 = vmatprep.subr.bf16.mxu0 %v10369
        %10446 = vmatpush1.bf16.msra.mxu0 %v10368
        %10447 = vmatprep.subr.bf16.mxu0 %v10367
        %10448 = vmatpush1.bf16.msra.mxu0 %v10366
        %10449 = vmatprep.subr.bf16.mxu0 %v10365
        %10450 = vmatpush1.bf16.msra.mxu0 %v10364
        %10451 = vmatprep.subr.bf16.mxu0 %v10363
        %10452 = vmatpush1.bf16.msra.mxu0 %v10362
        %10453 = vmatprep.subr.bf16.mxu0 %v10393
        %10454 = vmatpush2.bf16.msra.mxu0 %v10392
        %10455 = vmatprep.subr.bf16.mxu0 %v10391
        %10456 = vmatpush2.bf16.msra.mxu0 %v10390
        %10457 = vmatprep.subr.bf16.mxu0 %v10389
        %10458 = vmatpush2.bf16.msra.mxu0 %v10388
        %10459 = vmatprep.subr.bf16.mxu0 %v10387
        %10460 = vmatpush2.bf16.msra.mxu0 %v10386
        %10461 = vmatprep.subr.bf16.mxu0 %v10385
        %10462 = vmatpush2.bf16.msra.mxu0 %v10384
        %10463 = vmatprep.subr.bf16.mxu0 %v10383
        %10464 = vmatpush2.bf16.msra.mxu0 %v10382
        %10465 = vmatprep.subr.bf16.mxu0 %v10381
        %10466 = vmatpush2.bf16.msra.mxu0 %v10380
        %10467 = vmatprep.subr.bf16.mxu0 %v10379
        %10468 = vmatpush2.bf16.msra.mxu0 %v10378
        %10469 = vmatprep.mubr.bf16.mxu0 %v10232
        %10470 = vmatmul.mubr.bf16.gmra.mxu0 %v10231
        %v10471 = vpop.f32.mrf.mxu0
        %v10472 = vadd.f32 %v10430, %v10471
        %v10473 = vpop.f32.mrf.mxu0
        %v10474 = vadd.f32 %v10434, %v10473
        %v10475 = vpop.f32.mrf.mxu0
        %v10476 = vpop.f32.mrf.mxu0
        %10477 = vdwg.mxu0
        %v10478 = vadd.f32 %v10472, %v9970
        %v10479 = vadd.f32 %v10474, %v9971
        %vm10480 = vcmp.gt.f32.partialorder %v10478, 0.0
        %vm10481 = vcmp.gt.f32.partialorder %v10479, 0.0
        %v10482 = vmin.f32 %v10478, 0.0
        %v10483 = vmin.f32 %v10479, 0.0
        %v10484 = vmul.f32 %v10482, 1.442695
        %v10485 = vpow.pop %v10484
        %v10486 = vmul.f32 %v10483, 1.442695
        %v10487 = vpow.pop %v10486
        %v10488 = vsub.f32 %v10485, 1.0
        %v10489 = vsub.f32 %v10487, 1.0
        %v10490 = vsel %vm10480, %v10478, %v10488
        %v10491 = vsel %vm10481, %v10479, %v10489
        %v10492 = vpack.c.bf16 %v10490, %v10490
        %v10493 = vpack.c.bf16 %v10491, %v10491
        %v10494 = vld [vmem:[#allocation40] sm:$0xf]
        %v10495 = vld [vmem:[#allocation40 + $0x4] sm:$0xf]
        %v10496 = vld [vmem:[#allocation40 + $0x8] sm:$0xf]
        %v10497 = vld [vmem:[#allocation40 + $0xc] sm:$0xf]
        %v10498 = vld [vmem:[#allocation40 + $0x10] sm:$0xf]
        %v10499 = vld [vmem:[#allocation40 + $0x14] sm:$0xf]
        %v10500 = vld [vmem:[#allocation40 + $0x18] sm:$0xf]
        %v10501 = vld [vmem:[#allocation40 + $0x1c] sm:$0xf]
        %v10502 = vld [vmem:[#allocation40 + $0x20] sm:$0xf]
        %v10503 = vld [vmem:[#allocation40 + $0x24] sm:$0xf]
        %v10504 = vld [vmem:[#allocation40 + $0x28] sm:$0xf]
        %v10505 = vld [vmem:[#allocation40 + $0x2c] sm:$0xf]
        %v10506 = vld [vmem:[#allocation40 + $0x30] sm:$0xf]
        %v10507 = vld [vmem:[#allocation40 + $0x34] sm:$0xf]
        %v10508 = vld [vmem:[#allocation40 + $0x38] sm:$0xf]
        %v10509 = vld [vmem:[#allocation40 + $0x3c] sm:$0xf]
        %v10510 = vld [vmem:[#allocation40 + $0x40] sm:$0xf]
        %v10511 = vld [vmem:[#allocation40 + $0x44] sm:$0xf]
        %v10512 = vld [vmem:[#allocation40 + $0x48] sm:$0xf]
        %v10513 = vld [vmem:[#allocation40 + $0x4c] sm:$0xf]
        %v10514 = vld [vmem:[#allocation40 + $0x50] sm:$0xf]
        %v10515 = vld [vmem:[#allocation40 + $0x54] sm:$0xf]
        %v10516 = vld [vmem:[#allocation40 + $0x58] sm:$0xf]
        %v10517 = vld [vmem:[#allocation40 + $0x5c] sm:$0xf]
        %v10518 = vld [vmem:[#allocation40 + $0x60] sm:$0xf]
        %v10519 = vld [vmem:[#allocation40 + $0x64] sm:$0xf]
        %v10520 = vld [vmem:[#allocation40 + $0x68] sm:$0xf]
        %v10521 = vld [vmem:[#allocation40 + $0x6c] sm:$0xf]
        %v10522 = vld [vmem:[#allocation40 + $0x70] sm:$0xf]
        %v10523 = vld [vmem:[#allocation40 + $0x74] sm:$0xf]
        %v10524 = vld [vmem:[#allocation40 + $0x78] sm:$0xf]
        %v10525 = vld [vmem:[#allocation40 + $0x7c] sm:$0xf]
        %v10526 = vld [vmem:[#allocation41] sm:$0x1]
        %v10559 = vunpack.c.l.b16 %v10494
        %v10560 = vunpack.c.l.b16 %v10495
        %v10561 = vunpack.c.l.b16 %v10496
        %v10562 = vunpack.c.l.b16 %v10497
        %v10563 = vunpack.c.l.b16 %v10498
        %v10564 = vunpack.c.l.b16 %v10499
        %v10565 = vunpack.c.l.b16 %v10500
        %v10566 = vunpack.c.l.b16 %v10501
        %v10567 = vunpack.c.l.b16 %v10502
        %v10568 = vunpack.c.l.b16 %v10503
        %v10569 = vunpack.c.l.b16 %v10504
        %v10570 = vunpack.c.l.b16 %v10505
        %v10571 = vunpack.c.l.b16 %v10506
        %v10572 = vunpack.c.l.b16 %v10507
        %v10573 = vunpack.c.l.b16 %v10508
        %v10574 = vunpack.c.l.b16 %v10509
        %v10575 = vunpack.c.l.b16 %v10510
        %v10576 = vunpack.c.l.b16 %v10511
        %v10577 = vunpack.c.l.b16 %v10512
        %v10578 = vunpack.c.l.b16 %v10513
        %v10579 = vunpack.c.l.b16 %v10514
        %v10580 = vunpack.c.l.b16 %v10515
        %v10581 = vunpack.c.l.b16 %v10516
        %v10582 = vunpack.c.l.b16 %v10517
        %v10583 = vunpack.c.l.b16 %v10518
        %v10584 = vunpack.c.l.b16 %v10519
        %v10585 = vunpack.c.l.b16 %v10520
        %v10586 = vunpack.c.l.b16 %v10521
        %v10587 = vunpack.c.l.b16 %v10522
        %v10588 = vunpack.c.l.b16 %v10523
        %v10589 = vunpack.c.l.b16 %v10524
        %v10590 = vunpack.c.l.b16 %v10525
        %v10591 = vpack.c.b16 %v10560, %v10559
        %v10592 = vpack.c.b16 %v10562, %v10561
        %v10593 = vpack.c.b16 %v10564, %v10563
        %v10594 = vpack.c.b16 %v10566, %v10565
        %v10595 = vpack.c.b16 %v10568, %v10567
        %v10596 = vpack.c.b16 %v10570, %v10569
        %v10597 = vpack.c.b16 %v10572, %v10571
        %v10598 = vpack.c.b16 %v10574, %v10573
        %v10599 = vpack.c.b16 %v10576, %v10575
        %v10600 = vpack.c.b16 %v10578, %v10577
        %v10601 = vpack.c.b16 %v10580, %v10579
        %v10602 = vpack.c.b16 %v10582, %v10581
        %v10603 = vpack.c.b16 %v10584, %v10583
        %v10604 = vpack.c.b16 %v10586, %v10585
        %v10605 = vpack.c.b16 %v10588, %v10587
        %v10606 = vpack.c.b16 %v10590, %v10589
        %10623 = vmatprep.subr.bf16.mxu0 0
        %10624 = vmatpush1.bf16.msra.mxu0 %v10598
        %10625 = vmatprep.subr.bf16.mxu0 0
        %10626 = vmatpush1.bf16.msra.mxu0 %v10597
        %10627 = vmatprep.subr.bf16.mxu0 0
        %10628 = vmatpush1.bf16.msra.mxu0 %v10596
        %10629 = vmatprep.subr.bf16.mxu0 0
        %10630 = vmatpush1.bf16.msra.mxu0 %v10595
        %10631 = vmatprep.subr.bf16.mxu0 0
        %10632 = vmatpush1.bf16.msra.mxu0 %v10594
        %10633 = vmatprep.subr.bf16.mxu0 0
        %10634 = vmatpush1.bf16.msra.mxu0 %v10593
        %10635 = vmatprep.subr.bf16.mxu0 0
        %10636 = vmatpush1.bf16.msra.mxu0 %v10592
        %10637 = vmatprep.subr.bf16.mxu0 0
        %10638 = vmatpush1.bf16.msra.mxu0 %v10591
        %10639 = vmatprep.subr.bf16.mxu0 0
        %10640 = vmatpush2.bf16.msra.mxu0 %v10606
        %10641 = vmatprep.subr.bf16.mxu0 0
        %10642 = vmatpush2.bf16.msra.mxu0 %v10605
        %10643 = vmatprep.subr.bf16.mxu0 0
        %10644 = vmatpush2.bf16.msra.mxu0 %v10604
        %10645 = vmatprep.subr.bf16.mxu0 0
        %10646 = vmatpush2.bf16.msra.mxu0 %v10603
        %10647 = vmatprep.subr.bf16.mxu0 0
        %10648 = vmatpush2.bf16.msra.mxu0 %v10602
        %10649 = vmatprep.subr.bf16.mxu0 0
        %10650 = vmatpush2.bf16.msra.mxu0 %v10601
        %10651 = vmatprep.subr.bf16.mxu0 0
        %10652 = vmatpush2.bf16.msra.mxu0 %v10600
        %10653 = vmatprep.subr.bf16.mxu0 0
        %10654 = vmatpush2.bf16.msra.mxu0 %v10599
        %10655 = vmatprep.mubr.bf16.mxu0 %v10493
        %10656 = vmatmul.mubr.bf16.gmra.mxu0 %v10492
        %v10657 = vpop.f32.mrf.mxu0
        %v10658 = vadd.f32 %v10526, %v10657
        %v10659 = vpop.f32.mrf.mxu0
        %v10660 = vpop.f32.mrf.mxu0
        %v10661 = vpop.f32.mrf.mxu0
        %10662 = vdwg.mxu0
        %v10663 = vld [vmem:[#allocation34] sm:$0xf]
        %v10664 = vld [vmem:[#allocation34 + $0x4] sm:$0xf]
        %v10665 = vld [vmem:[#allocation34 + $0x8] sm:$0xf]
        %v10666 = vld [vmem:[#allocation34 + $0xc] sm:$0xf]
        %v10667 = vld [vmem:[#allocation34 + $0x10] sm:$0xf]
        %v10668 = vld [vmem:[#allocation34 + $0x14] sm:$0xf]
        %v10669 = vld [vmem:[#allocation34 + $0x18] sm:$0xf]
        %v10670 = vld [vmem:[#allocation34 + $0x1c] sm:$0xf]
        %v10671 = vld [vmem:[#allocation34 + $0x20] sm:$0xf]
        %v10672 = vld [vmem:[#allocation34 + $0x24] sm:$0xf]
        %v10673 = vld [vmem:[#allocation34 + $0x28] sm:$0xf]
        %v10674 = vld [vmem:[#allocation34 + $0x2c] sm:$0xf]
        %v10675 = vld [vmem:[#allocation34 + $0x30] sm:$0xf]
        %v10676 = vld [vmem:[#allocation34 + $0x34] sm:$0xf]
        %v10677 = vld [vmem:[#allocation34 + $0x38] sm:$0xf]
        %v10678 = vld [vmem:[#allocation34 + $0x3c] sm:$0xf]
        %v10679 = vld [vmem:[#allocation34 + $0x40] sm:$0xf]
        %v10680 = vld [vmem:[#allocation34 + $0x44] sm:$0xf]
        %v10681 = vld [vmem:[#allocation34 + $0x48] sm:$0xf]
        %v10682 = vld [vmem:[#allocation34 + $0x4c] sm:$0xf]
        %v10683 = vld [vmem:[#allocation34 + $0x50] sm:$0xf]
        %v10684 = vld [vmem:[#allocation34 + $0x54] sm:$0xf]
        %v10685 = vld [vmem:[#allocation34 + $0x58] sm:$0xf]
        %v10686 = vld [vmem:[#allocation34 + $0x5c] sm:$0xf]
        %v10687 = vld [vmem:[#allocation34 + $0x60] sm:$0xf]
        %v10688 = vld [vmem:[#allocation34 + $0x64] sm:$0xf]
        %v10689 = vld [vmem:[#allocation34 + $0x68] sm:$0xf]
        %v10690 = vld [vmem:[#allocation34 + $0x6c] sm:$0xf]
        %v10691 = vld [vmem:[#allocation34 + $0x70] sm:$0xf]
        %v10692 = vld [vmem:[#allocation34 + $0x74] sm:$0xf]
        %v10693 = vld [vmem:[#allocation34 + $0x78] sm:$0xf]
        %v10694 = vld [vmem:[#allocation34 + $0x7c] sm:$0xf]
        %v10695 = vld [vmem:[#allocation35] sm:$0x1]
        %v10728 = vunpack.c.l.b16 %v10663
        %v10729 = vunpack.c.l.b16 %v10664
        %v10730 = vunpack.c.l.b16 %v10665
        %v10731 = vunpack.c.l.b16 %v10666
        %v10732 = vunpack.c.l.b16 %v10667
        %v10733 = vunpack.c.l.b16 %v10668
        %v10734 = vunpack.c.l.b16 %v10669
        %v10735 = vunpack.c.l.b16 %v10670
        %v10736 = vunpack.c.l.b16 %v10671
        %v10737 = vunpack.c.l.b16 %v10672
        %v10738 = vunpack.c.l.b16 %v10673
        %v10739 = vunpack.c.l.b16 %v10674
        %v10740 = vunpack.c.l.b16 %v10675
        %v10741 = vunpack.c.l.b16 %v10676
        %v10742 = vunpack.c.l.b16 %v10677
        %v10743 = vunpack.c.l.b16 %v10678
        %v10744 = vunpack.c.l.b16 %v10679
        %v10745 = vunpack.c.l.b16 %v10680
        %v10746 = vunpack.c.l.b16 %v10681
        %v10747 = vunpack.c.l.b16 %v10682
        %v10748 = vunpack.c.l.b16 %v10683
        %v10749 = vunpack.c.l.b16 %v10684
        %v10750 = vunpack.c.l.b16 %v10685
        %v10751 = vunpack.c.l.b16 %v10686
        %v10752 = vunpack.c.l.b16 %v10687
        %v10753 = vunpack.c.l.b16 %v10688
        %v10754 = vunpack.c.l.b16 %v10689
        %v10755 = vunpack.c.l.b16 %v10690
        %v10756 = vunpack.c.l.b16 %v10691
        %v10757 = vunpack.c.l.b16 %v10692
        %v10758 = vunpack.c.l.b16 %v10693
        %v10759 = vunpack.c.l.b16 %v10694
        %v10760 = vpack.c.b16 %v10729, %v10728
        %v10761 = vpack.c.b16 %v10731, %v10730
        %v10762 = vpack.c.b16 %v10733, %v10732
        %v10763 = vpack.c.b16 %v10735, %v10734
        %v10764 = vpack.c.b16 %v10737, %v10736
        %v10765 = vpack.c.b16 %v10739, %v10738
        %v10766 = vpack.c.b16 %v10741, %v10740
        %v10767 = vpack.c.b16 %v10743, %v10742
        %v10768 = vpack.c.b16 %v10745, %v10744
        %v10769 = vpack.c.b16 %v10747, %v10746
        %v10770 = vpack.c.b16 %v10749, %v10748
        %v10771 = vpack.c.b16 %v10751, %v10750
        %v10772 = vpack.c.b16 %v10753, %v10752
        %v10773 = vpack.c.b16 %v10755, %v10754
        %v10774 = vpack.c.b16 %v10757, %v10756
        %v10775 = vpack.c.b16 %v10759, %v10758
        %10792 = vmatprep.subr.bf16.mxu0 0
        %10793 = vmatpush1.bf16.msra.mxu0 %v10767
        %10794 = vmatprep.subr.bf16.mxu0 0
        %10795 = vmatpush1.bf16.msra.mxu0 %v10766
        %10796 = vmatprep.subr.bf16.mxu0 0
        %10797 = vmatpush1.bf16.msra.mxu0 %v10765
        %10798 = vmatprep.subr.bf16.mxu0 0
        %10799 = vmatpush1.bf16.msra.mxu0 %v10764
        %10800 = vmatprep.subr.bf16.mxu0 0
        %10801 = vmatpush1.bf16.msra.mxu0 %v10763
        %10802 = vmatprep.subr.bf16.mxu0 0
        %10803 = vmatpush1.bf16.msra.mxu0 %v10762
        %10804 = vmatprep.subr.bf16.mxu0 0
        %10805 = vmatpush1.bf16.msra.mxu0 %v10761
        %10806 = vmatprep.subr.bf16.mxu0 0
        %10807 = vmatpush1.bf16.msra.mxu0 %v10760
        %10808 = vmatprep.subr.bf16.mxu0 0
        %10809 = vmatpush2.bf16.msra.mxu0 %v10775
        %10810 = vmatprep.subr.bf16.mxu0 0
        %10811 = vmatpush2.bf16.msra.mxu0 %v10774
        %10812 = vmatprep.subr.bf16.mxu0 0
        %10813 = vmatpush2.bf16.msra.mxu0 %v10773
        %10814 = vmatprep.subr.bf16.mxu0 0
        %10815 = vmatpush2.bf16.msra.mxu0 %v10772
        %10816 = vmatprep.subr.bf16.mxu0 0
        %10817 = vmatpush2.bf16.msra.mxu0 %v10771
        %10818 = vmatprep.subr.bf16.mxu0 0
        %10819 = vmatpush2.bf16.msra.mxu0 %v10770
        %10820 = vmatprep.subr.bf16.mxu0 0
        %10821 = vmatpush2.bf16.msra.mxu0 %v10769
        %10822 = vmatprep.subr.bf16.mxu0 0
        %10823 = vmatpush2.bf16.msra.mxu0 %v10768
        %10824 = vmatprep.mubr.bf16.mxu0 %v10493
        %10825 = vmatmul.mubr.bf16.gmra.mxu0 %v10492
        %v10826 = vpop.f32.mrf.mxu0
        %v10827 = vadd.f32 %v10695, %v10826
        %v10828 = vpop.f32.mrf.mxu0
        %v10829 = vpop.f32.mrf.mxu0
        %v10830 = vpop.f32.mrf.mxu0
        %10831 = vdwg.mxu0
        %vm10832 = vcmp.gt.f32.partialorder %v10827, 0.0
        %v10833 = vmin.f32 %v10827, 0.0
        %v10834 = vmul.f32 %v10833, 1.442695
        %v10835 = vpow.pop %v10834
        %v10836 = vsub.f32 %v10835, 1.0
        %v10837 = vsel %vm10832, %v10827, %v10836
        %v10838 = vpack.c.bf16 %v10837, %v10837
        %v10839 = vld [vmem:[#allocation37] sm:$0xf]
        %v10840 = vld [vmem:[#allocation37 + $0x4] sm:$0xf]
        %v10841 = vld [vmem:[#allocation37 + $0x8] sm:$0xf]
        %v10842 = vld [vmem:[#allocation37 + $0xc] sm:$0xf]
        %v10843 = vld [vmem:[#allocation37 + $0x10] sm:$0xf]
        %v10844 = vld [vmem:[#allocation37 + $0x14] sm:$0xf]
        %v10845 = vld [vmem:[#allocation37 + $0x18] sm:$0xf]
        %v10846 = vld [vmem:[#allocation37 + $0x1c] sm:$0xf]
        %v10847 = vld [vmem:[#allocation37 + $0x20] sm:$0xf]
        %v10848 = vld [vmem:[#allocation37 + $0x24] sm:$0xf]
        %v10849 = vld [vmem:[#allocation37 + $0x28] sm:$0xf]
        %v10850 = vld [vmem:[#allocation37 + $0x2c] sm:$0xf]
        %v10851 = vld [vmem:[#allocation37 + $0x30] sm:$0xf]
        %v10852 = vld [vmem:[#allocation37 + $0x34] sm:$0xf]
        %v10853 = vld [vmem:[#allocation37 + $0x38] sm:$0xf]
        %v10854 = vld [vmem:[#allocation37 + $0x3c] sm:$0xf]
        %v10855 = vld [vmem:[#allocation38] sm:$0x1]
        %v10872 = vunpack.c.l.b16 %v10839
        %v10873 = vunpack.c.l.b16 %v10840
        %v10874 = vunpack.c.l.b16 %v10841
        %v10875 = vunpack.c.l.b16 %v10842
        %v10876 = vunpack.c.l.b16 %v10843
        %v10877 = vunpack.c.l.b16 %v10844
        %v10878 = vunpack.c.l.b16 %v10845
        %v10879 = vunpack.c.l.b16 %v10846
        %v10880 = vunpack.c.l.b16 %v10847
        %v10881 = vunpack.c.l.b16 %v10848
        %v10882 = vunpack.c.l.b16 %v10849
        %v10883 = vunpack.c.l.b16 %v10850
        %v10884 = vunpack.c.l.b16 %v10851
        %v10885 = vunpack.c.l.b16 %v10852
        %v10886 = vunpack.c.l.b16 %v10853
        %v10887 = vunpack.c.l.b16 %v10854
        %v10888 = vpack.c.b16 %v10873, %v10872
        %v10889 = vpack.c.b16 %v10875, %v10874
        %v10890 = vpack.c.b16 %v10877, %v10876
        %v10891 = vpack.c.b16 %v10879, %v10878
        %v10892 = vpack.c.b16 %v10881, %v10880
        %v10893 = vpack.c.b16 %v10883, %v10882
        %v10894 = vpack.c.b16 %v10885, %v10884
        %v10895 = vpack.c.b16 %v10887, %v10886
        %10904 = vmatprep.subr.bf16.mxu0 0
        %10905 = vmatpush1.bf16.msra.mxu0 %v10895
        %10906 = vmatprep.subr.bf16.mxu0 0
        %10907 = vmatpush1.bf16.msra.mxu0 %v10894
        %10908 = vmatprep.subr.bf16.mxu0 0
        %10909 = vmatpush1.bf16.msra.mxu0 %v10893
        %10910 = vmatprep.subr.bf16.mxu0 0
        %10911 = vmatpush1.bf16.msra.mxu0 %v10892
        %10912 = vmatprep.subr.bf16.mxu0 0
        %10913 = vmatpush1.bf16.msra.mxu0 %v10891
        %10914 = vmatprep.subr.bf16.mxu0 0
        %10915 = vmatpush1.bf16.msra.mxu0 %v10890
        %10916 = vmatprep.subr.bf16.mxu0 0
        %10917 = vmatpush1.bf16.msra.mxu0 %v10889
        %10918 = vmatprep.subr.bf16.mxu0 0
        %10919 = vmatpush1.bf16.msra.mxu0 %v10888
        %10920 = vmatprep.subr.bf16.mxu0 0
        %10921 = vmatpush2.bf16.msra.mxu0 0
        %10922 = vmatprep.subr.bf16.mxu0 0
        %10923 = vmatpush2.bf16.msra.mxu0 0
        %10924 = vmatprep.subr.bf16.mxu0 0
        %10925 = vmatpush2.bf16.msra.mxu0 0
        %10926 = vmatprep.subr.bf16.mxu0 0
        %10927 = vmatpush2.bf16.msra.mxu0 0
        %10928 = vmatprep.subr.bf16.mxu0 0
        %10929 = vmatpush2.bf16.msra.mxu0 0
        %10930 = vmatprep.subr.bf16.mxu0 0
        %10931 = vmatpush2.bf16.msra.mxu0 0
        %10932 = vmatprep.subr.bf16.mxu0 0
        %10933 = vmatpush2.bf16.msra.mxu0 0
        %10934 = vmatprep.subr.bf16.mxu0 0
        %10935 = vmatpush2.bf16.msra.mxu0 0
        %10936 = vmatprep.mubr.bf16.mxu0 0
        %10937 = vmatmul.mubr.bf16.gmra.mxu0 %v10838
        %v10938 = vpop.f32.mrf.mxu0
        %v10939 = vadd.f32 %v10855, %v10938
        %v10940 = vpop.f32.mrf.mxu0
        %v10941 = vpop.f32.mrf.mxu0
        %v10942 = vpop.f32.mrf.mxu0
        %10943 = vdwg.mxu0
        %v10944 = vadd.f32 %v10939, %v10658
        %vm10945 = vcmp.gt.f32.partialorder %v10944, 0.0
        %v10946 = vmin.f32 %v10944, 0.0
        %v10947 = vmul.f32 %v10946, 1.442695
        %v10948 = vpow.pop %v10947
        %v10949 = vsub.f32 %v10948, 1.0
        %v10950 = vsel %vm10945, %v10944, %v10949
        %v10951 = vpack.c.bf16 %v10950, %v10950
        %v10952 = vld [vmem:[#allocation43] sm:$0xf]
        %v10953 = vld [vmem:[#allocation43 + $0x4] sm:$0xf]
        %v10954 = vld [vmem:[#allocation43 + $0x8] sm:$0xf]
        %v10955 = vld [vmem:[#allocation43 + $0xc] sm:$0xf]
        %v10956 = vld [vmem:[#allocation43 + $0x10] sm:$0xf]
        %v10957 = vld [vmem:[#allocation43 + $0x14] sm:$0xf]
        %v10958 = vld [vmem:[#allocation43 + $0x18] sm:$0xf]
        %v10959 = vld [vmem:[#allocation43 + $0x1c] sm:$0xf]
        %v10960 = vld [vmem:[#allocation43 + $0x20] sm:$0xf]
        %v10961 = vld [vmem:[#allocation43 + $0x24] sm:$0xf]
        %v10962 = vld [vmem:[#allocation43 + $0x28] sm:$0xf]
        %v10963 = vld [vmem:[#allocation43 + $0x2c] sm:$0xf]
        %v10964 = vld [vmem:[#allocation43 + $0x30] sm:$0xf]
        %v10965 = vld [vmem:[#allocation43 + $0x34] sm:$0xf]
        %v10966 = vld [vmem:[#allocation43 + $0x38] sm:$0xf]
        %v10967 = vld [vmem:[#allocation43 + $0x3c] sm:$0xf]
        %v10968 = vld [vmem:[#allocation44] sm:$0x1]
        %v10985 = vunpack.c.l.b16 %v10952
        %v10986 = vunpack.c.l.b16 %v10953
        %v10987 = vunpack.c.l.b16 %v10954
        %v10988 = vunpack.c.l.b16 %v10955
        %v10989 = vunpack.c.l.b16 %v10956
        %v10990 = vunpack.c.l.b16 %v10957
        %v10991 = vunpack.c.l.b16 %v10958
        %v10992 = vunpack.c.l.b16 %v10959
        %v10993 = vunpack.c.l.b16 %v10960
        %v10994 = vunpack.c.l.b16 %v10961
        %v10995 = vunpack.c.l.b16 %v10962
        %v10996 = vunpack.c.l.b16 %v10963
        %v10997 = vunpack.c.l.b16 %v10964
        %v10998 = vunpack.c.l.b16 %v10965
        %v10999 = vunpack.c.l.b16 %v10966
        %v11000 = vunpack.c.l.b16 %v10967
        %v11001 = vpack.c.b16 %v10986, %v10985
        %v11002 = vpack.c.b16 %v10988, %v10987
        %v11003 = vpack.c.b16 %v10990, %v10989
        %v11004 = vpack.c.b16 %v10992, %v10991
        %v11005 = vpack.c.b16 %v10994, %v10993
        %v11006 = vpack.c.b16 %v10996, %v10995
        %v11007 = vpack.c.b16 %v10998, %v10997
        %v11008 = vpack.c.b16 %v11000, %v10999
        %11017 = vmatprep.subr.bf16.mxu0 0
        %11018 = vmatpush1.bf16.msra.mxu0 %v11008
        %11019 = vmatprep.subr.bf16.mxu0 0
        %11020 = vmatpush1.bf16.msra.mxu0 %v11007
        %11021 = vmatprep.subr.bf16.mxu0 0
        %11022 = vmatpush1.bf16.msra.mxu0 %v11006
        %11023 = vmatprep.subr.bf16.mxu0 0
        %11024 = vmatpush1.bf16.msra.mxu0 %v11005
        %11025 = vmatprep.subr.bf16.mxu0 0
        %11026 = vmatpush1.bf16.msra.mxu0 %v11004
        %11027 = vmatprep.subr.bf16.mxu0 0
        %11028 = vmatpush1.bf16.msra.mxu0 %v11003
        %11029 = vmatprep.subr.bf16.mxu0 0
        %11030 = vmatpush1.bf16.msra.mxu0 %v11002
        %11031 = vmatprep.subr.bf16.mxu0 0
        %11032 = vmatpush1.bf16.msra.mxu0 %v11001
        %11033 = vmatprep.subr.bf16.mxu0 0
        %11034 = vmatpush2.bf16.msra.mxu0 0
        %11035 = vmatprep.subr.bf16.mxu0 0
        %11036 = vmatpush2.bf16.msra.mxu0 0
        %11037 = vmatprep.subr.bf16.mxu0 0
        %11038 = vmatpush2.bf16.msra.mxu0 0
        %11039 = vmatprep.subr.bf16.mxu0 0
        %11040 = vmatpush2.bf16.msra.mxu0 0
        %11041 = vmatprep.subr.bf16.mxu0 0
        %11042 = vmatpush2.bf16.msra.mxu0 0
        %11043 = vmatprep.subr.bf16.mxu0 0
        %11044 = vmatpush2.bf16.msra.mxu0 0
        %11045 = vmatprep.subr.bf16.mxu0 0
        %11046 = vmatpush2.bf16.msra.mxu0 0
        %11047 = vmatprep.subr.bf16.mxu0 0
        %11048 = vmatpush2.bf16.msra.mxu0 0
        %11049 = vmatprep.mubr.bf16.mxu0 0
        %11050 = vmatmul.mubr.bf16.gmra.mxu0 %v10951
        %v11051 = vpop.f32.mrf.mxu0
        %v11052 = vadd.f32 %v10968, %v11051
        %v11053 = vpop.f32.mrf.mxu0
        %v11054 = vpop.f32.mrf.mxu0
        %v11055 = vpop.f32.mrf.mxu0
        %11056 = vdwg.mxu0
        %vm11057 = vcmp.gt.f32.partialorder %v11052, 0.0
        %v11058 = vmin.f32 %v11052, 0.0
        %v11059 = vmul.f32 %v11058, 1.442695
        %v11060 = vpow.pop %v11059
        %v11061 = vsub.f32 %v11060, 1.0
        %v11062 = vsel %vm11057, %v11052, %v11061
        %v11063 = vpack.c.bf16 %v11062, %v11062
        %v11064 = vld [vmem:[#allocation46] sm:$0xf]
        %v11065 = vld [vmem:[#allocation46 + $0x4] sm:$0xf]
        %v11066 = vld [vmem:[#allocation46 + $0x8] sm:$0xf]
        %v11067 = vld [vmem:[#allocation46 + $0xc] sm:$0xf]
        %v11068 = vld [vmem:[#allocation46 + $0x10] sm:$0xf]
        %v11069 = vld [vmem:[#allocation46 + $0x14] sm:$0xf]
        %v11070 = vld [vmem:[#allocation46 + $0x18] sm:$0xf]
        %v11071 = vld [vmem:[#allocation46 + $0x1c] sm:$0xf]
        %v11072 = vld [vmem:[#allocation46 + $0x20] sm:$0xf]
        %v11073 = vld [vmem:[#allocation46 + $0x24] sm:$0xf]
        %v11074 = vld [vmem:[#allocation46 + $0x28] sm:$0xf]
        %v11075 = vld [vmem:[#allocation46 + $0x2c] sm:$0xf]
        %v11076 = vld [vmem:[#allocation46 + $0x30] sm:$0xf]
        %v11077 = vld [vmem:[#allocation46 + $0x34] sm:$0xf]
        %v11078 = vld [vmem:[#allocation46 + $0x38] sm:$0xf]
        %v11079 = vld [vmem:[#allocation46 + $0x3c] sm:$0xf]
        %v11080 = vld [vmem:[#allocation47] sm:$0x1]
        %v11097 = vunpack.c.l.b16 %v11064
        %v11098 = vunpack.c.l.b16 %v11065
        %v11099 = vunpack.c.l.b16 %v11066
        %v11100 = vunpack.c.l.b16 %v11067
        %v11101 = vunpack.c.l.b16 %v11068
        %v11102 = vunpack.c.l.b16 %v11069
        %v11103 = vunpack.c.l.b16 %v11070
        %v11104 = vunpack.c.l.b16 %v11071
        %v11105 = vunpack.c.l.b16 %v11072
        %v11106 = vunpack.c.l.b16 %v11073
        %v11107 = vunpack.c.l.b16 %v11074
        %v11108 = vunpack.c.l.b16 %v11075
        %v11109 = vunpack.c.l.b16 %v11076
        %v11110 = vunpack.c.l.b16 %v11077
        %v11111 = vunpack.c.l.b16 %v11078
        %v11112 = vunpack.c.l.b16 %v11079
        %v11113 = vpack.c.b16 %v11098, %v11097
        %v11114 = vpack.c.b16 %v11100, %v11099
        %v11115 = vpack.c.b16 %v11102, %v11101
        %v11116 = vpack.c.b16 %v11104, %v11103
        %v11117 = vpack.c.b16 %v11106, %v11105
        %v11118 = vpack.c.b16 %v11108, %v11107
        %v11119 = vpack.c.b16 %v11110, %v11109
        %v11120 = vpack.c.b16 %v11112, %v11111
        %11129 = vmatprep.subr.bf16.mxu0 0
        %11130 = vmatpush1.bf16.msra.mxu0 %v11120
        %11131 = vmatprep.subr.bf16.mxu0 0
        %11132 = vmatpush1.bf16.msra.mxu0 %v11119
        %11133 = vmatprep.subr.bf16.mxu0 0
        %11134 = vmatpush1.bf16.msra.mxu0 %v11118
        %11135 = vmatprep.subr.bf16.mxu0 0
        %11136 = vmatpush1.bf16.msra.mxu0 %v11117
        %11137 = vmatprep.subr.bf16.mxu0 0
        %11138 = vmatpush1.bf16.msra.mxu0 %v11116
        %11139 = vmatprep.subr.bf16.mxu0 0
        %11140 = vmatpush1.bf16.msra.mxu0 %v11115
        %11141 = vmatprep.subr.bf16.mxu0 0
        %11142 = vmatpush1.bf16.msra.mxu0 %v11114
        %11143 = vmatprep.subr.bf16.mxu0 0
        %11144 = vmatpush1.bf16.msra.mxu0 %v11113
        %11145 = vmatprep.subr.bf16.mxu0 0
        %11146 = vmatpush2.bf16.msra.mxu0 0
        %11147 = vmatprep.subr.bf16.mxu0 0
        %11148 = vmatpush2.bf16.msra.mxu0 0
        %11149 = vmatprep.subr.bf16.mxu0 0
        %11150 = vmatpush2.bf16.msra.mxu0 0
        %11151 = vmatprep.subr.bf16.mxu0 0
        %11152 = vmatpush2.bf16.msra.mxu0 0
        %11153 = vmatprep.subr.bf16.mxu0 0
        %11154 = vmatpush2.bf16.msra.mxu0 0
        %11155 = vmatprep.subr.bf16.mxu0 0
        %11156 = vmatpush2.bf16.msra.mxu0 0
        %11157 = vmatprep.subr.bf16.mxu0 0
        %11158 = vmatpush2.bf16.msra.mxu0 0
        %11159 = vmatprep.subr.bf16.mxu0 0
        %11160 = vmatpush2.bf16.msra.mxu0 0
        %11161 = vmatprep.mubr.bf16.mxu0 0
        %11162 = vmatmul.mubr.bf16.gmra.mxu0 %v11063
        %v11163 = vpop.f32.mrf.mxu0
        %v11164 = vadd.f32 %v11080, %v11163
        %v11165 = vpop.f32.mrf.mxu0
        %v11166 = vpop.f32.mrf.mxu0
        %v11167 = vpop.f32.mrf.mxu0
        %11168 = vdwg.mxu0
        %v11169 = vadd.f32 %v11164, %v10950
        %vm11170 = vcmp.gt.f32.partialorder %v11169, 0.0
        %v11171 = vmin.f32 %v11169, 0.0
        %v11172 = vmul.f32 %v11171, 1.442695
        %v11173 = vpow.pop %v11172
        %v11174 = vsub.f32 %v11173, 1.0
        %v11175 = vsel %vm11170, %v11169, %v11174
        %11176 = vst [vmem:[%s1382] sm:$0x1] %v11175
        %s11177 = sand.u32 %s780, 1
        %s11178 = scalar_lea.sflag [#allocation4], %s11177
        %s11179 = sand.u32 %s780, 1
        %s11180 = scalar_lea.vmem [#allocation49], %s11179
        // Predicated region
        $region269: #{_lambda_.1} parent=147 // pred_check
          %p11181 = pneg %p790
        $region270: #{_lambda_.1} parent=147 // pred_check_branch
          %11183 = sbr.rel (%p11181) target = $region272
        $region271: #{_lambda_.1} parent=147 // pred_region
          %s11185 = ssub.s32 16, 16
          %11186 = vsyncadd %s11178, %s11185
          %s11187 = smul.addr %s95, 16
          %s11188 = scalar_lea.hbm %s65, %s11187
          %s11190 = sshll.u32 %s11180, 4
          %s11191 = int_to_ptr.vmem [resolvable:$true] %s11190
          %11193 = dma.vmem_to_hbm [thread:$0]  %s11191, 16, %s11188, %s11178
        $region272: #{_lambda_.1} parent=147 // pred_fallthru
          _
      $region148: #{_lambda_.1} parent=5 // pred_fallthru
        _
      %p11194 = scmp.le.s32.totalorder 2, %s90
      // Predicated region
      $region273: #{_lambda_.1} parent=5 // pred_check
        %p11195 = pneg %p11194
      $region274: #{_lambda_.1} parent=5 // pred_check_branch
        %11197 = sbr.rel (%p11195) target = $region276
      $region275: #{_lambda_.1} parent=5 // pred_region
        %s11198 = ssub.s32 %s90, 2
        // Predicated region
        $region277: #{_lambda_.1} parent=275 // pred_check
          %p11199 = pneg %p796
        $region278: #{_lambda_.1} parent=275 // pred_check_branch
          %11201 = sbr.rel (%p11199) target = $region280
        $region279: #{_lambda_.1} parent=275 // pred_region
          %s11202 = sand.u32 %s781, 1
          %s11203 = scalar_lea.sflag [#allocation4], %s11202
          %s11204 = sand.u32 %s781, 1
          %s11205 = scalar_lea.vmem [#allocation49], %s11204
          %11206 = dma.done %s11203, 16
        $region280: #{_lambda_.1} parent=275 // pred_fallthru
          _
      $region276: #{_lambda_.1} parent=5 // pred_fallthru
        _
    $region6: #{_lambda_.1} parent=1 // loop_footer
      %s94 = sadd.s32 1, %s90
    $region7: #{_lambda_.1} parent=1 // loop_footer_branch
      %89 = sbr.rel target = $region3
    $region8: #{_lambda_.1} parent=1 // loop_exit
      _
    %11207 = vsyncpa [#allocation3], 1
    %s11208 = scalar_lea.sflag [#allocation3], 1
    %11209 = vsyncpa %s11208, 1
    %11210 = vsyncpa [#allocation6], 1
    %11211 = vsyncpa [#allocation9], 1
    %11212 = vsyncpa [#allocation12], 1
    %11213 = vsyncpa [#allocation15], 1
    %11214 = vsyncpa [#allocation18], 1
    %11215 = vsyncpa [#allocation21], 1
    %11216 = vsyncpa [#allocation24], 1
    %11217 = vsyncpa [#allocation27], 1
    %11218 = vsyncpa [#allocation30], 1
    %11219 = vsyncpa [#allocation33], 1
    %11220 = vsyncpa [#allocation36], 1
    %11221 = vsyncpa [#allocation39], 1
    %11222 = vsyncpa [#allocation42], 1
    %11223 = vsyncpa [#allocation45], 1
    %11224 = vsyncpa [#allocation48], 1
    %11225 = vsyncpa [#allocation4], 1
    %s11226 = scalar_lea.sflag [#allocation4], 1
    %11227 = vsyncpa %s11226, 1

</llo_original>
